<compile_context>
chip_gen: v5e
topology: v5e:2x2
jax: 0.10.0
libtpu: 0.0.40
codegen_flags: <defaults>
</compile_context>

<pallas_src>
import functools

import jax
import jax.numpy as jnp
from jax.experimental import pallas as pl
from jax.experimental.pallas import tpu as pltpu


def _round_up(x, m):
    return ((x + m - 1) // m) * m


def _pick_tm(m, tm_max):
    """Choose an M tile.

    Large tiles amortize per-grid-step overhead, but we aim for >= 2 M tiles
    (v7x has 2 TensorCores fed by the "parallel" grid axis) and round to a
    multiple of 16 so bf16 rows fill vregs (16 sublanes per bf16 vreg).
    """
    tm = min(tm_max, _round_up(pl.cdiv(m, 2), 256))
    return min(tm, _round_up(m, 16))


# ---------------------------------------------------------------------------
# Pallas kernels: out = relu?(x @ w + b)
# ---------------------------------------------------------------------------
def _mm_bias_kernel(x_ref, w_ref, b_ref, o_ref, *, relu):
    # Single full-K block: no accumulator scratch, no init/epilogue passes.
    y = jnp.dot(x_ref[...], w_ref[...], preferred_element_type=jnp.float32)
    y = y + b_ref[...]                      # (1, N) broadcasts over rows
    if relu:
        y = jnp.maximum(y, 0.0)
    o_ref[...] = y.astype(o_ref.dtype)


def _mm_bias_acc_kernel(x_ref, w_ref, b_ref, o_ref, acc_ref, *, relu):
    # General K-tiled path (unused by this model; kept for tk != None).
    @pl.when(pl.program_id(1) == 0)
    def _():
        acc_ref[...] = jnp.zeros_like(acc_ref)

    acc_ref[...] += jnp.dot(x_ref[...], w_ref[...],
                            preferred_element_type=jnp.float32)

    @pl.when(pl.program_id(1) == pl.num_programs(1) - 1)
    def _():
        y = acc_ref[...] + b_ref[...]
        if relu:
            y = jnp.maximum(y, 0.0)
        o_ref[...] = y.astype(o_ref.dtype)


def matmul_bias(x, w, b, *, relu, out_dtype, tm_max=2048, tk=None):
    """x: (M, K) bf16, w: (K, N) bf16, b: (1, N) f32 -> (M, N) out_dtype."""
    M, K = x.shape
    Kw, N = w.shape
    assert K == Kw and b.shape == (1, N)

    # The reduction axis must be tiled exactly (OOB rows must never enter the
    # accumulation); this model always takes the single full-K block path.
    if tk is None or K % tk != 0:
        tk = K
    nk = K // tk
    tm = _pick_tm(M, tm_max)
    nm = pl.cdiv(M, tm)

    cost = pl.CostEstimate(
        flops=2 * M * K * N,
        transcendentals=0,
        bytes_accessed=(M * K * x.dtype.itemsize + K * N * w.dtype.itemsize
                        + N * 4 + M * N * jnp.dtype(out_dtype).itemsize),
    )

    if nk == 1:
        return pl.pallas_call(
            functools.partial(_mm_bias_kernel, relu=relu),
            out_shape=jax.ShapeDtypeStruct((M, N), out_dtype),
            grid_spec=pltpu.PrefetchScalarGridSpec(
                num_scalar_prefetch=0,
                grid=(nm,),
                in_specs=[
                    pl.BlockSpec((tm, K), lambda m: (m, 0)),
                    pl.BlockSpec((K, N), lambda m: (0, 0)),
                    pl.BlockSpec((1, N), lambda m: (0, 0)),
                ],
                out_specs=pl.BlockSpec((tm, N), lambda m: (m, 0)),
            ),
            compiler_params=pltpu.CompilerParams(
                dimension_semantics=("parallel",)),
            cost_estimate=cost,
        )(x, w, b)

    return pl.pallas_call(
        functools.partial(_mm_bias_acc_kernel, relu=relu),
        out_shape=jax.ShapeDtypeStruct((M, N), out_dtype),
        grid_spec=pltpu.PrefetchScalarGridSpec(
            num_scalar_prefetch=0,
            grid=(nm, nk),
            in_specs=[
                pl.BlockSpec((tm, tk), lambda m, k: (m, k)),
                pl.BlockSpec((tk, N), lambda m, k: (k, 0)),
                pl.BlockSpec((1, N), lambda m, k: (0, 0)),
            ],
            out_specs=pl.BlockSpec((tm, N), lambda m, k: (m, 0)),
            scratch_shapes=[pltpu.VMEM((tm, N), jnp.float32)],
        ),
        compiler_params=pltpu.CompilerParams(
            dimension_semantics=("parallel", "arbitrary")),
        cost_estimate=cost,
    )(x, w, b)


# ---------------------------------------------------------------------------
# Pallas kernel: fused fc1(+ReLU) -> fc2 head (hidden stays on-chip)
# ---------------------------------------------------------------------------
def _head_kernel(x_ref, w4_ref, b4_ref, w5_ref, b5_ref, o_ref):
    h = jnp.dot(x_ref[...], w4_ref[...], preferred_element_type=jnp.float32)
    h = jnp.maximum(h + b4_ref[...], 0.0)
    q = jnp.dot(h.astype(w5_ref.dtype), w5_ref[...],
                preferred_element_type=jnp.float32)
    o_ref[...] = (q + b5_ref[...]).astype(o_ref.dtype)


def mlp_head(x, w4, b4, w5, b5, *, tm_max=512):
    """x: (M, K) bf16, w4: (K, H) bf16, w5: (H, A) bf16 -> (M, A) f32."""
    M, K = x.shape
    _, H = w4.shape
    _, A = w5.shape
    tm = _pick_tm(M, tm_max)
    nm = pl.cdiv(M, tm)

    cost = pl.CostEstimate(
        flops=2 * M * K * H + 2 * M * H * A,
        transcendentals=0,
        bytes_accessed=(M * K * 2 + K * H * 2 + H * 4
                        + H * A * 2 + A * 4 + M * A * 4),
    )

    return pl.pallas_call(
        _head_kernel,
        out_shape=jax.ShapeDtypeStruct((M, A), jnp.float32),
        grid_spec=pltpu.PrefetchScalarGridSpec(
            num_scalar_prefetch=0,
            grid=(nm,),
            in_specs=[
                pl.BlockSpec((tm, K), lambda m: (m, 0)),
                pl.BlockSpec((K, H), lambda m: (0, 0)),
                pl.BlockSpec((1, H), lambda m: (0, 0)),
                pl.BlockSpec((H, A), lambda m: (0, 0)),
                pl.BlockSpec((1, A), lambda m: (0, 0)),
            ],
            out_specs=pl.BlockSpec((tm, A), lambda m: (m, 0)),
        ),
        compiler_params=pltpu.CompilerParams(
            dimension_semantics=("parallel",),
            # tm=512 needs > v5e's 16 MiB scoped default; 40 MiB is safely
            # below every generation's physical per-core VMEM (64 MiB on v7x).
            vmem_limit_bytes=40 * 1024 * 1024),
        cost_estimate=cost,
    )(x, w4, b4, w5, b5)


# ---------------------------------------------------------------------------
# Convolution = im2col (glue) + tiled Pallas GEMM (hot path)
# ---------------------------------------------------------------------------
def _im2col(x, k, s):
    """x: (N, H, W, C) NHWC -> (N*oh*ow, k*k*C) with (kh, kw, c) feature order."""
    N, H, W, C = x.shape
    oh = (H - k) // s + 1
    ow = (W - k) // s + 1
    cols = []
    for i in range(k):
        for j in range(k):
            cols.append(x[:, i:i + s * (oh - 1) + 1:s, j:j + s * (ow - 1) + 1:s, :])
    patches = jnp.stack(cols, axis=3)                 # (N, oh, ow, k*k, C)
    return patches.reshape(N * oh * ow, k * k * C), oh, ow


# TODO(synk): fuse im2col into the conv kernel (space-to-depth staging +
# in-VMEM tap extraction) so the patch matrix never hits HBM — the remaining
# #1 lever per the perf review; kept as XLA glue here to preserve a
# verified-running GEMM path.
def conv2d_relu(x, w2, b, k, stride):
    """x: NHWC bf16, w2: (k*k*in_c, out_c) bf16 (preprocessed), b: (1, out_c) f32."""
    patches, oh, ow = _im2col(x, k, stride)
    out_c = w2.shape[1]
    y = matmul_bias(patches, w2, b, relu=True, out_dtype=jnp.bfloat16,
                    tm_max=2048)
    return y.reshape(x.shape[0], oh, ow, out_c)


# ---------------------------------------------------------------------------
# Parameters
# ---------------------------------------------------------------------------
def init_params(key, in_channels=4, num_actions=6):
    ks = jax.random.split(key, 10)

    def nrm(k, shape, scale):
        return (scale * jax.random.normal(k, shape)).astype(jnp.float32)

    return {
        # conv weights in PyTorch layout (out_c, in_c, kh, kw)
        "w1": nrm(ks[0], (32, in_channels, 8, 8), 0.05),
        "b1": nrm(ks[1], (32,), 0.05),
        "w2": nrm(ks[2], (64, 32, 4, 4), 0.05),
        "b2": nrm(ks[3], (64,), 0.05),
        "w3": nrm(ks[4], (64, 64, 3, 3), 0.05),
        "b3": nrm(ks[5], (64,), 0.05),
        # fc weights as (in_features, out_features); fc1 rows indexed in
        # PyTorch NCHW-flatten order (c*49 + h*7 + w), like nn.Linear(3136, 512)
        "w4": nrm(ks[6], (7 * 7 * 64, 512), 0.02),
        "b4": nrm(ks[7], (512,), 0.02),
        "w5": nrm(ks[8], (512, num_actions), 0.02),
        "b5": nrm(ks[9], (num_actions,), 0.02),
    }


def preprocess_params(params):
    """One-time weight relayout, hoisted out of the forward hot path."""

    def conv_w(w):
        # (out_c, in_c, kh, kw) -> (kh*kw*in_c, out_c), matching im2col's
        # (kh, kw, c) feature order.
        out_c, in_c, kh, kw = w.shape
        return (jnp.transpose(w, (2, 3, 1, 0))
                .reshape(kh * kw * in_c, out_c).astype(jnp.bfloat16))

    def bias(b):
        return b.astype(jnp.float32).reshape(1, -1)

    # fc1: permute rows from NCHW-flatten (c*49 + h*7 + w) to NHWC-flatten
    # (h*7*64 + w*64 + c) so conv3's NHWC output flattens directly (no per-call
    # activation transpose), preserving exact PyTorch `view` semantics.
    w4 = params["w4"]
    hid = w4.shape[1]
    w4 = (w4.reshape(64, 7, 7, hid).transpose(1, 2, 0, 3)
          .reshape(7 * 7 * 64, hid).astype(jnp.bfloat16))

    return {
        "w1": conv_w(params["w1"]), "b1": bias(params["b1"]),
        "w2": conv_w(params["w2"]), "b2": bias(params["b2"]),
        "w3": conv_w(params["w3"]), "b3": bias(params["b3"]),
        "w4": w4, "b4": bias(params["b4"]),
        "w5": params["w5"].astype(jnp.bfloat16), "b5": bias(params["b5"]),
    }


# ---------------------------------------------------------------------------
# Forward pass (equivalent to DQN.forward)
# ---------------------------------------------------------------------------
def dqn_forward(prep, x):
    """x: (N, in_channels, 84, 84) NCHW float32 -> (N, num_actions) float32."""
    n = x.shape[0]
    x = jnp.transpose(x, (0, 2, 3, 1)).astype(jnp.bfloat16)       # NHWC bf16
    h = conv2d_relu(x, prep["w1"], prep["b1"], k=8, stride=4)     # (N, 20, 20, 32)
    h = conv2d_relu(h, prep["w2"], prep["b2"], k=4, stride=2)     # (N, 9, 9, 64)
    h = conv2d_relu(h, prep["w3"], prep["b3"], k=3, stride=1)     # (N, 7, 7, 64)
    h = h.reshape(n, -1)                                          # NHWC flatten
    # TODO(synk): fuse conv3 + fc1 + fc2 into one pallas_call to skip the
    # (N, 3136) HBM round trip at inference batch sizes.
    return mlp_head(h, prep["w4"], prep["b4"], prep["w5"], prep["b5"])


if __name__ == "__main__":
    key = jax.random.PRNGKey(0)
    k_param, k_state = jax.random.split(key)

    in_channels, num_actions, batch = 4, 6, 2
    params = init_params(k_param, in_channels=in_channels, num_actions=num_actions)
    prep = preprocess_params(params)                 # one-time weight relayout

    # 84x84 spatial is dictated by the module (fc1 expects 7*7*64 features).
    state = jax.random.uniform(k_state, (batch, in_channels, 84, 84), jnp.float32)

    fwd = jax.jit(dqn_forward)
    q = jax.block_until_ready(fwd(prep, state))

    assert q.shape == (batch, num_actions), q.shape
    assert q.dtype == jnp.float32
    assert bool(jnp.all(jnp.isfinite(q)))
    print("KERNEL_OK")
</pallas_src>

<mosaic_0001>
module attributes {stable_mosaic.version = 11 : i64} {
  func.func @_mm_bias_kernel(%arg0: i32, %arg1: memref<512x256xbf16, #tpu.memory_space<vmem>>, %arg2: memref<256x32xbf16, #tpu.memory_space<vmem>>, %arg3: memref<1x32xf32, #tpu.memory_space<vmem>>, %arg4: memref<512x32xbf16, #tpu.memory_space<vmem>>) attributes {dimension_semantics = [#tpu.dimension_semantics<parallel>], iteration_bounds = array<i64: 2>, scalar_prefetch = 0 : i64, scratch_operands = 0 : i64, tpu.core_type = #tpu.core_type<tc>, window_params = [{transform_indices = @transform_0, window_bounds = array<i64: 512, 256>}, {pipeline_mode = #tpu.pipeline_mode<synchronous>, transform_indices = @transform_1, window_bounds = array<i64: 256, 32>}, {pipeline_mode = #tpu.pipeline_mode<synchronous>, transform_indices = @transform_2, window_bounds = array<i64: 1, 32>}, {transform_indices = @transform_3, window_bounds = array<i64: 512, 32>}]} {
    %c0 = arith.constant 0 : index
    %c0_0 = arith.constant 0 : index
    %0 = vector.load %arg1[%c0, %c0_0] : memref<512x256xbf16, #tpu.memory_space<vmem>>, vector<512x256xbf16>
    %c0_1 = arith.constant 0 : index
    %c0_2 = arith.constant 0 : index
    %1 = vector.load %arg2[%c0_1, %c0_2] : memref<256x32xbf16, #tpu.memory_space<vmem>>, vector<256x32xbf16>
    %cst = arith.constant dense<0.000000e+00> : vector<512x32xf32>
    %2 = tpu.matmul %0, %1, %cst {dimension_numbers = #tpu.dot_dimension_numbers<[1], [0], [0], [1], [0, 0, 1, 1], [], []>} : vector<512x256xbf16>, vector<256x32xbf16>, vector<512x32xf32> -> vector<512x32xf32>
    %c0_3 = arith.constant 0 : index
    %c0_4 = arith.constant 0 : index
    %3 = vector.load %arg3[%c0_3, %c0_4] : memref<1x32xf32, #tpu.memory_space<vmem>>, vector<1x32xf32>
    %4 = vector.broadcast %3 : vector<1x32xf32> to vector<512x32xf32>
    %5 = arith.addf %2, %4 : vector<512x32xf32>
    %cst_5 = arith.constant 0.000000e+00 : f32
    %6 = vector.broadcast %cst_5 : f32 to vector<512x32xf32>
    %7 = arith.maximumf %5, %6 : vector<512x32xf32>
    %8 = arith.truncf %7 : vector<512x32xf32> to vector<512x32xbf16>
    %c0_6 = arith.constant 0 : index
    %c0_7 = arith.constant 0 : index
    %9 = vector.load %arg4[%c0_6, %c0_7] : memref<512x32xbf16, #tpu.memory_space<vmem>>, vector<512x32xbf16>
    tpu.vector_store %arg4[%c0_6, %c0_7], %8 {strides = array<i32>} : memref<512x32xbf16, #tpu.memory_space<vmem>>, vector<512x32xbf16>,
    return
  }
  func.func @transform_0(%arg0: i32) -> (i32, i32) {
    %c0_i32 = arith.constant 0 : i32
    %c0_i32_0 = arith.constant 0 : i32
    return %arg0, %c0_i32 : i32, i32
  }
  func.func @transform_1(%arg0: i32) -> (i32, i32) {
    %c0_i32 = arith.constant 0 : i32
    %c0_i32_0 = arith.constant 0 : i32
    %c0_i32_1 = arith.constant 0 : i32
    return %c0_i32, %c0_i32_0 : i32, i32
  }
  func.func @transform_2(%arg0: i32) -> (i32, i32) {
    %c0_i32 = arith.constant 0 : i32
    %c0_i32_0 = arith.constant 0 : i32
    %c0_i32_1 = arith.constant 0 : i32
    return %c0_i32, %c0_i32_0 : i32, i32
  }
  func.func @transform_3(%arg0: i32) -> (i32, i32) {
    %c0_i32 = arith.constant 0 : i32
    %c0_i32_0 = arith.constant 0 : i32
    return %arg0, %c0_i32 : i32, i32
  }
}

module attributes {stable_mosaic.version = 11 : i64} {
  func.func @_mm_bias_kernel(%arg0: i32, %arg1: memref<176x512xbf16, #tpu.memory_space<vmem>>, %arg2: memref<512x64xbf16, #tpu.memory_space<vmem>>, %arg3: memref<1x64xf32, #tpu.memory_space<vmem>>, %arg4: memref<176x64xbf16, #tpu.memory_space<vmem>>) attributes {dimension_semantics = [#tpu.dimension_semantics<parallel>], iteration_bounds = array<i64: 1>, scalar_prefetch = 0 : i64, scratch_operands = 0 : i64, tpu.core_type = #tpu.core_type<tc>, window_params = [{transform_indices = @transform_0, window_bounds = array<i64: 176, 512>}, {pipeline_mode = #tpu.pipeline_mode<synchronous>, transform_indices = @transform_1, window_bounds = array<i64: 512, 64>}, {pipeline_mode = #tpu.pipeline_mode<synchronous>, transform_indices = @transform_2, window_bounds = array<i64: 1, 64>}, {transform_indices = @transform_3, window_bounds = array<i64: 176, 64>}]} {
    %c0 = arith.constant 0 : index
    %c0_0 = arith.constant 0 : index
    %0 = vector.load %arg1[%c0, %c0_0] : memref<176x512xbf16, #tpu.memory_space<vmem>>, vector<176x512xbf16>
    %c0_1 = arith.constant 0 : index
    %c0_2 = arith.constant 0 : index
    %1 = vector.load %arg2[%c0_1, %c0_2] : memref<512x64xbf16, #tpu.memory_space<vmem>>, vector<512x64xbf16>
    %cst = arith.constant dense<0.000000e+00> : vector<176x64xf32>
    %2 = tpu.matmul %0, %1, %cst {dimension_numbers = #tpu.dot_dimension_numbers<[1], [0], [0], [1], [0, 0, 1, 1], [], []>} : vector<176x512xbf16>, vector<512x64xbf16>, vector<176x64xf32> -> vector<176x64xf32>
    %c0_3 = arith.constant 0 : index
    %c0_4 = arith.constant 0 : index
    %3 = vector.load %arg3[%c0_3, %c0_4] : memref<1x64xf32, #tpu.memory_space<vmem>>, vector<1x64xf32>
    %4 = vector.broadcast %3 : vector<1x64xf32> to vector<176x64xf32>
    %5 = arith.addf %2, %4 : vector<176x64xf32>
    %cst_5 = arith.constant 0.000000e+00 : f32
    %6 = vector.broadcast %cst_5 : f32 to vector<176x64xf32>
    %7 = arith.maximumf %5, %6 : vector<176x64xf32>
    %8 = arith.truncf %7 : vector<176x64xf32> to vector<176x64xbf16>
    %c0_6 = arith.constant 0 : index
    %c0_7 = arith.constant 0 : index
    %9 = vector.load %arg4[%c0_6, %c0_7] : memref<176x64xbf16, #tpu.memory_space<vmem>>, vector<176x64xbf16>
    tpu.vector_store %arg4[%c0_6, %c0_7], %8 {strides = array<i32>} : memref<176x64xbf16, #tpu.memory_space<vmem>>, vector<176x64xbf16>,
    return
  }
  func.func @transform_0(%arg0: i32) -> (i32, i32) {
    %c0_i32 = arith.constant 0 : i32
    %c0_i32_0 = arith.constant 0 : i32
    return %arg0, %c0_i32 : i32, i32
  }
  func.func @transform_1(%arg0: i32) -> (i32, i32) {
    %c0_i32 = arith.constant 0 : i32
    %c0_i32_0 = arith.constant 0 : i32
    %c0_i32_1 = arith.constant 0 : i32
    return %c0_i32, %c0_i32_0 : i32, i32
  }
  func.func @transform_2(%arg0: i32) -> (i32, i32) {
    %c0_i32 = arith.constant 0 : i32
    %c0_i32_0 = arith.constant 0 : i32
    %c0_i32_1 = arith.constant 0 : i32
    return %c0_i32, %c0_i32_0 : i32, i32
  }
  func.func @transform_3(%arg0: i32) -> (i32, i32) {
    %c0_i32 = arith.constant 0 : i32
    %c0_i32_0 = arith.constant 0 : i32
    return %arg0, %c0_i32 : i32, i32
  }
}

module attributes {stable_mosaic.version = 11 : i64} {
  func.func @_mm_bias_kernel(%arg0: i32, %arg1: memref<112x576xbf16, #tpu.memory_space<vmem>>, %arg2: memref<576x64xbf16, #tpu.memory_space<vmem>>, %arg3: memref<1x64xf32, #tpu.memory_space<vmem>>, %arg4: memref<112x64xbf16, #tpu.memory_space<vmem>>) attributes {dimension_semantics = [#tpu.dimension_semantics<parallel>], iteration_bounds = array<i64: 1>, scalar_prefetch = 0 : i64, scratch_operands = 0 : i64, tpu.core_type = #tpu.core_type<tc>, window_params = [{transform_indices = @transform_0, window_bounds = array<i64: 112, 576>}, {pipeline_mode = #tpu.pipeline_mode<synchronous>, transform_indices = @transform_1, window_bounds = array<i64: 576, 64>}, {pipeline_mode = #tpu.pipeline_mode<synchronous>, transform_indices = @transform_2, window_bounds = array<i64: 1, 64>}, {transform_indices = @transform_3, window_bounds = array<i64: 112, 64>}]} {
    %c0 = arith.constant 0 : index
    %c0_0 = arith.constant 0 : index
    %0 = vector.load %arg1[%c0, %c0_0] : memref<112x576xbf16, #tpu.memory_space<vmem>>, vector<112x576xbf16>
    %c0_1 = arith.constant 0 : index
    %c0_2 = arith.constant 0 : index
    %1 = vector.load %arg2[%c0_1, %c0_2] : memref<576x64xbf16, #tpu.memory_space<vmem>>, vector<576x64xbf16>
    %cst = arith.constant dense<0.000000e+00> : vector<112x64xf32>
    %2 = tpu.matmul %0, %1, %cst {dimension_numbers = #tpu.dot_dimension_numbers<[1], [0], [0], [1], [0, 0, 1, 1], [], []>} : vector<112x576xbf16>, vector<576x64xbf16>, vector<112x64xf32> -> vector<112x64xf32>
    %c0_3 = arith.constant 0 : index
    %c0_4 = arith.constant 0 : index
    %3 = vector.load %arg3[%c0_3, %c0_4] : memref<1x64xf32, #tpu.memory_space<vmem>>, vector<1x64xf32>
    %4 = vector.broadcast %3 : vector<1x64xf32> to vector<112x64xf32>
    %5 = arith.addf %2, %4 : vector<112x64xf32>
    %cst_5 = arith.constant 0.000000e+00 : f32
    %6 = vector.broadcast %cst_5 : f32 to vector<112x64xf32>
    %7 = arith.maximumf %5, %6 : vector<112x64xf32>
    %8 = arith.truncf %7 : vector<112x64xf32> to vector<112x64xbf16>
    %c0_6 = arith.constant 0 : index
    %c0_7 = arith.constant 0 : index
    %9 = vector.load %arg4[%c0_6, %c0_7] : memref<112x64xbf16, #tpu.memory_space<vmem>>, vector<112x64xbf16>
    tpu.vector_store %arg4[%c0_6, %c0_7], %8 {strides = array<i32>} : memref<112x64xbf16, #tpu.memory_space<vmem>>, vector<112x64xbf16>,
    return
  }
  func.func @transform_0(%arg0: i32) -> (i32, i32) {
    %c0_i32 = arith.constant 0 : i32
    %c0_i32_0 = arith.constant 0 : i32
    return %arg0, %c0_i32 : i32, i32
  }
  func.func @transform_1(%arg0: i32) -> (i32, i32) {
    %c0_i32 = arith.constant 0 : i32
    %c0_i32_0 = arith.constant 0 : i32
    %c0_i32_1 = arith.constant 0 : i32
    return %c0_i32, %c0_i32_0 : i32, i32
  }
  func.func @transform_2(%arg0: i32) -> (i32, i32) {
    %c0_i32 = arith.constant 0 : i32
    %c0_i32_0 = arith.constant 0 : i32
    %c0_i32_1 = arith.constant 0 : i32
    return %c0_i32, %c0_i32_0 : i32, i32
  }
  func.func @transform_3(%arg0: i32) -> (i32, i32) {
    %c0_i32 = arith.constant 0 : i32
    %c0_i32_0 = arith.constant 0 : i32
    return %arg0, %c0_i32 : i32, i32
  }
}

module attributes {stable_mosaic.version = 11 : i64} {
  func.func @_head_kernel(%arg0: i32, %arg1: memref<16x3136xbf16, #tpu.memory_space<vmem>>, %arg2: memref<3136x512xbf16, #tpu.memory_space<vmem>>, %arg3: memref<1x512xf32, #tpu.memory_space<vmem>>, %arg4: memref<512x6xbf16, #tpu.memory_space<vmem>>, %arg5: memref<1x6xf32, #tpu.memory_space<vmem>>, %arg6: memref<16x6xf32, #tpu.memory_space<vmem>>) attributes {dimension_semantics = [#tpu.dimension_semantics<parallel>], iteration_bounds = array<i64: 1>, scalar_prefetch = 0 : i64, scratch_operands = 0 : i64, tpu.core_type = #tpu.core_type<tc>, window_params = [{transform_indices = @transform_0, window_bounds = array<i64: 16, 3136>}, {pipeline_mode = #tpu.pipeline_mode<synchronous>, transform_indices = @transform_1, window_bounds = array<i64: 3136, 512>}, {pipeline_mode = #tpu.pipeline_mode<synchronous>, transform_indices = @transform_2, window_bounds = array<i64: 1, 512>}, {pipeline_mode = #tpu.pipeline_mode<synchronous>, transform_indices = @transform_3, window_bounds = array<i64: 512, 6>}, {pipeline_mode = #tpu.pipeline_mode<synchronous>, transform_indices = @transform_4, window_bounds = array<i64: 1, 6>}, {transform_indices = @transform_5, window_bounds = array<i64: 16, 6>}]} {
    %c0 = arith.constant 0 : index
    %c0_0 = arith.constant 0 : index
    %0 = vector.load %arg1[%c0, %c0_0] : memref<16x3136xbf16, #tpu.memory_space<vmem>>, vector<16x3136xbf16>
    %c0_1 = arith.constant 0 : index
    %c0_2 = arith.constant 0 : index
    %1 = vector.load %arg2[%c0_1, %c0_2] : memref<3136x512xbf16, #tpu.memory_space<vmem>>, vector<3136x512xbf16>
    %cst = arith.constant dense<0.000000e+00> : vector<16x512xf32>
    %2 = tpu.matmul %0, %1, %cst {dimension_numbers = #tpu.dot_dimension_numbers<[1], [0], [0], [1], [0, 0, 1, 1], [], []>} : vector<16x3136xbf16>, vector<3136x512xbf16>, vector<16x512xf32> -> vector<16x512xf32>
    %c0_3 = arith.constant 0 : index
    %c0_4 = arith.constant 0 : index
    %3 = vector.load %arg3[%c0_3, %c0_4] : memref<1x512xf32, #tpu.memory_space<vmem>>, vector<1x512xf32>
    %4 = vector.broadcast %3 : vector<1x512xf32> to vector<16x512xf32>
    %5 = arith.addf %2, %4 : vector<16x512xf32>
    %cst_5 = arith.constant 0.000000e+00 : f32
    %6 = vector.broadcast %cst_5 : f32 to vector<16x512xf32>
    %7 = arith.maximumf %5, %6 : vector<16x512xf32>
    %8 = arith.truncf %7 : vector<16x512xf32> to vector<16x512xbf16>
    %c0_6 = arith.constant 0 : index
    %c0_7 = arith.constant 0 : index
    %9 = vector.load %arg4[%c0_6, %c0_7] : memref<512x6xbf16, #tpu.memory_space<vmem>>, vector<512x6xbf16>
    %cst_8 = arith.constant dense<0.000000e+00> : vector<16x6xf32>
    %10 = tpu.matmul %8, %9, %cst_8 {dimension_numbers = #tpu.dot_dimension_numbers<[1], [0], [0], [1], [0, 0, 1, 1], [], []>} : vector<16x512xbf16>, vector<512x6xbf16>, vector<16x6xf32> -> vector<16x6xf32>
    %c0_9 = arith.constant 0 : index
    %c0_10 = arith.constant 0 : index
    %11 = vector.load %arg5[%c0_9, %c0_10] : memref<1x6xf32, #tpu.memory_space<vmem>>, vector<1x6xf32>
    %12 = vector.broadcast %11 : vector<1x6xf32> to vector<16x6xf32>
    %13 = arith.addf %10, %12 : vector<16x6xf32>
    %c0_11 = arith.constant 0 : index
    %c0_12 = arith.constant 0 : index
    %14 = vector.load %arg6[%c0_11, %c0_12] : memref<16x6xf32, #tpu.memory_space<vmem>>, vector<16x6xf32>
    tpu.vector_store %arg6[%c0_11, %c0_12], %13 {strides = array<i32>} : memref<16x6xf32, #tpu.memory_space<vmem>>, vector<16x6xf32>,
    return
  }
  func.func @transform_0(%arg0: i32) -> (i32, i32) {
    %c0_i32 = arith.constant 0 : i32
    %c0_i32_0 = arith.constant 0 : i32
    return %arg0, %c0_i32 : i32, i32
  }
  func.func @transform_1(%arg0: i32) -> (i32, i32) {
    %c0_i32 = arith.constant 0 : i32
    %c0_i32_0 = arith.constant 0 : i32
    %c0_i32_1 = arith.constant 0 : i32
    return %c0_i32, %c0_i32_0 : i32, i32
  }
  func.func @transform_2(%arg0: i32) -> (i32, i32) {
    %c0_i32 = arith.constant 0 : i32
    %c0_i32_0 = arith.constant 0 : i32
    %c0_i32_1 = arith.constant 0 : i32
    return %c0_i32, %c0_i32_0 : i32, i32
  }
  func.func @transform_3(%arg0: i32) -> (i32, i32) {
    %c0_i32 = arith.constant 0 : i32
    %c0_i32_0 = arith.constant 0 : i32
    %c0_i32_1 = arith.constant 0 : i32
    return %c0_i32, %c0_i32_0 : i32, i32
  }
  func.func @transform_4(%arg0: i32) -> (i32, i32) {
    %c0_i32 = arith.constant 0 : i32
    %c0_i32_0 = arith.constant 0 : i32
    %c0_i32_1 = arith.constant 0 : i32
    return %c0_i32, %c0_i32_0 : i32, i32
  }
  func.func @transform_5(%arg0: i32) -> (i32, i32) {
    %c0_i32 = arith.constant 0 : i32
    %c0_i32_0 = arith.constant 0 : i32
    return %arg0, %c0_i32 : i32, i32
  }
}

</mosaic_0001>

<llo_original>
// kernel: dqn_forward.4
$region0: #{dqn_forward.4}
  #allocation0 [shape = 'u32[]', space=smem, size = 0x4, offset = 0x4, fixed_abs, tag = 'smem constant byte address 0x4 - core index']
  #allocation1 [shape = 'u32[72,128]{1,0:T(1,128)}', space=vmem, size = 0x9000, scoped, tag = 'internal scratch']
  %s0 = inlined_call_operand.vmem [shape: bf16[800,256], index: 0, kind: input, shape index: {}]
  %s1 = inlined_call_operand.vmem [shape: bf16[256,32], index: 1, kind: input, shape index: {}]
  %s2 = inlined_call_operand.vmem [shape: f32[1,32], index: 2, kind: input, shape index: {}]
  %s3 = inlined_call_operand.vmem [shape: bf16[800,32], index: 3, kind: output, shape index: {}]
  %s4 = sld [smem:[#allocation0]]
  $region89: #{dqn_forward.4} parent=0
    _
  %s6 = ssub.s32 1, %s4
  %s7 = scalar_select 0, %s6, %s4
  $region1: #{dqn_forward.4} parent=0
    #allocation2 [shape = 'u8[262144]{0}', space=vmem, size = 0x40000, scoped, tag = 'output window, operand 0']
    loop: start=0, step=1, limit=4
    $region2: #{dqn_forward.4} parent=1 // loop_pre_header
      _
    $region3: #{dqn_forward.4} parent=1 // loop_header
      %s9 = sphi 0, %s13
      %p10 = scmp.ge.s32.totalorder %s9, 4
      %s19 = sphi 0, %s21
      %s22 = sphi 0, %s19
      %s23 = sphi 0, %s22
      %s39 = sphi 0, %s23
      %s43 = sphi 0, %s43
      %s45 = sphi 0, %s43
      %s46 = sphi 0, %s45
      %s60 = sphi 0, %s46
      %s64 = sphi 0, %s64
      %s66 = sphi 0, %s64
      %s67 = sphi 0, %s66
      %s81 = sphi 0, %s67
      %s87 = sphi 0, %s89
      %s90 = sphi 0, %s87
      %s91 = sphi 0, %s90
      %s107 = sphi 0, %s91
    $region4: #{dqn_forward.4} parent=1 // loop_header_branch
      %12 = sbr.rel (%p10) target = $region8
    $region5: #{dqn_forward.4} parent=1 // loop_body
      %s14 = ssub.s32 %s9, 1
      %s15 = ssub.s32 %s9, 2
      %s16 = sadd.s32 %s9, 1
      %s17 = ssub.s32 %s9, %s16
      %p18 = scmp.eq.s32.totalorder %s17, 0
      %s20 = sadd.s32 %s19, 1
      %s21 = scalar_select %p18, %s19, %s20
      %p24 = pneg %p18
      %p25 = scmp.eq.s32.totalorder %s9, 1
      %p26 = por %p24, %p25
      %p27 = scmp.ne.s32.totalorder %s19, %s22
      %p28 = scmp.eq.s32.totalorder %s9, 0
      %p29 = por %p27, %p28
      %p30 = scmp.ne.s32.totalorder %s19, %s22
      %p31 = scmp.eq.s32.totalorder %s14, 1
      %p32 = por %p30, %p31
      %p33 = scmp.ne.s32.totalorder %s22, %s23
      %p34 = scmp.eq.s32.totalorder %s14, 0
      %p35 = por %p33, %p34
      %p36 = scmp.ne.s32.totalorder %s22, %s23
      %p37 = scmp.eq.s32.totalorder %s15, 1
      %p38 = por %p36, %p37
      %p40 = scmp.ne.s32.totalorder %s23, %s39
      %p41 = scmp.eq.s32.totalorder %s15, 0
      %p42 = por %p40, %p41
      %s44 = sadd.s32 %s43, 1
      %p47 = scmp.eq.s32.totalorder %s9, 1
      %p48 = scmp.ne.s32.totalorder %s43, %s45
      %p49 = scmp.eq.s32.totalorder %s9, 0
      %p50 = por %p48, %p49
      %p51 = scmp.ne.s32.totalorder %s43, %s45
      %p52 = scmp.eq.s32.totalorder %s14, 1
      %p53 = por %p51, %p52
      %p54 = scmp.ne.s32.totalorder %s45, %s46
      %p55 = scmp.eq.s32.totalorder %s14, 0
      %p56 = por %p54, %p55
      %p57 = scmp.ne.s32.totalorder %s45, %s46
      %p58 = scmp.eq.s32.totalorder %s15, 1
      %p59 = por %p57, %p58
      %p61 = scmp.ne.s32.totalorder %s46, %s60
      %p62 = scmp.eq.s32.totalorder %s15, 0
      %p63 = por %p61, %p62
      %s65 = sadd.s32 %s64, 1
      %p68 = scmp.eq.s32.totalorder %s9, 1
      %p69 = scmp.ne.s32.totalorder %s64, %s66
      %p70 = scmp.eq.s32.totalorder %s9, 0
      %p71 = por %p69, %p70
      %p72 = scmp.ne.s32.totalorder %s64, %s66
      %p73 = scmp.eq.s32.totalorder %s14, 1
      %p74 = por %p72, %p73
      %p75 = scmp.ne.s32.totalorder %s66, %s67
      %p76 = scmp.eq.s32.totalorder %s14, 0
      %p77 = por %p75, %p76
      %p78 = scmp.ne.s32.totalorder %s66, %s67
      %p79 = scmp.eq.s32.totalorder %s15, 1
      %p80 = por %p78, %p79
      %p82 = scmp.ne.s32.totalorder %s67, %s81
      %p83 = scmp.eq.s32.totalorder %s15, 0
      %p84 = por %p82, %p83
      %s85 = ssub.s32 %s9, %s16
      %p86 = scmp.eq.s32.totalorder %s85, 0
      %s88 = sadd.s32 %s87, 1
      %s89 = scalar_select %p86, %s87, %s88
      %p92 = pneg %p86
      %p93 = scmp.eq.s32.totalorder %s9, 1
      %p94 = por %p92, %p93
      %p95 = scmp.ne.s32.totalorder %s87, %s90
      %p96 = scmp.eq.s32.totalorder %s9, 0
      %p97 = por %p95, %p96
      %p98 = scmp.ne.s32.totalorder %s87, %s90
      %p99 = scmp.eq.s32.totalorder %s14, 1
      %p100 = por %p98, %p99
      %p101 = scmp.ne.s32.totalorder %s90, %s91
      %p102 = scmp.eq.s32.totalorder %s14, 0
      %p103 = por %p101, %p102
      %p104 = scmp.ne.s32.totalorder %s90, %s91
      %p105 = scmp.eq.s32.totalorder %s15, 1
      %p106 = por %p104, %p105
      %p108 = scmp.ne.s32.totalorder %s91, %s107
      %p109 = scmp.eq.s32.totalorder %s15, 0
      %p110 = por %p108, %p109
      %p111 = scmp.le.s32.totalorder 1, %s9
      %p112 = scmp.lt.s32.totalorder %s9, 3
      %p113 = pnand %p111, %p112
      %p114 = pneg %p113
      // Predicated region
      $region9: #{dqn_forward.4} parent=5 // pred_check
        _
      $region10: #{dqn_forward.4} parent=5 // pred_check_branch
        %116 = sbr.rel (%p113) target = $region12
      $region11: #{dqn_forward.4} parent=5 // pred_region
        %s117 = ssub.s32 %s9, 1
        // Predicated region
        $region13: #{dqn_forward.4} parent=11 // pred_check
          %p118 = pneg %p56
        $region14: #{dqn_forward.4} parent=11 // pred_check_branch
          %120 = sbr.rel (%p118) target = $region16
        $region15: #{dqn_forward.4} parent=11 // pred_region
          _
        $region16: #{dqn_forward.4} parent=11 // pred_fallthru
          _
        // Predicated region
        $region17: #{dqn_forward.4} parent=11 // pred_check
          %p121 = pneg %p77
        $region18: #{dqn_forward.4} parent=11 // pred_check_branch
          %123 = sbr.rel (%p121) target = $region20
        $region19: #{dqn_forward.4} parent=11 // pred_region
          _
        $region20: #{dqn_forward.4} parent=11 // pred_fallthru
          _
      $region12: #{dqn_forward.4} parent=5 // pred_fallthru
        _
      %p124 = scmp.lt.s32.totalorder %s9, 2
      // Predicated region
      $region21: #{dqn_forward.4} parent=5 // pred_check
        %p125 = pneg %p124
      $region22: #{dqn_forward.4} parent=5 // pred_check_branch
        %127 = sbr.rel (%p125) target = $region24
      $region23: #{dqn_forward.4} parent=5 // pred_region
        // Predicated region
        $region25: #{dqn_forward.4} parent=23 // pred_check
          %p128 = pneg %p29
        $region26: #{dqn_forward.4} parent=23 // pred_check_branch
          %130 = sbr.rel (%p128) target = $region28
        $region27: #{dqn_forward.4} parent=23 // pred_region
          %s131 = smul.u32 64, %s9
          %s132 = ssub.s32 100, %s131
          %p133 = scmp.lt.s32.totalorder %s132, 64
          %s134 = scalar_select %p133, %s132, 64
          %s135 = smul.u32 4, %s134
          %s136 = smul.u32 %s135, 2
          %p137 = scmp.lt.s32.totalorder %s131, 99
          %s138 = scalar_select %p137, %s131, 99
          %s139 = smul.addr %s138, 2
          %s140 = smul.addr %s139, 4
          %s141 = scalar_lea.vmem %s0, %s140
          %s142 = smul.u32 64, %s9
          %s143 = ssub.s32 100, %s142
          %p144 = scmp.lt.s32.totalorder %s143, 64
          %s145 = scalar_select %p144, %s143, 64
          %s146 = smul.u32 4, %s145
          %s147 = smul.u32 %s146, 2
        $region28: #{dqn_forward.4} parent=23 // pred_fallthru
          _
      $region24: #{dqn_forward.4} parent=5 // pred_fallthru
        _
      %p148 = scmp.le.s32.totalorder 1, %s9
      %p149 = scmp.lt.s32.totalorder %s9, 3
      %p150 = pnand %p148, %p149
      %p151 = pneg %p150
      // Predicated region
      $region29: #{dqn_forward.4} parent=5 // pred_check
        _
      $region30: #{dqn_forward.4} parent=5 // pred_check_branch
        %153 = sbr.rel (%p150) target = $region32
      $region31: #{dqn_forward.4} parent=5 // pred_region
        %s154 = ssub.s32 %s9, 1
        %s155 = smul.u32 64, %s14
        %s156 = ssub.s32 100, %s155
        %p157 = scmp.lt.s32.totalorder %s156, 64
        %s158 = scalar_select %p157, %s156, 64
        %s159 = smul.u32 4, %s158
        %s160 = smul.u32 %s159, 2
        %p161 = scmp.lt.s32.totalorder %s155, 99
        %s162 = scalar_select %p161, %s155, 99
        %s163 = smul.addr %s162, 2
        %s164 = smul.addr %s163, 4
        %s165 = scalar_lea.vmem %s0, %s164
        %p166 = pneg %p35
        %p167 = pneg %p32
        %p168 = pneg %p56
        %p169 = pneg %p53
        %p170 = pneg %p77
        %p171 = pneg %p74
        %p172 = pneg %p103
        %p173 = pneg %p100
        %s174 = sand.u32 %s90, 1
        %s175 = sand.u32 %s90, 1
        %s176 = smul.addr %s175, 256
        %s177 = scalar_lea.vmem [#allocation2], %s176
        %s178 = smul.u32 64, %s14
        %s179 = ssub.s32 100, %s178
        %p180 = scmp.lt.s32.totalorder %s179, 64
        %s181 = scalar_select %p180, %s179, 64
        %s182 = smul.u32 4, %s181
        %s183 = smul.u32 %s182, 2
        %p184 = scmp.lt.s32.totalorder %s178, 99
        %s185 = scalar_select %p184, %s178, 99
        %s186 = smul.addr %s185, 2
        %s187 = smul.addr %s186, 4
        %s188 = scalar_lea.vmem %s0, %s187
        %s189 = smul.u32 64, %s14
        %s190 = ssub.s32 100, %s189
        %p191 = scmp.lt.s32.totalorder %s190, 64
        %s192 = scalar_select %p191, %s190, 64
        %s193 = smul.u32 4, %s192
        %s194 = smul.u32 %s193, 2
        %s195 = smul.u32 64, %s14
        %s196 = ssub.s32 100, %s195
        %p197 = scmp.lt.s32.totalorder %s196, 64
        %s198 = scalar_select %p197, %s196, 64
        %s199 = smul.u32 4, %s198
        %v200 = vld [vmem:[%s188] sm:$0xff]
        %v201 = vld [vmem:[%s188 + $0x8] sm:$0xff]
        %v202 = vld [vmem:[%s188 + $0x10] sm:$0xff]
        %v203 = vld [vmem:[%s188 + $0x18] sm:$0xff]
        %v204 = vld [vmem:[%s188 + $0x20] sm:$0xff]
        %v205 = vld [vmem:[%s188 + $0x28] sm:$0xff]
        %v206 = vld [vmem:[%s188 + $0x30] sm:$0xff]
        %v207 = vld [vmem:[%s188 + $0x38] sm:$0xff]
        %v208 = vld [vmem:[%s188 + $0x40] sm:$0xff]
        %v209 = vld [vmem:[%s188 + $0x48] sm:$0xff]
        %v210 = vld [vmem:[%s188 + $0x50] sm:$0xff]
        %v211 = vld [vmem:[%s188 + $0x58] sm:$0xff]
        %v212 = vld [vmem:[%s188 + $0x60] sm:$0xff]
        %v213 = vld [vmem:[%s188 + $0x68] sm:$0xff]
        %v214 = vld [vmem:[%s188 + $0x70] sm:$0xff]
        %v215 = vld [vmem:[%s188 + $0x78] sm:$0xff]
        %v216 = vld [vmem:[%s188 + $0x80] sm:$0xff]
        %v217 = vld [vmem:[%s188 + $0x88] sm:$0xff]
        %v218 = vld [vmem:[%s188 + $0x90] sm:$0xff]
        %v219 = vld [vmem:[%s188 + $0x98] sm:$0xff]
        %v220 = vld [vmem:[%s188 + $0xa0] sm:$0xff]
        %v221 = vld [vmem:[%s188 + $0xa8] sm:$0xff]
        %v222 = vld [vmem:[%s188 + $0xb0] sm:$0xff]
        %v223 = vld [vmem:[%s188 + $0xb8] sm:$0xff]
        %v224 = vld [vmem:[%s188 + $0xc0] sm:$0xff]
        %v225 = vld [vmem:[%s188 + $0xc8] sm:$0xff]
        %v226 = vld [vmem:[%s188 + $0xd0] sm:$0xff]
        %v227 = vld [vmem:[%s188 + $0xd8] sm:$0xff]
        %v228 = vld [vmem:[%s188 + $0xe0] sm:$0xff]
        %v229 = vld [vmem:[%s188 + $0xe8] sm:$0xff]
        %v230 = vld [vmem:[%s188 + $0xf0] sm:$0xff]
        %v231 = vld [vmem:[%s188 + $0xf8] sm:$0xff]
        %v232 = vld [vmem:[%s188 + $0x100] sm:$0xff]
        %v233 = vld [vmem:[%s188 + $0x108] sm:$0xff]
        %v234 = vld [vmem:[%s188 + $0x110] sm:$0xff]
        %v235 = vld [vmem:[%s188 + $0x118] sm:$0xff]
        %v236 = vld [vmem:[%s188 + $0x120] sm:$0xff]
        %v237 = vld [vmem:[%s188 + $0x128] sm:$0xff]
        %v238 = vld [vmem:[%s188 + $0x130] sm:$0xff]
        %v239 = vld [vmem:[%s188 + $0x138] sm:$0xff]
        %v240 = vld [vmem:[%s188 + $0x140] sm:$0xff]
        %v241 = vld [vmem:[%s188 + $0x148] sm:$0xff]
        %v242 = vld [vmem:[%s188 + $0x150] sm:$0xff]
        %v243 = vld [vmem:[%s188 + $0x158] sm:$0xff]
        %v244 = vld [vmem:[%s188 + $0x160] sm:$0xff]
        %v245 = vld [vmem:[%s188 + $0x168] sm:$0xff]
        %v246 = vld [vmem:[%s188 + $0x170] sm:$0xff]
        %v247 = vld [vmem:[%s188 + $0x178] sm:$0xff]
        %v248 = vld [vmem:[%s188 + $0x180] sm:$0xff]
        %v249 = vld [vmem:[%s188 + $0x188] sm:$0xff]
        %v250 = vld [vmem:[%s188 + $0x190] sm:$0xff]
        %v251 = vld [vmem:[%s188 + $0x198] sm:$0xff]
        %v252 = vld [vmem:[%s188 + $0x1a0] sm:$0xff]
        %v253 = vld [vmem:[%s188 + $0x1a8] sm:$0xff]
        %v254 = vld [vmem:[%s188 + $0x1b0] sm:$0xff]
        %v255 = vld [vmem:[%s188 + $0x1b8] sm:$0xff]
        %v256 = vld [vmem:[%s188 + $0x1c0] sm:$0xff]
        %v257 = vld [vmem:[%s188 + $0x1c8] sm:$0xff]
        %v258 = vld [vmem:[%s188 + $0x1d0] sm:$0xff]
        %v259 = vld [vmem:[%s188 + $0x1d8] sm:$0xff]
        %v260 = vld [vmem:[%s188 + $0x1e0] sm:$0xff]
        %v261 = vld [vmem:[%s188 + $0x1e8] sm:$0xff]
        %v262 = vld [vmem:[%s188 + $0x1f0] sm:$0xff]
        %v263 = vld [vmem:[%s188 + $0x1f8] sm:$0xff]
        %v264 = vld [vmem:[%s1] sm:$0xf]
        %v265 = vld [vmem:[%s1 + $0x4] sm:$0xf]
        %v266 = vld [vmem:[%s1 + $0x8] sm:$0xf]
        %v267 = vld [vmem:[%s1 + $0xc] sm:$0xf]
        %v268 = vld [vmem:[%s1 + $0x10] sm:$0xf]
        %v269 = vld [vmem:[%s1 + $0x14] sm:$0xf]
        %v270 = vld [vmem:[%s1 + $0x18] sm:$0xf]
        %v271 = vld [vmem:[%s1 + $0x1c] sm:$0xf]
        %v272 = vld [vmem:[%s1 + $0x20] sm:$0xf]
        %v273 = vld [vmem:[%s1 + $0x24] sm:$0xf]
        %v274 = vld [vmem:[%s1 + $0x28] sm:$0xf]
        %v275 = vld [vmem:[%s1 + $0x2c] sm:$0xf]
        %v276 = vld [vmem:[%s1 + $0x30] sm:$0xf]
        %v277 = vld [vmem:[%s1 + $0x34] sm:$0xf]
        %v278 = vld [vmem:[%s1 + $0x38] sm:$0xf]
        %v279 = vld [vmem:[%s1 + $0x3c] sm:$0xf]
        %v280 = vld [vmem:[%s1 + $0x40] sm:$0xf]
        %v281 = vld [vmem:[%s1 + $0x44] sm:$0xf]
        %v282 = vld [vmem:[%s1 + $0x48] sm:$0xf]
        %v283 = vld [vmem:[%s1 + $0x4c] sm:$0xf]
        %v284 = vld [vmem:[%s1 + $0x50] sm:$0xf]
        %v285 = vld [vmem:[%s1 + $0x54] sm:$0xf]
        %v286 = vld [vmem:[%s1 + $0x58] sm:$0xf]
        %v287 = vld [vmem:[%s1 + $0x5c] sm:$0xf]
        %v288 = vld [vmem:[%s1 + $0x60] sm:$0xf]
        %v289 = vld [vmem:[%s1 + $0x64] sm:$0xf]
        %v290 = vld [vmem:[%s1 + $0x68] sm:$0xf]
        %v291 = vld [vmem:[%s1 + $0x6c] sm:$0xf]
        %v292 = vld [vmem:[%s1 + $0x70] sm:$0xf]
        %v293 = vld [vmem:[%s1 + $0x74] sm:$0xf]
        %v294 = vld [vmem:[%s1 + $0x78] sm:$0xf]
        %v295 = vld [vmem:[%s1 + $0x7c] sm:$0xf]
        %v296 = vld [vmem:[%s2] sm:$0x1]
        %v298 = vperm.slane %v296, 0
        %v364 = vunpack.c.l.b16 %v200
        %v365 = vunpack.c.h.b16 %v200
        %v366 = vunpack.c.l.b16 %v201
        %v367 = vunpack.c.h.b16 %v201
        %v368 = vunpack.c.l.b16 %v202
        %v369 = vunpack.c.h.b16 %v202
        %v370 = vunpack.c.l.b16 %v203
        %v371 = vunpack.c.h.b16 %v203
        %v372 = vunpack.c.l.b16 %v204
        %v373 = vunpack.c.h.b16 %v204
        %v374 = vunpack.c.l.b16 %v205
        %v375 = vunpack.c.h.b16 %v205
        %v376 = vunpack.c.l.b16 %v206
        %v377 = vunpack.c.h.b16 %v206
        %v378 = vunpack.c.l.b16 %v207
        %v379 = vunpack.c.h.b16 %v207
        %v380 = vunpack.c.l.b16 %v208
        %v381 = vunpack.c.h.b16 %v208
        %v382 = vunpack.c.l.b16 %v209
        %v383 = vunpack.c.h.b16 %v209
        %v384 = vunpack.c.l.b16 %v210
        %v385 = vunpack.c.h.b16 %v210
        %v386 = vunpack.c.l.b16 %v211
        %v387 = vunpack.c.h.b16 %v211
        %v388 = vunpack.c.l.b16 %v212
        %v389 = vunpack.c.h.b16 %v212
        %v390 = vunpack.c.l.b16 %v213
        %v391 = vunpack.c.h.b16 %v213
        %v392 = vunpack.c.l.b16 %v214
        %v393 = vunpack.c.h.b16 %v214
        %v394 = vunpack.c.l.b16 %v215
        %v395 = vunpack.c.h.b16 %v215
        %v396 = vunpack.c.l.b16 %v216
        %v397 = vunpack.c.h.b16 %v216
        %v398 = vunpack.c.l.b16 %v217
        %v399 = vunpack.c.h.b16 %v217
        %v400 = vunpack.c.l.b16 %v218
        %v401 = vunpack.c.h.b16 %v218
        %v402 = vunpack.c.l.b16 %v219
        %v403 = vunpack.c.h.b16 %v219
        %v404 = vunpack.c.l.b16 %v220
        %v405 = vunpack.c.h.b16 %v220
        %v406 = vunpack.c.l.b16 %v221
        %v407 = vunpack.c.h.b16 %v221
        %v408 = vunpack.c.l.b16 %v222
        %v409 = vunpack.c.h.b16 %v222
        %v410 = vunpack.c.l.b16 %v223
        %v411 = vunpack.c.h.b16 %v223
        %v412 = vunpack.c.l.b16 %v224
        %v413 = vunpack.c.h.b16 %v224
        %v414 = vunpack.c.l.b16 %v225
        %v415 = vunpack.c.h.b16 %v225
        %v416 = vunpack.c.l.b16 %v226
        %v417 = vunpack.c.h.b16 %v226
        %v418 = vunpack.c.l.b16 %v227
        %v419 = vunpack.c.h.b16 %v227
        %v420 = vunpack.c.l.b16 %v228
        %v421 = vunpack.c.h.b16 %v228
        %v422 = vunpack.c.l.b16 %v229
        %v423 = vunpack.c.h.b16 %v229
        %v424 = vunpack.c.l.b16 %v230
        %v425 = vunpack.c.h.b16 %v230
        %v426 = vunpack.c.l.b16 %v231
        %v427 = vunpack.c.h.b16 %v231
        %v428 = vunpack.c.l.b16 %v232
        %v429 = vunpack.c.h.b16 %v232
        %v430 = vunpack.c.l.b16 %v233
        %v431 = vunpack.c.h.b16 %v233
        %v432 = vunpack.c.l.b16 %v234
        %v433 = vunpack.c.h.b16 %v234
        %v434 = vunpack.c.l.b16 %v235
        %v435 = vunpack.c.h.b16 %v235
        %v436 = vunpack.c.l.b16 %v236
        %v437 = vunpack.c.h.b16 %v236
        %v438 = vunpack.c.l.b16 %v237
        %v439 = vunpack.c.h.b16 %v237
        %v440 = vunpack.c.l.b16 %v238
        %v441 = vunpack.c.h.b16 %v238
        %v442 = vunpack.c.l.b16 %v239
        %v443 = vunpack.c.h.b16 %v239
        %v444 = vunpack.c.l.b16 %v240
        %v445 = vunpack.c.h.b16 %v240
        %v446 = vunpack.c.l.b16 %v241
        %v447 = vunpack.c.h.b16 %v241
        %v448 = vunpack.c.l.b16 %v242
        %v449 = vunpack.c.h.b16 %v242
        %v450 = vunpack.c.l.b16 %v243
        %v451 = vunpack.c.h.b16 %v243
        %v452 = vunpack.c.l.b16 %v244
        %v453 = vunpack.c.h.b16 %v244
        %v454 = vunpack.c.l.b16 %v245
        %v455 = vunpack.c.h.b16 %v245
        %v456 = vunpack.c.l.b16 %v246
        %v457 = vunpack.c.h.b16 %v246
        %v458 = vunpack.c.l.b16 %v247
        %v459 = vunpack.c.h.b16 %v247
        %v460 = vunpack.c.l.b16 %v248
        %v461 = vunpack.c.h.b16 %v248
        %v462 = vunpack.c.l.b16 %v249
        %v463 = vunpack.c.h.b16 %v249
        %v464 = vunpack.c.l.b16 %v250
        %v465 = vunpack.c.h.b16 %v250
        %v466 = vunpack.c.l.b16 %v251
        %v467 = vunpack.c.h.b16 %v251
        %v468 = vunpack.c.l.b16 %v252
        %v469 = vunpack.c.h.b16 %v252
        %v470 = vunpack.c.l.b16 %v253
        %v471 = vunpack.c.h.b16 %v253
        %v472 = vunpack.c.l.b16 %v254
        %v473 = vunpack.c.h.b16 %v254
        %v474 = vunpack.c.l.b16 %v255
        %v475 = vunpack.c.h.b16 %v255
        %v476 = vunpack.c.l.b16 %v256
        %v477 = vunpack.c.h.b16 %v256
        %v478 = vunpack.c.l.b16 %v257
        %v479 = vunpack.c.h.b16 %v257
        %v480 = vunpack.c.l.b16 %v258
        %v481 = vunpack.c.h.b16 %v258
        %v482 = vunpack.c.l.b16 %v259
        %v483 = vunpack.c.h.b16 %v259
        %v484 = vunpack.c.l.b16 %v260
        %v485 = vunpack.c.h.b16 %v260
        %v486 = vunpack.c.l.b16 %v261
        %v487 = vunpack.c.h.b16 %v261
        %v488 = vunpack.c.l.b16 %v262
        %v489 = vunpack.c.h.b16 %v262
        %v490 = vunpack.c.l.b16 %v263
        %v491 = vunpack.c.h.b16 %v263
        %v492 = vpack.c.b16 %v366, %v364
        %v493 = vpack.c.b16 %v367, %v365
        %v494 = vpack.c.b16 %v370, %v368
        %v495 = vpack.c.b16 %v371, %v369
        %v496 = vpack.c.b16 %v374, %v372
        %v497 = vpack.c.b16 %v375, %v373
        %v498 = vpack.c.b16 %v378, %v376
        %v499 = vpack.c.b16 %v379, %v377
        %v500 = vpack.c.b16 %v382, %v380
        %v501 = vpack.c.b16 %v383, %v381
        %v502 = vpack.c.b16 %v386, %v384
        %v503 = vpack.c.b16 %v387, %v385
        %v504 = vpack.c.b16 %v390, %v388
        %v505 = vpack.c.b16 %v391, %v389
        %v506 = vpack.c.b16 %v394, %v392
        %v507 = vpack.c.b16 %v395, %v393
        %v508 = vpack.c.b16 %v398, %v396
        %v509 = vpack.c.b16 %v399, %v397
        %v510 = vpack.c.b16 %v402, %v400
        %v511 = vpack.c.b16 %v403, %v401
        %v512 = vpack.c.b16 %v406, %v404
        %v513 = vpack.c.b16 %v407, %v405
        %v514 = vpack.c.b16 %v410, %v408
        %v515 = vpack.c.b16 %v411, %v409
        %v516 = vpack.c.b16 %v414, %v412
        %v517 = vpack.c.b16 %v415, %v413
        %v518 = vpack.c.b16 %v418, %v416
        %v519 = vpack.c.b16 %v419, %v417
        %v520 = vpack.c.b16 %v422, %v420
        %v521 = vpack.c.b16 %v423, %v421
        %v522 = vpack.c.b16 %v426, %v424
        %v523 = vpack.c.b16 %v427, %v425
        %v524 = vpack.c.b16 %v430, %v428
        %v525 = vpack.c.b16 %v431, %v429
        %v526 = vpack.c.b16 %v434, %v432
        %v527 = vpack.c.b16 %v435, %v433
        %v528 = vpack.c.b16 %v438, %v436
        %v529 = vpack.c.b16 %v439, %v437
        %v530 = vpack.c.b16 %v442, %v440
        %v531 = vpack.c.b16 %v443, %v441
        %v532 = vpack.c.b16 %v446, %v444
        %v533 = vpack.c.b16 %v447, %v445
        %v534 = vpack.c.b16 %v450, %v448
        %v535 = vpack.c.b16 %v451, %v449
        %v536 = vpack.c.b16 %v454, %v452
        %v537 = vpack.c.b16 %v455, %v453
        %v538 = vpack.c.b16 %v458, %v456
        %v539 = vpack.c.b16 %v459, %v457
        %v540 = vpack.c.b16 %v462, %v460
        %v541 = vpack.c.b16 %v463, %v461
        %v542 = vpack.c.b16 %v466, %v464
        %v543 = vpack.c.b16 %v467, %v465
        %v544 = vpack.c.b16 %v470, %v468
        %v545 = vpack.c.b16 %v471, %v469
        %v546 = vpack.c.b16 %v474, %v472
        %v547 = vpack.c.b16 %v475, %v473
        %v548 = vpack.c.b16 %v478, %v476
        %v549 = vpack.c.b16 %v479, %v477
        %v550 = vpack.c.b16 %v482, %v480
        %v551 = vpack.c.b16 %v483, %v481
        %v552 = vpack.c.b16 %v486, %v484
        %v553 = vpack.c.b16 %v487, %v485
        %v554 = vpack.c.b16 %v490, %v488
        %v555 = vpack.c.b16 %v491, %v489
        %v652 = vunpack.c.l.b16 %v264
        %v653 = vunpack.c.l.b16 %v265
        %v654 = vunpack.c.l.b16 %v266
        %v655 = vunpack.c.l.b16 %v267
        %v656 = vunpack.c.l.b16 %v268
        %v657 = vunpack.c.l.b16 %v269
        %v658 = vunpack.c.l.b16 %v270
        %v659 = vunpack.c.l.b16 %v271
        %v660 = vunpack.c.l.b16 %v272
        %v661 = vunpack.c.l.b16 %v273
        %v662 = vunpack.c.l.b16 %v274
        %v663 = vunpack.c.l.b16 %v275
        %v664 = vunpack.c.l.b16 %v276
        %v665 = vunpack.c.l.b16 %v277
        %v666 = vunpack.c.l.b16 %v278
        %v667 = vunpack.c.l.b16 %v279
        %v668 = vunpack.c.l.b16 %v280
        %v669 = vunpack.c.l.b16 %v281
        %v670 = vunpack.c.l.b16 %v282
        %v671 = vunpack.c.l.b16 %v283
        %v672 = vunpack.c.l.b16 %v284
        %v673 = vunpack.c.l.b16 %v285
        %v674 = vunpack.c.l.b16 %v286
        %v675 = vunpack.c.l.b16 %v287
        %v676 = vunpack.c.l.b16 %v288
        %v677 = vunpack.c.l.b16 %v289
        %v678 = vunpack.c.l.b16 %v290
        %v679 = vunpack.c.l.b16 %v291
        %v680 = vunpack.c.l.b16 %v292
        %v681 = vunpack.c.l.b16 %v293
        %v682 = vunpack.c.l.b16 %v294
        %v683 = vunpack.c.l.b16 %v295
        %v684 = vpack.c.b16 %v653, %v652
        %v685 = vpack.c.b16 %v655, %v654
        %v686 = vpack.c.b16 %v657, %v656
        %v687 = vpack.c.b16 %v659, %v658
        %v688 = vpack.c.b16 %v661, %v660
        %v689 = vpack.c.b16 %v663, %v662
        %v690 = vpack.c.b16 %v665, %v664
        %v691 = vpack.c.b16 %v667, %v666
        %v692 = vpack.c.b16 %v669, %v668
        %v693 = vpack.c.b16 %v671, %v670
        %v694 = vpack.c.b16 %v673, %v672
        %v695 = vpack.c.b16 %v675, %v674
        %v696 = vpack.c.b16 %v677, %v676
        %v697 = vpack.c.b16 %v679, %v678
        %v698 = vpack.c.b16 %v681, %v680
        %v699 = vpack.c.b16 %v683, %v682
        %716 = vmatpush.bf16.msra.mxu0 %v691
        %717 = vmatpush.bf16.msra.mxu0 %v690
        %718 = vmatpush.bf16.msra.mxu0 %v689
        %719 = vmatpush.bf16.msra.mxu0 %v688
        %720 = vmatpush.bf16.msra.mxu0 %v687
        %721 = vmatpush.bf16.msra.mxu0 %v686
        %722 = vmatpush.bf16.msra.mxu0 %v685
        %723 = vmatpush.bf16.msra.mxu0 %v684
        %724 = vmatmul.bf16.gmra.mxu0 %v492
        %v725 = vpop.f32.mrf.mxu0
        %v726 = vadd.f32 %v298, %v725
        %v727 = vpop.f32.mrf.mxu0
        %v728 = vadd.f32 %v298, %v727
        %729 = vmatmul.bf16.gmra.mxu0 %v494
        %v730 = vpop.f32.mrf.mxu0
        %v731 = vadd.f32 %v298, %v730
        %v732 = vpop.f32.mrf.mxu0
        %v733 = vadd.f32 %v298, %v732
        %734 = vmatmul.bf16.gmra.mxu0 %v496
        %v735 = vpop.f32.mrf.mxu0
        %v736 = vadd.f32 %v298, %v735
        %v737 = vpop.f32.mrf.mxu0
        %v738 = vadd.f32 %v298, %v737
        %739 = vmatmul.bf16.gmra.mxu0 %v498
        %v740 = vpop.f32.mrf.mxu0
        %v741 = vadd.f32 %v298, %v740
        %v742 = vpop.f32.mrf.mxu0
        %v743 = vadd.f32 %v298, %v742
        %744 = vmatmul.bf16.gmra.mxu0 %v500
        %v745 = vpop.f32.mrf.mxu0
        %v746 = vadd.f32 %v298, %v745
        %v747 = vpop.f32.mrf.mxu0
        %v748 = vadd.f32 %v298, %v747
        %749 = vmatmul.bf16.gmra.mxu0 %v502
        %v750 = vpop.f32.mrf.mxu0
        %v751 = vadd.f32 %v298, %v750
        %v752 = vpop.f32.mrf.mxu0
        %v753 = vadd.f32 %v298, %v752
        %754 = vmatmul.bf16.gmra.mxu0 %v504
        %v755 = vpop.f32.mrf.mxu0
        %v756 = vadd.f32 %v298, %v755
        %v757 = vpop.f32.mrf.mxu0
        %v758 = vadd.f32 %v298, %v757
        %759 = vmatmul.bf16.gmra.mxu0 %v506
        %v760 = vpop.f32.mrf.mxu0
        %v761 = vadd.f32 %v298, %v760
        %v762 = vpop.f32.mrf.mxu0
        %v763 = vadd.f32 %v298, %v762
        %764 = vmatmul.bf16.gmra.mxu0 %v508
        %v765 = vpop.f32.mrf.mxu0
        %v766 = vadd.f32 %v298, %v765
        %v767 = vpop.f32.mrf.mxu0
        %v768 = vadd.f32 %v298, %v767
        %769 = vmatmul.bf16.gmra.mxu0 %v510
        %v770 = vpop.f32.mrf.mxu0
        %v771 = vadd.f32 %v298, %v770
        %v772 = vpop.f32.mrf.mxu0
        %v773 = vadd.f32 %v298, %v772
        %774 = vmatmul.bf16.gmra.mxu0 %v512
        %v775 = vpop.f32.mrf.mxu0
        %v776 = vadd.f32 %v298, %v775
        %v777 = vpop.f32.mrf.mxu0
        %v778 = vadd.f32 %v298, %v777
        %779 = vmatmul.bf16.gmra.mxu0 %v514
        %v780 = vpop.f32.mrf.mxu0
        %v781 = vadd.f32 %v298, %v780
        %v782 = vpop.f32.mrf.mxu0
        %v783 = vadd.f32 %v298, %v782
        %784 = vmatmul.bf16.gmra.mxu0 %v516
        %v785 = vpop.f32.mrf.mxu0
        %v786 = vadd.f32 %v298, %v785
        %v787 = vpop.f32.mrf.mxu0
        %v788 = vadd.f32 %v298, %v787
        %789 = vmatmul.bf16.gmra.mxu0 %v518
        %v790 = vpop.f32.mrf.mxu0
        %v791 = vadd.f32 %v298, %v790
        %v792 = vpop.f32.mrf.mxu0
        %v793 = vadd.f32 %v298, %v792
        %794 = vmatmul.bf16.gmra.mxu0 %v520
        %v795 = vpop.f32.mrf.mxu0
        %v796 = vadd.f32 %v298, %v795
        %v797 = vpop.f32.mrf.mxu0
        %v798 = vadd.f32 %v298, %v797
        %799 = vmatmul.bf16.gmra.mxu0 %v522
        %v800 = vpop.f32.mrf.mxu0
        %v801 = vadd.f32 %v298, %v800
        %v802 = vpop.f32.mrf.mxu0
        %v803 = vadd.f32 %v298, %v802
        %804 = vmatmul.bf16.gmra.mxu0 %v524
        %v805 = vpop.f32.mrf.mxu0
        %v806 = vadd.f32 %v298, %v805
        %v807 = vpop.f32.mrf.mxu0
        %v808 = vadd.f32 %v298, %v807
        %809 = vmatmul.bf16.gmra.mxu0 %v526
        %v810 = vpop.f32.mrf.mxu0
        %v811 = vadd.f32 %v298, %v810
        %v812 = vpop.f32.mrf.mxu0
        %v813 = vadd.f32 %v298, %v812
        %814 = vmatmul.bf16.gmra.mxu0 %v528
        %v815 = vpop.f32.mrf.mxu0
        %v816 = vadd.f32 %v298, %v815
        %v817 = vpop.f32.mrf.mxu0
        %v818 = vadd.f32 %v298, %v817
        %819 = vmatmul.bf16.gmra.mxu0 %v530
        %v820 = vpop.f32.mrf.mxu0
        %v821 = vadd.f32 %v298, %v820
        %v822 = vpop.f32.mrf.mxu0
        %v823 = vadd.f32 %v298, %v822
        %824 = vmatmul.bf16.gmra.mxu0 %v532
        %v825 = vpop.f32.mrf.mxu0
        %v826 = vadd.f32 %v298, %v825
        %v827 = vpop.f32.mrf.mxu0
        %v828 = vadd.f32 %v298, %v827
        %829 = vmatmul.bf16.gmra.mxu0 %v534
        %v830 = vpop.f32.mrf.mxu0
        %v831 = vadd.f32 %v298, %v830
        %v832 = vpop.f32.mrf.mxu0
        %v833 = vadd.f32 %v298, %v832
        %834 = vmatmul.bf16.gmra.mxu0 %v536
        %v835 = vpop.f32.mrf.mxu0
        %v836 = vadd.f32 %v298, %v835
        %v837 = vpop.f32.mrf.mxu0
        %v838 = vadd.f32 %v298, %v837
        %839 = vmatmul.bf16.gmra.mxu0 %v538
        %v840 = vpop.f32.mrf.mxu0
        %v841 = vadd.f32 %v298, %v840
        %v842 = vpop.f32.mrf.mxu0
        %v843 = vadd.f32 %v298, %v842
        %844 = vmatmul.bf16.gmra.mxu0 %v540
        %v845 = vpop.f32.mrf.mxu0
        %v846 = vadd.f32 %v298, %v845
        %v847 = vpop.f32.mrf.mxu0
        %v848 = vadd.f32 %v298, %v847
        %849 = vmatmul.bf16.gmra.mxu0 %v542
        %v850 = vpop.f32.mrf.mxu0
        %v851 = vadd.f32 %v298, %v850
        %v852 = vpop.f32.mrf.mxu0
        %v853 = vadd.f32 %v298, %v852
        %854 = vmatmul.bf16.gmra.mxu0 %v544
        %v855 = vpop.f32.mrf.mxu0
        %v856 = vadd.f32 %v298, %v855
        %v857 = vpop.f32.mrf.mxu0
        %v858 = vadd.f32 %v298, %v857
        %859 = vmatmul.bf16.gmra.mxu0 %v546
        %v860 = vpop.f32.mrf.mxu0
        %v861 = vadd.f32 %v298, %v860
        %v862 = vpop.f32.mrf.mxu0
        %v863 = vadd.f32 %v298, %v862
        %864 = vmatmul.bf16.gmra.mxu0 %v548
        %v865 = vpop.f32.mrf.mxu0
        %v866 = vadd.f32 %v298, %v865
        %v867 = vpop.f32.mrf.mxu0
        %v868 = vadd.f32 %v298, %v867
        %869 = vmatmul.bf16.gmra.mxu0 %v550
        %v870 = vpop.f32.mrf.mxu0
        %v871 = vadd.f32 %v298, %v870
        %v872 = vpop.f32.mrf.mxu0
        %v873 = vadd.f32 %v298, %v872
        %874 = vmatmul.bf16.gmra.mxu0 %v552
        %v875 = vpop.f32.mrf.mxu0
        %v876 = vadd.f32 %v298, %v875
        %v877 = vpop.f32.mrf.mxu0
        %v878 = vadd.f32 %v298, %v877
        %879 = vmatmul.bf16.gmra.mxu0 %v554
        %v880 = vpop.f32.mrf.mxu0
        %v881 = vadd.f32 %v298, %v880
        %v882 = vpop.f32.mrf.mxu0
        %v883 = vadd.f32 %v298, %v882
        %884 = vdwg.mxu0
        %885 = vmatpush.bf16.msra.mxu0 %v699
        %886 = vmatpush.bf16.msra.mxu0 %v698
        %887 = vmatpush.bf16.msra.mxu0 %v697
        %888 = vmatpush.bf16.msra.mxu0 %v696
        %889 = vmatpush.bf16.msra.mxu0 %v695
        %890 = vmatpush.bf16.msra.mxu0 %v694
        %891 = vmatpush.bf16.msra.mxu0 %v693
        %892 = vmatpush.bf16.msra.mxu0 %v692
        %893 = vmatmul.bf16.gmra.mxu0 %v493
        %v894 = vpop.f32.mrf.mxu0
        %v895 = vadd.f32 %v726, %v894
        %v896 = vpop.f32.mrf.mxu0
        %v897 = vadd.f32 %v728, %v896
        %898 = vmatmul.bf16.gmra.mxu0 %v495
        %v899 = vpop.f32.mrf.mxu0
        %v900 = vadd.f32 %v731, %v899
        %v901 = vpop.f32.mrf.mxu0
        %v902 = vadd.f32 %v733, %v901
        %903 = vmatmul.bf16.gmra.mxu0 %v497
        %v904 = vpop.f32.mrf.mxu0
        %v905 = vadd.f32 %v736, %v904
        %v906 = vpop.f32.mrf.mxu0
        %v907 = vadd.f32 %v738, %v906
        %908 = vmatmul.bf16.gmra.mxu0 %v499
        %v909 = vpop.f32.mrf.mxu0
        %v910 = vadd.f32 %v741, %v909
        %v911 = vpop.f32.mrf.mxu0
        %v912 = vadd.f32 %v743, %v911
        %913 = vmatmul.bf16.gmra.mxu0 %v501
        %v914 = vpop.f32.mrf.mxu0
        %v915 = vadd.f32 %v746, %v914
        %v916 = vpop.f32.mrf.mxu0
        %v917 = vadd.f32 %v748, %v916
        %918 = vmatmul.bf16.gmra.mxu0 %v503
        %v919 = vpop.f32.mrf.mxu0
        %v920 = vadd.f32 %v751, %v919
        %v921 = vpop.f32.mrf.mxu0
        %v922 = vadd.f32 %v753, %v921
        %923 = vmatmul.bf16.gmra.mxu0 %v505
        %v924 = vpop.f32.mrf.mxu0
        %v925 = vadd.f32 %v756, %v924
        %v926 = vpop.f32.mrf.mxu0
        %v927 = vadd.f32 %v758, %v926
        %928 = vmatmul.bf16.gmra.mxu0 %v507
        %v929 = vpop.f32.mrf.mxu0
        %v930 = vadd.f32 %v761, %v929
        %v931 = vpop.f32.mrf.mxu0
        %v932 = vadd.f32 %v763, %v931
        %933 = vmatmul.bf16.gmra.mxu0 %v509
        %v934 = vpop.f32.mrf.mxu0
        %v935 = vadd.f32 %v766, %v934
        %v936 = vpop.f32.mrf.mxu0
        %v937 = vadd.f32 %v768, %v936
        %938 = vmatmul.bf16.gmra.mxu0 %v511
        %v939 = vpop.f32.mrf.mxu0
        %v940 = vadd.f32 %v771, %v939
        %v941 = vpop.f32.mrf.mxu0
        %v942 = vadd.f32 %v773, %v941
        %943 = vmatmul.bf16.gmra.mxu0 %v513
        %v944 = vpop.f32.mrf.mxu0
        %v945 = vadd.f32 %v776, %v944
        %v946 = vpop.f32.mrf.mxu0
        %v947 = vadd.f32 %v778, %v946
        %948 = vmatmul.bf16.gmra.mxu0 %v515
        %v949 = vpop.f32.mrf.mxu0
        %v950 = vadd.f32 %v781, %v949
        %v951 = vpop.f32.mrf.mxu0
        %v952 = vadd.f32 %v783, %v951
        %953 = vmatmul.bf16.gmra.mxu0 %v517
        %v954 = vpop.f32.mrf.mxu0
        %v955 = vadd.f32 %v786, %v954
        %v956 = vpop.f32.mrf.mxu0
        %v957 = vadd.f32 %v788, %v956
        %958 = vmatmul.bf16.gmra.mxu0 %v519
        %v959 = vpop.f32.mrf.mxu0
        %v960 = vadd.f32 %v791, %v959
        %v961 = vpop.f32.mrf.mxu0
        %v962 = vadd.f32 %v793, %v961
        %963 = vmatmul.bf16.gmra.mxu0 %v521
        %v964 = vpop.f32.mrf.mxu0
        %v965 = vadd.f32 %v796, %v964
        %v966 = vpop.f32.mrf.mxu0
        %v967 = vadd.f32 %v798, %v966
        %968 = vmatmul.bf16.gmra.mxu0 %v523
        %v969 = vpop.f32.mrf.mxu0
        %v970 = vadd.f32 %v801, %v969
        %v971 = vpop.f32.mrf.mxu0
        %v972 = vadd.f32 %v803, %v971
        %973 = vmatmul.bf16.gmra.mxu0 %v525
        %v974 = vpop.f32.mrf.mxu0
        %v975 = vadd.f32 %v806, %v974
        %v976 = vpop.f32.mrf.mxu0
        %v977 = vadd.f32 %v808, %v976
        %978 = vmatmul.bf16.gmra.mxu0 %v527
        %v979 = vpop.f32.mrf.mxu0
        %v980 = vadd.f32 %v811, %v979
        %v981 = vpop.f32.mrf.mxu0
        %v982 = vadd.f32 %v813, %v981
        %983 = vmatmul.bf16.gmra.mxu0 %v529
        %v984 = vpop.f32.mrf.mxu0
        %v985 = vadd.f32 %v816, %v984
        %v986 = vpop.f32.mrf.mxu0
        %v987 = vadd.f32 %v818, %v986
        %988 = vmatmul.bf16.gmra.mxu0 %v531
        %v989 = vpop.f32.mrf.mxu0
        %v990 = vadd.f32 %v821, %v989
        %v991 = vpop.f32.mrf.mxu0
        %v992 = vadd.f32 %v823, %v991
        %993 = vmatmul.bf16.gmra.mxu0 %v533
        %v994 = vpop.f32.mrf.mxu0
        %v995 = vadd.f32 %v826, %v994
        %v996 = vpop.f32.mrf.mxu0
        %v997 = vadd.f32 %v828, %v996
        %998 = vmatmul.bf16.gmra.mxu0 %v535
        %v999 = vpop.f32.mrf.mxu0
        %v1000 = vadd.f32 %v831, %v999
        %v1001 = vpop.f32.mrf.mxu0
        %v1002 = vadd.f32 %v833, %v1001
        %1003 = vmatmul.bf16.gmra.mxu0 %v537
        %v1004 = vpop.f32.mrf.mxu0
        %v1005 = vadd.f32 %v836, %v1004
        %v1006 = vpop.f32.mrf.mxu0
        %v1007 = vadd.f32 %v838, %v1006
        %1008 = vmatmul.bf16.gmra.mxu0 %v539
        %v1009 = vpop.f32.mrf.mxu0
        %v1010 = vadd.f32 %v841, %v1009
        %v1011 = vpop.f32.mrf.mxu0
        %v1012 = vadd.f32 %v843, %v1011
        %1013 = vmatmul.bf16.gmra.mxu0 %v541
        %v1014 = vpop.f32.mrf.mxu0
        %v1015 = vadd.f32 %v846, %v1014
        %v1016 = vpop.f32.mrf.mxu0
        %v1017 = vadd.f32 %v848, %v1016
        %1018 = vmatmul.bf16.gmra.mxu0 %v543
        %v1019 = vpop.f32.mrf.mxu0
        %v1020 = vadd.f32 %v851, %v1019
        %v1021 = vpop.f32.mrf.mxu0
        %v1022 = vadd.f32 %v853, %v1021
        %1023 = vmatmul.bf16.gmra.mxu0 %v545
        %v1024 = vpop.f32.mrf.mxu0
        %v1025 = vadd.f32 %v856, %v1024
        %v1026 = vpop.f32.mrf.mxu0
        %v1027 = vadd.f32 %v858, %v1026
        %1028 = vmatmul.bf16.gmra.mxu0 %v547
        %v1029 = vpop.f32.mrf.mxu0
        %v1030 = vadd.f32 %v861, %v1029
        %v1031 = vpop.f32.mrf.mxu0
        %v1032 = vadd.f32 %v863, %v1031
        %1033 = vmatmul.bf16.gmra.mxu0 %v549
        %v1034 = vpop.f32.mrf.mxu0
        %v1035 = vadd.f32 %v866, %v1034
        %v1036 = vpop.f32.mrf.mxu0
        %v1037 = vadd.f32 %v868, %v1036
        %1038 = vmatmul.bf16.gmra.mxu0 %v551
        %v1039 = vpop.f32.mrf.mxu0
        %v1040 = vadd.f32 %v871, %v1039
        %v1041 = vpop.f32.mrf.mxu0
        %v1042 = vadd.f32 %v873, %v1041
        %1043 = vmatmul.bf16.gmra.mxu0 %v553
        %v1044 = vpop.f32.mrf.mxu0
        %v1045 = vadd.f32 %v876, %v1044
        %v1046 = vpop.f32.mrf.mxu0
        %v1047 = vadd.f32 %v878, %v1046
        %1048 = vmatmul.bf16.gmra.mxu0 %v555
        %v1049 = vpop.f32.mrf.mxu0
        %v1050 = vadd.f32 %v881, %v1049
        %v1051 = vpop.f32.mrf.mxu0
        %v1052 = vadd.f32 %v883, %v1051
        %1053 = vdwg.mxu0
        %v1054 = vmax.f32 %v895, 0.0
        %v1055 = vmax.f32 %v897, 0.0
        %v1056 = vmax.f32 %v900, 0.0
        %v1057 = vmax.f32 %v902, 0.0
        %v1058 = vmax.f32 %v905, 0.0
        %v1059 = vmax.f32 %v907, 0.0
        %v1060 = vmax.f32 %v910, 0.0
        %v1061 = vmax.f32 %v912, 0.0
        %v1062 = vmax.f32 %v915, 0.0
        %v1063 = vmax.f32 %v917, 0.0
        %v1064 = vmax.f32 %v920, 0.0
        %v1065 = vmax.f32 %v922, 0.0
        %v1066 = vmax.f32 %v925, 0.0
        %v1067 = vmax.f32 %v927, 0.0
        %v1068 = vmax.f32 %v930, 0.0
        %v1069 = vmax.f32 %v932, 0.0
        %v1070 = vmax.f32 %v935, 0.0
        %v1071 = vmax.f32 %v937, 0.0
        %v1072 = vmax.f32 %v940, 0.0
        %v1073 = vmax.f32 %v942, 0.0
        %v1074 = vmax.f32 %v945, 0.0
        %v1075 = vmax.f32 %v947, 0.0
        %v1076 = vmax.f32 %v950, 0.0
        %v1077 = vmax.f32 %v952, 0.0
        %v1078 = vmax.f32 %v955, 0.0
        %v1079 = vmax.f32 %v957, 0.0
        %v1080 = vmax.f32 %v960, 0.0
        %v1081 = vmax.f32 %v962, 0.0
        %v1082 = vmax.f32 %v965, 0.0
        %v1083 = vmax.f32 %v967, 0.0
        %v1084 = vmax.f32 %v970, 0.0
        %v1085 = vmax.f32 %v972, 0.0
        %v1086 = vmax.f32 %v975, 0.0
        %v1087 = vmax.f32 %v977, 0.0
        %v1088 = vmax.f32 %v980, 0.0
        %v1089 = vmax.f32 %v982, 0.0
        %v1090 = vmax.f32 %v985, 0.0
        %v1091 = vmax.f32 %v987, 0.0
        %v1092 = vmax.f32 %v990, 0.0
        %v1093 = vmax.f32 %v992, 0.0
        %v1094 = vmax.f32 %v995, 0.0
        %v1095 = vmax.f32 %v997, 0.0
        %v1096 = vmax.f32 %v1000, 0.0
        %v1097 = vmax.f32 %v1002, 0.0
        %v1098 = vmax.f32 %v1005, 0.0
        %v1099 = vmax.f32 %v1007, 0.0
        %v1100 = vmax.f32 %v1010, 0.0
        %v1101 = vmax.f32 %v1012, 0.0
        %v1102 = vmax.f32 %v1015, 0.0
        %v1103 = vmax.f32 %v1017, 0.0
        %v1104 = vmax.f32 %v1020, 0.0
        %v1105 = vmax.f32 %v1022, 0.0
        %v1106 = vmax.f32 %v1025, 0.0
        %v1107 = vmax.f32 %v1027, 0.0
        %v1108 = vmax.f32 %v1030, 0.0
        %v1109 = vmax.f32 %v1032, 0.0
        %v1110 = vmax.f32 %v1035, 0.0
        %v1111 = vmax.f32 %v1037, 0.0
        %v1112 = vmax.f32 %v1040, 0.0
        %v1113 = vmax.f32 %v1042, 0.0
        %v1114 = vmax.f32 %v1045, 0.0
        %v1115 = vmax.f32 %v1047, 0.0
        %v1116 = vmax.f32 %v1050, 0.0
        %v1117 = vmax.f32 %v1052, 0.0
        %v1118 = vpack.c.bf16 %v1054, %v1054
        %v1119 = vpack.c.bf16 %v1055, %v1055
        %v1120 = vpack.c.bf16 %v1056, %v1056
        %v1121 = vpack.c.bf16 %v1057, %v1057
        %v1122 = vpack.c.bf16 %v1058, %v1058
        %v1123 = vpack.c.bf16 %v1059, %v1059
        %v1124 = vpack.c.bf16 %v1060, %v1060
        %v1125 = vpack.c.bf16 %v1061, %v1061
        %v1126 = vpack.c.bf16 %v1062, %v1062
        %v1127 = vpack.c.bf16 %v1063, %v1063
        %v1128 = vpack.c.bf16 %v1064, %v1064
        %v1129 = vpack.c.bf16 %v1065, %v1065
        %v1130 = vpack.c.bf16 %v1066, %v1066
        %v1131 = vpack.c.bf16 %v1067, %v1067
        %v1132 = vpack.c.bf16 %v1068, %v1068
        %v1133 = vpack.c.bf16 %v1069, %v1069
        %v1134 = vpack.c.bf16 %v1070, %v1070
        %v1135 = vpack.c.bf16 %v1071, %v1071
        %v1136 = vpack.c.bf16 %v1072, %v1072
        %v1137 = vpack.c.bf16 %v1073, %v1073
        %v1138 = vpack.c.bf16 %v1074, %v1074
        %v1139 = vpack.c.bf16 %v1075, %v1075
        %v1140 = vpack.c.bf16 %v1076, %v1076
        %v1141 = vpack.c.bf16 %v1077, %v1077
        %v1142 = vpack.c.bf16 %v1078, %v1078
        %v1143 = vpack.c.bf16 %v1079, %v1079
        %v1144 = vpack.c.bf16 %v1080, %v1080
        %v1145 = vpack.c.bf16 %v1081, %v1081
        %v1146 = vpack.c.bf16 %v1082, %v1082
        %v1147 = vpack.c.bf16 %v1083, %v1083
        %v1148 = vpack.c.bf16 %v1084, %v1084
        %v1149 = vpack.c.bf16 %v1085, %v1085
        %v1150 = vpack.c.bf16 %v1086, %v1086
        %v1151 = vpack.c.bf16 %v1087, %v1087
        %v1152 = vpack.c.bf16 %v1088, %v1088
        %v1153 = vpack.c.bf16 %v1089, %v1089
        %v1154 = vpack.c.bf16 %v1090, %v1090
        %v1155 = vpack.c.bf16 %v1091, %v1091
        %v1156 = vpack.c.bf16 %v1092, %v1092
        %v1157 = vpack.c.bf16 %v1093, %v1093
        %v1158 = vpack.c.bf16 %v1094, %v1094
        %v1159 = vpack.c.bf16 %v1095, %v1095
        %v1160 = vpack.c.bf16 %v1096, %v1096
        %v1161 = vpack.c.bf16 %v1097, %v1097
        %v1162 = vpack.c.bf16 %v1098, %v1098
        %v1163 = vpack.c.bf16 %v1099, %v1099
        %v1164 = vpack.c.bf16 %v1100, %v1100
        %v1165 = vpack.c.bf16 %v1101, %v1101
        %v1166 = vpack.c.bf16 %v1102, %v1102
        %v1167 = vpack.c.bf16 %v1103, %v1103
        %v1168 = vpack.c.bf16 %v1104, %v1104
        %v1169 = vpack.c.bf16 %v1105, %v1105
        %v1170 = vpack.c.bf16 %v1106, %v1106
        %v1171 = vpack.c.bf16 %v1107, %v1107
        %v1172 = vpack.c.bf16 %v1108, %v1108
        %v1173 = vpack.c.bf16 %v1109, %v1109
        %v1174 = vpack.c.bf16 %v1110, %v1110
        %v1175 = vpack.c.bf16 %v1111, %v1111
        %v1176 = vpack.c.bf16 %v1112, %v1112
        %v1177 = vpack.c.bf16 %v1113, %v1113
        %v1178 = vpack.c.bf16 %v1114, %v1114
        %v1179 = vpack.c.bf16 %v1115, %v1115
        %v1180 = vpack.c.bf16 %v1116, %v1116
        %v1181 = vpack.c.bf16 %v1117, %v1117
        %vm1182 = vcmask 257024
        %1183 = vst.msk [vmem:[%s177] sm:$0xf] %vm1182, %v1118
        %1184 = vst.msk [vmem:[%s177 + $0x4] sm:$0xf] %vm1182, %v1119
        %1185 = vst.msk [vmem:[%s177 + $0x8] sm:$0xf] %vm1182, %v1120
        %1186 = vst.msk [vmem:[%s177 + $0xc] sm:$0xf] %vm1182, %v1121
        %1187 = vst.msk [vmem:[%s177 + $0x10] sm:$0xf] %vm1182, %v1122
        %1188 = vst.msk [vmem:[%s177 + $0x14] sm:$0xf] %vm1182, %v1123
        %1189 = vst.msk [vmem:[%s177 + $0x18] sm:$0xf] %vm1182, %v1124
        %1190 = vst.msk [vmem:[%s177 + $0x1c] sm:$0xf] %vm1182, %v1125
        %1191 = vst.msk [vmem:[%s177 + $0x20] sm:$0xf] %vm1182, %v1126
        %1192 = vst.msk [vmem:[%s177 + $0x24] sm:$0xf] %vm1182, %v1127
        %1193 = vst.msk [vmem:[%s177 + $0x28] sm:$0xf] %vm1182, %v1128
        %1194 = vst.msk [vmem:[%s177 + $0x2c] sm:$0xf] %vm1182, %v1129
        %1195 = vst.msk [vmem:[%s177 + $0x30] sm:$0xf] %vm1182, %v1130
        %1196 = vst.msk [vmem:[%s177 + $0x34] sm:$0xf] %vm1182, %v1131
        %1197 = vst.msk [vmem:[%s177 + $0x38] sm:$0xf] %vm1182, %v1132
        %1198 = vst.msk [vmem:[%s177 + $0x3c] sm:$0xf] %vm1182, %v1133
        %1199 = vst.msk [vmem:[%s177 + $0x40] sm:$0xf] %vm1182, %v1134
        %1200 = vst.msk [vmem:[%s177 + $0x44] sm:$0xf] %vm1182, %v1135
        %1201 = vst.msk [vmem:[%s177 + $0x48] sm:$0xf] %vm1182, %v1136
        %1202 = vst.msk [vmem:[%s177 + $0x4c] sm:$0xf] %vm1182, %v1137
        %1203 = vst.msk [vmem:[%s177 + $0x50] sm:$0xf] %vm1182, %v1138
        %1204 = vst.msk [vmem:[%s177 + $0x54] sm:$0xf] %vm1182, %v1139
        %1205 = vst.msk [vmem:[%s177 + $0x58] sm:$0xf] %vm1182, %v1140
        %1206 = vst.msk [vmem:[%s177 + $0x5c] sm:$0xf] %vm1182, %v1141
        %1207 = vst.msk [vmem:[%s177 + $0x60] sm:$0xf] %vm1182, %v1142
        %1208 = vst.msk [vmem:[%s177 + $0x64] sm:$0xf] %vm1182, %v1143
        %1209 = vst.msk [vmem:[%s177 + $0x68] sm:$0xf] %vm1182, %v1144
        %1210 = vst.msk [vmem:[%s177 + $0x6c] sm:$0xf] %vm1182, %v1145
        %1211 = vst.msk [vmem:[%s177 + $0x70] sm:$0xf] %vm1182, %v1146
        %1212 = vst.msk [vmem:[%s177 + $0x74] sm:$0xf] %vm1182, %v1147
        %1213 = vst.msk [vmem:[%s177 + $0x78] sm:$0xf] %vm1182, %v1148
        %1214 = vst.msk [vmem:[%s177 + $0x7c] sm:$0xf] %vm1182, %v1149
        %1215 = vst.msk [vmem:[%s177 + $0x80] sm:$0xf] %vm1182, %v1150
        %1216 = vst.msk [vmem:[%s177 + $0x84] sm:$0xf] %vm1182, %v1151
        %1217 = vst.msk [vmem:[%s177 + $0x88] sm:$0xf] %vm1182, %v1152
        %1218 = vst.msk [vmem:[%s177 + $0x8c] sm:$0xf] %vm1182, %v1153
        %1219 = vst.msk [vmem:[%s177 + $0x90] sm:$0xf] %vm1182, %v1154
        %1220 = vst.msk [vmem:[%s177 + $0x94] sm:$0xf] %vm1182, %v1155
        %1221 = vst.msk [vmem:[%s177 + $0x98] sm:$0xf] %vm1182, %v1156
        %1222 = vst.msk [vmem:[%s177 + $0x9c] sm:$0xf] %vm1182, %v1157
        %1223 = vst.msk [vmem:[%s177 + $0xa0] sm:$0xf] %vm1182, %v1158
        %1224 = vst.msk [vmem:[%s177 + $0xa4] sm:$0xf] %vm1182, %v1159
        %1225 = vst.msk [vmem:[%s177 + $0xa8] sm:$0xf] %vm1182, %v1160
        %1226 = vst.msk [vmem:[%s177 + $0xac] sm:$0xf] %vm1182, %v1161
        %1227 = vst.msk [vmem:[%s177 + $0xb0] sm:$0xf] %vm1182, %v1162
        %1228 = vst.msk [vmem:[%s177 + $0xb4] sm:$0xf] %vm1182, %v1163
        %1229 = vst.msk [vmem:[%s177 + $0xb8] sm:$0xf] %vm1182, %v1164
        %1230 = vst.msk [vmem:[%s177 + $0xbc] sm:$0xf] %vm1182, %v1165
        %1231 = vst.msk [vmem:[%s177 + $0xc0] sm:$0xf] %vm1182, %v1166
        %1232 = vst.msk [vmem:[%s177 + $0xc4] sm:$0xf] %vm1182, %v1167
        %1233 = vst.msk [vmem:[%s177 + $0xc8] sm:$0xf] %vm1182, %v1168
        %1234 = vst.msk [vmem:[%s177 + $0xcc] sm:$0xf] %vm1182, %v1169
        %1235 = vst.msk [vmem:[%s177 + $0xd0] sm:$0xf] %vm1182, %v1170
        %1236 = vst.msk [vmem:[%s177 + $0xd4] sm:$0xf] %vm1182, %v1171
        %1237 = vst.msk [vmem:[%s177 + $0xd8] sm:$0xf] %vm1182, %v1172
        %1238 = vst.msk [vmem:[%s177 + $0xdc] sm:$0xf] %vm1182, %v1173
        %1239 = vst.msk [vmem:[%s177 + $0xe0] sm:$0xf] %vm1182, %v1174
        %1240 = vst.msk [vmem:[%s177 + $0xe4] sm:$0xf] %vm1182, %v1175
        %1241 = vst.msk [vmem:[%s177 + $0xe8] sm:$0xf] %vm1182, %v1176
        %1242 = vst.msk [vmem:[%s177 + $0xec] sm:$0xf] %vm1182, %v1177
        %1243 = vst.msk [vmem:[%s177 + $0xf0] sm:$0xf] %vm1182, %v1178
        %1244 = vst.msk [vmem:[%s177 + $0xf4] sm:$0xf] %vm1182, %v1179
        %1245 = vst.msk [vmem:[%s177 + $0xf8] sm:$0xf] %vm1182, %v1180
        %1246 = vst.msk [vmem:[%s177 + $0xfc] sm:$0xf] %vm1182, %v1181
        %s1247 = sand.u32 %s90, 1
        %s1248 = sand.u32 %s90, 1
        %s1249 = smul.addr %s1248, 256
        %s1250 = scalar_lea.vmem [#allocation2], %s1249
        // Predicated region
        $region33: #{dqn_forward.4} parent=31 // pred_check
          %p1251 = pneg %p100
        $region34: #{dqn_forward.4} parent=31 // pred_check_branch
          %1253 = sbr.rel (%p1251) target = $region36
        $region35: #{dqn_forward.4} parent=31 // pred_region
          %s1254 = smul.u32 64, %s14
          %s1255 = ssub.s32 100, %s1254
          %p1256 = scmp.lt.s32.totalorder %s1255, 64
          %s1257 = scalar_select %p1256, %s1255, 64
          %s1258 = smul.u32 4, %s1257
          %p1259 = scmp.ne.s32.totalorder 0, %s1258
          %s1260 = smul.addr %s1254, 4
          %s1261 = scalar_lea.vmem %s3, %s1260
          // Predicated region
          $region37: #{dqn_forward.4} parent=35 // pred_check
            %p1262 = pneg %p1259
          $region38: #{dqn_forward.4} parent=35 // pred_check_branch
            %1264 = sbr.rel (%p1262) target = $region40
          $region39: #{dqn_forward.4} parent=35 // pred_region
            // Predicated region
            $region41: #{dqn_forward.4} parent=39 // pred_check
              _
            $region42: #{dqn_forward.4} parent=39 // pred_check_branch
              %1266 = sbr.rel target = $region44
            $region43: #{dqn_forward.4} parent=39 // pred_region
              // Predicated region
              $region63: #{dqn_forward.4} parent=43 // pred_check
                _
              $region64: #{dqn_forward.4} parent=43 // pred_check_branch
                %1378 = sbr.rel (0) target = $region66
              $region65: #{dqn_forward.4} parent=43 // pred_region
                %s1380 = ssub.s32 16, 1
                %s1381 = sshrl.u32 %s1257, 5
                // While loop
                $region67: #{dqn_forward.4} parent=65 // loop_pre_header
                  _
                $region68: #{dqn_forward.4} parent=65 // loop_header
                  %s1383 = sphi 0, %s1385
                  %p1384 = scmp.ge.s32.totalorder %s1383, %s1381
                  %s1388 = sphi 0, %s1457
                  %s1389 = sphi %s1250, %s1460
                  %s1390 = sphi %s1261, %s1461
                $region69: #{dqn_forward.4} parent=65 // loop_header_branch
                  %1387 = sbr.rel (%p1384) target = $region73
                $region70: #{dqn_forward.4} parent=65 // loop_body
                  %v1391 = vld [vmem:[%s1389] sm:%s1380]
                  %1392 = vst [vmem:[%s1390] sm:%s1380] %v1391
                  %v1393 = vld [vmem:[%s1389 + $0x4] sm:%s1380]
                  %1394 = vst [vmem:[%s1390 + $0x4] sm:%s1380] %v1393
                  %v1395 = vld [vmem:[%s1389 + $0x8] sm:%s1380]
                  %1396 = vst [vmem:[%s1390 + $0x8] sm:%s1380] %v1395
                  %v1397 = vld [vmem:[%s1389 + $0xc] sm:%s1380]
                  %1398 = vst [vmem:[%s1390 + $0xc] sm:%s1380] %v1397
                  %v1399 = vld [vmem:[%s1389 + $0x10] sm:%s1380]
                  %1400 = vst [vmem:[%s1390 + $0x10] sm:%s1380] %v1399
                  %v1401 = vld [vmem:[%s1389 + $0x14] sm:%s1380]
                  %1402 = vst [vmem:[%s1390 + $0x14] sm:%s1380] %v1401
                  %v1403 = vld [vmem:[%s1389 + $0x18] sm:%s1380]
                  %1404 = vst [vmem:[%s1390 + $0x18] sm:%s1380] %v1403
                  %v1405 = vld [vmem:[%s1389 + $0x1c] sm:%s1380]
                  %1406 = vst [vmem:[%s1390 + $0x1c] sm:%s1380] %v1405
                  %v1407 = vld [vmem:[%s1389 + $0x20] sm:%s1380]
                  %1408 = vst [vmem:[%s1390 + $0x20] sm:%s1380] %v1407
                  %v1409 = vld [vmem:[%s1389 + $0x24] sm:%s1380]
                  %1410 = vst [vmem:[%s1390 + $0x24] sm:%s1380] %v1409
                  %v1411 = vld [vmem:[%s1389 + $0x28] sm:%s1380]
                  %1412 = vst [vmem:[%s1390 + $0x28] sm:%s1380] %v1411
                  %v1413 = vld [vmem:[%s1389 + $0x2c] sm:%s1380]
                  %1414 = vst [vmem:[%s1390 + $0x2c] sm:%s1380] %v1413
                  %v1415 = vld [vmem:[%s1389 + $0x30] sm:%s1380]
                  %1416 = vst [vmem:[%s1390 + $0x30] sm:%s1380] %v1415
                  %v1417 = vld [vmem:[%s1389 + $0x34] sm:%s1380]
                  %1418 = vst [vmem:[%s1390 + $0x34] sm:%s1380] %v1417
                  %v1419 = vld [vmem:[%s1389 + $0x38] sm:%s1380]
                  %1420 = vst [vmem:[%s1390 + $0x38] sm:%s1380] %v1419
                  %v1421 = vld [vmem:[%s1389 + $0x3c] sm:%s1380]
                  %1422 = vst [vmem:[%s1390 + $0x3c] sm:%s1380] %v1421
                  %v1423 = vld [vmem:[%s1389 + $0x40] sm:%s1380]
                  %1424 = vst [vmem:[%s1390 + $0x40] sm:%s1380] %v1423
                  %v1425 = vld [vmem:[%s1389 + $0x44] sm:%s1380]
                  %1426 = vst [vmem:[%s1390 + $0x44] sm:%s1380] %v1425
                  %v1427 = vld [vmem:[%s1389 + $0x48] sm:%s1380]
                  %1428 = vst [vmem:[%s1390 + $0x48] sm:%s1380] %v1427
                  %v1429 = vld [vmem:[%s1389 + $0x4c] sm:%s1380]
                  %1430 = vst [vmem:[%s1390 + $0x4c] sm:%s1380] %v1429
                  %v1431 = vld [vmem:[%s1389 + $0x50] sm:%s1380]
                  %1432 = vst [vmem:[%s1390 + $0x50] sm:%s1380] %v1431
                  %v1433 = vld [vmem:[%s1389 + $0x54] sm:%s1380]
                  %1434 = vst [vmem:[%s1390 + $0x54] sm:%s1380] %v1433
                  %v1435 = vld [vmem:[%s1389 + $0x58] sm:%s1380]
                  %1436 = vst [vmem:[%s1390 + $0x58] sm:%s1380] %v1435
                  %v1437 = vld [vmem:[%s1389 + $0x5c] sm:%s1380]
                  %1438 = vst [vmem:[%s1390 + $0x5c] sm:%s1380] %v1437
                  %v1439 = vld [vmem:[%s1389 + $0x60] sm:%s1380]
                  %1440 = vst [vmem:[%s1390 + $0x60] sm:%s1380] %v1439
                  %v1441 = vld [vmem:[%s1389 + $0x64] sm:%s1380]
                  %1442 = vst [vmem:[%s1390 + $0x64] sm:%s1380] %v1441
                  %v1443 = vld [vmem:[%s1389 + $0x68] sm:%s1380]
                  %1444 = vst [vmem:[%s1390 + $0x68] sm:%s1380] %v1443
                  %v1445 = vld [vmem:[%s1389 + $0x6c] sm:%s1380]
                  %1446 = vst [vmem:[%s1390 + $0x6c] sm:%s1380] %v1445
                  %v1447 = vld [vmem:[%s1389 + $0x70] sm:%s1380]
                  %1448 = vst [vmem:[%s1390 + $0x70] sm:%s1380] %v1447
                  %v1449 = vld [vmem:[%s1389 + $0x74] sm:%s1380]
                  %1450 = vst [vmem:[%s1390 + $0x74] sm:%s1380] %v1449
                  %v1451 = vld [vmem:[%s1389 + $0x78] sm:%s1380]
                  %1452 = vst [vmem:[%s1390 + $0x78] sm:%s1380] %v1451
                  %v1453 = vld [vmem:[%s1389 + $0x7c] sm:%s1380]
                  %1454 = vst [vmem:[%s1390 + $0x7c] sm:%s1380] %v1453
                  %s1455 = sadd.s32 1, %s1388
                  %p1456 = scmp.ge.s32.totalorder %s1455, %s1381
                  %s1457 = scalar_select %p1456, 0, %s1455
                  %s1458 = smul.u32 %s1457, 128
                  %s1459 = smul.u32 %s1457, 128
                  %s1460 = scalar_lea.vmem %s1250, %s1458 [#allocation2]
                  %s1461 = scalar_lea.vmem %s1261, %s1459
                $region71: #{dqn_forward.4} parent=65 // loop_footer
                  %s1385 = sadd.s32 %s1383, 1
                $region72: #{dqn_forward.4} parent=65 // loop_footer_branch
                  %1382 = sbr.rel target = $region68
                $region73: #{dqn_forward.4} parent=65 // loop_exit
                  _
                %s1462 = sshrl.u32 %s1257, 5
                %s1463 = sand.u32 %s1257, 31
                %s1464 = smul.u32 %s1462, 32
                %s1465 = smul.u32 4, %s1464
                %s1466 = scalar_lea.vmem %s1250, %s1465 [#allocation2]
                %s1467 = smul.u32 4, %s1464
                %s1468 = scalar_lea.vmem %s1261, %s1467
                // While loop
                $region74: #{dqn_forward.4} parent=65 // loop_pre_header
                  _
                $region75: #{dqn_forward.4} parent=65 // loop_header
                  %s1470 = sphi 0, %s1472
                  %p1471 = scmp.ge.s32.totalorder %s1470, %s1463
                  %s1475 = sphi 0, %s1482
                  %s1476 = sphi %s1466, %s1485
                  %s1477 = sphi %s1468, %s1486
                $region76: #{dqn_forward.4} parent=65 // loop_header_branch
                  %1474 = sbr.rel (%p1471) target = $region80
                $region77: #{dqn_forward.4} parent=65 // loop_body
                  %v1478 = vld [vmem:[%s1476] sm:%s1380]
                  %1479 = vst [vmem:[%s1477] sm:%s1380] %v1478
                  %s1480 = sadd.s32 1, %s1475
                  %p1481 = scmp.ge.s32.totalorder %s1480, %s1463
                  %s1482 = scalar_select %p1481, 0, %s1480
                  %s1483 = smul.u32 %s1482, 4
                  %s1484 = smul.u32 %s1482, 4
                  %s1485 = scalar_lea.vmem %s1466, %s1483 [#allocation2]
                  %s1486 = scalar_lea.vmem %s1468, %s1484
                $region78: #{dqn_forward.4} parent=65 // loop_footer
                  %s1472 = sadd.s32 %s1470, 1
                $region79: #{dqn_forward.4} parent=65 // loop_footer_branch
                  %1469 = sbr.rel target = $region75
                $region80: #{dqn_forward.4} parent=65 // loop_exit
                  _
              $region66: #{dqn_forward.4} parent=43 // pred_fallthru
                _
            $region44: #{dqn_forward.4} parent=39 // pred_fallthru
              _
            // Predicated region
            $region45: #{dqn_forward.4} parent=39 // pred_check
              _
            $region46: #{dqn_forward.4} parent=39 // pred_check_branch
              %1268 = sbr.rel (0) target = $region48
            $region47: #{dqn_forward.4} parent=39 // pred_region
              %s1270 = ssub.s32 16, 1
              %s1271 = sshrl.u32 %s1257, 5
              // While loop
              $region49: #{dqn_forward.4} parent=47 // loop_pre_header
                _
              $region50: #{dqn_forward.4} parent=47 // loop_header
                %s1273 = sphi 0, %s1275
                %p1274 = scmp.ge.s32.totalorder %s1273, %s1271
                %s1278 = sphi 0, %s1347
                %s1279 = sphi %s1250, %s1350
                %s1280 = sphi %s1261, %s1351
              $region51: #{dqn_forward.4} parent=47 // loop_header_branch
                %1277 = sbr.rel (%p1274) target = $region55
              $region52: #{dqn_forward.4} parent=47 // loop_body
                %v1281 = vld [vmem:[%s1279] sm:%s1270]
                %1282 = vst [vmem:[%s1280] sm:%s1270] %v1281
                %v1283 = vld [vmem:[%s1279 + $0x4] sm:%s1270]
                %1284 = vst [vmem:[%s1280 + $0x4] sm:%s1270] %v1283
                %v1285 = vld [vmem:[%s1279 + $0x8] sm:%s1270]
                %1286 = vst [vmem:[%s1280 + $0x8] sm:%s1270] %v1285
                %v1287 = vld [vmem:[%s1279 + $0xc] sm:%s1270]
                %1288 = vst [vmem:[%s1280 + $0xc] sm:%s1270] %v1287
                %v1289 = vld [vmem:[%s1279 + $0x10] sm:%s1270]
                %1290 = vst [vmem:[%s1280 + $0x10] sm:%s1270] %v1289
                %v1291 = vld [vmem:[%s1279 + $0x14] sm:%s1270]
                %1292 = vst [vmem:[%s1280 + $0x14] sm:%s1270] %v1291
                %v1293 = vld [vmem:[%s1279 + $0x18] sm:%s1270]
                %1294 = vst [vmem:[%s1280 + $0x18] sm:%s1270] %v1293
                %v1295 = vld [vmem:[%s1279 + $0x1c] sm:%s1270]
                %1296 = vst [vmem:[%s1280 + $0x1c] sm:%s1270] %v1295
                %v1297 = vld [vmem:[%s1279 + $0x20] sm:%s1270]
                %1298 = vst [vmem:[%s1280 + $0x20] sm:%s1270] %v1297
                %v1299 = vld [vmem:[%s1279 + $0x24] sm:%s1270]
                %1300 = vst [vmem:[%s1280 + $0x24] sm:%s1270] %v1299
                %v1301 = vld [vmem:[%s1279 + $0x28] sm:%s1270]
                %1302 = vst [vmem:[%s1280 + $0x28] sm:%s1270] %v1301
                %v1303 = vld [vmem:[%s1279 + $0x2c] sm:%s1270]
                %1304 = vst [vmem:[%s1280 + $0x2c] sm:%s1270] %v1303
                %v1305 = vld [vmem:[%s1279 + $0x30] sm:%s1270]
                %1306 = vst [vmem:[%s1280 + $0x30] sm:%s1270] %v1305
                %v1307 = vld [vmem:[%s1279 + $0x34] sm:%s1270]
                %1308 = vst [vmem:[%s1280 + $0x34] sm:%s1270] %v1307
                %v1309 = vld [vmem:[%s1279 + $0x38] sm:%s1270]
                %1310 = vst [vmem:[%s1280 + $0x38] sm:%s1270] %v1309
                %v1311 = vld [vmem:[%s1279 + $0x3c] sm:%s1270]
                %1312 = vst [vmem:[%s1280 + $0x3c] sm:%s1270] %v1311
                %v1313 = vld [vmem:[%s1279 + $0x40] sm:%s1270]
                %1314 = vst [vmem:[%s1280 + $0x40] sm:%s1270] %v1313
                %v1315 = vld [vmem:[%s1279 + $0x44] sm:%s1270]
                %1316 = vst [vmem:[%s1280 + $0x44] sm:%s1270] %v1315
                %v1317 = vld [vmem:[%s1279 + $0x48] sm:%s1270]
                %1318 = vst [vmem:[%s1280 + $0x48] sm:%s1270] %v1317
                %v1319 = vld [vmem:[%s1279 + $0x4c] sm:%s1270]
                %1320 = vst [vmem:[%s1280 + $0x4c] sm:%s1270] %v1319
                %v1321 = vld [vmem:[%s1279 + $0x50] sm:%s1270]
                %1322 = vst [vmem:[%s1280 + $0x50] sm:%s1270] %v1321
                %v1323 = vld [vmem:[%s1279 + $0x54] sm:%s1270]
                %1324 = vst [vmem:[%s1280 + $0x54] sm:%s1270] %v1323
                %v1325 = vld [vmem:[%s1279 + $0x58] sm:%s1270]
                %1326 = vst [vmem:[%s1280 + $0x58] sm:%s1270] %v1325
                %v1327 = vld [vmem:[%s1279 + $0x5c] sm:%s1270]
                %1328 = vst [vmem:[%s1280 + $0x5c] sm:%s1270] %v1327
                %v1329 = vld [vmem:[%s1279 + $0x60] sm:%s1270]
                %1330 = vst [vmem:[%s1280 + $0x60] sm:%s1270] %v1329
                %v1331 = vld [vmem:[%s1279 + $0x64] sm:%s1270]
                %1332 = vst [vmem:[%s1280 + $0x64] sm:%s1270] %v1331
                %v1333 = vld [vmem:[%s1279 + $0x68] sm:%s1270]
                %1334 = vst [vmem:[%s1280 + $0x68] sm:%s1270] %v1333
                %v1335 = vld [vmem:[%s1279 + $0x6c] sm:%s1270]
                %1336 = vst [vmem:[%s1280 + $0x6c] sm:%s1270] %v1335
                %v1337 = vld [vmem:[%s1279 + $0x70] sm:%s1270]
                %1338 = vst [vmem:[%s1280 + $0x70] sm:%s1270] %v1337
                %v1339 = vld [vmem:[%s1279 + $0x74] sm:%s1270]
                %1340 = vst [vmem:[%s1280 + $0x74] sm:%s1270] %v1339
                %v1341 = vld [vmem:[%s1279 + $0x78] sm:%s1270]
                %1342 = vst [vmem:[%s1280 + $0x78] sm:%s1270] %v1341
                %v1343 = vld [vmem:[%s1279 + $0x7c] sm:%s1270]
                %1344 = vst [vmem:[%s1280 + $0x7c] sm:%s1270] %v1343
                %s1345 = sadd.s32 1, %s1278
                %p1346 = scmp.ge.s32.totalorder %s1345, %s1271
                %s1347 = scalar_select %p1346, 0, %s1345
                %s1348 = smul.u32 %s1347, 128
                %s1349 = smul.u32 %s1347, 128
                %s1350 = scalar_lea.vmem %s1250, %s1348 [#allocation2]
                %s1351 = scalar_lea.vmem %s1261, %s1349
              $region53: #{dqn_forward.4} parent=47 // loop_footer
                %s1275 = sadd.s32 %s1273, 1
              $region54: #{dqn_forward.4} parent=47 // loop_footer_branch
                %1272 = sbr.rel target = $region50
              $region55: #{dqn_forward.4} parent=47 // loop_exit
                _
              %s1352 = sshrl.u32 %s1257, 5
              %s1353 = sand.u32 %s1257, 31
              %s1354 = smul.u32 %s1352, 32
              %s1355 = smul.u32 4, %s1354
              %s1356 = scalar_lea.vmem %s1250, %s1355 [#allocation2]
              %s1357 = smul.u32 4, %s1354
              %s1358 = scalar_lea.vmem %s1261, %s1357
              // While loop
              $region56: #{dqn_forward.4} parent=47 // loop_pre_header
                _
              $region57: #{dqn_forward.4} parent=47 // loop_header
                %s1360 = sphi 0, %s1362
                %p1361 = scmp.ge.s32.totalorder %s1360, %s1353
                %s1365 = sphi 0, %s1372
                %s1366 = sphi %s1356, %s1375
                %s1367 = sphi %s1358, %s1376
              $region58: #{dqn_forward.4} parent=47 // loop_header_branch
                %1364 = sbr.rel (%p1361) target = $region62
              $region59: #{dqn_forward.4} parent=47 // loop_body
                %v1368 = vld [vmem:[%s1366] sm:%s1270]
                %1369 = vst [vmem:[%s1367] sm:%s1270] %v1368
                %s1370 = sadd.s32 1, %s1365
                %p1371 = scmp.ge.s32.totalorder %s1370, %s1353
                %s1372 = scalar_select %p1371, 0, %s1370
                %s1373 = smul.u32 %s1372, 4
                %s1374 = smul.u32 %s1372, 4
                %s1375 = scalar_lea.vmem %s1356, %s1373 [#allocation2]
                %s1376 = scalar_lea.vmem %s1358, %s1374
              $region60: #{dqn_forward.4} parent=47 // loop_footer
                %s1362 = sadd.s32 %s1360, 1
              $region61: #{dqn_forward.4} parent=47 // loop_footer_branch
                %1359 = sbr.rel target = $region57
              $region62: #{dqn_forward.4} parent=47 // loop_exit
                _
            $region48: #{dqn_forward.4} parent=39 // pred_fallthru
              _
          $region40: #{dqn_forward.4} parent=35 // pred_fallthru
            _
          %1487 = vnop
        $region36: #{dqn_forward.4} parent=31 // pred_fallthru
          _
      $region32: #{dqn_forward.4} parent=5 // pred_fallthru
        _
      %p1488 = scmp.le.s32.totalorder 2, %s9
      // Predicated region
      $region81: #{dqn_forward.4} parent=5 // pred_check
        %p1489 = pneg %p1488
      $region82: #{dqn_forward.4} parent=5 // pred_check_branch
        %1491 = sbr.rel (%p1489) target = $region84
      $region83: #{dqn_forward.4} parent=5 // pred_region
        %s1492 = ssub.s32 %s9, 2
        // Predicated region
        $region85: #{dqn_forward.4} parent=83 // pred_check
          %p1493 = pneg %p106
        $region86: #{dqn_forward.4} parent=83 // pred_check_branch
          %1495 = sbr.rel (%p1493) target = $region88
        $region87: #{dqn_forward.4} parent=83 // pred_region
          %s1496 = sand.u32 %s91, 1
          %s1497 = sand.u32 %s91, 1
          %s1498 = smul.addr %s1497, 256
          %s1499 = scalar_lea.vmem [#allocation2], %s1498
        $region88: #{dqn_forward.4} parent=83 // pred_fallthru
          _
      $region84: #{dqn_forward.4} parent=5 // pred_fallthru
        _
    $region6: #{dqn_forward.4} parent=1 // loop_footer
      %s13 = sadd.s32 1, %s9
    $region7: #{dqn_forward.4} parent=1 // loop_footer_branch
      %8 = sbr.rel target = $region3
    $region8: #{dqn_forward.4} parent=1 // loop_exit
      _

// kernel: dqn_forward.5
$region0: #{dqn_forward.5}
  #allocation0 [shape = 'u32[]', space=smem, size = 0x4, offset = 0x4, fixed_abs, tag = 'smem constant byte address 0x4 - core index']
  #allocation1 [shape = 'u32[72,128]{1,0:T(1,128)}', space=vmem, size = 0x9000, scoped, tag = 'internal scratch']
  %s0 = inlined_call_operand.vmem [shape: bf16[162,512], index: 0, kind: input, shape index: {}]
  %s1 = inlined_call_operand.vmem [shape: bf16[512,64], index: 1, kind: input, shape index: {}]
  %s2 = inlined_call_operand.vmem [shape: f32[1,64], index: 2, kind: input, shape index: {}]
  %s3 = inlined_call_operand.vmem [shape: bf16[162,64], index: 3, kind: output, shape index: {}]
  %s4 = sld [smem:[#allocation0]]
  $region59: #{dqn_forward.5} parent=0
    _
  %s6 = ssub.s32 1, %s4
  %s7 = scalar_select 0, %s6, %s4
  $region1: #{dqn_forward.5} parent=0
    #allocation2 [shape = 'u8[45056]{0}', space=vmem, size = 0xb000, scoped, tag = 'output window, operand 0, single buffered']
    // Predicated region
    $region2: #{dqn_forward.5} parent=1 // pred_check
      _
    $region3: #{dqn_forward.5} parent=1 // pred_check_branch
      %9 = sbr.rel (0) target = $region5
    $region4: #{dqn_forward.5} parent=1 // pred_region
      _
    $region5: #{dqn_forward.5} parent=1 // pred_fallthru
      _
    // Predicated region
    $region6: #{dqn_forward.5} parent=1 // pred_check
      _
    $region7: #{dqn_forward.5} parent=1 // pred_check_branch
      %11 = sbr.rel (0) target = $region9
    $region8: #{dqn_forward.5} parent=1 // pred_region
      _
    $region9: #{dqn_forward.5} parent=1 // pred_fallthru
      _
    // Predicated region
    $region10: #{dqn_forward.5} parent=1 // pred_check
      _
    $region11: #{dqn_forward.5} parent=1 // pred_check_branch
      %13 = sbr.rel (0) target = $region13
    $region12: #{dqn_forward.5} parent=1 // pred_region
      _
    $region13: #{dqn_forward.5} parent=1 // pred_fallthru
      _
    %v14 = vld [vmem:[%s0] sm:$0xff]
    %v15 = vld [vmem:[%s0 + $0x8] sm:$0xff]
    %v16 = vld [vmem:[%s0 + $0x10] sm:$0xff]
    %v17 = vld [vmem:[%s0 + $0x18] sm:$0xff]
    %v18 = vld [vmem:[%s0 + $0x20] sm:$0xff]
    %v19 = vld [vmem:[%s0 + $0x28] sm:$0xff]
    %v20 = vld [vmem:[%s0 + $0x30] sm:$0xff]
    %v21 = vld [vmem:[%s0 + $0x38] sm:$0xff]
    %v22 = vld [vmem:[%s0 + $0x40] sm:$0xff]
    %v23 = vld [vmem:[%s0 + $0x48] sm:$0xff]
    %v24 = vld [vmem:[%s0 + $0x50] sm:$0xff]
    %v25 = vld [vmem:[%s0 + $0x58] sm:$0xff]
    %v26 = vld [vmem:[%s0 + $0x60] sm:$0xff]
    %v27 = vld [vmem:[%s0 + $0x68] sm:$0xff]
    %v28 = vld [vmem:[%s0 + $0x70] sm:$0xff]
    %v29 = vld [vmem:[%s0 + $0x78] sm:$0xff]
    %v30 = vld [vmem:[%s0 + $0x80] sm:$0xff]
    %v31 = vld [vmem:[%s0 + $0x88] sm:$0xff]
    %v32 = vld [vmem:[%s0 + $0x90] sm:$0xff]
    %v33 = vld [vmem:[%s0 + $0x98] sm:$0xff]
    %v34 = vld [vmem:[%s0 + $0xa0] sm:$0xff]
    %v35 = vld [vmem:[%s0 + $0xa8] sm:$0xff]
    %v36 = vld [vmem:[%s0 + $0xb0] sm:$0xff]
    %v37 = vld [vmem:[%s0 + $0xb8] sm:$0xff]
    %v38 = vld [vmem:[%s0 + $0xc0] sm:$0xff]
    %v39 = vld [vmem:[%s0 + $0xc8] sm:$0xff]
    %v40 = vld [vmem:[%s0 + $0xd0] sm:$0xff]
    %v41 = vld [vmem:[%s0 + $0xd8] sm:$0xff]
    %v42 = vld [vmem:[%s0 + $0xe0] sm:$0xff]
    %v43 = vld [vmem:[%s0 + $0xe8] sm:$0xff]
    %v44 = vld [vmem:[%s0 + $0xf0] sm:$0xff]
    %v45 = vld [vmem:[%s0 + $0xf8] sm:$0xff]
    %v46 = vld [vmem:[%s0 + $0x100] sm:$0xff]
    %v47 = vld [vmem:[%s0 + $0x108] sm:$0xff]
    %v48 = vld [vmem:[%s0 + $0x110] sm:$0xff]
    %v49 = vld [vmem:[%s0 + $0x118] sm:$0xff]
    %v50 = vld [vmem:[%s0 + $0x120] sm:$0xff]
    %v51 = vld [vmem:[%s0 + $0x128] sm:$0xff]
    %v52 = vld [vmem:[%s0 + $0x130] sm:$0xff]
    %v53 = vld [vmem:[%s0 + $0x138] sm:$0xff]
    %v54 = vld [vmem:[%s0 + $0x140] sm:$0xff]
    %v55 = vld [vmem:[%s0 + $0x148] sm:$0xff]
    %v56 = vld [vmem:[%s0 + $0x150] sm:$0xff]
    %v57 = vld [vmem:[%s0 + $0x158] sm:$0xff]
    %v58 = vld [vmem:[%s1] sm:$0xf]
    %v59 = vld [vmem:[%s1 + $0x4] sm:$0xf]
    %v60 = vld [vmem:[%s1 + $0x8] sm:$0xf]
    %v61 = vld [vmem:[%s1 + $0xc] sm:$0xf]
    %v62 = vld [vmem:[%s1 + $0x10] sm:$0xf]
    %v63 = vld [vmem:[%s1 + $0x14] sm:$0xf]
    %v64 = vld [vmem:[%s1 + $0x18] sm:$0xf]
    %v65 = vld [vmem:[%s1 + $0x1c] sm:$0xf]
    %v66 = vld [vmem:[%s1 + $0x20] sm:$0xf]
    %v67 = vld [vmem:[%s1 + $0x24] sm:$0xf]
    %v68 = vld [vmem:[%s1 + $0x28] sm:$0xf]
    %v69 = vld [vmem:[%s1 + $0x2c] sm:$0xf]
    %v70 = vld [vmem:[%s1 + $0x30] sm:$0xf]
    %v71 = vld [vmem:[%s1 + $0x34] sm:$0xf]
    %v72 = vld [vmem:[%s1 + $0x38] sm:$0xf]
    %v73 = vld [vmem:[%s1 + $0x3c] sm:$0xf]
    %v74 = vld [vmem:[%s1 + $0x40] sm:$0xf]
    %v75 = vld [vmem:[%s1 + $0x44] sm:$0xf]
    %v76 = vld [vmem:[%s1 + $0x48] sm:$0xf]
    %v77 = vld [vmem:[%s1 + $0x4c] sm:$0xf]
    %v78 = vld [vmem:[%s1 + $0x50] sm:$0xf]
    %v79 = vld [vmem:[%s1 + $0x54] sm:$0xf]
    %v80 = vld [vmem:[%s1 + $0x58] sm:$0xf]
    %v81 = vld [vmem:[%s1 + $0x5c] sm:$0xf]
    %v82 = vld [vmem:[%s1 + $0x60] sm:$0xf]
    %v83 = vld [vmem:[%s1 + $0x64] sm:$0xf]
    %v84 = vld [vmem:[%s1 + $0x68] sm:$0xf]
    %v85 = vld [vmem:[%s1 + $0x6c] sm:$0xf]
    %v86 = vld [vmem:[%s1 + $0x70] sm:$0xf]
    %v87 = vld [vmem:[%s1 + $0x74] sm:$0xf]
    %v88 = vld [vmem:[%s1 + $0x78] sm:$0xf]
    %v89 = vld [vmem:[%s1 + $0x7c] sm:$0xf]
    %v90 = vld [vmem:[%s1 + $0x80] sm:$0xf]
    %v91 = vld [vmem:[%s1 + $0x84] sm:$0xf]
    %v92 = vld [vmem:[%s1 + $0x88] sm:$0xf]
    %v93 = vld [vmem:[%s1 + $0x8c] sm:$0xf]
    %v94 = vld [vmem:[%s1 + $0x90] sm:$0xf]
    %v95 = vld [vmem:[%s1 + $0x94] sm:$0xf]
    %v96 = vld [vmem:[%s1 + $0x98] sm:$0xf]
    %v97 = vld [vmem:[%s1 + $0x9c] sm:$0xf]
    %v98 = vld [vmem:[%s1 + $0xa0] sm:$0xf]
    %v99 = vld [vmem:[%s1 + $0xa4] sm:$0xf]
    %v100 = vld [vmem:[%s1 + $0xa8] sm:$0xf]
    %v101 = vld [vmem:[%s1 + $0xac] sm:$0xf]
    %v102 = vld [vmem:[%s1 + $0xb0] sm:$0xf]
    %v103 = vld [vmem:[%s1 + $0xb4] sm:$0xf]
    %v104 = vld [vmem:[%s1 + $0xb8] sm:$0xf]
    %v105 = vld [vmem:[%s1 + $0xbc] sm:$0xf]
    %v106 = vld [vmem:[%s1 + $0xc0] sm:$0xf]
    %v107 = vld [vmem:[%s1 + $0xc4] sm:$0xf]
    %v108 = vld [vmem:[%s1 + $0xc8] sm:$0xf]
    %v109 = vld [vmem:[%s1 + $0xcc] sm:$0xf]
    %v110 = vld [vmem:[%s1 + $0xd0] sm:$0xf]
    %v111 = vld [vmem:[%s1 + $0xd4] sm:$0xf]
    %v112 = vld [vmem:[%s1 + $0xd8] sm:$0xf]
    %v113 = vld [vmem:[%s1 + $0xdc] sm:$0xf]
    %v114 = vld [vmem:[%s1 + $0xe0] sm:$0xf]
    %v115 = vld [vmem:[%s1 + $0xe4] sm:$0xf]
    %v116 = vld [vmem:[%s1 + $0xe8] sm:$0xf]
    %v117 = vld [vmem:[%s1 + $0xec] sm:$0xf]
    %v118 = vld [vmem:[%s1 + $0xf0] sm:$0xf]
    %v119 = vld [vmem:[%s1 + $0xf4] sm:$0xf]
    %v120 = vld [vmem:[%s1 + $0xf8] sm:$0xf]
    %v121 = vld [vmem:[%s1 + $0xfc] sm:$0xf]
    %v122 = vld [vmem:[%s2] sm:$0x1]
    %v124 = vperm.slane %v122, 0
    %v170 = vunpack.c.l.b16 %v14
    %v171 = vunpack.c.h.b16 %v14
    %v172 = vunpack.c.l.b16 %v15
    %v173 = vunpack.c.h.b16 %v15
    %v174 = vunpack.c.l.b16 %v16
    %v175 = vunpack.c.h.b16 %v16
    %v176 = vunpack.c.l.b16 %v17
    %v177 = vunpack.c.h.b16 %v17
    %v178 = vunpack.c.l.b16 %v18
    %v179 = vunpack.c.h.b16 %v18
    %v180 = vunpack.c.l.b16 %v19
    %v181 = vunpack.c.h.b16 %v19
    %v182 = vunpack.c.l.b16 %v20
    %v183 = vunpack.c.h.b16 %v20
    %v184 = vunpack.c.l.b16 %v21
    %v185 = vunpack.c.h.b16 %v21
    %v186 = vunpack.c.l.b16 %v22
    %v187 = vunpack.c.h.b16 %v22
    %v188 = vunpack.c.l.b16 %v23
    %v189 = vunpack.c.h.b16 %v23
    %v190 = vunpack.c.l.b16 %v24
    %v191 = vunpack.c.h.b16 %v24
    %v192 = vunpack.c.l.b16 %v25
    %v193 = vunpack.c.h.b16 %v25
    %v194 = vunpack.c.l.b16 %v26
    %v195 = vunpack.c.h.b16 %v26
    %v196 = vunpack.c.l.b16 %v27
    %v197 = vunpack.c.h.b16 %v27
    %v198 = vunpack.c.l.b16 %v28
    %v199 = vunpack.c.h.b16 %v28
    %v200 = vunpack.c.l.b16 %v29
    %v201 = vunpack.c.h.b16 %v29
    %v202 = vunpack.c.l.b16 %v30
    %v203 = vunpack.c.h.b16 %v30
    %v204 = vunpack.c.l.b16 %v31
    %v205 = vunpack.c.h.b16 %v31
    %v206 = vunpack.c.l.b16 %v32
    %v207 = vunpack.c.h.b16 %v32
    %v208 = vunpack.c.l.b16 %v33
    %v209 = vunpack.c.h.b16 %v33
    %v210 = vunpack.c.l.b16 %v34
    %v211 = vunpack.c.h.b16 %v34
    %v212 = vunpack.c.l.b16 %v35
    %v213 = vunpack.c.h.b16 %v35
    %v214 = vunpack.c.l.b16 %v36
    %v215 = vunpack.c.h.b16 %v36
    %v216 = vunpack.c.l.b16 %v37
    %v217 = vunpack.c.h.b16 %v37
    %v218 = vunpack.c.l.b16 %v38
    %v219 = vunpack.c.h.b16 %v38
    %v220 = vunpack.c.l.b16 %v39
    %v221 = vunpack.c.h.b16 %v39
    %v222 = vunpack.c.l.b16 %v40
    %v223 = vunpack.c.h.b16 %v40
    %v224 = vunpack.c.l.b16 %v41
    %v225 = vunpack.c.h.b16 %v41
    %v226 = vunpack.c.l.b16 %v42
    %v227 = vunpack.c.h.b16 %v42
    %v228 = vunpack.c.l.b16 %v43
    %v229 = vunpack.c.h.b16 %v43
    %v230 = vunpack.c.l.b16 %v44
    %v231 = vunpack.c.h.b16 %v44
    %v232 = vunpack.c.l.b16 %v45
    %v233 = vunpack.c.h.b16 %v45
    %v234 = vunpack.c.l.b16 %v46
    %v235 = vunpack.c.h.b16 %v46
    %v236 = vunpack.c.l.b16 %v47
    %v237 = vunpack.c.h.b16 %v47
    %v238 = vunpack.c.l.b16 %v48
    %v239 = vunpack.c.h.b16 %v48
    %v240 = vunpack.c.l.b16 %v49
    %v241 = vunpack.c.h.b16 %v49
    %v242 = vunpack.c.l.b16 %v50
    %v243 = vunpack.c.h.b16 %v50
    %v244 = vunpack.c.l.b16 %v51
    %v245 = vunpack.c.h.b16 %v51
    %v246 = vunpack.c.l.b16 %v52
    %v247 = vunpack.c.h.b16 %v52
    %v248 = vunpack.c.l.b16 %v53
    %v249 = vunpack.c.h.b16 %v53
    %v250 = vunpack.c.l.b16 %v54
    %v251 = vunpack.c.h.b16 %v54
    %v252 = vunpack.c.l.b16 %v55
    %v253 = vunpack.c.h.b16 %v55
    %v254 = vunpack.c.l.b16 %v56
    %v255 = vunpack.c.h.b16 %v56
    %v256 = vunpack.c.l.b16 %v57
    %v257 = vunpack.c.h.b16 %v57
    %v258 = vpack.c.b16 %v174, %v170
    %v259 = vpack.c.b16 %v175, %v171
    %v260 = vpack.c.b16 %v176, %v172
    %v261 = vpack.c.b16 %v177, %v173
    %v262 = vpack.c.b16 %v182, %v178
    %v263 = vpack.c.b16 %v183, %v179
    %v264 = vpack.c.b16 %v184, %v180
    %v265 = vpack.c.b16 %v185, %v181
    %v266 = vpack.c.b16 %v190, %v186
    %v267 = vpack.c.b16 %v191, %v187
    %v268 = vpack.c.b16 %v192, %v188
    %v269 = vpack.c.b16 %v193, %v189
    %v270 = vpack.c.b16 %v198, %v194
    %v271 = vpack.c.b16 %v199, %v195
    %v272 = vpack.c.b16 %v200, %v196
    %v273 = vpack.c.b16 %v201, %v197
    %v274 = vpack.c.b16 %v206, %v202
    %v275 = vpack.c.b16 %v207, %v203
    %v276 = vpack.c.b16 %v208, %v204
    %v277 = vpack.c.b16 %v209, %v205
    %v278 = vpack.c.b16 %v214, %v210
    %v279 = vpack.c.b16 %v215, %v211
    %v280 = vpack.c.b16 %v216, %v212
    %v281 = vpack.c.b16 %v217, %v213
    %v282 = vpack.c.b16 %v222, %v218
    %v283 = vpack.c.b16 %v223, %v219
    %v284 = vpack.c.b16 %v224, %v220
    %v285 = vpack.c.b16 %v225, %v221
    %v286 = vpack.c.b16 %v230, %v226
    %v287 = vpack.c.b16 %v231, %v227
    %v288 = vpack.c.b16 %v232, %v228
    %v289 = vpack.c.b16 %v233, %v229
    %v290 = vpack.c.b16 %v238, %v234
    %v291 = vpack.c.b16 %v239, %v235
    %v292 = vpack.c.b16 %v240, %v236
    %v293 = vpack.c.b16 %v241, %v237
    %v294 = vpack.c.b16 %v246, %v242
    %v295 = vpack.c.b16 %v247, %v243
    %v296 = vpack.c.b16 %v248, %v244
    %v297 = vpack.c.b16 %v249, %v245
    %v298 = vpack.c.b16 %v254, %v250
    %v299 = vpack.c.b16 %v255, %v251
    %v300 = vpack.c.b16 %v256, %v252
    %v301 = vpack.c.b16 %v257, %v253
    %v410 = vunpack.c.l.b16 %v58
    %v411 = vunpack.c.l.b16 %v59
    %v412 = vunpack.c.l.b16 %v60
    %v413 = vunpack.c.l.b16 %v61
    %v414 = vunpack.c.l.b16 %v62
    %v415 = vunpack.c.l.b16 %v63
    %v416 = vunpack.c.l.b16 %v64
    %v417 = vunpack.c.l.b16 %v65
    %v418 = vunpack.c.l.b16 %v66
    %v419 = vunpack.c.l.b16 %v67
    %v420 = vunpack.c.l.b16 %v68
    %v421 = vunpack.c.l.b16 %v69
    %v422 = vunpack.c.l.b16 %v70
    %v423 = vunpack.c.l.b16 %v71
    %v424 = vunpack.c.l.b16 %v72
    %v425 = vunpack.c.l.b16 %v73
    %v426 = vunpack.c.l.b16 %v74
    %v427 = vunpack.c.l.b16 %v75
    %v428 = vunpack.c.l.b16 %v76
    %v429 = vunpack.c.l.b16 %v77
    %v430 = vunpack.c.l.b16 %v78
    %v431 = vunpack.c.l.b16 %v79
    %v432 = vunpack.c.l.b16 %v80
    %v433 = vunpack.c.l.b16 %v81
    %v434 = vunpack.c.l.b16 %v82
    %v435 = vunpack.c.l.b16 %v83
    %v436 = vunpack.c.l.b16 %v84
    %v437 = vunpack.c.l.b16 %v85
    %v438 = vunpack.c.l.b16 %v86
    %v439 = vunpack.c.l.b16 %v87
    %v440 = vunpack.c.l.b16 %v88
    %v441 = vunpack.c.l.b16 %v89
    %v442 = vunpack.c.l.b16 %v90
    %v443 = vunpack.c.l.b16 %v91
    %v444 = vunpack.c.l.b16 %v92
    %v445 = vunpack.c.l.b16 %v93
    %v446 = vunpack.c.l.b16 %v94
    %v447 = vunpack.c.l.b16 %v95
    %v448 = vunpack.c.l.b16 %v96
    %v449 = vunpack.c.l.b16 %v97
    %v450 = vunpack.c.l.b16 %v98
    %v451 = vunpack.c.l.b16 %v99
    %v452 = vunpack.c.l.b16 %v100
    %v453 = vunpack.c.l.b16 %v101
    %v454 = vunpack.c.l.b16 %v102
    %v455 = vunpack.c.l.b16 %v103
    %v456 = vunpack.c.l.b16 %v104
    %v457 = vunpack.c.l.b16 %v105
    %v458 = vunpack.c.l.b16 %v106
    %v459 = vunpack.c.l.b16 %v107
    %v460 = vunpack.c.l.b16 %v108
    %v461 = vunpack.c.l.b16 %v109
    %v462 = vunpack.c.l.b16 %v110
    %v463 = vunpack.c.l.b16 %v111
    %v464 = vunpack.c.l.b16 %v112
    %v465 = vunpack.c.l.b16 %v113
    %v466 = vunpack.c.l.b16 %v114
    %v467 = vunpack.c.l.b16 %v115
    %v468 = vunpack.c.l.b16 %v116
    %v469 = vunpack.c.l.b16 %v117
    %v470 = vunpack.c.l.b16 %v118
    %v471 = vunpack.c.l.b16 %v119
    %v472 = vunpack.c.l.b16 %v120
    %v473 = vunpack.c.l.b16 %v121
    %v474 = vpack.c.b16 %v411, %v410
    %v475 = vpack.c.b16 %v413, %v412
    %v476 = vpack.c.b16 %v415, %v414
    %v477 = vpack.c.b16 %v417, %v416
    %v478 = vpack.c.b16 %v419, %v418
    %v479 = vpack.c.b16 %v421, %v420
    %v480 = vpack.c.b16 %v423, %v422
    %v481 = vpack.c.b16 %v425, %v424
    %v482 = vpack.c.b16 %v427, %v426
    %v483 = vpack.c.b16 %v429, %v428
    %v484 = vpack.c.b16 %v431, %v430
    %v485 = vpack.c.b16 %v433, %v432
    %v486 = vpack.c.b16 %v435, %v434
    %v487 = vpack.c.b16 %v437, %v436
    %v488 = vpack.c.b16 %v439, %v438
    %v489 = vpack.c.b16 %v441, %v440
    %v490 = vpack.c.b16 %v443, %v442
    %v491 = vpack.c.b16 %v445, %v444
    %v492 = vpack.c.b16 %v447, %v446
    %v493 = vpack.c.b16 %v449, %v448
    %v494 = vpack.c.b16 %v451, %v450
    %v495 = vpack.c.b16 %v453, %v452
    %v496 = vpack.c.b16 %v455, %v454
    %v497 = vpack.c.b16 %v457, %v456
    %v498 = vpack.c.b16 %v459, %v458
    %v499 = vpack.c.b16 %v461, %v460
    %v500 = vpack.c.b16 %v463, %v462
    %v501 = vpack.c.b16 %v465, %v464
    %v502 = vpack.c.b16 %v467, %v466
    %v503 = vpack.c.b16 %v469, %v468
    %v504 = vpack.c.b16 %v471, %v470
    %v505 = vpack.c.b16 %v473, %v472
    %538 = vmatpush.bf16.msra.mxu0 %v481
    %539 = vmatpush.bf16.msra.mxu0 %v480
    %540 = vmatpush.bf16.msra.mxu0 %v479
    %541 = vmatpush.bf16.msra.mxu0 %v478
    %542 = vmatpush.bf16.msra.mxu0 %v477
    %543 = vmatpush.bf16.msra.mxu0 %v476
    %544 = vmatpush.bf16.msra.mxu0 %v475
    %545 = vmatpush.bf16.msra.mxu0 %v474
    %546 = vmatmul.bf16.gmra.mxu0 %v258
    %v547 = vpop.f32.mrf.mxu0
    %v548 = vadd.f32 %v124, %v547
    %v549 = vpop.f32.mrf.mxu0
    %v550 = vadd.f32 %v124, %v549
    %551 = vmatmul.bf16.gmra.mxu0 %v262
    %v552 = vpop.f32.mrf.mxu0
    %v553 = vadd.f32 %v124, %v552
    %v554 = vpop.f32.mrf.mxu0
    %v555 = vadd.f32 %v124, %v554
    %556 = vmatmul.bf16.gmra.mxu0 %v266
    %v557 = vpop.f32.mrf.mxu0
    %v558 = vadd.f32 %v124, %v557
    %v559 = vpop.f32.mrf.mxu0
    %v560 = vadd.f32 %v124, %v559
    %561 = vmatmul.bf16.gmra.mxu0 %v270
    %v562 = vpop.f32.mrf.mxu0
    %v563 = vadd.f32 %v124, %v562
    %v564 = vpop.f32.mrf.mxu0
    %v565 = vadd.f32 %v124, %v564
    %566 = vmatmul.bf16.gmra.mxu0 %v274
    %v567 = vpop.f32.mrf.mxu0
    %v568 = vadd.f32 %v124, %v567
    %v569 = vpop.f32.mrf.mxu0
    %v570 = vadd.f32 %v124, %v569
    %571 = vmatmul.bf16.gmra.mxu0 %v278
    %v572 = vpop.f32.mrf.mxu0
    %v573 = vadd.f32 %v124, %v572
    %v574 = vpop.f32.mrf.mxu0
    %v575 = vadd.f32 %v124, %v574
    %576 = vmatmul.bf16.gmra.mxu0 %v282
    %v577 = vpop.f32.mrf.mxu0
    %v578 = vadd.f32 %v124, %v577
    %v579 = vpop.f32.mrf.mxu0
    %v580 = vadd.f32 %v124, %v579
    %581 = vmatmul.bf16.gmra.mxu0 %v286
    %v582 = vpop.f32.mrf.mxu0
    %v583 = vadd.f32 %v124, %v582
    %v584 = vpop.f32.mrf.mxu0
    %v585 = vadd.f32 %v124, %v584
    %586 = vmatmul.bf16.gmra.mxu0 %v290
    %v587 = vpop.f32.mrf.mxu0
    %v588 = vadd.f32 %v124, %v587
    %v589 = vpop.f32.mrf.mxu0
    %v590 = vadd.f32 %v124, %v589
    %591 = vmatmul.bf16.gmra.mxu0 %v294
    %v592 = vpop.f32.mrf.mxu0
    %v593 = vadd.f32 %v124, %v592
    %v594 = vpop.f32.mrf.mxu0
    %v595 = vadd.f32 %v124, %v594
    %596 = vmatmul.bf16.gmra.mxu0 %v298
    %v597 = vpop.f32.mrf.mxu0
    %v598 = vadd.f32 %v124, %v597
    %v599 = vpop.f32.mrf.mxu0
    %v600 = vadd.f32 %v124, %v599
    %601 = vdwg.mxu0
    %602 = vmatpush.bf16.msra.mxu0 %v489
    %603 = vmatpush.bf16.msra.mxu0 %v488
    %604 = vmatpush.bf16.msra.mxu0 %v487
    %605 = vmatpush.bf16.msra.mxu0 %v486
    %606 = vmatpush.bf16.msra.mxu0 %v485
    %607 = vmatpush.bf16.msra.mxu0 %v484
    %608 = vmatpush.bf16.msra.mxu0 %v483
    %609 = vmatpush.bf16.msra.mxu0 %v482
    %610 = vmatmul.bf16.gmra.mxu0 %v259
    %v611 = vpop.f32.mrf.mxu0
    %v612 = vadd.f32 %v548, %v611
    %v613 = vpop.f32.mrf.mxu0
    %v614 = vadd.f32 %v550, %v613
    %615 = vmatmul.bf16.gmra.mxu0 %v263
    %v616 = vpop.f32.mrf.mxu0
    %v617 = vadd.f32 %v553, %v616
    %v618 = vpop.f32.mrf.mxu0
    %v619 = vadd.f32 %v555, %v618
    %620 = vmatmul.bf16.gmra.mxu0 %v267
    %v621 = vpop.f32.mrf.mxu0
    %v622 = vadd.f32 %v558, %v621
    %v623 = vpop.f32.mrf.mxu0
    %v624 = vadd.f32 %v560, %v623
    %625 = vmatmul.bf16.gmra.mxu0 %v271
    %v626 = vpop.f32.mrf.mxu0
    %v627 = vadd.f32 %v563, %v626
    %v628 = vpop.f32.mrf.mxu0
    %v629 = vadd.f32 %v565, %v628
    %630 = vmatmul.bf16.gmra.mxu0 %v275
    %v631 = vpop.f32.mrf.mxu0
    %v632 = vadd.f32 %v568, %v631
    %v633 = vpop.f32.mrf.mxu0
    %v634 = vadd.f32 %v570, %v633
    %635 = vmatmul.bf16.gmra.mxu0 %v279
    %v636 = vpop.f32.mrf.mxu0
    %v637 = vadd.f32 %v573, %v636
    %v638 = vpop.f32.mrf.mxu0
    %v639 = vadd.f32 %v575, %v638
    %640 = vmatmul.bf16.gmra.mxu0 %v283
    %v641 = vpop.f32.mrf.mxu0
    %v642 = vadd.f32 %v578, %v641
    %v643 = vpop.f32.mrf.mxu0
    %v644 = vadd.f32 %v580, %v643
    %645 = vmatmul.bf16.gmra.mxu0 %v287
    %v646 = vpop.f32.mrf.mxu0
    %v647 = vadd.f32 %v583, %v646
    %v648 = vpop.f32.mrf.mxu0
    %v649 = vadd.f32 %v585, %v648
    %650 = vmatmul.bf16.gmra.mxu0 %v291
    %v651 = vpop.f32.mrf.mxu0
    %v652 = vadd.f32 %v588, %v651
    %v653 = vpop.f32.mrf.mxu0
    %v654 = vadd.f32 %v590, %v653
    %655 = vmatmul.bf16.gmra.mxu0 %v295
    %v656 = vpop.f32.mrf.mxu0
    %v657 = vadd.f32 %v593, %v656
    %v658 = vpop.f32.mrf.mxu0
    %v659 = vadd.f32 %v595, %v658
    %660 = vmatmul.bf16.gmra.mxu0 %v299
    %v661 = vpop.f32.mrf.mxu0
    %v662 = vadd.f32 %v598, %v661
    %v663 = vpop.f32.mrf.mxu0
    %v664 = vadd.f32 %v600, %v663
    %665 = vdwg.mxu0
    %666 = vmatpush.bf16.msra.mxu0 %v497
    %667 = vmatpush.bf16.msra.mxu0 %v496
    %668 = vmatpush.bf16.msra.mxu0 %v495
    %669 = vmatpush.bf16.msra.mxu0 %v494
    %670 = vmatpush.bf16.msra.mxu0 %v493
    %671 = vmatpush.bf16.msra.mxu0 %v492
    %672 = vmatpush.bf16.msra.mxu0 %v491
    %673 = vmatpush.bf16.msra.mxu0 %v490
    %674 = vmatmul.bf16.gmra.mxu0 %v260
    %v675 = vpop.f32.mrf.mxu0
    %v676 = vadd.f32 %v612, %v675
    %v677 = vpop.f32.mrf.mxu0
    %v678 = vadd.f32 %v614, %v677
    %679 = vmatmul.bf16.gmra.mxu0 %v264
    %v680 = vpop.f32.mrf.mxu0
    %v681 = vadd.f32 %v617, %v680
    %v682 = vpop.f32.mrf.mxu0
    %v683 = vadd.f32 %v619, %v682
    %684 = vmatmul.bf16.gmra.mxu0 %v268
    %v685 = vpop.f32.mrf.mxu0
    %v686 = vadd.f32 %v622, %v685
    %v687 = vpop.f32.mrf.mxu0
    %v688 = vadd.f32 %v624, %v687
    %689 = vmatmul.bf16.gmra.mxu0 %v272
    %v690 = vpop.f32.mrf.mxu0
    %v691 = vadd.f32 %v627, %v690
    %v692 = vpop.f32.mrf.mxu0
    %v693 = vadd.f32 %v629, %v692
    %694 = vmatmul.bf16.gmra.mxu0 %v276
    %v695 = vpop.f32.mrf.mxu0
    %v696 = vadd.f32 %v632, %v695
    %v697 = vpop.f32.mrf.mxu0
    %v698 = vadd.f32 %v634, %v697
    %699 = vmatmul.bf16.gmra.mxu0 %v280
    %v700 = vpop.f32.mrf.mxu0
    %v701 = vadd.f32 %v637, %v700
    %v702 = vpop.f32.mrf.mxu0
    %v703 = vadd.f32 %v639, %v702
    %704 = vmatmul.bf16.gmra.mxu0 %v284
    %v705 = vpop.f32.mrf.mxu0
    %v706 = vadd.f32 %v642, %v705
    %v707 = vpop.f32.mrf.mxu0
    %v708 = vadd.f32 %v644, %v707
    %709 = vmatmul.bf16.gmra.mxu0 %v288
    %v710 = vpop.f32.mrf.mxu0
    %v711 = vadd.f32 %v647, %v710
    %v712 = vpop.f32.mrf.mxu0
    %v713 = vadd.f32 %v649, %v712
    %714 = vmatmul.bf16.gmra.mxu0 %v292
    %v715 = vpop.f32.mrf.mxu0
    %v716 = vadd.f32 %v652, %v715
    %v717 = vpop.f32.mrf.mxu0
    %v718 = vadd.f32 %v654, %v717
    %719 = vmatmul.bf16.gmra.mxu0 %v296
    %v720 = vpop.f32.mrf.mxu0
    %v721 = vadd.f32 %v657, %v720
    %v722 = vpop.f32.mrf.mxu0
    %v723 = vadd.f32 %v659, %v722
    %724 = vmatmul.bf16.gmra.mxu0 %v300
    %v725 = vpop.f32.mrf.mxu0
    %v726 = vadd.f32 %v662, %v725
    %v727 = vpop.f32.mrf.mxu0
    %v728 = vadd.f32 %v664, %v727
    %729 = vdwg.mxu0
    %730 = vmatpush.bf16.msra.mxu0 %v505
    %731 = vmatpush.bf16.msra.mxu0 %v504
    %732 = vmatpush.bf16.msra.mxu0 %v503
    %733 = vmatpush.bf16.msra.mxu0 %v502
    %734 = vmatpush.bf16.msra.mxu0 %v501
    %735 = vmatpush.bf16.msra.mxu0 %v500
    %736 = vmatpush.bf16.msra.mxu0 %v499
    %737 = vmatpush.bf16.msra.mxu0 %v498
    %738 = vmatmul.bf16.gmra.mxu0 %v261
    %v739 = vpop.f32.mrf.mxu0
    %v740 = vadd.f32 %v676, %v739
    %v741 = vpop.f32.mrf.mxu0
    %v742 = vadd.f32 %v678, %v741
    %743 = vmatmul.bf16.gmra.mxu0 %v265
    %v744 = vpop.f32.mrf.mxu0
    %v745 = vadd.f32 %v681, %v744
    %v746 = vpop.f32.mrf.mxu0
    %v747 = vadd.f32 %v683, %v746
    %748 = vmatmul.bf16.gmra.mxu0 %v269
    %v749 = vpop.f32.mrf.mxu0
    %v750 = vadd.f32 %v686, %v749
    %v751 = vpop.f32.mrf.mxu0
    %v752 = vadd.f32 %v688, %v751
    %753 = vmatmul.bf16.gmra.mxu0 %v273
    %v754 = vpop.f32.mrf.mxu0
    %v755 = vadd.f32 %v691, %v754
    %v756 = vpop.f32.mrf.mxu0
    %v757 = vadd.f32 %v693, %v756
    %758 = vmatmul.bf16.gmra.mxu0 %v277
    %v759 = vpop.f32.mrf.mxu0
    %v760 = vadd.f32 %v696, %v759
    %v761 = vpop.f32.mrf.mxu0
    %v762 = vadd.f32 %v698, %v761
    %763 = vmatmul.bf16.gmra.mxu0 %v281
    %v764 = vpop.f32.mrf.mxu0
    %v765 = vadd.f32 %v701, %v764
    %v766 = vpop.f32.mrf.mxu0
    %v767 = vadd.f32 %v703, %v766
    %768 = vmatmul.bf16.gmra.mxu0 %v285
    %v769 = vpop.f32.mrf.mxu0
    %v770 = vadd.f32 %v706, %v769
    %v771 = vpop.f32.mrf.mxu0
    %v772 = vadd.f32 %v708, %v771
    %773 = vmatmul.bf16.gmra.mxu0 %v289
    %v774 = vpop.f32.mrf.mxu0
    %v775 = vadd.f32 %v711, %v774
    %v776 = vpop.f32.mrf.mxu0
    %v777 = vadd.f32 %v713, %v776
    %778 = vmatmul.bf16.gmra.mxu0 %v293
    %v779 = vpop.f32.mrf.mxu0
    %v780 = vadd.f32 %v716, %v779
    %v781 = vpop.f32.mrf.mxu0
    %v782 = vadd.f32 %v718, %v781
    %783 = vmatmul.bf16.gmra.mxu0 %v297
    %v784 = vpop.f32.mrf.mxu0
    %v785 = vadd.f32 %v721, %v784
    %v786 = vpop.f32.mrf.mxu0
    %v787 = vadd.f32 %v723, %v786
    %788 = vmatmul.bf16.gmra.mxu0 %v301
    %v789 = vpop.f32.mrf.mxu0
    %v790 = vadd.f32 %v726, %v789
    %v791 = vpop.f32.mrf.mxu0
    %v792 = vadd.f32 %v728, %v791
    %793 = vdwg.mxu0
    %v794 = vmax.f32 %v740, 0.0
    %v795 = vmax.f32 %v742, 0.0
    %v796 = vmax.f32 %v745, 0.0
    %v797 = vmax.f32 %v747, 0.0
    %v798 = vmax.f32 %v750, 0.0
    %v799 = vmax.f32 %v752, 0.0
    %v800 = vmax.f32 %v755, 0.0
    %v801 = vmax.f32 %v757, 0.0
    %v802 = vmax.f32 %v760, 0.0
    %v803 = vmax.f32 %v762, 0.0
    %v804 = vmax.f32 %v765, 0.0
    %v805 = vmax.f32 %v767, 0.0
    %v806 = vmax.f32 %v770, 0.0
    %v807 = vmax.f32 %v772, 0.0
    %v808 = vmax.f32 %v775, 0.0
    %v809 = vmax.f32 %v777, 0.0
    %v810 = vmax.f32 %v780, 0.0
    %v811 = vmax.f32 %v782, 0.0
    %v812 = vmax.f32 %v785, 0.0
    %v813 = vmax.f32 %v787, 0.0
    %v814 = vmax.f32 %v790, 0.0
    %v815 = vmax.f32 %v792, 0.0
    %v816 = vpack.c.bf16 %v794, %v794
    %v817 = vpack.c.bf16 %v795, %v795
    %v818 = vpack.c.bf16 %v796, %v796
    %v819 = vpack.c.bf16 %v797, %v797
    %v820 = vpack.c.bf16 %v798, %v798
    %v821 = vpack.c.bf16 %v799, %v799
    %v822 = vpack.c.bf16 %v800, %v800
    %v823 = vpack.c.bf16 %v801, %v801
    %v824 = vpack.c.bf16 %v802, %v802
    %v825 = vpack.c.bf16 %v803, %v803
    %v826 = vpack.c.bf16 %v804, %v804
    %v827 = vpack.c.bf16 %v805, %v805
    %v828 = vpack.c.bf16 %v806, %v806
    %v829 = vpack.c.bf16 %v807, %v807
    %v830 = vpack.c.bf16 %v808, %v808
    %v831 = vpack.c.bf16 %v809, %v809
    %v832 = vpack.c.bf16 %v810, %v810
    %v833 = vpack.c.bf16 %v811, %v811
    %v834 = vpack.c.bf16 %v812, %v812
    %v835 = vpack.c.bf16 %v813, %v813
    %v836 = vpack.c.bf16 %v814, %v814
    %v837 = vpack.c.bf16 %v815, %v815
    %vm838 = vcmask 519168
    %839 = vst.msk [vmem:[#allocation2] sm:$0xf] %vm838, %v816
    %840 = vst.msk [vmem:[#allocation2 + $0x4] sm:$0xf] %vm838, %v817
    %841 = vst.msk [vmem:[#allocation2 + $0x8] sm:$0xf] %vm838, %v818
    %842 = vst.msk [vmem:[#allocation2 + $0xc] sm:$0xf] %vm838, %v819
    %843 = vst.msk [vmem:[#allocation2 + $0x10] sm:$0xf] %vm838, %v820
    %844 = vst.msk [vmem:[#allocation2 + $0x14] sm:$0xf] %vm838, %v821
    %845 = vst.msk [vmem:[#allocation2 + $0x18] sm:$0xf] %vm838, %v822
    %846 = vst.msk [vmem:[#allocation2 + $0x1c] sm:$0xf] %vm838, %v823
    %847 = vst.msk [vmem:[#allocation2 + $0x20] sm:$0xf] %vm838, %v824
    %848 = vst.msk [vmem:[#allocation2 + $0x24] sm:$0xf] %vm838, %v825
    %849 = vst.msk [vmem:[#allocation2 + $0x28] sm:$0xf] %vm838, %v826
    %850 = vst.msk [vmem:[#allocation2 + $0x2c] sm:$0xf] %vm838, %v827
    %851 = vst.msk [vmem:[#allocation2 + $0x30] sm:$0xf] %vm838, %v828
    %852 = vst.msk [vmem:[#allocation2 + $0x34] sm:$0xf] %vm838, %v829
    %853 = vst.msk [vmem:[#allocation2 + $0x38] sm:$0xf] %vm838, %v830
    %854 = vst.msk [vmem:[#allocation2 + $0x3c] sm:$0xf] %vm838, %v831
    %855 = vst.msk [vmem:[#allocation2 + $0x40] sm:$0xf] %vm838, %v832
    %856 = vst.msk [vmem:[#allocation2 + $0x44] sm:$0xf] %vm838, %v833
    %857 = vst.msk [vmem:[#allocation2 + $0x48] sm:$0xf] %vm838, %v834
    %858 = vst.msk [vmem:[#allocation2 + $0x4c] sm:$0xf] %vm838, %v835
    %859 = vst.msk [vmem:[#allocation2 + $0x50] sm:$0xf] %vm838, %v836
    %860 = vst.msk [vmem:[#allocation2 + $0x54] sm:$0xf] %vm838, %v837
    // Predicated region
    $region14: #{dqn_forward.5} parent=1 // pred_check
      _
    $region15: #{dqn_forward.5} parent=1 // pred_check_branch
      %862 = sbr.rel (0) target = $region17
    $region16: #{dqn_forward.5} parent=1 // pred_region
      // Predicated region
      $region18: #{dqn_forward.5} parent=16 // pred_check
        _
      $region19: #{dqn_forward.5} parent=16 // pred_check_branch
        %864 = sbr.rel (0) target = $region21
      $region20: #{dqn_forward.5} parent=16 // pred_region
        // Predicated region
        $region22: #{dqn_forward.5} parent=20 // pred_check
          _
        $region23: #{dqn_forward.5} parent=20 // pred_check_branch
          %866 = sbr.rel target = $region25
        $region24: #{dqn_forward.5} parent=20 // pred_region
          // Predicated region
          $region37: #{dqn_forward.5} parent=24 // pred_check
            _
          $region38: #{dqn_forward.5} parent=24 // pred_check_branch
            %922 = sbr.rel (0) target = $region40
          $region39: #{dqn_forward.5} parent=24 // pred_region
            loop: start=0, step=1, limit=1
            $region41: #{dqn_forward.5} parent=39 // loop_pre_header
              _
            $region42: #{dqn_forward.5} parent=39 // loop_header
              %s924 = sphi 0, %s928
              %p925 = scmp.ge.s32.totalorder %s924, 1
              %s929 = sphi [#allocation2], [#allocation2]
              %s930 = sphi %s3, %s3
            $region43: #{dqn_forward.5} parent=39 // loop_header_branch
              %927 = sbr.rel (%p925) target = $region47
            $region44: #{dqn_forward.5} parent=39 // loop_body
              _
            $region45: #{dqn_forward.5} parent=39 // loop_footer
              %s928 = sadd.s32 1, %s924
            $region46: #{dqn_forward.5} parent=39 // loop_footer_branch
              %923 = sbr.rel target = $region42
            $region47: #{dqn_forward.5} parent=39 // loop_exit
              _
            %s932 = ssub.s32 16, 1
            loop: start=0, step=1, limit=1
            $region48: #{dqn_forward.5} parent=39 // loop_pre_header
              _
            $region49: #{dqn_forward.5} parent=39 // loop_header
              %s934 = sphi 0, %s938
              %p935 = scmp.ge.s32.totalorder %s934, 1
              %s939 = sphi [#allocation2], [#allocation2]
              %s940 = sphi %s3, %s3
            $region50: #{dqn_forward.5} parent=39 // loop_header_branch
              %937 = sbr.rel (%p935) target = $region54
            $region51: #{dqn_forward.5} parent=39 // loop_body
              %v941 = vld [vmem:[%s939] sm:%s932]
              %942 = vst [vmem:[%s940] sm:%s932] %v941
              %v943 = vld [vmem:[%s939 + $0x4] sm:%s932]
              %944 = vst [vmem:[%s940 + $0x4] sm:%s932] %v943
              %v945 = vld [vmem:[%s939 + $0x8] sm:%s932]
              %946 = vst [vmem:[%s940 + $0x8] sm:%s932] %v945
              %v947 = vld [vmem:[%s939 + $0xc] sm:%s932]
              %948 = vst [vmem:[%s940 + $0xc] sm:%s932] %v947
              %v949 = vld [vmem:[%s939 + $0x10] sm:%s932]
              %950 = vst [vmem:[%s940 + $0x10] sm:%s932] %v949
              %v951 = vld [vmem:[%s939 + $0x14] sm:%s932]
              %952 = vst [vmem:[%s940 + $0x14] sm:%s932] %v951
              %v953 = vld [vmem:[%s939 + $0x18] sm:%s932]
              %954 = vst [vmem:[%s940 + $0x18] sm:%s932] %v953
              %v955 = vld [vmem:[%s939 + $0x1c] sm:%s932]
              %956 = vst [vmem:[%s940 + $0x1c] sm:%s932] %v955
              %v957 = vld [vmem:[%s939 + $0x20] sm:%s932]
              %958 = vst [vmem:[%s940 + $0x20] sm:%s932] %v957
              %v959 = vld [vmem:[%s939 + $0x24] sm:%s932]
              %960 = vst [vmem:[%s940 + $0x24] sm:%s932] %v959
              %v961 = vld [vmem:[%s939 + $0x28] sm:%s932]
              %962 = vst [vmem:[%s940 + $0x28] sm:%s932] %v961
              %v963 = vld [vmem:[%s939 + $0x2c] sm:%s932]
              %964 = vst [vmem:[%s940 + $0x2c] sm:%s932] %v963
              %v965 = vld [vmem:[%s939 + $0x30] sm:%s932]
              %966 = vst [vmem:[%s940 + $0x30] sm:%s932] %v965
              %v967 = vld [vmem:[%s939 + $0x34] sm:%s932]
              %968 = vst [vmem:[%s940 + $0x34] sm:%s932] %v967
              %v969 = vld [vmem:[%s939 + $0x38] sm:%s932]
              %970 = vst [vmem:[%s940 + $0x38] sm:%s932] %v969
              %v971 = vld [vmem:[%s939 + $0x3c] sm:%s932]
              %972 = vst [vmem:[%s940 + $0x3c] sm:%s932] %v971
              %v973 = vld [vmem:[%s939 + $0x40] sm:%s932]
              %974 = vst [vmem:[%s940 + $0x40] sm:%s932] %v973
              %v975 = vld [vmem:[%s939 + $0x44] sm:%s932]
              %976 = vst [vmem:[%s940 + $0x44] sm:%s932] %v975
              %v977 = vld [vmem:[%s939 + $0x48] sm:%s932]
              %978 = vst [vmem:[%s940 + $0x48] sm:%s932] %v977
              %v979 = vld [vmem:[%s939 + $0x4c] sm:%s932]
              %980 = vst [vmem:[%s940 + $0x4c] sm:%s932] %v979
              %v981 = vld [vmem:[%s939 + $0x50] sm:%s932]
              %982 = vst [vmem:[%s940 + $0x50] sm:%s932] %v981
            $region52: #{dqn_forward.5} parent=39 // loop_footer
              %s938 = sadd.s32 1, %s934
            $region53: #{dqn_forward.5} parent=39 // loop_footer_branch
              %933 = sbr.rel target = $region49
            $region54: #{dqn_forward.5} parent=39 // loop_exit
              _
          $region40: #{dqn_forward.5} parent=24 // pred_fallthru
            _
        $region25: #{dqn_forward.5} parent=20 // pred_fallthru
          _
        // Predicated region
        $region26: #{dqn_forward.5} parent=20 // pred_check
          _
        $region27: #{dqn_forward.5} parent=20 // pred_check_branch
          %868 = sbr.rel (0) target = $region29
        $region28: #{dqn_forward.5} parent=20 // pred_region
          %s870 = ssub.s32 16, 1
          loop: start=0, step=1, limit=1
          $region30: #{dqn_forward.5} parent=28 // loop_pre_header
            _
          $region31: #{dqn_forward.5} parent=28 // loop_header
            %s872 = sphi 0, %s876
            %p873 = scmp.ge.s32.totalorder %s872, 1
            %s877 = sphi [#allocation2], [#allocation2]
            %s878 = sphi %s3, %s3
          $region32: #{dqn_forward.5} parent=28 // loop_header_branch
            %875 = sbr.rel (%p873) target = $region36
          $region33: #{dqn_forward.5} parent=28 // loop_body
            %v879 = vld [vmem:[%s877] sm:%s870]
            %880 = vst [vmem:[%s878] sm:%s870] %v879
            %v881 = vld [vmem:[%s877 + $0x4] sm:%s870]
            %882 = vst [vmem:[%s878 + $0x4] sm:%s870] %v881
            %v883 = vld [vmem:[%s877 + $0x8] sm:%s870]
            %884 = vst [vmem:[%s878 + $0x8] sm:%s870] %v883
            %v885 = vld [vmem:[%s877 + $0xc] sm:%s870]
            %886 = vst [vmem:[%s878 + $0xc] sm:%s870] %v885
            %v887 = vld [vmem:[%s877 + $0x10] sm:%s870]
            %888 = vst [vmem:[%s878 + $0x10] sm:%s870] %v887
            %v889 = vld [vmem:[%s877 + $0x14] sm:%s870]
            %890 = vst [vmem:[%s878 + $0x14] sm:%s870] %v889
            %v891 = vld [vmem:[%s877 + $0x18] sm:%s870]
            %892 = vst [vmem:[%s878 + $0x18] sm:%s870] %v891
            %v893 = vld [vmem:[%s877 + $0x1c] sm:%s870]
            %894 = vst [vmem:[%s878 + $0x1c] sm:%s870] %v893
            %v895 = vld [vmem:[%s877 + $0x20] sm:%s870]
            %896 = vst [vmem:[%s878 + $0x20] sm:%s870] %v895
            %v897 = vld [vmem:[%s877 + $0x24] sm:%s870]
            %898 = vst [vmem:[%s878 + $0x24] sm:%s870] %v897
            %v899 = vld [vmem:[%s877 + $0x28] sm:%s870]
            %900 = vst [vmem:[%s878 + $0x28] sm:%s870] %v899
            %v901 = vld [vmem:[%s877 + $0x2c] sm:%s870]
            %902 = vst [vmem:[%s878 + $0x2c] sm:%s870] %v901
            %v903 = vld [vmem:[%s877 + $0x30] sm:%s870]
            %904 = vst [vmem:[%s878 + $0x30] sm:%s870] %v903
            %v905 = vld [vmem:[%s877 + $0x34] sm:%s870]
            %906 = vst [vmem:[%s878 + $0x34] sm:%s870] %v905
            %v907 = vld [vmem:[%s877 + $0x38] sm:%s870]
            %908 = vst [vmem:[%s878 + $0x38] sm:%s870] %v907
            %v909 = vld [vmem:[%s877 + $0x3c] sm:%s870]
            %910 = vst [vmem:[%s878 + $0x3c] sm:%s870] %v909
            %v911 = vld [vmem:[%s877 + $0x40] sm:%s870]
            %912 = vst [vmem:[%s878 + $0x40] sm:%s870] %v911
            %v913 = vld [vmem:[%s877 + $0x44] sm:%s870]
            %914 = vst [vmem:[%s878 + $0x44] sm:%s870] %v913
            %v915 = vld [vmem:[%s877 + $0x48] sm:%s870]
            %916 = vst [vmem:[%s878 + $0x48] sm:%s870] %v915
            %v917 = vld [vmem:[%s877 + $0x4c] sm:%s870]
            %918 = vst [vmem:[%s878 + $0x4c] sm:%s870] %v917
            %v919 = vld [vmem:[%s877 + $0x50] sm:%s870]
            %920 = vst [vmem:[%s878 + $0x50] sm:%s870] %v919
          $region34: #{dqn_forward.5} parent=28 // loop_footer
            %s876 = sadd.s32 1, %s872
          $region35: #{dqn_forward.5} parent=28 // loop_footer_branch
            %871 = sbr.rel target = $region31
          $region36: #{dqn_forward.5} parent=28 // loop_exit
            _
        $region29: #{dqn_forward.5} parent=20 // pred_fallthru
          _
      $region21: #{dqn_forward.5} parent=16 // pred_fallthru
        _
      %983 = vnop
    $region17: #{dqn_forward.5} parent=1 // pred_fallthru
      _
    // Predicated region
    $region55: #{dqn_forward.5} parent=1 // pred_check
      _
    $region56: #{dqn_forward.5} parent=1 // pred_check_branch
      %985 = sbr.rel (0) target = $region58
    $region57: #{dqn_forward.5} parent=1 // pred_region
      _
    $region58: #{dqn_forward.5} parent=1 // pred_fallthru
      _

// kernel: dqn_forward.6
$region0: #{dqn_forward.6}
  #allocation0 [shape = 'u32[]', space=smem, size = 0x4, offset = 0x4, fixed_abs, tag = 'smem constant byte address 0x4 - core index']
  #allocation1 [shape = 'u32[72,128]{1,0:T(1,128)}', space=vmem, size = 0x9000, scoped, tag = 'internal scratch']
  %s0 = inlined_call_operand.vmem [shape: bf16[98,576], index: 0, kind: input, shape index: {}]
  %s1 = inlined_call_operand.vmem [shape: bf16[576,64], index: 1, kind: input, shape index: {}]
  %s2 = inlined_call_operand.vmem [shape: f32[1,64], index: 2, kind: input, shape index: {}]
  %s3 = inlined_call_operand.vmem [shape: bf16[98,64], index: 3, kind: output, shape index: {}]
  %s4 = sld [smem:[#allocation0]]
  $region59: #{dqn_forward.6} parent=0
    _
  %s6 = ssub.s32 1, %s4
  %s7 = scalar_select 0, %s6, %s4
  $region1: #{dqn_forward.6} parent=0
    #allocation2 [shape = 'u8[28672]{0}', space=vmem, size = 0x7000, scoped, tag = 'output window, operand 0, single buffered']
    // Predicated region
    $region2: #{dqn_forward.6} parent=1 // pred_check
      _
    $region3: #{dqn_forward.6} parent=1 // pred_check_branch
      %9 = sbr.rel (0) target = $region5
    $region4: #{dqn_forward.6} parent=1 // pred_region
      _
    $region5: #{dqn_forward.6} parent=1 // pred_fallthru
      _
    // Predicated region
    $region6: #{dqn_forward.6} parent=1 // pred_check
      _
    $region7: #{dqn_forward.6} parent=1 // pred_check_branch
      %11 = sbr.rel (0) target = $region9
    $region8: #{dqn_forward.6} parent=1 // pred_region
      _
    $region9: #{dqn_forward.6} parent=1 // pred_fallthru
      _
    // Predicated region
    $region10: #{dqn_forward.6} parent=1 // pred_check
      _
    $region11: #{dqn_forward.6} parent=1 // pred_check_branch
      %13 = sbr.rel (0) target = $region13
    $region12: #{dqn_forward.6} parent=1 // pred_region
      _
    $region13: #{dqn_forward.6} parent=1 // pred_fallthru
      _
    %v15 = vld [vmem:[%s0] sm:$0xff]
    %v16 = vld [vmem:[%s0 + $0x8] sm:$0xff]
    %v17 = vld [vmem:[%s0 + $0x10] sm:$0xf]
    %v18 = vld [vmem:[%s0 + $0x14] sm:$0xff]
    %v19 = vld [vmem:[%s0 + $0x1c] sm:$0xff]
    %v20 = vld [vmem:[%s0 + $0x24] sm:$0xf]
    %v21 = vld [vmem:[%s0 + $0x28] sm:$0xff]
    %v22 = vld [vmem:[%s0 + $0x30] sm:$0xff]
    %v23 = vld [vmem:[%s0 + $0x38] sm:$0xf]
    %v24 = vld [vmem:[%s0 + $0x3c] sm:$0xff]
    %v25 = vld [vmem:[%s0 + $0x44] sm:$0xff]
    %v26 = vld [vmem:[%s0 + $0x4c] sm:$0xf]
    %v27 = vld [vmem:[%s0 + $0x50] sm:$0xff]
    %v28 = vld [vmem:[%s0 + $0x58] sm:$0xff]
    %v29 = vld [vmem:[%s0 + $0x60] sm:$0xf]
    %v30 = vld [vmem:[%s0 + $0x64] sm:$0xff]
    %v31 = vld [vmem:[%s0 + $0x6c] sm:$0xff]
    %v32 = vld [vmem:[%s0 + $0x74] sm:$0xf]
    %v33 = vld [vmem:[%s0 + $0x78] sm:$0xff]
    %v34 = vld [vmem:[%s0 + $0x80] sm:$0xff]
    %v35 = vld [vmem:[%s0 + $0x88] sm:$0xf]
    %v36 = vld [vmem:[%s0 + $0x8c] sm:$0xff]
    %v37 = vld [vmem:[%s0 + $0x94] sm:$0xff]
    %v38 = vld [vmem:[%s0 + $0x9c] sm:$0xf]
    %v39 = vld [vmem:[%s0 + $0xa0] sm:$0xff]
    %v40 = vld [vmem:[%s0 + $0xa8] sm:$0xff]
    %v41 = vld [vmem:[%s0 + $0xb0] sm:$0xf]
    %v42 = vld [vmem:[%s0 + $0xb4] sm:$0xff]
    %v43 = vld [vmem:[%s0 + $0xbc] sm:$0xff]
    %v44 = vld [vmem:[%s0 + $0xc4] sm:$0xf]
    %v45 = vld [vmem:[%s0 + $0xc8] sm:$0xff]
    %v46 = vld [vmem:[%s0 + $0xd0] sm:$0xff]
    %v47 = vld [vmem:[%s0 + $0xd8] sm:$0xf]
    %v48 = vld [vmem:[%s0 + $0xdc] sm:$0xff]
    %v49 = vld [vmem:[%s0 + $0xe4] sm:$0xff]
    %v50 = vld [vmem:[%s0 + $0xec] sm:$0xf]
    %v51 = vld [vmem:[%s0 + $0xf0] sm:$0xff]
    %v52 = vld [vmem:[%s0 + $0xf8] sm:$0xff]
    %v53 = vld [vmem:[%s0 + $0x100] sm:$0xf]
    %v54 = vld [vmem:[%s0 + $0x104] sm:$0xff]
    %v55 = vld [vmem:[%s0 + $0x10c] sm:$0xff]
    %v56 = vld [vmem:[%s0 + $0x114] sm:$0xf]
    %v57 = vld [vmem:[%s1] sm:$0xf]
    %v58 = vld [vmem:[%s1 + $0x4] sm:$0xf]
    %v59 = vld [vmem:[%s1 + $0x8] sm:$0xf]
    %v60 = vld [vmem:[%s1 + $0xc] sm:$0xf]
    %v61 = vld [vmem:[%s1 + $0x10] sm:$0xf]
    %v62 = vld [vmem:[%s1 + $0x14] sm:$0xf]
    %v63 = vld [vmem:[%s1 + $0x18] sm:$0xf]
    %v64 = vld [vmem:[%s1 + $0x1c] sm:$0xf]
    %v65 = vld [vmem:[%s1 + $0x20] sm:$0xf]
    %v66 = vld [vmem:[%s1 + $0x24] sm:$0xf]
    %v67 = vld [vmem:[%s1 + $0x28] sm:$0xf]
    %v68 = vld [vmem:[%s1 + $0x2c] sm:$0xf]
    %v69 = vld [vmem:[%s1 + $0x30] sm:$0xf]
    %v70 = vld [vmem:[%s1 + $0x34] sm:$0xf]
    %v71 = vld [vmem:[%s1 + $0x38] sm:$0xf]
    %v72 = vld [vmem:[%s1 + $0x3c] sm:$0xf]
    %v73 = vld [vmem:[%s1 + $0x40] sm:$0xf]
    %v74 = vld [vmem:[%s1 + $0x44] sm:$0xf]
    %v75 = vld [vmem:[%s1 + $0x48] sm:$0xf]
    %v76 = vld [vmem:[%s1 + $0x4c] sm:$0xf]
    %v77 = vld [vmem:[%s1 + $0x50] sm:$0xf]
    %v78 = vld [vmem:[%s1 + $0x54] sm:$0xf]
    %v79 = vld [vmem:[%s1 + $0x58] sm:$0xf]
    %v80 = vld [vmem:[%s1 + $0x5c] sm:$0xf]
    %v81 = vld [vmem:[%s1 + $0x60] sm:$0xf]
    %v82 = vld [vmem:[%s1 + $0x64] sm:$0xf]
    %v83 = vld [vmem:[%s1 + $0x68] sm:$0xf]
    %v84 = vld [vmem:[%s1 + $0x6c] sm:$0xf]
    %v85 = vld [vmem:[%s1 + $0x70] sm:$0xf]
    %v86 = vld [vmem:[%s1 + $0x74] sm:$0xf]
    %v87 = vld [vmem:[%s1 + $0x78] sm:$0xf]
    %v88 = vld [vmem:[%s1 + $0x7c] sm:$0xf]
    %v89 = vld [vmem:[%s1 + $0x80] sm:$0xf]
    %v90 = vld [vmem:[%s1 + $0x84] sm:$0xf]
    %v91 = vld [vmem:[%s1 + $0x88] sm:$0xf]
    %v92 = vld [vmem:[%s1 + $0x8c] sm:$0xf]
    %v93 = vld [vmem:[%s1 + $0x90] sm:$0xf]
    %v94 = vld [vmem:[%s1 + $0x94] sm:$0xf]
    %v95 = vld [vmem:[%s1 + $0x98] sm:$0xf]
    %v96 = vld [vmem:[%s1 + $0x9c] sm:$0xf]
    %v97 = vld [vmem:[%s1 + $0xa0] sm:$0xf]
    %v98 = vld [vmem:[%s1 + $0xa4] sm:$0xf]
    %v99 = vld [vmem:[%s1 + $0xa8] sm:$0xf]
    %v100 = vld [vmem:[%s1 + $0xac] sm:$0xf]
    %v101 = vld [vmem:[%s1 + $0xb0] sm:$0xf]
    %v102 = vld [vmem:[%s1 + $0xb4] sm:$0xf]
    %v103 = vld [vmem:[%s1 + $0xb8] sm:$0xf]
    %v104 = vld [vmem:[%s1 + $0xbc] sm:$0xf]
    %v105 = vld [vmem:[%s1 + $0xc0] sm:$0xf]
    %v106 = vld [vmem:[%s1 + $0xc4] sm:$0xf]
    %v107 = vld [vmem:[%s1 + $0xc8] sm:$0xf]
    %v108 = vld [vmem:[%s1 + $0xcc] sm:$0xf]
    %v109 = vld [vmem:[%s1 + $0xd0] sm:$0xf]
    %v110 = vld [vmem:[%s1 + $0xd4] sm:$0xf]
    %v111 = vld [vmem:[%s1 + $0xd8] sm:$0xf]
    %v112 = vld [vmem:[%s1 + $0xdc] sm:$0xf]
    %v113 = vld [vmem:[%s1 + $0xe0] sm:$0xf]
    %v114 = vld [vmem:[%s1 + $0xe4] sm:$0xf]
    %v115 = vld [vmem:[%s1 + $0xe8] sm:$0xf]
    %v116 = vld [vmem:[%s1 + $0xec] sm:$0xf]
    %v117 = vld [vmem:[%s1 + $0xf0] sm:$0xf]
    %v118 = vld [vmem:[%s1 + $0xf4] sm:$0xf]
    %v119 = vld [vmem:[%s1 + $0xf8] sm:$0xf]
    %v120 = vld [vmem:[%s1 + $0xfc] sm:$0xf]
    %v121 = vld [vmem:[%s1 + $0x100] sm:$0xf]
    %v122 = vld [vmem:[%s1 + $0x104] sm:$0xf]
    %v123 = vld [vmem:[%s1 + $0x108] sm:$0xf]
    %v124 = vld [vmem:[%s1 + $0x10c] sm:$0xf]
    %v125 = vld [vmem:[%s1 + $0x110] sm:$0xf]
    %v126 = vld [vmem:[%s1 + $0x114] sm:$0xf]
    %v127 = vld [vmem:[%s1 + $0x118] sm:$0xf]
    %v128 = vld [vmem:[%s1 + $0x11c] sm:$0xf]
    %v129 = vld [vmem:[%s2] sm:$0x1]
    %v131 = vperm.slane %v129, 0
    %v175 = vunpack.c.l.b16 %v15
    %v176 = vunpack.c.h.b16 %v15
    %v177 = vunpack.c.l.b16 %v16
    %v178 = vunpack.c.h.b16 %v16
    %v179 = vunpack.c.l.b16 %v17
    %v180 = vunpack.c.l.b16 %v18
    %v181 = vunpack.c.h.b16 %v18
    %v182 = vunpack.c.l.b16 %v19
    %v183 = vunpack.c.h.b16 %v19
    %v184 = vunpack.c.l.b16 %v20
    %v185 = vunpack.c.l.b16 %v21
    %v186 = vunpack.c.h.b16 %v21
    %v187 = vunpack.c.l.b16 %v22
    %v188 = vunpack.c.h.b16 %v22
    %v189 = vunpack.c.l.b16 %v23
    %v190 = vunpack.c.l.b16 %v24
    %v191 = vunpack.c.h.b16 %v24
    %v192 = vunpack.c.l.b16 %v25
    %v193 = vunpack.c.h.b16 %v25
    %v194 = vunpack.c.l.b16 %v26
    %v195 = vunpack.c.l.b16 %v27
    %v196 = vunpack.c.h.b16 %v27
    %v197 = vunpack.c.l.b16 %v28
    %v198 = vunpack.c.h.b16 %v28
    %v199 = vunpack.c.l.b16 %v29
    %v200 = vunpack.c.l.b16 %v30
    %v201 = vunpack.c.h.b16 %v30
    %v202 = vunpack.c.l.b16 %v31
    %v203 = vunpack.c.h.b16 %v31
    %v204 = vunpack.c.l.b16 %v32
    %v205 = vunpack.c.l.b16 %v33
    %v206 = vunpack.c.h.b16 %v33
    %v207 = vunpack.c.l.b16 %v34
    %v208 = vunpack.c.h.b16 %v34
    %v209 = vunpack.c.l.b16 %v35
    %v210 = vunpack.c.l.b16 %v36
    %v211 = vunpack.c.h.b16 %v36
    %v212 = vunpack.c.l.b16 %v37
    %v213 = vunpack.c.h.b16 %v37
    %v214 = vunpack.c.l.b16 %v38
    %v215 = vunpack.c.l.b16 %v39
    %v216 = vunpack.c.h.b16 %v39
    %v217 = vunpack.c.l.b16 %v40
    %v218 = vunpack.c.h.b16 %v40
    %v219 = vunpack.c.l.b16 %v41
    %v220 = vunpack.c.l.b16 %v42
    %v221 = vunpack.c.h.b16 %v42
    %v222 = vunpack.c.l.b16 %v43
    %v223 = vunpack.c.h.b16 %v43
    %v224 = vunpack.c.l.b16 %v44
    %v225 = vunpack.c.l.b16 %v45
    %v226 = vunpack.c.h.b16 %v45
    %v227 = vunpack.c.l.b16 %v46
    %v228 = vunpack.c.h.b16 %v46
    %v229 = vunpack.c.l.b16 %v47
    %v230 = vunpack.c.l.b16 %v48
    %v231 = vunpack.c.h.b16 %v48
    %v232 = vunpack.c.l.b16 %v49
    %v233 = vunpack.c.h.b16 %v49
    %v234 = vunpack.c.l.b16 %v50
    %v235 = vunpack.c.l.b16 %v51
    %v236 = vunpack.c.h.b16 %v51
    %v237 = vunpack.c.l.b16 %v52
    %v238 = vunpack.c.h.b16 %v52
    %v239 = vunpack.c.l.b16 %v53
    %v240 = vunpack.c.l.b16 %v54
    %v241 = vunpack.c.h.b16 %v54
    %v242 = vunpack.c.l.b16 %v55
    %v243 = vunpack.c.h.b16 %v55
    %v244 = vunpack.c.l.b16 %v56
    %v245 = vpack.c.b16 %v180, %v175
    %v246 = vpack.c.b16 %v181, %v176
    %v247 = vpack.c.b16 %v182, %v177
    %v248 = vpack.c.b16 %v183, %v178
    %v249 = vpack.c.b16 %v184, %v179
    %v250 = vpack.c.b16 %v190, %v185
    %v251 = vpack.c.b16 %v191, %v186
    %v252 = vpack.c.b16 %v192, %v187
    %v253 = vpack.c.b16 %v193, %v188
    %v254 = vpack.c.b16 %v194, %v189
    %v255 = vpack.c.b16 %v200, %v195
    %v256 = vpack.c.b16 %v201, %v196
    %v257 = vpack.c.b16 %v202, %v197
    %v258 = vpack.c.b16 %v203, %v198
    %v259 = vpack.c.b16 %v204, %v199
    %v260 = vpack.c.b16 %v210, %v205
    %v261 = vpack.c.b16 %v211, %v206
    %v262 = vpack.c.b16 %v212, %v207
    %v263 = vpack.c.b16 %v213, %v208
    %v264 = vpack.c.b16 %v214, %v209
    %v265 = vpack.c.b16 %v220, %v215
    %v266 = vpack.c.b16 %v221, %v216
    %v267 = vpack.c.b16 %v222, %v217
    %v268 = vpack.c.b16 %v223, %v218
    %v269 = vpack.c.b16 %v224, %v219
    %v270 = vpack.c.b16 %v230, %v225
    %v271 = vpack.c.b16 %v231, %v226
    %v272 = vpack.c.b16 %v232, %v227
    %v273 = vpack.c.b16 %v233, %v228
    %v274 = vpack.c.b16 %v234, %v229
    %v275 = vpack.c.b16 %v240, %v235
    %v276 = vpack.c.b16 %v241, %v236
    %v277 = vpack.c.b16 %v242, %v237
    %v278 = vpack.c.b16 %v243, %v238
    %v279 = vpack.c.b16 %v244, %v239
    %v380 = vunpack.c.l.b16 %v57
    %v381 = vunpack.c.l.b16 %v58
    %v382 = vunpack.c.l.b16 %v59
    %v383 = vunpack.c.l.b16 %v60
    %v384 = vunpack.c.l.b16 %v61
    %v385 = vunpack.c.l.b16 %v62
    %v386 = vunpack.c.l.b16 %v63
    %v387 = vunpack.c.l.b16 %v64
    %v388 = vunpack.c.l.b16 %v65
    %v389 = vunpack.c.l.b16 %v66
    %v390 = vunpack.c.l.b16 %v67
    %v391 = vunpack.c.l.b16 %v68
    %v392 = vunpack.c.l.b16 %v69
    %v393 = vunpack.c.l.b16 %v70
    %v394 = vunpack.c.l.b16 %v71
    %v395 = vunpack.c.l.b16 %v72
    %v396 = vunpack.c.l.b16 %v73
    %v397 = vunpack.c.l.b16 %v74
    %v398 = vunpack.c.l.b16 %v75
    %v399 = vunpack.c.l.b16 %v76
    %v400 = vunpack.c.l.b16 %v77
    %v401 = vunpack.c.l.b16 %v78
    %v402 = vunpack.c.l.b16 %v79
    %v403 = vunpack.c.l.b16 %v80
    %v404 = vunpack.c.l.b16 %v81
    %v405 = vunpack.c.l.b16 %v82
    %v406 = vunpack.c.l.b16 %v83
    %v407 = vunpack.c.l.b16 %v84
    %v408 = vunpack.c.l.b16 %v85
    %v409 = vunpack.c.l.b16 %v86
    %v410 = vunpack.c.l.b16 %v87
    %v411 = vunpack.c.l.b16 %v88
    %v412 = vunpack.c.l.b16 %v89
    %v413 = vunpack.c.l.b16 %v90
    %v414 = vunpack.c.l.b16 %v91
    %v415 = vunpack.c.l.b16 %v92
    %v416 = vunpack.c.l.b16 %v93
    %v417 = vunpack.c.l.b16 %v94
    %v418 = vunpack.c.l.b16 %v95
    %v419 = vunpack.c.l.b16 %v96
    %v420 = vunpack.c.l.b16 %v97
    %v421 = vunpack.c.l.b16 %v98
    %v422 = vunpack.c.l.b16 %v99
    %v423 = vunpack.c.l.b16 %v100
    %v424 = vunpack.c.l.b16 %v101
    %v425 = vunpack.c.l.b16 %v102
    %v426 = vunpack.c.l.b16 %v103
    %v427 = vunpack.c.l.b16 %v104
    %v428 = vunpack.c.l.b16 %v105
    %v429 = vunpack.c.l.b16 %v106
    %v430 = vunpack.c.l.b16 %v107
    %v431 = vunpack.c.l.b16 %v108
    %v432 = vunpack.c.l.b16 %v109
    %v433 = vunpack.c.l.b16 %v110
    %v434 = vunpack.c.l.b16 %v111
    %v435 = vunpack.c.l.b16 %v112
    %v436 = vunpack.c.l.b16 %v113
    %v437 = vunpack.c.l.b16 %v114
    %v438 = vunpack.c.l.b16 %v115
    %v439 = vunpack.c.l.b16 %v116
    %v440 = vunpack.c.l.b16 %v117
    %v441 = vunpack.c.l.b16 %v118
    %v442 = vunpack.c.l.b16 %v119
    %v443 = vunpack.c.l.b16 %v120
    %v444 = vunpack.c.l.b16 %v121
    %v445 = vunpack.c.l.b16 %v122
    %v446 = vunpack.c.l.b16 %v123
    %v447 = vunpack.c.l.b16 %v124
    %v448 = vunpack.c.l.b16 %v125
    %v449 = vunpack.c.l.b16 %v126
    %v450 = vunpack.c.l.b16 %v127
    %v451 = vunpack.c.l.b16 %v128
    %v452 = vpack.c.b16 %v381, %v380
    %v453 = vpack.c.b16 %v383, %v382
    %v454 = vpack.c.b16 %v385, %v384
    %v455 = vpack.c.b16 %v387, %v386
    %v456 = vpack.c.b16 %v389, %v388
    %v457 = vpack.c.b16 %v391, %v390
    %v458 = vpack.c.b16 %v393, %v392
    %v459 = vpack.c.b16 %v395, %v394
    %v460 = vpack.c.b16 %v397, %v396
    %v461 = vpack.c.b16 %v399, %v398
    %v462 = vpack.c.b16 %v401, %v400
    %v463 = vpack.c.b16 %v403, %v402
    %v464 = vpack.c.b16 %v405, %v404
    %v465 = vpack.c.b16 %v407, %v406
    %v466 = vpack.c.b16 %v409, %v408
    %v467 = vpack.c.b16 %v411, %v410
    %v468 = vpack.c.b16 %v413, %v412
    %v469 = vpack.c.b16 %v415, %v414
    %v470 = vpack.c.b16 %v417, %v416
    %v471 = vpack.c.b16 %v419, %v418
    %v472 = vpack.c.b16 %v421, %v420
    %v473 = vpack.c.b16 %v423, %v422
    %v474 = vpack.c.b16 %v425, %v424
    %v475 = vpack.c.b16 %v427, %v426
    %v476 = vpack.c.b16 %v429, %v428
    %v477 = vpack.c.b16 %v431, %v430
    %v478 = vpack.c.b16 %v433, %v432
    %v479 = vpack.c.b16 %v435, %v434
    %v480 = vpack.c.b16 %v437, %v436
    %v481 = vpack.c.b16 %v439, %v438
    %v482 = vpack.c.b16 %v441, %v440
    %v483 = vpack.c.b16 %v443, %v442
    %v484 = vpack.c.b16 %v445, %v444
    %v485 = vpack.c.b16 %v447, %v446
    %v486 = vpack.c.b16 %v449, %v448
    %v487 = vpack.c.b16 %v451, %v450
    %vm524 = vcmask 523264
    %v526 = vsel %vm524, %v249, 0
    %v529 = vsel %vm524, %v254, 0
    %v532 = vsel %vm524, %v259, 0
    %v535 = vsel %vm524, %v264, 0
    %v538 = vsel %vm524, %v269, 0
    %v541 = vsel %vm524, %v274, 0
    %v544 = vsel %vm524, %v279, 0
    %546 = vmatpush.bf16.msra.mxu0 %v459
    %547 = vmatpush.bf16.msra.mxu0 %v458
    %548 = vmatpush.bf16.msra.mxu0 %v457
    %549 = vmatpush.bf16.msra.mxu0 %v456
    %550 = vmatpush.bf16.msra.mxu0 %v455
    %551 = vmatpush.bf16.msra.mxu0 %v454
    %552 = vmatpush.bf16.msra.mxu0 %v453
    %553 = vmatpush.bf16.msra.mxu0 %v452
    %554 = vmatmul.bf16.gmra.mxu0 %v245
    %v555 = vpop.f32.mrf.mxu0
    %v556 = vadd.f32 %v131, %v555
    %v557 = vpop.f32.mrf.mxu0
    %v558 = vadd.f32 %v131, %v557
    %559 = vmatmul.bf16.gmra.mxu0 %v250
    %v560 = vpop.f32.mrf.mxu0
    %v561 = vadd.f32 %v131, %v560
    %v562 = vpop.f32.mrf.mxu0
    %v563 = vadd.f32 %v131, %v562
    %564 = vmatmul.bf16.gmra.mxu0 %v255
    %v565 = vpop.f32.mrf.mxu0
    %v566 = vadd.f32 %v131, %v565
    %v567 = vpop.f32.mrf.mxu0
    %v568 = vadd.f32 %v131, %v567
    %569 = vmatmul.bf16.gmra.mxu0 %v260
    %v570 = vpop.f32.mrf.mxu0
    %v571 = vadd.f32 %v131, %v570
    %v572 = vpop.f32.mrf.mxu0
    %v573 = vadd.f32 %v131, %v572
    %574 = vmatmul.bf16.gmra.mxu0 %v265
    %v575 = vpop.f32.mrf.mxu0
    %v576 = vadd.f32 %v131, %v575
    %v577 = vpop.f32.mrf.mxu0
    %v578 = vadd.f32 %v131, %v577
    %579 = vmatmul.bf16.gmra.mxu0 %v270
    %v580 = vpop.f32.mrf.mxu0
    %v581 = vadd.f32 %v131, %v580
    %v582 = vpop.f32.mrf.mxu0
    %v583 = vadd.f32 %v131, %v582
    %584 = vmatmul.bf16.gmra.mxu0 %v275
    %v585 = vpop.f32.mrf.mxu0
    %v586 = vadd.f32 %v131, %v585
    %v587 = vpop.f32.mrf.mxu0
    %v588 = vadd.f32 %v131, %v587
    %589 = vdwg.mxu0
    %590 = vmatpush.bf16.msra.mxu0 %v467
    %591 = vmatpush.bf16.msra.mxu0 %v466
    %592 = vmatpush.bf16.msra.mxu0 %v465
    %593 = vmatpush.bf16.msra.mxu0 %v464
    %594 = vmatpush.bf16.msra.mxu0 %v463
    %595 = vmatpush.bf16.msra.mxu0 %v462
    %596 = vmatpush.bf16.msra.mxu0 %v461
    %597 = vmatpush.bf16.msra.mxu0 %v460
    %598 = vmatmul.bf16.gmra.mxu0 %v246
    %v599 = vpop.f32.mrf.mxu0
    %v600 = vadd.f32 %v556, %v599
    %v601 = vpop.f32.mrf.mxu0
    %v602 = vadd.f32 %v558, %v601
    %603 = vmatmul.bf16.gmra.mxu0 %v251
    %v604 = vpop.f32.mrf.mxu0
    %v605 = vadd.f32 %v561, %v604
    %v606 = vpop.f32.mrf.mxu0
    %v607 = vadd.f32 %v563, %v606
    %608 = vmatmul.bf16.gmra.mxu0 %v256
    %v609 = vpop.f32.mrf.mxu0
    %v610 = vadd.f32 %v566, %v609
    %v611 = vpop.f32.mrf.mxu0
    %v612 = vadd.f32 %v568, %v611
    %613 = vmatmul.bf16.gmra.mxu0 %v261
    %v614 = vpop.f32.mrf.mxu0
    %v615 = vadd.f32 %v571, %v614
    %v616 = vpop.f32.mrf.mxu0
    %v617 = vadd.f32 %v573, %v616
    %618 = vmatmul.bf16.gmra.mxu0 %v266
    %v619 = vpop.f32.mrf.mxu0
    %v620 = vadd.f32 %v576, %v619
    %v621 = vpop.f32.mrf.mxu0
    %v622 = vadd.f32 %v578, %v621
    %623 = vmatmul.bf16.gmra.mxu0 %v271
    %v624 = vpop.f32.mrf.mxu0
    %v625 = vadd.f32 %v581, %v624
    %v626 = vpop.f32.mrf.mxu0
    %v627 = vadd.f32 %v583, %v626
    %628 = vmatmul.bf16.gmra.mxu0 %v276
    %v629 = vpop.f32.mrf.mxu0
    %v630 = vadd.f32 %v586, %v629
    %v631 = vpop.f32.mrf.mxu0
    %v632 = vadd.f32 %v588, %v631
    %633 = vdwg.mxu0
    %634 = vmatpush.bf16.msra.mxu0 %v475
    %635 = vmatpush.bf16.msra.mxu0 %v474
    %636 = vmatpush.bf16.msra.mxu0 %v473
    %637 = vmatpush.bf16.msra.mxu0 %v472
    %638 = vmatpush.bf16.msra.mxu0 %v471
    %639 = vmatpush.bf16.msra.mxu0 %v470
    %640 = vmatpush.bf16.msra.mxu0 %v469
    %641 = vmatpush.bf16.msra.mxu0 %v468
    %642 = vmatmul.bf16.gmra.mxu0 %v247
    %v643 = vpop.f32.mrf.mxu0
    %v644 = vadd.f32 %v600, %v643
    %v645 = vpop.f32.mrf.mxu0
    %v646 = vadd.f32 %v602, %v645
    %647 = vmatmul.bf16.gmra.mxu0 %v252
    %v648 = vpop.f32.mrf.mxu0
    %v649 = vadd.f32 %v605, %v648
    %v650 = vpop.f32.mrf.mxu0
    %v651 = vadd.f32 %v607, %v650
    %652 = vmatmul.bf16.gmra.mxu0 %v257
    %v653 = vpop.f32.mrf.mxu0
    %v654 = vadd.f32 %v610, %v653
    %v655 = vpop.f32.mrf.mxu0
    %v656 = vadd.f32 %v612, %v655
    %657 = vmatmul.bf16.gmra.mxu0 %v262
    %v658 = vpop.f32.mrf.mxu0
    %v659 = vadd.f32 %v615, %v658
    %v660 = vpop.f32.mrf.mxu0
    %v661 = vadd.f32 %v617, %v660
    %662 = vmatmul.bf16.gmra.mxu0 %v267
    %v663 = vpop.f32.mrf.mxu0
    %v664 = vadd.f32 %v620, %v663
    %v665 = vpop.f32.mrf.mxu0
    %v666 = vadd.f32 %v622, %v665
    %667 = vmatmul.bf16.gmra.mxu0 %v272
    %v668 = vpop.f32.mrf.mxu0
    %v669 = vadd.f32 %v625, %v668
    %v670 = vpop.f32.mrf.mxu0
    %v671 = vadd.f32 %v627, %v670
    %672 = vmatmul.bf16.gmra.mxu0 %v277
    %v673 = vpop.f32.mrf.mxu0
    %v674 = vadd.f32 %v630, %v673
    %v675 = vpop.f32.mrf.mxu0
    %v676 = vadd.f32 %v632, %v675
    %677 = vdwg.mxu0
    %678 = vmatpush.bf16.msra.mxu0 %v483
    %679 = vmatpush.bf16.msra.mxu0 %v482
    %680 = vmatpush.bf16.msra.mxu0 %v481
    %681 = vmatpush.bf16.msra.mxu0 %v480
    %682 = vmatpush.bf16.msra.mxu0 %v479
    %683 = vmatpush.bf16.msra.mxu0 %v478
    %684 = vmatpush.bf16.msra.mxu0 %v477
    %685 = vmatpush.bf16.msra.mxu0 %v476
    %686 = vmatmul.bf16.gmra.mxu0 %v248
    %v687 = vpop.f32.mrf.mxu0
    %v688 = vadd.f32 %v644, %v687
    %v689 = vpop.f32.mrf.mxu0
    %v690 = vadd.f32 %v646, %v689
    %691 = vmatmul.bf16.gmra.mxu0 %v253
    %v692 = vpop.f32.mrf.mxu0
    %v693 = vadd.f32 %v649, %v692
    %v694 = vpop.f32.mrf.mxu0
    %v695 = vadd.f32 %v651, %v694
    %696 = vmatmul.bf16.gmra.mxu0 %v258
    %v697 = vpop.f32.mrf.mxu0
    %v698 = vadd.f32 %v654, %v697
    %v699 = vpop.f32.mrf.mxu0
    %v700 = vadd.f32 %v656, %v699
    %701 = vmatmul.bf16.gmra.mxu0 %v263
    %v702 = vpop.f32.mrf.mxu0
    %v703 = vadd.f32 %v659, %v702
    %v704 = vpop.f32.mrf.mxu0
    %v705 = vadd.f32 %v661, %v704
    %706 = vmatmul.bf16.gmra.mxu0 %v268
    %v707 = vpop.f32.mrf.mxu0
    %v708 = vadd.f32 %v664, %v707
    %v709 = vpop.f32.mrf.mxu0
    %v710 = vadd.f32 %v666, %v709
    %711 = vmatmul.bf16.gmra.mxu0 %v273
    %v712 = vpop.f32.mrf.mxu0
    %v713 = vadd.f32 %v669, %v712
    %v714 = vpop.f32.mrf.mxu0
    %v715 = vadd.f32 %v671, %v714
    %716 = vmatmul.bf16.gmra.mxu0 %v278
    %v717 = vpop.f32.mrf.mxu0
    %v718 = vadd.f32 %v674, %v717
    %v719 = vpop.f32.mrf.mxu0
    %v720 = vadd.f32 %v676, %v719
    %721 = vdwg.mxu0
    %722 = vmatpush.bf16.msra.mxu0 0
    %723 = vmatpush.bf16.msra.mxu0 0
    %724 = vmatpush.bf16.msra.mxu0 0
    %725 = vmatpush.bf16.msra.mxu0 0
    %726 = vmatpush.bf16.msra.mxu0 %v487
    %727 = vmatpush.bf16.msra.mxu0 %v486
    %728 = vmatpush.bf16.msra.mxu0 %v485
    %729 = vmatpush.bf16.msra.mxu0 %v484
    %730 = vmatmul.bf16.gmra.mxu0 %v526
    %v731 = vpop.f32.mrf.mxu0
    %v732 = vadd.f32 %v688, %v731
    %v733 = vpop.f32.mrf.mxu0
    %v734 = vadd.f32 %v690, %v733
    %735 = vmatmul.bf16.gmra.mxu0 %v529
    %v736 = vpop.f32.mrf.mxu0
    %v737 = vadd.f32 %v693, %v736
    %v738 = vpop.f32.mrf.mxu0
    %v739 = vadd.f32 %v695, %v738
    %740 = vmatmul.bf16.gmra.mxu0 %v532
    %v741 = vpop.f32.mrf.mxu0
    %v742 = vadd.f32 %v698, %v741
    %v743 = vpop.f32.mrf.mxu0
    %v744 = vadd.f32 %v700, %v743
    %745 = vmatmul.bf16.gmra.mxu0 %v535
    %v746 = vpop.f32.mrf.mxu0
    %v747 = vadd.f32 %v703, %v746
    %v748 = vpop.f32.mrf.mxu0
    %v749 = vadd.f32 %v705, %v748
    %750 = vmatmul.bf16.gmra.mxu0 %v538
    %v751 = vpop.f32.mrf.mxu0
    %v752 = vadd.f32 %v708, %v751
    %v753 = vpop.f32.mrf.mxu0
    %v754 = vadd.f32 %v710, %v753
    %755 = vmatmul.bf16.gmra.mxu0 %v541
    %v756 = vpop.f32.mrf.mxu0
    %v757 = vadd.f32 %v713, %v756
    %v758 = vpop.f32.mrf.mxu0
    %v759 = vadd.f32 %v715, %v758
    %760 = vmatmul.bf16.gmra.mxu0 %v544
    %v761 = vpop.f32.mrf.mxu0
    %v762 = vadd.f32 %v718, %v761
    %v763 = vpop.f32.mrf.mxu0
    %v764 = vadd.f32 %v720, %v763
    %765 = vdwg.mxu0
    %v766 = vmax.f32 %v732, 0.0
    %v767 = vmax.f32 %v734, 0.0
    %v768 = vmax.f32 %v737, 0.0
    %v769 = vmax.f32 %v739, 0.0
    %v770 = vmax.f32 %v742, 0.0
    %v771 = vmax.f32 %v744, 0.0
    %v772 = vmax.f32 %v747, 0.0
    %v773 = vmax.f32 %v749, 0.0
    %v774 = vmax.f32 %v752, 0.0
    %v775 = vmax.f32 %v754, 0.0
    %v776 = vmax.f32 %v757, 0.0
    %v777 = vmax.f32 %v759, 0.0
    %v778 = vmax.f32 %v762, 0.0
    %v779 = vmax.f32 %v764, 0.0
    %v780 = vpack.c.bf16 %v766, %v766
    %v781 = vpack.c.bf16 %v767, %v767
    %v782 = vpack.c.bf16 %v768, %v768
    %v783 = vpack.c.bf16 %v769, %v769
    %v784 = vpack.c.bf16 %v770, %v770
    %v785 = vpack.c.bf16 %v771, %v771
    %v786 = vpack.c.bf16 %v772, %v772
    %v787 = vpack.c.bf16 %v773, %v773
    %v788 = vpack.c.bf16 %v774, %v774
    %v789 = vpack.c.bf16 %v775, %v775
    %v790 = vpack.c.bf16 %v776, %v776
    %v791 = vpack.c.bf16 %v777, %v777
    %v792 = vpack.c.bf16 %v778, %v778
    %v793 = vpack.c.bf16 %v779, %v779
    %vm794 = vcmask 519168
    %795 = vst.msk [vmem:[#allocation2] sm:$0xf] %vm794, %v780
    %796 = vst.msk [vmem:[#allocation2 + $0x4] sm:$0xf] %vm794, %v781
    %797 = vst.msk [vmem:[#allocation2 + $0x8] sm:$0xf] %vm794, %v782
    %798 = vst.msk [vmem:[#allocation2 + $0xc] sm:$0xf] %vm794, %v783
    %799 = vst.msk [vmem:[#allocation2 + $0x10] sm:$0xf] %vm794, %v784
    %800 = vst.msk [vmem:[#allocation2 + $0x14] sm:$0xf] %vm794, %v785
    %801 = vst.msk [vmem:[#allocation2 + $0x18] sm:$0xf] %vm794, %v786
    %802 = vst.msk [vmem:[#allocation2 + $0x1c] sm:$0xf] %vm794, %v787
    %803 = vst.msk [vmem:[#allocation2 + $0x20] sm:$0xf] %vm794, %v788
    %804 = vst.msk [vmem:[#allocation2 + $0x24] sm:$0xf] %vm794, %v789
    %805 = vst.msk [vmem:[#allocation2 + $0x28] sm:$0xf] %vm794, %v790
    %806 = vst.msk [vmem:[#allocation2 + $0x2c] sm:$0xf] %vm794, %v791
    %807 = vst.msk [vmem:[#allocation2 + $0x30] sm:$0xf] %vm794, %v792
    %808 = vst.msk [vmem:[#allocation2 + $0x34] sm:$0xf] %vm794, %v793
    // Predicated region
    $region14: #{dqn_forward.6} parent=1 // pred_check
      _
    $region15: #{dqn_forward.6} parent=1 // pred_check_branch
      %810 = sbr.rel (0) target = $region17
    $region16: #{dqn_forward.6} parent=1 // pred_region
      // Predicated region
      $region18: #{dqn_forward.6} parent=16 // pred_check
        _
      $region19: #{dqn_forward.6} parent=16 // pred_check_branch
        %812 = sbr.rel (0) target = $region21
      $region20: #{dqn_forward.6} parent=16 // pred_region
        // Predicated region
        $region22: #{dqn_forward.6} parent=20 // pred_check
          _
        $region23: #{dqn_forward.6} parent=20 // pred_check_branch
          %814 = sbr.rel target = $region25
        $region24: #{dqn_forward.6} parent=20 // pred_region
          // Predicated region
          $region37: #{dqn_forward.6} parent=24 // pred_check
            _
          $region38: #{dqn_forward.6} parent=24 // pred_check_branch
            %854 = sbr.rel (0) target = $region40
          $region39: #{dqn_forward.6} parent=24 // pred_region
            loop: start=0, step=1, limit=1
            $region41: #{dqn_forward.6} parent=39 // loop_pre_header
              _
            $region42: #{dqn_forward.6} parent=39 // loop_header
              %s856 = sphi 0, %s860
              %p857 = scmp.ge.s32.totalorder %s856, 1
              %s861 = sphi [#allocation2], [#allocation2]
              %s862 = sphi %s3, %s3
            $region43: #{dqn_forward.6} parent=39 // loop_header_branch
              %859 = sbr.rel (%p857) target = $region47
            $region44: #{dqn_forward.6} parent=39 // loop_body
              _
            $region45: #{dqn_forward.6} parent=39 // loop_footer
              %s860 = sadd.s32 1, %s856
            $region46: #{dqn_forward.6} parent=39 // loop_footer_branch
              %855 = sbr.rel target = $region42
            $region47: #{dqn_forward.6} parent=39 // loop_exit
              _
            %s864 = ssub.s32 16, 1
            loop: start=0, step=1, limit=1
            $region48: #{dqn_forward.6} parent=39 // loop_pre_header
              _
            $region49: #{dqn_forward.6} parent=39 // loop_header
              %s866 = sphi 0, %s870
              %p867 = scmp.ge.s32.totalorder %s866, 1
              %s871 = sphi [#allocation2], [#allocation2]
              %s872 = sphi %s3, %s3
            $region50: #{dqn_forward.6} parent=39 // loop_header_branch
              %869 = sbr.rel (%p867) target = $region54
            $region51: #{dqn_forward.6} parent=39 // loop_body
              %v873 = vld [vmem:[%s871] sm:%s864]
              %874 = vst [vmem:[%s872] sm:%s864] %v873
              %v875 = vld [vmem:[%s871 + $0x4] sm:%s864]
              %876 = vst [vmem:[%s872 + $0x4] sm:%s864] %v875
              %v877 = vld [vmem:[%s871 + $0x8] sm:%s864]
              %878 = vst [vmem:[%s872 + $0x8] sm:%s864] %v877
              %v879 = vld [vmem:[%s871 + $0xc] sm:%s864]
              %880 = vst [vmem:[%s872 + $0xc] sm:%s864] %v879
              %v881 = vld [vmem:[%s871 + $0x10] sm:%s864]
              %882 = vst [vmem:[%s872 + $0x10] sm:%s864] %v881
              %v883 = vld [vmem:[%s871 + $0x14] sm:%s864]
              %884 = vst [vmem:[%s872 + $0x14] sm:%s864] %v883
              %v885 = vld [vmem:[%s871 + $0x18] sm:%s864]
              %886 = vst [vmem:[%s872 + $0x18] sm:%s864] %v885
              %v887 = vld [vmem:[%s871 + $0x1c] sm:%s864]
              %888 = vst [vmem:[%s872 + $0x1c] sm:%s864] %v887
              %v889 = vld [vmem:[%s871 + $0x20] sm:%s864]
              %890 = vst [vmem:[%s872 + $0x20] sm:%s864] %v889
              %v891 = vld [vmem:[%s871 + $0x24] sm:%s864]
              %892 = vst [vmem:[%s872 + $0x24] sm:%s864] %v891
              %v893 = vld [vmem:[%s871 + $0x28] sm:%s864]
              %894 = vst [vmem:[%s872 + $0x28] sm:%s864] %v893
              %v895 = vld [vmem:[%s871 + $0x2c] sm:%s864]
              %896 = vst [vmem:[%s872 + $0x2c] sm:%s864] %v895
              %v897 = vld [vmem:[%s871 + $0x30] sm:%s864]
              %898 = vst [vmem:[%s872 + $0x30] sm:%s864] %v897
            $region52: #{dqn_forward.6} parent=39 // loop_footer
              %s870 = sadd.s32 1, %s866
            $region53: #{dqn_forward.6} parent=39 // loop_footer_branch
              %865 = sbr.rel target = $region49
            $region54: #{dqn_forward.6} parent=39 // loop_exit
              _
          $region40: #{dqn_forward.6} parent=24 // pred_fallthru
            _
        $region25: #{dqn_forward.6} parent=20 // pred_fallthru
          _
        // Predicated region
        $region26: #{dqn_forward.6} parent=20 // pred_check
          _
        $region27: #{dqn_forward.6} parent=20 // pred_check_branch
          %816 = sbr.rel (0) target = $region29
        $region28: #{dqn_forward.6} parent=20 // pred_region
          %s818 = ssub.s32 16, 1
          loop: start=0, step=1, limit=1
          $region30: #{dqn_forward.6} parent=28 // loop_pre_header
            _
          $region31: #{dqn_forward.6} parent=28 // loop_header
            %s820 = sphi 0, %s824
            %p821 = scmp.ge.s32.totalorder %s820, 1
            %s825 = sphi [#allocation2], [#allocation2]
            %s826 = sphi %s3, %s3
          $region32: #{dqn_forward.6} parent=28 // loop_header_branch
            %823 = sbr.rel (%p821) target = $region36
          $region33: #{dqn_forward.6} parent=28 // loop_body
            %v827 = vld [vmem:[%s825] sm:%s818]
            %828 = vst [vmem:[%s826] sm:%s818] %v827
            %v829 = vld [vmem:[%s825 + $0x4] sm:%s818]
            %830 = vst [vmem:[%s826 + $0x4] sm:%s818] %v829
            %v831 = vld [vmem:[%s825 + $0x8] sm:%s818]
            %832 = vst [vmem:[%s826 + $0x8] sm:%s818] %v831
            %v833 = vld [vmem:[%s825 + $0xc] sm:%s818]
            %834 = vst [vmem:[%s826 + $0xc] sm:%s818] %v833
            %v835 = vld [vmem:[%s825 + $0x10] sm:%s818]
            %836 = vst [vmem:[%s826 + $0x10] sm:%s818] %v835
            %v837 = vld [vmem:[%s825 + $0x14] sm:%s818]
            %838 = vst [vmem:[%s826 + $0x14] sm:%s818] %v837
            %v839 = vld [vmem:[%s825 + $0x18] sm:%s818]
            %840 = vst [vmem:[%s826 + $0x18] sm:%s818] %v839
            %v841 = vld [vmem:[%s825 + $0x1c] sm:%s818]
            %842 = vst [vmem:[%s826 + $0x1c] sm:%s818] %v841
            %v843 = vld [vmem:[%s825 + $0x20] sm:%s818]
            %844 = vst [vmem:[%s826 + $0x20] sm:%s818] %v843
            %v845 = vld [vmem:[%s825 + $0x24] sm:%s818]
            %846 = vst [vmem:[%s826 + $0x24] sm:%s818] %v845
            %v847 = vld [vmem:[%s825 + $0x28] sm:%s818]
            %848 = vst [vmem:[%s826 + $0x28] sm:%s818] %v847
            %v849 = vld [vmem:[%s825 + $0x2c] sm:%s818]
            %850 = vst [vmem:[%s826 + $0x2c] sm:%s818] %v849
            %v851 = vld [vmem:[%s825 + $0x30] sm:%s818]
            %852 = vst [vmem:[%s826 + $0x30] sm:%s818] %v851
          $region34: #{dqn_forward.6} parent=28 // loop_footer
            %s824 = sadd.s32 1, %s820
          $region35: #{dqn_forward.6} parent=28 // loop_footer_branch
            %819 = sbr.rel target = $region31
          $region36: #{dqn_forward.6} parent=28 // loop_exit
            _
        $region29: #{dqn_forward.6} parent=20 // pred_fallthru
          _
      $region21: #{dqn_forward.6} parent=16 // pred_fallthru
        _
      %899 = vnop
    $region17: #{dqn_forward.6} parent=1 // pred_fallthru
      _
    // Predicated region
    $region55: #{dqn_forward.6} parent=1 // pred_check
      _
    $region56: #{dqn_forward.6} parent=1 // pred_check_branch
      %901 = sbr.rel (0) target = $region58
    $region57: #{dqn_forward.6} parent=1 // pred_region
      _
    $region58: #{dqn_forward.6} parent=1 // pred_fallthru
      _

// kernel: dqn_forward.7
$region0: #{dqn_forward.7}
  #allocation0 [shape = 'u32[]', space=smem, size = 0x4, offset = 0x4, fixed_abs, tag = 'smem constant byte address 0x4 - core index']
  #allocation1 [shape = 'u32[72,128]{1,0:T(1,128)}', space=vmem, size = 0x9000, scoped, tag = 'internal scratch']
  %s0 = inlined_call_operand.vmem [shape: bf16[2,3136], index: 0, kind: input, shape index: {}]
  %s1 = inlined_call_operand.vmem [shape: bf16[3136,512], index: 1, kind: input, shape index: {}]
  %s2 = inlined_call_operand.vmem [shape: f32[1,512], index: 2, kind: input, shape index: {}]
  %s3 = inlined_call_operand.vmem [shape: bf16[512,6], index: 3, kind: input, shape index: {}]
  %s4 = inlined_call_operand.vmem [shape: f32[1,6], index: 4, kind: input, shape index: {}]
  %s5 = inlined_call_operand.hbm [shape: f32[2,6], index: 5, kind: output, shape index: {}]
  %s6 = sld [smem:[#allocation0]]
  $region30: #{dqn_forward.7} parent=0
    _
  %s8 = ssub.s32 1, %s6
  %s9 = scalar_select 0, %s8, %s6
  $region1: #{dqn_forward.7} parent=0
    #allocation2 [shape = 'u8[8192]{0}', space=vmem, size = 0x2000, scoped, tag = 'output window, operand 0, single buffered']
    #allocation3 [shape = 's32[1]{0}', space=sflag, size = 0x4, scoped, tag = 'scoped memory for dqn_forward.7']
    %10 = vsyncpa [#allocation3], 0
    // Predicated region
    $region2: #{dqn_forward.7} parent=1 // pred_check
      _
    $region3: #{dqn_forward.7} parent=1 // pred_check_branch
      %12 = sbr.rel (0) target = $region5
    $region4: #{dqn_forward.7} parent=1 // pred_region
      _
    $region5: #{dqn_forward.7} parent=1 // pred_fallthru
      _
    // Predicated region
    $region6: #{dqn_forward.7} parent=1 // pred_check
      _
    $region7: #{dqn_forward.7} parent=1 // pred_check_branch
      %14 = sbr.rel (0) target = $region9
    $region8: #{dqn_forward.7} parent=1 // pred_region
      _
    $region9: #{dqn_forward.7} parent=1 // pred_fallthru
      _
    // Predicated region
    $region10: #{dqn_forward.7} parent=1 // pred_check
      _
    $region11: #{dqn_forward.7} parent=1 // pred_check_branch
      %16 = sbr.rel (0) target = $region13
    $region12: #{dqn_forward.7} parent=1 // pred_region
      _
    $region13: #{dqn_forward.7} parent=1 // pred_fallthru
      _
    // Predicated region
    $region14: #{dqn_forward.7} parent=1 // pred_check
      _
    $region15: #{dqn_forward.7} parent=1 // pred_check_branch
      %18 = sbr.rel (0) target = $region17
    $region16: #{dqn_forward.7} parent=1 // pred_region
      _
    $region17: #{dqn_forward.7} parent=1 // pred_fallthru
      _
    // Predicated region
    $region18: #{dqn_forward.7} parent=1 // pred_check
      _
    $region19: #{dqn_forward.7} parent=1 // pred_check_branch
      %20 = sbr.rel (0) target = $region21
    $region20: #{dqn_forward.7} parent=1 // pred_region
      _
    $region21: #{dqn_forward.7} parent=1 // pred_fallthru
      _
    %v22 = vld [vmem:[%s0] sm:$0xff]
    %v23 = vld [vmem:[%s0 + $0x8] sm:$0xff]
    %v24 = vld [vmem:[%s0 + $0x10] sm:$0xff]
    %v25 = vld [vmem:[%s0 + $0x18] sm:$0x1]
    %v26 = vld [vmem:[%s0 + $0x19] sm:$0xff]
    %v27 = vld [vmem:[%s0 + $0x21] sm:$0xff]
    %v28 = vld [vmem:[%s0 + $0x29] sm:$0xff]
    %v29 = vld [vmem:[%s0 + $0x31] sm:$0x1]
    %v30 = vld [vmem:[%s0 + $0x32] sm:$0xff]
    %v31 = vld [vmem:[%s0 + $0x3a] sm:$0xff]
    %v32 = vld [vmem:[%s0 + $0x42] sm:$0xff]
    %v33 = vld [vmem:[%s0 + $0x4a] sm:$0x1]
    %v34 = vld [vmem:[%s0 + $0x4b] sm:$0xff]
    %v35 = vld [vmem:[%s0 + $0x53] sm:$0xff]
    %v36 = vld [vmem:[%s0 + $0x5b] sm:$0xff]
    %v37 = vld [vmem:[%s0 + $0x63] sm:$0x1]
    %v38 = vld [vmem:[%s0 + $0x64] sm:$0xff]
    %v39 = vld [vmem:[%s0 + $0x6c] sm:$0xff]
    %v40 = vld [vmem:[%s0 + $0x74] sm:$0xff]
    %v41 = vld [vmem:[%s0 + $0x7c] sm:$0x1]
    %v42 = vld [vmem:[%s0 + $0x7d] sm:$0xff]
    %v43 = vld [vmem:[%s0 + $0x85] sm:$0xff]
    %v44 = vld [vmem:[%s0 + $0x8d] sm:$0xff]
    %v45 = vld [vmem:[%s0 + $0x95] sm:$0x1]
    %v46 = vld [vmem:[%s0 + $0x96] sm:$0xff]
    %v47 = vld [vmem:[%s0 + $0x9e] sm:$0xff]
    %v48 = vld [vmem:[%s0 + $0xa6] sm:$0xff]
    %v49 = vld [vmem:[%s0 + $0xae] sm:$0x1]
    %v50 = vld [vmem:[%s0 + $0xaf] sm:$0xff]
    %v51 = vld [vmem:[%s0 + $0xb7] sm:$0xff]
    %v52 = vld [vmem:[%s0 + $0xbf] sm:$0xff]
    %v53 = vld [vmem:[%s0 + $0xc7] sm:$0x1]
    %v54 = vld [vmem:[%s1] sm:$0xff]
    %v55 = vld [vmem:[%s1 + $0x8] sm:$0xff]
    %v56 = vld [vmem:[%s1 + $0x10] sm:$0xff]
    %v57 = vld [vmem:[%s1 + $0x18] sm:$0xff]
    %v58 = vld [vmem:[%s1 + $0x20] sm:$0xff]
    %v59 = vld [vmem:[%s1 + $0x28] sm:$0xff]
    %v60 = vld [vmem:[%s1 + $0x30] sm:$0xff]
    %v61 = vld [vmem:[%s1 + $0x38] sm:$0xff]
    %v62 = vld [vmem:[%s1 + $0x40] sm:$0xff]
    %v63 = vld [vmem:[%s1 + $0x48] sm:$0xff]
    %v64 = vld [vmem:[%s1 + $0x50] sm:$0xff]
    %v65 = vld [vmem:[%s1 + $0x58] sm:$0xff]
    %v66 = vld [vmem:[%s1 + $0x60] sm:$0xff]
    %v67 = vld [vmem:[%s1 + $0x68] sm:$0xff]
    %v68 = vld [vmem:[%s1 + $0x70] sm:$0xff]
    %v69 = vld [vmem:[%s1 + $0x78] sm:$0xff]
    %v70 = vld [vmem:[%s1 + $0x80] sm:$0xff]
    %v71 = vld [vmem:[%s1 + $0x88] sm:$0xff]
    %v72 = vld [vmem:[%s1 + $0x90] sm:$0xff]
    %v73 = vld [vmem:[%s1 + $0x98] sm:$0xff]
    %v74 = vld [vmem:[%s1 + $0xa0] sm:$0xff]
    %v75 = vld [vmem:[%s1 + $0xa8] sm:$0xff]
    %v76 = vld [vmem:[%s1 + $0xb0] sm:$0xff]
    %v77 = vld [vmem:[%s1 + $0xb8] sm:$0xff]
    %v78 = vld [vmem:[%s1 + $0xc0] sm:$0xff]
    %v79 = vld [vmem:[%s1 + $0xc8] sm:$0xff]
    %v80 = vld [vmem:[%s1 + $0xd0] sm:$0xff]
    %v81 = vld [vmem:[%s1 + $0xd8] sm:$0xff]
    %v82 = vld [vmem:[%s1 + $0xe0] sm:$0xff]
    %v83 = vld [vmem:[%s1 + $0xe8] sm:$0xff]
    %v84 = vld [vmem:[%s1 + $0xf0] sm:$0xff]
    %v85 = vld [vmem:[%s1 + $0xf8] sm:$0xff]
    %v86 = vld [vmem:[%s1 + $0x100] sm:$0xff]
    %v87 = vld [vmem:[%s1 + $0x108] sm:$0xff]
    %v88 = vld [vmem:[%s1 + $0x110] sm:$0xff]
    %v89 = vld [vmem:[%s1 + $0x118] sm:$0xff]
    %v90 = vld [vmem:[%s1 + $0x120] sm:$0xff]
    %v91 = vld [vmem:[%s1 + $0x128] sm:$0xff]
    %v92 = vld [vmem:[%s1 + $0x130] sm:$0xff]
    %v93 = vld [vmem:[%s1 + $0x138] sm:$0xff]
    %v94 = vld [vmem:[%s1 + $0x140] sm:$0xff]
    %v95 = vld [vmem:[%s1 + $0x148] sm:$0xff]
    %v96 = vld [vmem:[%s1 + $0x150] sm:$0xff]
    %v97 = vld [vmem:[%s1 + $0x158] sm:$0xff]
    %v98 = vld [vmem:[%s1 + $0x160] sm:$0xff]
    %v99 = vld [vmem:[%s1 + $0x168] sm:$0xff]
    %v100 = vld [vmem:[%s1 + $0x170] sm:$0xff]
    %v101 = vld [vmem:[%s1 + $0x178] sm:$0xff]
    %v102 = vld [vmem:[%s1 + $0x180] sm:$0xff]
    %v103 = vld [vmem:[%s1 + $0x188] sm:$0xff]
    %v104 = vld [vmem:[%s1 + $0x190] sm:$0xff]
    %v105 = vld [vmem:[%s1 + $0x198] sm:$0xff]
    %v106 = vld [vmem:[%s1 + $0x1a0] sm:$0xff]
    %v107 = vld [vmem:[%s1 + $0x1a8] sm:$0xff]
    %v108 = vld [vmem:[%s1 + $0x1b0] sm:$0xff]
    %v109 = vld [vmem:[%s1 + $0x1b8] sm:$0xff]
    %v110 = vld [vmem:[%s1 + $0x1c0] sm:$0xff]
    %v111 = vld [vmem:[%s1 + $0x1c8] sm:$0xff]
    %v112 = vld [vmem:[%s1 + $0x1d0] sm:$0xff]
    %v113 = vld [vmem:[%s1 + $0x1d8] sm:$0xff]
    %v114 = vld [vmem:[%s1 + $0x1e0] sm:$0xff]
    %v115 = vld [vmem:[%s1 + $0x1e8] sm:$0xff]
    %v116 = vld [vmem:[%s1 + $0x1f0] sm:$0xff]
    %v117 = vld [vmem:[%s1 + $0x1f8] sm:$0xff]
    %v118 = vld [vmem:[%s1 + $0x200] sm:$0xff]
    %v119 = vld [vmem:[%s1 + $0x208] sm:$0xff]
    %v120 = vld [vmem:[%s1 + $0x210] sm:$0xff]
    %v121 = vld [vmem:[%s1 + $0x218] sm:$0xff]
    %v122 = vld [vmem:[%s1 + $0x220] sm:$0xff]
    %v123 = vld [vmem:[%s1 + $0x228] sm:$0xff]
    %v124 = vld [vmem:[%s1 + $0x230] sm:$0xff]
    %v125 = vld [vmem:[%s1 + $0x238] sm:$0xff]
    %v126 = vld [vmem:[%s1 + $0x240] sm:$0xff]
    %v127 = vld [vmem:[%s1 + $0x248] sm:$0xff]
    %v128 = vld [vmem:[%s1 + $0x250] sm:$0xff]
    %v129 = vld [vmem:[%s1 + $0x258] sm:$0xff]
    %v130 = vld [vmem:[%s1 + $0x260] sm:$0xff]
    %v131 = vld [vmem:[%s1 + $0x268] sm:$0xff]
    %v132 = vld [vmem:[%s1 + $0x270] sm:$0xff]
    %v133 = vld [vmem:[%s1 + $0x278] sm:$0xff]
    %v134 = vld [vmem:[%s1 + $0x280] sm:$0xff]
    %v135 = vld [vmem:[%s1 + $0x288] sm:$0xff]
    %v136 = vld [vmem:[%s1 + $0x290] sm:$0xff]
    %v137 = vld [vmem:[%s1 + $0x298] sm:$0xff]
    %v138 = vld [vmem:[%s1 + $0x2a0] sm:$0xff]
    %v139 = vld [vmem:[%s1 + $0x2a8] sm:$0xff]
    %v140 = vld [vmem:[%s1 + $0x2b0] sm:$0xff]
    %v141 = vld [vmem:[%s1 + $0x2b8] sm:$0xff]
    %v142 = vld [vmem:[%s1 + $0x2c0] sm:$0xff]
    %v143 = vld [vmem:[%s1 + $0x2c8] sm:$0xff]
    %v144 = vld [vmem:[%s1 + $0x2d0] sm:$0xff]
    %v145 = vld [vmem:[%s1 + $0x2d8] sm:$0xff]
    %v146 = vld [vmem:[%s1 + $0x2e0] sm:$0xff]
    %v147 = vld [vmem:[%s1 + $0x2e8] sm:$0xff]
    %v148 = vld [vmem:[%s1 + $0x2f0] sm:$0xff]
    %v149 = vld [vmem:[%s1 + $0x2f8] sm:$0xff]
    %v150 = vld [vmem:[%s1 + $0x300] sm:$0xff]
    %v151 = vld [vmem:[%s1 + $0x308] sm:$0xff]
    %v152 = vld [vmem:[%s1 + $0x310] sm:$0xff]
    %v153 = vld [vmem:[%s1 + $0x318] sm:$0xff]
    %v154 = vld [vmem:[%s1 + $0x320] sm:$0xff]
    %v155 = vld [vmem:[%s1 + $0x328] sm:$0xff]
    %v156 = vld [vmem:[%s1 + $0x330] sm:$0xff]
    %v157 = vld [vmem:[%s1 + $0x338] sm:$0xff]
    %v158 = vld [vmem:[%s1 + $0x340] sm:$0xff]
    %v159 = vld [vmem:[%s1 + $0x348] sm:$0xff]
    %v160 = vld [vmem:[%s1 + $0x350] sm:$0xff]
    %v161 = vld [vmem:[%s1 + $0x358] sm:$0xff]
    %v162 = vld [vmem:[%s1 + $0x360] sm:$0xff]
    %v163 = vld [vmem:[%s1 + $0x368] sm:$0xff]
    %v164 = vld [vmem:[%s1 + $0x370] sm:$0xff]
    %v165 = vld [vmem:[%s1 + $0x378] sm:$0xff]
    %v166 = vld [vmem:[%s1 + $0x380] sm:$0xff]
    %v167 = vld [vmem:[%s1 + $0x388] sm:$0xff]
    %v168 = vld [vmem:[%s1 + $0x390] sm:$0xff]
    %v169 = vld [vmem:[%s1 + $0x398] sm:$0xff]
    %v170 = vld [vmem:[%s1 + $0x3a0] sm:$0xff]
    %v171 = vld [vmem:[%s1 + $0x3a8] sm:$0xff]
    %v172 = vld [vmem:[%s1 + $0x3b0] sm:$0xff]
    %v173 = vld [vmem:[%s1 + $0x3b8] sm:$0xff]
    %v174 = vld [vmem:[%s1 + $0x3c0] sm:$0xff]
    %v175 = vld [vmem:[%s1 + $0x3c8] sm:$0xff]
    %v176 = vld [vmem:[%s1 + $0x3d0] sm:$0xff]
    %v177 = vld [vmem:[%s1 + $0x3d8] sm:$0xff]
    %v178 = vld [vmem:[%s1 + $0x3e0] sm:$0xff]
    %v179 = vld [vmem:[%s1 + $0x3e8] sm:$0xff]
    %v180 = vld [vmem:[%s1 + $0x3f0] sm:$0xff]
    %v181 = vld [vmem:[%s1 + $0x3f8] sm:$0xff]
    %v182 = vld [vmem:[%s1 + $0x400] sm:$0xff]
    %v183 = vld [vmem:[%s1 + $0x408] sm:$0xff]
    %v184 = vld [vmem:[%s1 + $0x410] sm:$0xff]
    %v185 = vld [vmem:[%s1 + $0x418] sm:$0xff]
    %v186 = vld [vmem:[%s1 + $0x420] sm:$0xff]
    %v187 = vld [vmem:[%s1 + $0x428] sm:$0xff]
    %v188 = vld [vmem:[%s1 + $0x430] sm:$0xff]
    %v189 = vld [vmem:[%s1 + $0x438] sm:$0xff]
    %v190 = vld [vmem:[%s1 + $0x440] sm:$0xff]
    %v191 = vld [vmem:[%s1 + $0x448] sm:$0xff]
    %v192 = vld [vmem:[%s1 + $0x450] sm:$0xff]
    %v193 = vld [vmem:[%s1 + $0x458] sm:$0xff]
    %v194 = vld [vmem:[%s1 + $0x460] sm:$0xff]
    %v195 = vld [vmem:[%s1 + $0x468] sm:$0xff]
    %v196 = vld [vmem:[%s1 + $0x470] sm:$0xff]
    %v197 = vld [vmem:[%s1 + $0x478] sm:$0xff]
    %v198 = vld [vmem:[%s1 + $0x480] sm:$0xff]
    %v199 = vld [vmem:[%s1 + $0x488] sm:$0xff]
    %v200 = vld [vmem:[%s1 + $0x490] sm:$0xff]
    %v201 = vld [vmem:[%s1 + $0x498] sm:$0xff]
    %v202 = vld [vmem:[%s1 + $0x4a0] sm:$0xff]
    %v203 = vld [vmem:[%s1 + $0x4a8] sm:$0xff]
    %v204 = vld [vmem:[%s1 + $0x4b0] sm:$0xff]
    %v205 = vld [vmem:[%s1 + $0x4b8] sm:$0xff]
    %v206 = vld [vmem:[%s1 + $0x4c0] sm:$0xff]
    %v207 = vld [vmem:[%s1 + $0x4c8] sm:$0xff]
    %v208 = vld [vmem:[%s1 + $0x4d0] sm:$0xff]
    %v209 = vld [vmem:[%s1 + $0x4d8] sm:$0xff]
    %v210 = vld [vmem:[%s1 + $0x4e0] sm:$0xff]
    %v211 = vld [vmem:[%s1 + $0x4e8] sm:$0xff]
    %v212 = vld [vmem:[%s1 + $0x4f0] sm:$0xff]
    %v213 = vld [vmem:[%s1 + $0x4f8] sm:$0xff]
    %v214 = vld [vmem:[%s1 + $0x500] sm:$0xff]
    %v215 = vld [vmem:[%s1 + $0x508] sm:$0xff]
    %v216 = vld [vmem:[%s1 + $0x510] sm:$0xff]
    %v217 = vld [vmem:[%s1 + $0x518] sm:$0xff]
    %v218 = vld [vmem:[%s1 + $0x520] sm:$0xff]
    %v219 = vld [vmem:[%s1 + $0x528] sm:$0xff]
    %v220 = vld [vmem:[%s1 + $0x530] sm:$0xff]
    %v221 = vld [vmem:[%s1 + $0x538] sm:$0xff]
    %v222 = vld [vmem:[%s1 + $0x540] sm:$0xff]
    %v223 = vld [vmem:[%s1 + $0x548] sm:$0xff]
    %v224 = vld [vmem:[%s1 + $0x550] sm:$0xff]
    %v225 = vld [vmem:[%s1 + $0x558] sm:$0xff]
    %v226 = vld [vmem:[%s1 + $0x560] sm:$0xff]
    %v227 = vld [vmem:[%s1 + $0x568] sm:$0xff]
    %v228 = vld [vmem:[%s1 + $0x570] sm:$0xff]
    %v229 = vld [vmem:[%s1 + $0x578] sm:$0xff]
    %v230 = vld [vmem:[%s1 + $0x580] sm:$0xff]
    %v231 = vld [vmem:[%s1 + $0x588] sm:$0xff]
    %v232 = vld [vmem:[%s1 + $0x590] sm:$0xff]
    %v233 = vld [vmem:[%s1 + $0x598] sm:$0xff]
    %v234 = vld [vmem:[%s1 + $0x5a0] sm:$0xff]
    %v235 = vld [vmem:[%s1 + $0x5a8] sm:$0xff]
    %v236 = vld [vmem:[%s1 + $0x5b0] sm:$0xff]
    %v237 = vld [vmem:[%s1 + $0x5b8] sm:$0xff]
    %v238 = vld [vmem:[%s1 + $0x5c0] sm:$0xff]
    %v239 = vld [vmem:[%s1 + $0x5c8] sm:$0xff]
    %v240 = vld [vmem:[%s1 + $0x5d0] sm:$0xff]
    %v241 = vld [vmem:[%s1 + $0x5d8] sm:$0xff]
    %v242 = vld [vmem:[%s1 + $0x5e0] sm:$0xff]
    %v243 = vld [vmem:[%s1 + $0x5e8] sm:$0xff]
    %v244 = vld [vmem:[%s1 + $0x5f0] sm:$0xff]
    %v245 = vld [vmem:[%s1 + $0x5f8] sm:$0xff]
    %v246 = vld [vmem:[%s1 + $0x600] sm:$0xff]
    %v247 = vld [vmem:[%s1 + $0x608] sm:$0xff]
    %v248 = vld [vmem:[%s1 + $0x610] sm:$0xff]
    %v249 = vld [vmem:[%s1 + $0x618] sm:$0xff]
    %v250 = vld [vmem:[%s1 + $0x620] sm:$0xff]
    %v251 = vld [vmem:[%s1 + $0x628] sm:$0xff]
    %v252 = vld [vmem:[%s1 + $0x630] sm:$0xff]
    %v253 = vld [vmem:[%s1 + $0x638] sm:$0xff]
    %v254 = vld [vmem:[%s1 + $0x640] sm:$0xff]
    %v255 = vld [vmem:[%s1 + $0x648] sm:$0xff]
    %v256 = vld [vmem:[%s1 + $0x650] sm:$0xff]
    %v257 = vld [vmem:[%s1 + $0x658] sm:$0xff]
    %v258 = vld [vmem:[%s1 + $0x660] sm:$0xff]
    %v259 = vld [vmem:[%s1 + $0x668] sm:$0xff]
    %v260 = vld [vmem:[%s1 + $0x670] sm:$0xff]
    %v261 = vld [vmem:[%s1 + $0x678] sm:$0xff]
    %v262 = vld [vmem:[%s1 + $0x680] sm:$0xff]
    %v263 = vld [vmem:[%s1 + $0x688] sm:$0xff]
    %v264 = vld [vmem:[%s1 + $0x690] sm:$0xff]
    %v265 = vld [vmem:[%s1 + $0x698] sm:$0xff]
    %v266 = vld [vmem:[%s1 + $0x6a0] sm:$0xff]
    %v267 = vld [vmem:[%s1 + $0x6a8] sm:$0xff]
    %v268 = vld [vmem:[%s1 + $0x6b0] sm:$0xff]
    %v269 = vld [vmem:[%s1 + $0x6b8] sm:$0xff]
    %v270 = vld [vmem:[%s1 + $0x6c0] sm:$0xff]
    %v271 = vld [vmem:[%s1 + $0x6c8] sm:$0xff]
    %v272 = vld [vmem:[%s1 + $0x6d0] sm:$0xff]
    %v273 = vld [vmem:[%s1 + $0x6d8] sm:$0xff]
    %v274 = vld [vmem:[%s1 + $0x6e0] sm:$0xff]
    %v275 = vld [vmem:[%s1 + $0x6e8] sm:$0xff]
    %v276 = vld [vmem:[%s1 + $0x6f0] sm:$0xff]
    %v277 = vld [vmem:[%s1 + $0x6f8] sm:$0xff]
    %v278 = vld [vmem:[%s1 + $0x700] sm:$0xff]
    %v279 = vld [vmem:[%s1 + $0x708] sm:$0xff]
    %v280 = vld [vmem:[%s1 + $0x710] sm:$0xff]
    %v281 = vld [vmem:[%s1 + $0x718] sm:$0xff]
    %v282 = vld [vmem:[%s1 + $0x720] sm:$0xff]
    %v283 = vld [vmem:[%s1 + $0x728] sm:$0xff]
    %v284 = vld [vmem:[%s1 + $0x730] sm:$0xff]
    %v285 = vld [vmem:[%s1 + $0x738] sm:$0xff]
    %v286 = vld [vmem:[%s1 + $0x740] sm:$0xff]
    %v287 = vld [vmem:[%s1 + $0x748] sm:$0xff]
    %v288 = vld [vmem:[%s1 + $0x750] sm:$0xff]
    %v289 = vld [vmem:[%s1 + $0x758] sm:$0xff]
    %v290 = vld [vmem:[%s1 + $0x760] sm:$0xff]
    %v291 = vld [vmem:[%s1 + $0x768] sm:$0xff]
    %v292 = vld [vmem:[%s1 + $0x770] sm:$0xff]
    %v293 = vld [vmem:[%s1 + $0x778] sm:$0xff]
    %v294 = vld [vmem:[%s1 + $0x780] sm:$0xff]
    %v295 = vld [vmem:[%s1 + $0x788] sm:$0xff]
    %v296 = vld [vmem:[%s1 + $0x790] sm:$0xff]
    %v297 = vld [vmem:[%s1 + $0x798] sm:$0xff]
    %v298 = vld [vmem:[%s1 + $0x7a0] sm:$0xff]
    %v299 = vld [vmem:[%s1 + $0x7a8] sm:$0xff]
    %v300 = vld [vmem:[%s1 + $0x7b0] sm:$0xff]
    %v301 = vld [vmem:[%s1 + $0x7b8] sm:$0xff]
    %v302 = vld [vmem:[%s1 + $0x7c0] sm:$0xff]
    %v303 = vld [vmem:[%s1 + $0x7c8] sm:$0xff]
    %v304 = vld [vmem:[%s1 + $0x7d0] sm:$0xff]
    %v305 = vld [vmem:[%s1 + $0x7d8] sm:$0xff]
    %v306 = vld [vmem:[%s1 + $0x7e0] sm:$0xff]
    %v307 = vld [vmem:[%s1 + $0x7e8] sm:$0xff]
    %v308 = vld [vmem:[%s1 + $0x7f0] sm:$0xff]
    %v309 = vld [vmem:[%s1 + $0x7f8] sm:$0xff]
    %v310 = vld [vmem:[%s1 + $0x800] sm:$0xff]
    %v311 = vld [vmem:[%s1 + $0x808] sm:$0xff]
    %v312 = vld [vmem:[%s1 + $0x810] sm:$0xff]
    %v313 = vld [vmem:[%s1 + $0x818] sm:$0xff]
    %v314 = vld [vmem:[%s1 + $0x820] sm:$0xff]
    %v315 = vld [vmem:[%s1 + $0x828] sm:$0xff]
    %v316 = vld [vmem:[%s1 + $0x830] sm:$0xff]
    %v317 = vld [vmem:[%s1 + $0x838] sm:$0xff]
    %v318 = vld [vmem:[%s1 + $0x840] sm:$0xff]
    %v319 = vld [vmem:[%s1 + $0x848] sm:$0xff]
    %v320 = vld [vmem:[%s1 + $0x850] sm:$0xff]
    %v321 = vld [vmem:[%s1 + $0x858] sm:$0xff]
    %v322 = vld [vmem:[%s1 + $0x860] sm:$0xff]
    %v323 = vld [vmem:[%s1 + $0x868] sm:$0xff]
    %v324 = vld [vmem:[%s1 + $0x870] sm:$0xff]
    %v325 = vld [vmem:[%s1 + $0x878] sm:$0xff]
    %v326 = vld [vmem:[%s1 + $0x880] sm:$0xff]
    %v327 = vld [vmem:[%s1 + $0x888] sm:$0xff]
    %v328 = vld [vmem:[%s1 + $0x890] sm:$0xff]
    %v329 = vld [vmem:[%s1 + $0x898] sm:$0xff]
    %v330 = vld [vmem:[%s1 + $0x8a0] sm:$0xff]
    %v331 = vld [vmem:[%s1 + $0x8a8] sm:$0xff]
    %v332 = vld [vmem:[%s1 + $0x8b0] sm:$0xff]
    %v333 = vld [vmem:[%s1 + $0x8b8] sm:$0xff]
    %v334 = vld [vmem:[%s1 + $0x8c0] sm:$0xff]
    %v335 = vld [vmem:[%s1 + $0x8c8] sm:$0xff]
    %v336 = vld [vmem:[%s1 + $0x8d0] sm:$0xff]
    %v337 = vld [vmem:[%s1 + $0x8d8] sm:$0xff]
    %v338 = vld [vmem:[%s1 + $0x8e0] sm:$0xff]
    %v339 = vld [vmem:[%s1 + $0x8e8] sm:$0xff]
    %v340 = vld [vmem:[%s1 + $0x8f0] sm:$0xff]
    %v341 = vld [vmem:[%s1 + $0x8f8] sm:$0xff]
    %v342 = vld [vmem:[%s1 + $0x900] sm:$0xff]
    %v343 = vld [vmem:[%s1 + $0x908] sm:$0xff]
    %v344 = vld [vmem:[%s1 + $0x910] sm:$0xff]
    %v345 = vld [vmem:[%s1 + $0x918] sm:$0xff]
    %v346 = vld [vmem:[%s1 + $0x920] sm:$0xff]
    %v347 = vld [vmem:[%s1 + $0x928] sm:$0xff]
    %v348 = vld [vmem:[%s1 + $0x930] sm:$0xff]
    %v349 = vld [vmem:[%s1 + $0x938] sm:$0xff]
    %v350 = vld [vmem:[%s1 + $0x940] sm:$0xff]
    %v351 = vld [vmem:[%s1 + $0x948] sm:$0xff]
    %v352 = vld [vmem:[%s1 + $0x950] sm:$0xff]
    %v353 = vld [vmem:[%s1 + $0x958] sm:$0xff]
    %v354 = vld [vmem:[%s1 + $0x960] sm:$0xff]
    %v355 = vld [vmem:[%s1 + $0x968] sm:$0xff]
    %v356 = vld [vmem:[%s1 + $0x970] sm:$0xff]
    %v357 = vld [vmem:[%s1 + $0x978] sm:$0xff]
    %v358 = vld [vmem:[%s1 + $0x980] sm:$0xff]
    %v359 = vld [vmem:[%s1 + $0x988] sm:$0xff]
    %v360 = vld [vmem:[%s1 + $0x990] sm:$0xff]
    %v361 = vld [vmem:[%s1 + $0x998] sm:$0xff]
    %v362 = vld [vmem:[%s1 + $0x9a0] sm:$0xff]
    %v363 = vld [vmem:[%s1 + $0x9a8] sm:$0xff]
    %v364 = vld [vmem:[%s1 + $0x9b0] sm:$0xff]
    %v365 = vld [vmem:[%s1 + $0x9b8] sm:$0xff]
    %v366 = vld [vmem:[%s1 + $0x9c0] sm:$0xff]
    %v367 = vld [vmem:[%s1 + $0x9c8] sm:$0xff]
    %v368 = vld [vmem:[%s1 + $0x9d0] sm:$0xff]
    %v369 = vld [vmem:[%s1 + $0x9d8] sm:$0xff]
    %v370 = vld [vmem:[%s1 + $0x9e0] sm:$0xff]
    %v371 = vld [vmem:[%s1 + $0x9e8] sm:$0xff]
    %v372 = vld [vmem:[%s1 + $0x9f0] sm:$0xff]
    %v373 = vld [vmem:[%s1 + $0x9f8] sm:$0xff]
    %v374 = vld [vmem:[%s1 + $0xa00] sm:$0xff]
    %v375 = vld [vmem:[%s1 + $0xa08] sm:$0xff]
    %v376 = vld [vmem:[%s1 + $0xa10] sm:$0xff]
    %v377 = vld [vmem:[%s1 + $0xa18] sm:$0xff]
    %v378 = vld [vmem:[%s1 + $0xa20] sm:$0xff]
    %v379 = vld [vmem:[%s1 + $0xa28] sm:$0xff]
    %v380 = vld [vmem:[%s1 + $0xa30] sm:$0xff]
    %v381 = vld [vmem:[%s1 + $0xa38] sm:$0xff]
    %v382 = vld [vmem:[%s1 + $0xa40] sm:$0xff]
    %v383 = vld [vmem:[%s1 + $0xa48] sm:$0xff]
    %v384 = vld [vmem:[%s1 + $0xa50] sm:$0xff]
    %v385 = vld [vmem:[%s1 + $0xa58] sm:$0xff]
    %v386 = vld [vmem:[%s1 + $0xa60] sm:$0xff]
    %v387 = vld [vmem:[%s1 + $0xa68] sm:$0xff]
    %v388 = vld [vmem:[%s1 + $0xa70] sm:$0xff]
    %v389 = vld [vmem:[%s1 + $0xa78] sm:$0xff]
    %v390 = vld [vmem:[%s1 + $0xa80] sm:$0xff]
    %v391 = vld [vmem:[%s1 + $0xa88] sm:$0xff]
    %v392 = vld [vmem:[%s1 + $0xa90] sm:$0xff]
    %v393 = vld [vmem:[%s1 + $0xa98] sm:$0xff]
    %v394 = vld [vmem:[%s1 + $0xaa0] sm:$0xff]
    %v395 = vld [vmem:[%s1 + $0xaa8] sm:$0xff]
    %v396 = vld [vmem:[%s1 + $0xab0] sm:$0xff]
    %v397 = vld [vmem:[%s1 + $0xab8] sm:$0xff]
    %v398 = vld [vmem:[%s1 + $0xac0] sm:$0xff]
    %v399 = vld [vmem:[%s1 + $0xac8] sm:$0xff]
    %v400 = vld [vmem:[%s1 + $0xad0] sm:$0xff]
    %v401 = vld [vmem:[%s1 + $0xad8] sm:$0xff]
    %v402 = vld [vmem:[%s1 + $0xae0] sm:$0xff]
    %v403 = vld [vmem:[%s1 + $0xae8] sm:$0xff]
    %v404 = vld [vmem:[%s1 + $0xaf0] sm:$0xff]
    %v405 = vld [vmem:[%s1 + $0xaf8] sm:$0xff]
    %v406 = vld [vmem:[%s1 + $0xb00] sm:$0xff]
    %v407 = vld [vmem:[%s1 + $0xb08] sm:$0xff]
    %v408 = vld [vmem:[%s1 + $0xb10] sm:$0xff]
    %v409 = vld [vmem:[%s1 + $0xb18] sm:$0xff]
    %v410 = vld [vmem:[%s1 + $0xb20] sm:$0xff]
    %v411 = vld [vmem:[%s1 + $0xb28] sm:$0xff]
    %v412 = vld [vmem:[%s1 + $0xb30] sm:$0xff]
    %v413 = vld [vmem:[%s1 + $0xb38] sm:$0xff]
    %v414 = vld [vmem:[%s1 + $0xb40] sm:$0xff]
    %v415 = vld [vmem:[%s1 + $0xb48] sm:$0xff]
    %v416 = vld [vmem:[%s1 + $0xb50] sm:$0xff]
    %v417 = vld [vmem:[%s1 + $0xb58] sm:$0xff]
    %v418 = vld [vmem:[%s1 + $0xb60] sm:$0xff]
    %v419 = vld [vmem:[%s1 + $0xb68] sm:$0xff]
    %v420 = vld [vmem:[%s1 + $0xb70] sm:$0xff]
    %v421 = vld [vmem:[%s1 + $0xb78] sm:$0xff]
    %v422 = vld [vmem:[%s1 + $0xb80] sm:$0xff]
    %v423 = vld [vmem:[%s1 + $0xb88] sm:$0xff]
    %v424 = vld [vmem:[%s1 + $0xb90] sm:$0xff]
    %v425 = vld [vmem:[%s1 + $0xb98] sm:$0xff]
    %v426 = vld [vmem:[%s1 + $0xba0] sm:$0xff]
    %v427 = vld [vmem:[%s1 + $0xba8] sm:$0xff]
    %v428 = vld [vmem:[%s1 + $0xbb0] sm:$0xff]
    %v429 = vld [vmem:[%s1 + $0xbb8] sm:$0xff]
    %v430 = vld [vmem:[%s1 + $0xbc0] sm:$0xff]
    %v431 = vld [vmem:[%s1 + $0xbc8] sm:$0xff]
    %v432 = vld [vmem:[%s1 + $0xbd0] sm:$0xff]
    %v433 = vld [vmem:[%s1 + $0xbd8] sm:$0xff]
    %v434 = vld [vmem:[%s1 + $0xbe0] sm:$0xff]
    %v435 = vld [vmem:[%s1 + $0xbe8] sm:$0xff]
    %v436 = vld [vmem:[%s1 + $0xbf0] sm:$0xff]
    %v437 = vld [vmem:[%s1 + $0xbf8] sm:$0xff]
    %v438 = vld [vmem:[%s1 + $0xc00] sm:$0xff]
    %v439 = vld [vmem:[%s1 + $0xc08] sm:$0xff]
    %v440 = vld [vmem:[%s1 + $0xc10] sm:$0xff]
    %v441 = vld [vmem:[%s1 + $0xc18] sm:$0xff]
    %v442 = vld [vmem:[%s1 + $0xc20] sm:$0xff]
    %v443 = vld [vmem:[%s1 + $0xc28] sm:$0xff]
    %v444 = vld [vmem:[%s1 + $0xc30] sm:$0xff]
    %v445 = vld [vmem:[%s1 + $0xc38] sm:$0xff]
    %v446 = vld [vmem:[%s1 + $0xc40] sm:$0xff]
    %v447 = vld [vmem:[%s1 + $0xc48] sm:$0xff]
    %v448 = vld [vmem:[%s1 + $0xc50] sm:$0xff]
    %v449 = vld [vmem:[%s1 + $0xc58] sm:$0xff]
    %v450 = vld [vmem:[%s1 + $0xc60] sm:$0xff]
    %v451 = vld [vmem:[%s1 + $0xc68] sm:$0xff]
    %v452 = vld [vmem:[%s1 + $0xc70] sm:$0xff]
    %v453 = vld [vmem:[%s1 + $0xc78] sm:$0xff]
    %v454 = vld [vmem:[%s1 + $0xc80] sm:$0xff]
    %v455 = vld [vmem:[%s1 + $0xc88] sm:$0xff]
    %v456 = vld [vmem:[%s1 + $0xc90] sm:$0xff]
    %v457 = vld [vmem:[%s1 + $0xc98] sm:$0xff]
    %v458 = vld [vmem:[%s1 + $0xca0] sm:$0xff]
    %v459 = vld [vmem:[%s1 + $0xca8] sm:$0xff]
    %v460 = vld [vmem:[%s1 + $0xcb0] sm:$0xff]
    %v461 = vld [vmem:[%s1 + $0xcb8] sm:$0xff]
    %v462 = vld [vmem:[%s1 + $0xcc0] sm:$0xff]
    %v463 = vld [vmem:[%s1 + $0xcc8] sm:$0xff]
    %v464 = vld [vmem:[%s1 + $0xcd0] sm:$0xff]
    %v465 = vld [vmem:[%s1 + $0xcd8] sm:$0xff]
    %v466 = vld [vmem:[%s1 + $0xce0] sm:$0xff]
    %v467 = vld [vmem:[%s1 + $0xce8] sm:$0xff]
    %v468 = vld [vmem:[%s1 + $0xcf0] sm:$0xff]
    %v469 = vld [vmem:[%s1 + $0xcf8] sm:$0xff]
    %v470 = vld [vmem:[%s1 + $0xd00] sm:$0xff]
    %v471 = vld [vmem:[%s1 + $0xd08] sm:$0xff]
    %v472 = vld [vmem:[%s1 + $0xd10] sm:$0xff]
    %v473 = vld [vmem:[%s1 + $0xd18] sm:$0xff]
    %v474 = vld [vmem:[%s1 + $0xd20] sm:$0xff]
    %v475 = vld [vmem:[%s1 + $0xd28] sm:$0xff]
    %v476 = vld [vmem:[%s1 + $0xd30] sm:$0xff]
    %v477 = vld [vmem:[%s1 + $0xd38] sm:$0xff]
    %v478 = vld [vmem:[%s1 + $0xd40] sm:$0xff]
    %v479 = vld [vmem:[%s1 + $0xd48] sm:$0xff]
    %v480 = vld [vmem:[%s1 + $0xd50] sm:$0xff]
    %v481 = vld [vmem:[%s1 + $0xd58] sm:$0xff]
    %v482 = vld [vmem:[%s1 + $0xd60] sm:$0xff]
    %v483 = vld [vmem:[%s1 + $0xd68] sm:$0xff]
    %v484 = vld [vmem:[%s1 + $0xd70] sm:$0xff]
    %v485 = vld [vmem:[%s1 + $0xd78] sm:$0xff]
    %v486 = vld [vmem:[%s1 + $0xd80] sm:$0xff]
    %v487 = vld [vmem:[%s1 + $0xd88] sm:$0xff]
    %v488 = vld [vmem:[%s1 + $0xd90] sm:$0xff]
    %v489 = vld [vmem:[%s1 + $0xd98] sm:$0xff]
    %v490 = vld [vmem:[%s1 + $0xda0] sm:$0xff]
    %v491 = vld [vmem:[%s1 + $0xda8] sm:$0xff]
    %v492 = vld [vmem:[%s1 + $0xdb0] sm:$0xff]
    %v493 = vld [vmem:[%s1 + $0xdb8] sm:$0xff]
    %v494 = vld [vmem:[%s1 + $0xdc0] sm:$0xff]
    %v495 = vld [vmem:[%s1 + $0xdc8] sm:$0xff]
    %v496 = vld [vmem:[%s1 + $0xdd0] sm:$0xff]
    %v497 = vld [vmem:[%s1 + $0xdd8] sm:$0xff]
    %v498 = vld [vmem:[%s1 + $0xde0] sm:$0xff]
    %v499 = vld [vmem:[%s1 + $0xde8] sm:$0xff]
    %v500 = vld [vmem:[%s1 + $0xdf0] sm:$0xff]
    %v501 = vld [vmem:[%s1 + $0xdf8] sm:$0xff]
    %v502 = vld [vmem:[%s1 + $0xe00] sm:$0xff]
    %v503 = vld [vmem:[%s1 + $0xe08] sm:$0xff]
    %v504 = vld [vmem:[%s1 + $0xe10] sm:$0xff]
    %v505 = vld [vmem:[%s1 + $0xe18] sm:$0xff]
    %v506 = vld [vmem:[%s1 + $0xe20] sm:$0xff]
    %v507 = vld [vmem:[%s1 + $0xe28] sm:$0xff]
    %v508 = vld [vmem:[%s1 + $0xe30] sm:$0xff]
    %v509 = vld [vmem:[%s1 + $0xe38] sm:$0xff]
    %v510 = vld [vmem:[%s1 + $0xe40] sm:$0xff]
    %v511 = vld [vmem:[%s1 + $0xe48] sm:$0xff]
    %v512 = vld [vmem:[%s1 + $0xe50] sm:$0xff]
    %v513 = vld [vmem:[%s1 + $0xe58] sm:$0xff]
    %v514 = vld [vmem:[%s1 + $0xe60] sm:$0xff]
    %v515 = vld [vmem:[%s1 + $0xe68] sm:$0xff]
    %v516 = vld [vmem:[%s1 + $0xe70] sm:$0xff]
    %v517 = vld [vmem:[%s1 + $0xe78] sm:$0xff]
    %v518 = vld [vmem:[%s1 + $0xe80] sm:$0xff]
    %v519 = vld [vmem:[%s1 + $0xe88] sm:$0xff]
    %v520 = vld [vmem:[%s1 + $0xe90] sm:$0xff]
    %v521 = vld [vmem:[%s1 + $0xe98] sm:$0xff]
    %v522 = vld [vmem:[%s1 + $0xea0] sm:$0xff]
    %v523 = vld [vmem:[%s1 + $0xea8] sm:$0xff]
    %v524 = vld [vmem:[%s1 + $0xeb0] sm:$0xff]
    %v525 = vld [vmem:[%s1 + $0xeb8] sm:$0xff]
    %v526 = vld [vmem:[%s1 + $0xec0] sm:$0xff]
    %v527 = vld [vmem:[%s1 + $0xec8] sm:$0xff]
    %v528 = vld [vmem:[%s1 + $0xed0] sm:$0xff]
    %v529 = vld [vmem:[%s1 + $0xed8] sm:$0xff]
    %v530 = vld [vmem:[%s1 + $0xee0] sm:$0xff]
    %v531 = vld [vmem:[%s1 + $0xee8] sm:$0xff]
    %v532 = vld [vmem:[%s1 + $0xef0] sm:$0xff]
    %v533 = vld [vmem:[%s1 + $0xef8] sm:$0xff]
    %v534 = vld [vmem:[%s1 + $0xf00] sm:$0xff]
    %v535 = vld [vmem:[%s1 + $0xf08] sm:$0xff]
    %v536 = vld [vmem:[%s1 + $0xf10] sm:$0xff]
    %v537 = vld [vmem:[%s1 + $0xf18] sm:$0xff]
    %v538 = vld [vmem:[%s1 + $0xf20] sm:$0xff]
    %v539 = vld [vmem:[%s1 + $0xf28] sm:$0xff]
    %v540 = vld [vmem:[%s1 + $0xf30] sm:$0xff]
    %v541 = vld [vmem:[%s1 + $0xf38] sm:$0xff]
    %v542 = vld [vmem:[%s1 + $0xf40] sm:$0xff]
    %v543 = vld [vmem:[%s1 + $0xf48] sm:$0xff]
    %v544 = vld [vmem:[%s1 + $0xf50] sm:$0xff]
    %v545 = vld [vmem:[%s1 + $0xf58] sm:$0xff]
    %v546 = vld [vmem:[%s1 + $0xf60] sm:$0xff]
    %v547 = vld [vmem:[%s1 + $0xf68] sm:$0xff]
    %v548 = vld [vmem:[%s1 + $0xf70] sm:$0xff]
    %v549 = vld [vmem:[%s1 + $0xf78] sm:$0xff]
    %v550 = vld [vmem:[%s1 + $0xf80] sm:$0xff]
    %v551 = vld [vmem:[%s1 + $0xf88] sm:$0xff]
    %v552 = vld [vmem:[%s1 + $0xf90] sm:$0xff]
    %v553 = vld [vmem:[%s1 + $0xf98] sm:$0xff]
    %v554 = vld [vmem:[%s1 + $0xfa0] sm:$0xff]
    %v555 = vld [vmem:[%s1 + $0xfa8] sm:$0xff]
    %v556 = vld [vmem:[%s1 + $0xfb0] sm:$0xff]
    %v557 = vld [vmem:[%s1 + $0xfb8] sm:$0xff]
    %v558 = vld [vmem:[%s1 + $0xfc0] sm:$0xff]
    %v559 = vld [vmem:[%s1 + $0xfc8] sm:$0xff]
    %v560 = vld [vmem:[%s1 + $0xfd0] sm:$0xff]
    %v561 = vld [vmem:[%s1 + $0xfd8] sm:$0xff]
    %v562 = vld [vmem:[%s1 + $0xfe0] sm:$0xff]
    %v563 = vld [vmem:[%s1 + $0xfe8] sm:$0xff]
    %v564 = vld [vmem:[%s1 + $0xff0] sm:$0xff]
    %v565 = vld [vmem:[%s1 + $0xff8] sm:$0xff]
    %v566 = vld [vmem:[%s1 + $0x1000] sm:$0xff]
    %v567 = vld [vmem:[%s1 + $0x1008] sm:$0xff]
    %v568 = vld [vmem:[%s1 + $0x1010] sm:$0xff]
    %v569 = vld [vmem:[%s1 + $0x1018] sm:$0xff]
    %v570 = vld [vmem:[%s1 + $0x1020] sm:$0xff]
    %v571 = vld [vmem:[%s1 + $0x1028] sm:$0xff]
    %v572 = vld [vmem:[%s1 + $0x1030] sm:$0xff]
    %v573 = vld [vmem:[%s1 + $0x1038] sm:$0xff]
    %v574 = vld [vmem:[%s1 + $0x1040] sm:$0xff]
    %v575 = vld [vmem:[%s1 + $0x1048] sm:$0xff]
    %v576 = vld [vmem:[%s1 + $0x1050] sm:$0xff]
    %v577 = vld [vmem:[%s1 + $0x1058] sm:$0xff]
    %v578 = vld [vmem:[%s1 + $0x1060] sm:$0xff]
    %v579 = vld [vmem:[%s1 + $0x1068] sm:$0xff]
    %v580 = vld [vmem:[%s1 + $0x1070] sm:$0xff]
    %v581 = vld [vmem:[%s1 + $0x1078] sm:$0xff]
    %v582 = vld [vmem:[%s1 + $0x1080] sm:$0xff]
    %v583 = vld [vmem:[%s1 + $0x1088] sm:$0xff]
    %v584 = vld [vmem:[%s1 + $0x1090] sm:$0xff]
    %v585 = vld [vmem:[%s1 + $0x1098] sm:$0xff]
    %v586 = vld [vmem:[%s1 + $0x10a0] sm:$0xff]
    %v587 = vld [vmem:[%s1 + $0x10a8] sm:$0xff]
    %v588 = vld [vmem:[%s1 + $0x10b0] sm:$0xff]
    %v589 = vld [vmem:[%s1 + $0x10b8] sm:$0xff]
    %v590 = vld [vmem:[%s1 + $0x10c0] sm:$0xff]
    %v591 = vld [vmem:[%s1 + $0x10c8] sm:$0xff]
    %v592 = vld [vmem:[%s1 + $0x10d0] sm:$0xff]
    %v593 = vld [vmem:[%s1 + $0x10d8] sm:$0xff]
    %v594 = vld [vmem:[%s1 + $0x10e0] sm:$0xff]
    %v595 = vld [vmem:[%s1 + $0x10e8] sm:$0xff]
    %v596 = vld [vmem:[%s1 + $0x10f0] sm:$0xff]
    %v597 = vld [vmem:[%s1 + $0x10f8] sm:$0xff]
    %v598 = vld [vmem:[%s1 + $0x1100] sm:$0xff]
    %v599 = vld [vmem:[%s1 + $0x1108] sm:$0xff]
    %v600 = vld [vmem:[%s1 + $0x1110] sm:$0xff]
    %v601 = vld [vmem:[%s1 + $0x1118] sm:$0xff]
    %v602 = vld [vmem:[%s1 + $0x1120] sm:$0xff]
    %v603 = vld [vmem:[%s1 + $0x1128] sm:$0xff]
    %v604 = vld [vmem:[%s1 + $0x1130] sm:$0xff]
    %v605 = vld [vmem:[%s1 + $0x1138] sm:$0xff]
    %v606 = vld [vmem:[%s1 + $0x1140] sm:$0xff]
    %v607 = vld [vmem:[%s1 + $0x1148] sm:$0xff]
    %v608 = vld [vmem:[%s1 + $0x1150] sm:$0xff]
    %v609 = vld [vmem:[%s1 + $0x1158] sm:$0xff]
    %v610 = vld [vmem:[%s1 + $0x1160] sm:$0xff]
    %v611 = vld [vmem:[%s1 + $0x1168] sm:$0xff]
    %v612 = vld [vmem:[%s1 + $0x1170] sm:$0xff]
    %v613 = vld [vmem:[%s1 + $0x1178] sm:$0xff]
    %v614 = vld [vmem:[%s1 + $0x1180] sm:$0xff]
    %v615 = vld [vmem:[%s1 + $0x1188] sm:$0xff]
    %v616 = vld [vmem:[%s1 + $0x1190] sm:$0xff]
    %v617 = vld [vmem:[%s1 + $0x1198] sm:$0xff]
    %v618 = vld [vmem:[%s1 + $0x11a0] sm:$0xff]
    %v619 = vld [vmem:[%s1 + $0x11a8] sm:$0xff]
    %v620 = vld [vmem:[%s1 + $0x11b0] sm:$0xff]
    %v621 = vld [vmem:[%s1 + $0x11b8] sm:$0xff]
    %v622 = vld [vmem:[%s1 + $0x11c0] sm:$0xff]
    %v623 = vld [vmem:[%s1 + $0x11c8] sm:$0xff]
    %v624 = vld [vmem:[%s1 + $0x11d0] sm:$0xff]
    %v625 = vld [vmem:[%s1 + $0x11d8] sm:$0xff]
    %v626 = vld [vmem:[%s1 + $0x11e0] sm:$0xff]
    %v627 = vld [vmem:[%s1 + $0x11e8] sm:$0xff]
    %v628 = vld [vmem:[%s1 + $0x11f0] sm:$0xff]
    %v629 = vld [vmem:[%s1 + $0x11f8] sm:$0xff]
    %v630 = vld [vmem:[%s1 + $0x1200] sm:$0xff]
    %v631 = vld [vmem:[%s1 + $0x1208] sm:$0xff]
    %v632 = vld [vmem:[%s1 + $0x1210] sm:$0xff]
    %v633 = vld [vmem:[%s1 + $0x1218] sm:$0xff]
    %v634 = vld [vmem:[%s1 + $0x1220] sm:$0xff]
    %v635 = vld [vmem:[%s1 + $0x1228] sm:$0xff]
    %v636 = vld [vmem:[%s1 + $0x1230] sm:$0xff]
    %v637 = vld [vmem:[%s1 + $0x1238] sm:$0xff]
    %v638 = vld [vmem:[%s1 + $0x1240] sm:$0xff]
    %v639 = vld [vmem:[%s1 + $0x1248] sm:$0xff]
    %v640 = vld [vmem:[%s1 + $0x1250] sm:$0xff]
    %v641 = vld [vmem:[%s1 + $0x1258] sm:$0xff]
    %v642 = vld [vmem:[%s1 + $0x1260] sm:$0xff]
    %v643 = vld [vmem:[%s1 + $0x1268] sm:$0xff]
    %v644 = vld [vmem:[%s1 + $0x1270] sm:$0xff]
    %v645 = vld [vmem:[%s1 + $0x1278] sm:$0xff]
    %v646 = vld [vmem:[%s1 + $0x1280] sm:$0xff]
    %v647 = vld [vmem:[%s1 + $0x1288] sm:$0xff]
    %v648 = vld [vmem:[%s1 + $0x1290] sm:$0xff]
    %v649 = vld [vmem:[%s1 + $0x1298] sm:$0xff]
    %v650 = vld [vmem:[%s1 + $0x12a0] sm:$0xff]
    %v651 = vld [vmem:[%s1 + $0x12a8] sm:$0xff]
    %v652 = vld [vmem:[%s1 + $0x12b0] sm:$0xff]
    %v653 = vld [vmem:[%s1 + $0x12b8] sm:$0xff]
    %v654 = vld [vmem:[%s1 + $0x12c0] sm:$0xff]
    %v655 = vld [vmem:[%s1 + $0x12c8] sm:$0xff]
    %v656 = vld [vmem:[%s1 + $0x12d0] sm:$0xff]
    %v657 = vld [vmem:[%s1 + $0x12d8] sm:$0xff]
    %v658 = vld [vmem:[%s1 + $0x12e0] sm:$0xff]
    %v659 = vld [vmem:[%s1 + $0x12e8] sm:$0xff]
    %v660 = vld [vmem:[%s1 + $0x12f0] sm:$0xff]
    %v661 = vld [vmem:[%s1 + $0x12f8] sm:$0xff]
    %v662 = vld [vmem:[%s1 + $0x1300] sm:$0xff]
    %v663 = vld [vmem:[%s1 + $0x1308] sm:$0xff]
    %v664 = vld [vmem:[%s1 + $0x1310] sm:$0xff]
    %v665 = vld [vmem:[%s1 + $0x1318] sm:$0xff]
    %v666 = vld [vmem:[%s1 + $0x1320] sm:$0xff]
    %v667 = vld [vmem:[%s1 + $0x1328] sm:$0xff]
    %v668 = vld [vmem:[%s1 + $0x1330] sm:$0xff]
    %v669 = vld [vmem:[%s1 + $0x1338] sm:$0xff]
    %v670 = vld [vmem:[%s1 + $0x1340] sm:$0xff]
    %v671 = vld [vmem:[%s1 + $0x1348] sm:$0xff]
    %v672 = vld [vmem:[%s1 + $0x1350] sm:$0xff]
    %v673 = vld [vmem:[%s1 + $0x1358] sm:$0xff]
    %v674 = vld [vmem:[%s1 + $0x1360] sm:$0xff]
    %v675 = vld [vmem:[%s1 + $0x1368] sm:$0xff]
    %v676 = vld [vmem:[%s1 + $0x1370] sm:$0xff]
    %v677 = vld [vmem:[%s1 + $0x1378] sm:$0xff]
    %v678 = vld [vmem:[%s1 + $0x1380] sm:$0xff]
    %v679 = vld [vmem:[%s1 + $0x1388] sm:$0xff]
    %v680 = vld [vmem:[%s1 + $0x1390] sm:$0xff]
    %v681 = vld [vmem:[%s1 + $0x1398] sm:$0xff]
    %v682 = vld [vmem:[%s1 + $0x13a0] sm:$0xff]
    %v683 = vld [vmem:[%s1 + $0x13a8] sm:$0xff]
    %v684 = vld [vmem:[%s1 + $0x13b0] sm:$0xff]
    %v685 = vld [vmem:[%s1 + $0x13b8] sm:$0xff]
    %v686 = vld [vmem:[%s1 + $0x13c0] sm:$0xff]
    %v687 = vld [vmem:[%s1 + $0x13c8] sm:$0xff]
    %v688 = vld [vmem:[%s1 + $0x13d0] sm:$0xff]
    %v689 = vld [vmem:[%s1 + $0x13d8] sm:$0xff]
    %v690 = vld [vmem:[%s1 + $0x13e0] sm:$0xff]
    %v691 = vld [vmem:[%s1 + $0x13e8] sm:$0xff]
    %v692 = vld [vmem:[%s1 + $0x13f0] sm:$0xff]
    %v693 = vld [vmem:[%s1 + $0x13f8] sm:$0xff]
    %v694 = vld [vmem:[%s1 + $0x1400] sm:$0xff]
    %v695 = vld [vmem:[%s1 + $0x1408] sm:$0xff]
    %v696 = vld [vmem:[%s1 + $0x1410] sm:$0xff]
    %v697 = vld [vmem:[%s1 + $0x1418] sm:$0xff]
    %v698 = vld [vmem:[%s1 + $0x1420] sm:$0xff]
    %v699 = vld [vmem:[%s1 + $0x1428] sm:$0xff]
    %v700 = vld [vmem:[%s1 + $0x1430] sm:$0xff]
    %v701 = vld [vmem:[%s1 + $0x1438] sm:$0xff]
    %v702 = vld [vmem:[%s1 + $0x1440] sm:$0xff]
    %v703 = vld [vmem:[%s1 + $0x1448] sm:$0xff]
    %v704 = vld [vmem:[%s1 + $0x1450] sm:$0xff]
    %v705 = vld [vmem:[%s1 + $0x1458] sm:$0xff]
    %v706 = vld [vmem:[%s1 + $0x1460] sm:$0xff]
    %v707 = vld [vmem:[%s1 + $0x1468] sm:$0xff]
    %v708 = vld [vmem:[%s1 + $0x1470] sm:$0xff]
    %v709 = vld [vmem:[%s1 + $0x1478] sm:$0xff]
    %v710 = vld [vmem:[%s1 + $0x1480] sm:$0xff]
    %v711 = vld [vmem:[%s1 + $0x1488] sm:$0xff]
    %v712 = vld [vmem:[%s1 + $0x1490] sm:$0xff]
    %v713 = vld [vmem:[%s1 + $0x1498] sm:$0xff]
    %v714 = vld [vmem:[%s1 + $0x14a0] sm:$0xff]
    %v715 = vld [vmem:[%s1 + $0x14a8] sm:$0xff]
    %v716 = vld [vmem:[%s1 + $0x14b0] sm:$0xff]
    %v717 = vld [vmem:[%s1 + $0x14b8] sm:$0xff]
    %v718 = vld [vmem:[%s1 + $0x14c0] sm:$0xff]
    %v719 = vld [vmem:[%s1 + $0x14c8] sm:$0xff]
    %v720 = vld [vmem:[%s1 + $0x14d0] sm:$0xff]
    %v721 = vld [vmem:[%s1 + $0x14d8] sm:$0xff]
    %v722 = vld [vmem:[%s1 + $0x14e0] sm:$0xff]
    %v723 = vld [vmem:[%s1 + $0x14e8] sm:$0xff]
    %v724 = vld [vmem:[%s1 + $0x14f0] sm:$0xff]
    %v725 = vld [vmem:[%s1 + $0x14f8] sm:$0xff]
    %v726 = vld [vmem:[%s1 + $0x1500] sm:$0xff]
    %v727 = vld [vmem:[%s1 + $0x1508] sm:$0xff]
    %v728 = vld [vmem:[%s1 + $0x1510] sm:$0xff]
    %v729 = vld [vmem:[%s1 + $0x1518] sm:$0xff]
    %v730 = vld [vmem:[%s1 + $0x1520] sm:$0xff]
    %v731 = vld [vmem:[%s1 + $0x1528] sm:$0xff]
    %v732 = vld [vmem:[%s1 + $0x1530] sm:$0xff]
    %v733 = vld [vmem:[%s1 + $0x1538] sm:$0xff]
    %v734 = vld [vmem:[%s1 + $0x1540] sm:$0xff]
    %v735 = vld [vmem:[%s1 + $0x1548] sm:$0xff]
    %v736 = vld [vmem:[%s1 + $0x1550] sm:$0xff]
    %v737 = vld [vmem:[%s1 + $0x1558] sm:$0xff]
    %v738 = vld [vmem:[%s1 + $0x1560] sm:$0xff]
    %v739 = vld [vmem:[%s1 + $0x1568] sm:$0xff]
    %v740 = vld [vmem:[%s1 + $0x1570] sm:$0xff]
    %v741 = vld [vmem:[%s1 + $0x1578] sm:$0xff]
    %v742 = vld [vmem:[%s1 + $0x1580] sm:$0xff]
    %v743 = vld [vmem:[%s1 + $0x1588] sm:$0xff]
    %v744 = vld [vmem:[%s1 + $0x1590] sm:$0xff]
    %v745 = vld [vmem:[%s1 + $0x1598] sm:$0xff]
    %v746 = vld [vmem:[%s1 + $0x15a0] sm:$0xff]
    %v747 = vld [vmem:[%s1 + $0x15a8] sm:$0xff]
    %v748 = vld [vmem:[%s1 + $0x15b0] sm:$0xff]
    %v749 = vld [vmem:[%s1 + $0x15b8] sm:$0xff]
    %v750 = vld [vmem:[%s1 + $0x15c0] sm:$0xff]
    %v751 = vld [vmem:[%s1 + $0x15c8] sm:$0xff]
    %v752 = vld [vmem:[%s1 + $0x15d0] sm:$0xff]
    %v753 = vld [vmem:[%s1 + $0x15d8] sm:$0xff]
    %v754 = vld [vmem:[%s1 + $0x15e0] sm:$0xff]
    %v755 = vld [vmem:[%s1 + $0x15e8] sm:$0xff]
    %v756 = vld [vmem:[%s1 + $0x15f0] sm:$0xff]
    %v757 = vld [vmem:[%s1 + $0x15f8] sm:$0xff]
    %v758 = vld [vmem:[%s1 + $0x1600] sm:$0xff]
    %v759 = vld [vmem:[%s1 + $0x1608] sm:$0xff]
    %v760 = vld [vmem:[%s1 + $0x1610] sm:$0xff]
    %v761 = vld [vmem:[%s1 + $0x1618] sm:$0xff]
    %v762 = vld [vmem:[%s1 + $0x1620] sm:$0xff]
    %v763 = vld [vmem:[%s1 + $0x1628] sm:$0xff]
    %v764 = vld [vmem:[%s1 + $0x1630] sm:$0xff]
    %v765 = vld [vmem:[%s1 + $0x1638] sm:$0xff]
    %v766 = vld [vmem:[%s1 + $0x1640] sm:$0xff]
    %v767 = vld [vmem:[%s1 + $0x1648] sm:$0xff]
    %v768 = vld [vmem:[%s1 + $0x1650] sm:$0xff]
    %v769 = vld [vmem:[%s1 + $0x1658] sm:$0xff]
    %v770 = vld [vmem:[%s1 + $0x1660] sm:$0xff]
    %v771 = vld [vmem:[%s1 + $0x1668] sm:$0xff]
    %v772 = vld [vmem:[%s1 + $0x1670] sm:$0xff]
    %v773 = vld [vmem:[%s1 + $0x1678] sm:$0xff]
    %v774 = vld [vmem:[%s1 + $0x1680] sm:$0xff]
    %v775 = vld [vmem:[%s1 + $0x1688] sm:$0xff]
    %v776 = vld [vmem:[%s1 + $0x1690] sm:$0xff]
    %v777 = vld [vmem:[%s1 + $0x1698] sm:$0xff]
    %v778 = vld [vmem:[%s1 + $0x16a0] sm:$0xff]
    %v779 = vld [vmem:[%s1 + $0x16a8] sm:$0xff]
    %v780 = vld [vmem:[%s1 + $0x16b0] sm:$0xff]
    %v781 = vld [vmem:[%s1 + $0x16b8] sm:$0xff]
    %v782 = vld [vmem:[%s1 + $0x16c0] sm:$0xff]
    %v783 = vld [vmem:[%s1 + $0x16c8] sm:$0xff]
    %v784 = vld [vmem:[%s1 + $0x16d0] sm:$0xff]
    %v785 = vld [vmem:[%s1 + $0x16d8] sm:$0xff]
    %v786 = vld [vmem:[%s1 + $0x16e0] sm:$0xff]
    %v787 = vld [vmem:[%s1 + $0x16e8] sm:$0xff]
    %v788 = vld [vmem:[%s1 + $0x16f0] sm:$0xff]
    %v789 = vld [vmem:[%s1 + $0x16f8] sm:$0xff]
    %v790 = vld [vmem:[%s1 + $0x1700] sm:$0xff]
    %v791 = vld [vmem:[%s1 + $0x1708] sm:$0xff]
    %v792 = vld [vmem:[%s1 + $0x1710] sm:$0xff]
    %v793 = vld [vmem:[%s1 + $0x1718] sm:$0xff]
    %v794 = vld [vmem:[%s1 + $0x1720] sm:$0xff]
    %v795 = vld [vmem:[%s1 + $0x1728] sm:$0xff]
    %v796 = vld [vmem:[%s1 + $0x1730] sm:$0xff]
    %v797 = vld [vmem:[%s1 + $0x1738] sm:$0xff]
    %v798 = vld [vmem:[%s1 + $0x1740] sm:$0xff]
    %v799 = vld [vmem:[%s1 + $0x1748] sm:$0xff]
    %v800 = vld [vmem:[%s1 + $0x1750] sm:$0xff]
    %v801 = vld [vmem:[%s1 + $0x1758] sm:$0xff]
    %v802 = vld [vmem:[%s1 + $0x1760] sm:$0xff]
    %v803 = vld [vmem:[%s1 + $0x1768] sm:$0xff]
    %v804 = vld [vmem:[%s1 + $0x1770] sm:$0xff]
    %v805 = vld [vmem:[%s1 + $0x1778] sm:$0xff]
    %v806 = vld [vmem:[%s1 + $0x1780] sm:$0xff]
    %v807 = vld [vmem:[%s1 + $0x1788] sm:$0xff]
    %v808 = vld [vmem:[%s1 + $0x1790] sm:$0xff]
    %v809 = vld [vmem:[%s1 + $0x1798] sm:$0xff]
    %v810 = vld [vmem:[%s1 + $0x17a0] sm:$0xff]
    %v811 = vld [vmem:[%s1 + $0x17a8] sm:$0xff]
    %v812 = vld [vmem:[%s1 + $0x17b0] sm:$0xff]
    %v813 = vld [vmem:[%s1 + $0x17b8] sm:$0xff]
    %v814 = vld [vmem:[%s1 + $0x17c0] sm:$0xff]
    %v815 = vld [vmem:[%s1 + $0x17c8] sm:$0xff]
    %v816 = vld [vmem:[%s1 + $0x17d0] sm:$0xff]
    %v817 = vld [vmem:[%s1 + $0x17d8] sm:$0xff]
    %v818 = vld [vmem:[%s1 + $0x17e0] sm:$0xff]
    %v819 = vld [vmem:[%s1 + $0x17e8] sm:$0xff]
    %v820 = vld [vmem:[%s1 + $0x17f0] sm:$0xff]
    %v821 = vld [vmem:[%s1 + $0x17f8] sm:$0xff]
    %v822 = vld [vmem:[%s1 + $0x1800] sm:$0xff]
    %v823 = vld [vmem:[%s1 + $0x1808] sm:$0xff]
    %v824 = vld [vmem:[%s1 + $0x1810] sm:$0xff]
    %v825 = vld [vmem:[%s1 + $0x1818] sm:$0xff]
    %v826 = vld [vmem:[%s1 + $0x1820] sm:$0xff]
    %v827 = vld [vmem:[%s1 + $0x1828] sm:$0xff]
    %v828 = vld [vmem:[%s1 + $0x1830] sm:$0xff]
    %v829 = vld [vmem:[%s1 + $0x1838] sm:$0xff]
    %v830 = vld [vmem:[%s1 + $0x1840] sm:$0xff]
    %v831 = vld [vmem:[%s1 + $0x1848] sm:$0xff]
    %v832 = vld [vmem:[%s1 + $0x1850] sm:$0xff]
    %v833 = vld [vmem:[%s1 + $0x1858] sm:$0xff]
    %v834 = vld [vmem:[%s1 + $0x1860] sm:$0xff]
    %v835 = vld [vmem:[%s1 + $0x1868] sm:$0xff]
    %v836 = vld [vmem:[%s1 + $0x1870] sm:$0xff]
    %v837 = vld [vmem:[%s1 + $0x1878] sm:$0xff]
    %v838 = vld [vmem:[%s2] sm:$0xf]
    %v840 = vperm.slane %v838, 0
    %v841 = vperm.slane %v838, 1
    %v842 = vperm.slane %v838, 2
    %v843 = vperm.slane %v838, 3
    %849 = vst [vmem:[#allocation1] ss:$9 sm:$0xff] %v22
    %s851 = scalar_lea.vmem [#allocation1], 1
    %852 = vst [vmem:[%s851] ss:$9 sm:$0xff] %v26
    %s854 = scalar_lea.vmem [#allocation1], 2
    %855 = vst [vmem:[%s854] ss:$9 sm:$0xff] %v30
    %s857 = scalar_lea.vmem [#allocation1], 3
    %858 = vst [vmem:[%s857] ss:$9 sm:$0xff] %v34
    %s860 = scalar_lea.vmem [#allocation1], 4
    %861 = vst [vmem:[%s860] ss:$9 sm:$0xff] %v38
    %s863 = scalar_lea.vmem [#allocation1], 5
    %864 = vst [vmem:[%s863] ss:$9 sm:$0xff] %v42
    %s866 = scalar_lea.vmem [#allocation1], 6
    %867 = vst [vmem:[%s866] ss:$9 sm:$0xff] %v46
    %s869 = scalar_lea.vmem [#allocation1], 7
    %870 = vst [vmem:[%s869] ss:$9 sm:$0xff] %v50
    %v871 = vld [vmem:[#allocation1] sm:$0xff]
    %v872 = vld [vmem:[#allocation1 + $0x9] sm:$0xff]
    %v873 = vld [vmem:[#allocation1 + $0x12] sm:$0xff]
    %v874 = vld [vmem:[#allocation1 + $0x1b] sm:$0xff]
    %v875 = vld [vmem:[#allocation1 + $0x24] sm:$0xff]
    %v876 = vld [vmem:[#allocation1 + $0x2d] sm:$0xff]
    %v877 = vld [vmem:[#allocation1 + $0x36] sm:$0xff]
    %v878 = vld [vmem:[#allocation1 + $0x3f] sm:$0xff]
    %880 = vst [vmem:[#allocation1] ss:$9 sm:$0xff] %v23
    %882 = vst [vmem:[%s851] ss:$9 sm:$0xff] %v27
    %884 = vst [vmem:[%s854] ss:$9 sm:$0xff] %v31
    %886 = vst [vmem:[%s857] ss:$9 sm:$0xff] %v35
    %888 = vst [vmem:[%s860] ss:$9 sm:$0xff] %v39
    %890 = vst [vmem:[%s863] ss:$9 sm:$0xff] %v43
    %892 = vst [vmem:[%s866] ss:$9 sm:$0xff] %v47
    %894 = vst [vmem:[%s869] ss:$9 sm:$0xff] %v51
    %v895 = vld [vmem:[#allocation1] sm:$0xff]
    %v896 = vld [vmem:[#allocation1 + $0x9] sm:$0xff]
    %v897 = vld [vmem:[#allocation1 + $0x12] sm:$0xff]
    %v898 = vld [vmem:[#allocation1 + $0x1b] sm:$0xff]
    %v899 = vld [vmem:[#allocation1 + $0x24] sm:$0xff]
    %v900 = vld [vmem:[#allocation1 + $0x2d] sm:$0xff]
    %v901 = vld [vmem:[#allocation1 + $0x36] sm:$0xff]
    %v902 = vld [vmem:[#allocation1 + $0x3f] sm:$0xff]
    %904 = vst [vmem:[#allocation1] ss:$9 sm:$0xff] %v24
    %906 = vst [vmem:[%s851] ss:$9 sm:$0xff] %v28
    %908 = vst [vmem:[%s854] ss:$9 sm:$0xff] %v32
    %910 = vst [vmem:[%s857] ss:$9 sm:$0xff] %v36
    %912 = vst [vmem:[%s860] ss:$9 sm:$0xff] %v40
    %914 = vst [vmem:[%s863] ss:$9 sm:$0xff] %v44
    %916 = vst [vmem:[%s866] ss:$9 sm:$0xff] %v48
    %918 = vst [vmem:[%s869] ss:$9 sm:$0xff] %v52
    %v919 = vld [vmem:[#allocation1] sm:$0xff]
    %v920 = vld [vmem:[#allocation1 + $0x9] sm:$0xff]
    %v921 = vld [vmem:[#allocation1 + $0x12] sm:$0xff]
    %v922 = vld [vmem:[#allocation1 + $0x1b] sm:$0xff]
    %v923 = vld [vmem:[#allocation1 + $0x24] sm:$0xff]
    %v924 = vld [vmem:[#allocation1 + $0x2d] sm:$0xff]
    %v925 = vld [vmem:[#allocation1 + $0x36] sm:$0xff]
    %v926 = vld [vmem:[#allocation1 + $0x3f] sm:$0xff]
    %928 = vst [vmem:[#allocation1] ss:$9 sm:$0xff] %v25
    %930 = vst [vmem:[%s851] ss:$9 sm:$0xff] %v29
    %932 = vst [vmem:[%s854] ss:$9 sm:$0xff] %v33
    %934 = vst [vmem:[%s857] ss:$9 sm:$0xff] %v37
    %936 = vst [vmem:[%s860] ss:$9 sm:$0xff] %v41
    %938 = vst [vmem:[%s863] ss:$9 sm:$0xff] %v45
    %940 = vst [vmem:[%s866] ss:$9 sm:$0xff] %v49
    %942 = vst [vmem:[%s869] ss:$9 sm:$0xff] %v53
    %v943 = vld [vmem:[#allocation1] sm:$0xff]
    %v1752 = vunpack.c.l.b16 %v54
    %v1753 = vunpack.c.h.b16 %v54
    %v1754 = vunpack.c.l.b16 %v55
    %v1755 = vunpack.c.h.b16 %v55
    %v1756 = vunpack.c.l.b16 %v56
    %v1757 = vunpack.c.h.b16 %v56
    %v1758 = vunpack.c.l.b16 %v57
    %v1759 = vunpack.c.h.b16 %v57
    %v1760 = vunpack.c.l.b16 %v58
    %v1761 = vunpack.c.h.b16 %v58
    %v1762 = vunpack.c.l.b16 %v59
    %v1763 = vunpack.c.h.b16 %v59
    %v1764 = vunpack.c.l.b16 %v60
    %v1765 = vunpack.c.h.b16 %v60
    %v1766 = vunpack.c.l.b16 %v61
    %v1767 = vunpack.c.h.b16 %v61
    %v1768 = vunpack.c.l.b16 %v62
    %v1769 = vunpack.c.h.b16 %v62
    %v1770 = vunpack.c.l.b16 %v63
    %v1771 = vunpack.c.h.b16 %v63
    %v1772 = vunpack.c.l.b16 %v64
    %v1773 = vunpack.c.h.b16 %v64
    %v1774 = vunpack.c.l.b16 %v65
    %v1775 = vunpack.c.h.b16 %v65
    %v1776 = vunpack.c.l.b16 %v66
    %v1777 = vunpack.c.h.b16 %v66
    %v1778 = vunpack.c.l.b16 %v67
    %v1779 = vunpack.c.h.b16 %v67
    %v1780 = vunpack.c.l.b16 %v68
    %v1781 = vunpack.c.h.b16 %v68
    %v1782 = vunpack.c.l.b16 %v69
    %v1783 = vunpack.c.h.b16 %v69
    %v1784 = vunpack.c.l.b16 %v70
    %v1785 = vunpack.c.h.b16 %v70
    %v1786 = vunpack.c.l.b16 %v71
    %v1787 = vunpack.c.h.b16 %v71
    %v1788 = vunpack.c.l.b16 %v72
    %v1789 = vunpack.c.h.b16 %v72
    %v1790 = vunpack.c.l.b16 %v73
    %v1791 = vunpack.c.h.b16 %v73
    %v1792 = vunpack.c.l.b16 %v74
    %v1793 = vunpack.c.h.b16 %v74
    %v1794 = vunpack.c.l.b16 %v75
    %v1795 = vunpack.c.h.b16 %v75
    %v1796 = vunpack.c.l.b16 %v76
    %v1797 = vunpack.c.h.b16 %v76
    %v1798 = vunpack.c.l.b16 %v77
    %v1799 = vunpack.c.h.b16 %v77
    %v1800 = vunpack.c.l.b16 %v78
    %v1801 = vunpack.c.h.b16 %v78
    %v1802 = vunpack.c.l.b16 %v79
    %v1803 = vunpack.c.h.b16 %v79
    %v1804 = vunpack.c.l.b16 %v80
    %v1805 = vunpack.c.h.b16 %v80
    %v1806 = vunpack.c.l.b16 %v81
    %v1807 = vunpack.c.h.b16 %v81
    %v1808 = vunpack.c.l.b16 %v82
    %v1809 = vunpack.c.h.b16 %v82
    %v1810 = vunpack.c.l.b16 %v83
    %v1811 = vunpack.c.h.b16 %v83
    %v1812 = vunpack.c.l.b16 %v84
    %v1813 = vunpack.c.h.b16 %v84
    %v1814 = vunpack.c.l.b16 %v85
    %v1815 = vunpack.c.h.b16 %v85
    %v1816 = vunpack.c.l.b16 %v86
    %v1817 = vunpack.c.h.b16 %v86
    %v1818 = vunpack.c.l.b16 %v87
    %v1819 = vunpack.c.h.b16 %v87
    %v1820 = vunpack.c.l.b16 %v88
    %v1821 = vunpack.c.h.b16 %v88
    %v1822 = vunpack.c.l.b16 %v89
    %v1823 = vunpack.c.h.b16 %v89
    %v1824 = vunpack.c.l.b16 %v90
    %v1825 = vunpack.c.h.b16 %v90
    %v1826 = vunpack.c.l.b16 %v91
    %v1827 = vunpack.c.h.b16 %v91
    %v1828 = vunpack.c.l.b16 %v92
    %v1829 = vunpack.c.h.b16 %v92
    %v1830 = vunpack.c.l.b16 %v93
    %v1831 = vunpack.c.h.b16 %v93
    %v1832 = vunpack.c.l.b16 %v94
    %v1833 = vunpack.c.h.b16 %v94
    %v1834 = vunpack.c.l.b16 %v95
    %v1835 = vunpack.c.h.b16 %v95
    %v1836 = vunpack.c.l.b16 %v96
    %v1837 = vunpack.c.h.b16 %v96
    %v1838 = vunpack.c.l.b16 %v97
    %v1839 = vunpack.c.h.b16 %v97
    %v1840 = vunpack.c.l.b16 %v98
    %v1841 = vunpack.c.h.b16 %v98
    %v1842 = vunpack.c.l.b16 %v99
    %v1843 = vunpack.c.h.b16 %v99
    %v1844 = vunpack.c.l.b16 %v100
    %v1845 = vunpack.c.h.b16 %v100
    %v1846 = vunpack.c.l.b16 %v101
    %v1847 = vunpack.c.h.b16 %v101
    %v1848 = vunpack.c.l.b16 %v102
    %v1849 = vunpack.c.h.b16 %v102
    %v1850 = vunpack.c.l.b16 %v103
    %v1851 = vunpack.c.h.b16 %v103
    %v1852 = vunpack.c.l.b16 %v104
    %v1853 = vunpack.c.h.b16 %v104
    %v1854 = vunpack.c.l.b16 %v105
    %v1855 = vunpack.c.h.b16 %v105
    %v1856 = vunpack.c.l.b16 %v106
    %v1857 = vunpack.c.h.b16 %v106
    %v1858 = vunpack.c.l.b16 %v107
    %v1859 = vunpack.c.h.b16 %v107
    %v1860 = vunpack.c.l.b16 %v108
    %v1861 = vunpack.c.h.b16 %v108
    %v1862 = vunpack.c.l.b16 %v109
    %v1863 = vunpack.c.h.b16 %v109
    %v1864 = vunpack.c.l.b16 %v110
    %v1865 = vunpack.c.h.b16 %v110
    %v1866 = vunpack.c.l.b16 %v111
    %v1867 = vunpack.c.h.b16 %v111
    %v1868 = vunpack.c.l.b16 %v112
    %v1869 = vunpack.c.h.b16 %v112
    %v1870 = vunpack.c.l.b16 %v113
    %v1871 = vunpack.c.h.b16 %v113
    %v1872 = vunpack.c.l.b16 %v114
    %v1873 = vunpack.c.h.b16 %v114
    %v1874 = vunpack.c.l.b16 %v115
    %v1875 = vunpack.c.h.b16 %v115
    %v1876 = vunpack.c.l.b16 %v116
    %v1877 = vunpack.c.h.b16 %v116
    %v1878 = vunpack.c.l.b16 %v117
    %v1879 = vunpack.c.h.b16 %v117
    %v1880 = vunpack.c.l.b16 %v118
    %v1881 = vunpack.c.h.b16 %v118
    %v1882 = vunpack.c.l.b16 %v119
    %v1883 = vunpack.c.h.b16 %v119
    %v1884 = vunpack.c.l.b16 %v120
    %v1885 = vunpack.c.h.b16 %v120
    %v1886 = vunpack.c.l.b16 %v121
    %v1887 = vunpack.c.h.b16 %v121
    %v1888 = vunpack.c.l.b16 %v122
    %v1889 = vunpack.c.h.b16 %v122
    %v1890 = vunpack.c.l.b16 %v123
    %v1891 = vunpack.c.h.b16 %v123
    %v1892 = vunpack.c.l.b16 %v124
    %v1893 = vunpack.c.h.b16 %v124
    %v1894 = vunpack.c.l.b16 %v125
    %v1895 = vunpack.c.h.b16 %v125
    %v1896 = vunpack.c.l.b16 %v126
    %v1897 = vunpack.c.h.b16 %v126
    %v1898 = vunpack.c.l.b16 %v127
    %v1899 = vunpack.c.h.b16 %v127
    %v1900 = vunpack.c.l.b16 %v128
    %v1901 = vunpack.c.h.b16 %v128
    %v1902 = vunpack.c.l.b16 %v129
    %v1903 = vunpack.c.h.b16 %v129
    %v1904 = vunpack.c.l.b16 %v130
    %v1905 = vunpack.c.h.b16 %v130
    %v1906 = vunpack.c.l.b16 %v131
    %v1907 = vunpack.c.h.b16 %v131
    %v1908 = vunpack.c.l.b16 %v132
    %v1909 = vunpack.c.h.b16 %v132
    %v1910 = vunpack.c.l.b16 %v133
    %v1911 = vunpack.c.h.b16 %v133
    %v1912 = vunpack.c.l.b16 %v134
    %v1913 = vunpack.c.h.b16 %v134
    %v1914 = vunpack.c.l.b16 %v135
    %v1915 = vunpack.c.h.b16 %v135
    %v1916 = vunpack.c.l.b16 %v136
    %v1917 = vunpack.c.h.b16 %v136
    %v1918 = vunpack.c.l.b16 %v137
    %v1919 = vunpack.c.h.b16 %v137
    %v1920 = vunpack.c.l.b16 %v138
    %v1921 = vunpack.c.h.b16 %v138
    %v1922 = vunpack.c.l.b16 %v139
    %v1923 = vunpack.c.h.b16 %v139
    %v1924 = vunpack.c.l.b16 %v140
    %v1925 = vunpack.c.h.b16 %v140
    %v1926 = vunpack.c.l.b16 %v141
    %v1927 = vunpack.c.h.b16 %v141
    %v1928 = vunpack.c.l.b16 %v142
    %v1929 = vunpack.c.h.b16 %v142
    %v1930 = vunpack.c.l.b16 %v143
    %v1931 = vunpack.c.h.b16 %v143
    %v1932 = vunpack.c.l.b16 %v144
    %v1933 = vunpack.c.h.b16 %v144
    %v1934 = vunpack.c.l.b16 %v145
    %v1935 = vunpack.c.h.b16 %v145
    %v1936 = vunpack.c.l.b16 %v146
    %v1937 = vunpack.c.h.b16 %v146
    %v1938 = vunpack.c.l.b16 %v147
    %v1939 = vunpack.c.h.b16 %v147
    %v1940 = vunpack.c.l.b16 %v148
    %v1941 = vunpack.c.h.b16 %v148
    %v1942 = vunpack.c.l.b16 %v149
    %v1943 = vunpack.c.h.b16 %v149
    %v1944 = vunpack.c.l.b16 %v150
    %v1945 = vunpack.c.h.b16 %v150
    %v1946 = vunpack.c.l.b16 %v151
    %v1947 = vunpack.c.h.b16 %v151
    %v1948 = vunpack.c.l.b16 %v152
    %v1949 = vunpack.c.h.b16 %v152
    %v1950 = vunpack.c.l.b16 %v153
    %v1951 = vunpack.c.h.b16 %v153
    %v1952 = vunpack.c.l.b16 %v154
    %v1953 = vunpack.c.h.b16 %v154
    %v1954 = vunpack.c.l.b16 %v155
    %v1955 = vunpack.c.h.b16 %v155
    %v1956 = vunpack.c.l.b16 %v156
    %v1957 = vunpack.c.h.b16 %v156
    %v1958 = vunpack.c.l.b16 %v157
    %v1959 = vunpack.c.h.b16 %v157
    %v1960 = vunpack.c.l.b16 %v158
    %v1961 = vunpack.c.h.b16 %v158
    %v1962 = vunpack.c.l.b16 %v159
    %v1963 = vunpack.c.h.b16 %v159
    %v1964 = vunpack.c.l.b16 %v160
    %v1965 = vunpack.c.h.b16 %v160
    %v1966 = vunpack.c.l.b16 %v161
    %v1967 = vunpack.c.h.b16 %v161
    %v1968 = vunpack.c.l.b16 %v162
    %v1969 = vunpack.c.h.b16 %v162
    %v1970 = vunpack.c.l.b16 %v163
    %v1971 = vunpack.c.h.b16 %v163
    %v1972 = vunpack.c.l.b16 %v164
    %v1973 = vunpack.c.h.b16 %v164
    %v1974 = vunpack.c.l.b16 %v165
    %v1975 = vunpack.c.h.b16 %v165
    %v1976 = vunpack.c.l.b16 %v166
    %v1977 = vunpack.c.h.b16 %v166
    %v1978 = vunpack.c.l.b16 %v167
    %v1979 = vunpack.c.h.b16 %v167
    %v1980 = vunpack.c.l.b16 %v168
    %v1981 = vunpack.c.h.b16 %v168
    %v1982 = vunpack.c.l.b16 %v169
    %v1983 = vunpack.c.h.b16 %v169
    %v1984 = vunpack.c.l.b16 %v170
    %v1985 = vunpack.c.h.b16 %v170
    %v1986 = vunpack.c.l.b16 %v171
    %v1987 = vunpack.c.h.b16 %v171
    %v1988 = vunpack.c.l.b16 %v172
    %v1989 = vunpack.c.h.b16 %v172
    %v1990 = vunpack.c.l.b16 %v173
    %v1991 = vunpack.c.h.b16 %v173
    %v1992 = vunpack.c.l.b16 %v174
    %v1993 = vunpack.c.h.b16 %v174
    %v1994 = vunpack.c.l.b16 %v175
    %v1995 = vunpack.c.h.b16 %v175
    %v1996 = vunpack.c.l.b16 %v176
    %v1997 = vunpack.c.h.b16 %v176
    %v1998 = vunpack.c.l.b16 %v177
    %v1999 = vunpack.c.h.b16 %v177
    %v2000 = vunpack.c.l.b16 %v178
    %v2001 = vunpack.c.h.b16 %v178
    %v2002 = vunpack.c.l.b16 %v179
    %v2003 = vunpack.c.h.b16 %v179
    %v2004 = vunpack.c.l.b16 %v180
    %v2005 = vunpack.c.h.b16 %v180
    %v2006 = vunpack.c.l.b16 %v181
    %v2007 = vunpack.c.h.b16 %v181
    %v2008 = vunpack.c.l.b16 %v182
    %v2009 = vunpack.c.h.b16 %v182
    %v2010 = vunpack.c.l.b16 %v183
    %v2011 = vunpack.c.h.b16 %v183
    %v2012 = vunpack.c.l.b16 %v184
    %v2013 = vunpack.c.h.b16 %v184
    %v2014 = vunpack.c.l.b16 %v185
    %v2015 = vunpack.c.h.b16 %v185
    %v2016 = vunpack.c.l.b16 %v186
    %v2017 = vunpack.c.h.b16 %v186
    %v2018 = vunpack.c.l.b16 %v187
    %v2019 = vunpack.c.h.b16 %v187
    %v2020 = vunpack.c.l.b16 %v188
    %v2021 = vunpack.c.h.b16 %v188
    %v2022 = vunpack.c.l.b16 %v189
    %v2023 = vunpack.c.h.b16 %v189
    %v2024 = vunpack.c.l.b16 %v190
    %v2025 = vunpack.c.h.b16 %v190
    %v2026 = vunpack.c.l.b16 %v191
    %v2027 = vunpack.c.h.b16 %v191
    %v2028 = vunpack.c.l.b16 %v192
    %v2029 = vunpack.c.h.b16 %v192
    %v2030 = vunpack.c.l.b16 %v193
    %v2031 = vunpack.c.h.b16 %v193
    %v2032 = vunpack.c.l.b16 %v194
    %v2033 = vunpack.c.h.b16 %v194
    %v2034 = vunpack.c.l.b16 %v195
    %v2035 = vunpack.c.h.b16 %v195
    %v2036 = vunpack.c.l.b16 %v196
    %v2037 = vunpack.c.h.b16 %v196
    %v2038 = vunpack.c.l.b16 %v197
    %v2039 = vunpack.c.h.b16 %v197
    %v2040 = vunpack.c.l.b16 %v198
    %v2041 = vunpack.c.h.b16 %v198
    %v2042 = vunpack.c.l.b16 %v199
    %v2043 = vunpack.c.h.b16 %v199
    %v2044 = vunpack.c.l.b16 %v200
    %v2045 = vunpack.c.h.b16 %v200
    %v2046 = vunpack.c.l.b16 %v201
    %v2047 = vunpack.c.h.b16 %v201
    %v2048 = vunpack.c.l.b16 %v202
    %v2049 = vunpack.c.h.b16 %v202
    %v2050 = vunpack.c.l.b16 %v203
    %v2051 = vunpack.c.h.b16 %v203
    %v2052 = vunpack.c.l.b16 %v204
    %v2053 = vunpack.c.h.b16 %v204
    %v2054 = vunpack.c.l.b16 %v205
    %v2055 = vunpack.c.h.b16 %v205
    %v2056 = vunpack.c.l.b16 %v206
    %v2057 = vunpack.c.h.b16 %v206
    %v2058 = vunpack.c.l.b16 %v207
    %v2059 = vunpack.c.h.b16 %v207
    %v2060 = vunpack.c.l.b16 %v208
    %v2061 = vunpack.c.h.b16 %v208
    %v2062 = vunpack.c.l.b16 %v209
    %v2063 = vunpack.c.h.b16 %v209
    %v2064 = vunpack.c.l.b16 %v210
    %v2065 = vunpack.c.h.b16 %v210
    %v2066 = vunpack.c.l.b16 %v211
    %v2067 = vunpack.c.h.b16 %v211
    %v2068 = vunpack.c.l.b16 %v212
    %v2069 = vunpack.c.h.b16 %v212
    %v2070 = vunpack.c.l.b16 %v213
    %v2071 = vunpack.c.h.b16 %v213
    %v2072 = vunpack.c.l.b16 %v214
    %v2073 = vunpack.c.h.b16 %v214
    %v2074 = vunpack.c.l.b16 %v215
    %v2075 = vunpack.c.h.b16 %v215
    %v2076 = vunpack.c.l.b16 %v216
    %v2077 = vunpack.c.h.b16 %v216
    %v2078 = vunpack.c.l.b16 %v217
    %v2079 = vunpack.c.h.b16 %v217
    %v2080 = vunpack.c.l.b16 %v218
    %v2081 = vunpack.c.h.b16 %v218
    %v2082 = vunpack.c.l.b16 %v219
    %v2083 = vunpack.c.h.b16 %v219
    %v2084 = vunpack.c.l.b16 %v220
    %v2085 = vunpack.c.h.b16 %v220
    %v2086 = vunpack.c.l.b16 %v221
    %v2087 = vunpack.c.h.b16 %v221
    %v2088 = vunpack.c.l.b16 %v222
    %v2089 = vunpack.c.h.b16 %v222
    %v2090 = vunpack.c.l.b16 %v223
    %v2091 = vunpack.c.h.b16 %v223
    %v2092 = vunpack.c.l.b16 %v224
    %v2093 = vunpack.c.h.b16 %v224
    %v2094 = vunpack.c.l.b16 %v225
    %v2095 = vunpack.c.h.b16 %v225
    %v2096 = vunpack.c.l.b16 %v226
    %v2097 = vunpack.c.h.b16 %v226
    %v2098 = vunpack.c.l.b16 %v227
    %v2099 = vunpack.c.h.b16 %v227
    %v2100 = vunpack.c.l.b16 %v228
    %v2101 = vunpack.c.h.b16 %v228
    %v2102 = vunpack.c.l.b16 %v229
    %v2103 = vunpack.c.h.b16 %v229
    %v2104 = vunpack.c.l.b16 %v230
    %v2105 = vunpack.c.h.b16 %v230
    %v2106 = vunpack.c.l.b16 %v231
    %v2107 = vunpack.c.h.b16 %v231
    %v2108 = vunpack.c.l.b16 %v232
    %v2109 = vunpack.c.h.b16 %v232
    %v2110 = vunpack.c.l.b16 %v233
    %v2111 = vunpack.c.h.b16 %v233
    %v2112 = vunpack.c.l.b16 %v234
    %v2113 = vunpack.c.h.b16 %v234
    %v2114 = vunpack.c.l.b16 %v235
    %v2115 = vunpack.c.h.b16 %v235
    %v2116 = vunpack.c.l.b16 %v236
    %v2117 = vunpack.c.h.b16 %v236
    %v2118 = vunpack.c.l.b16 %v237
    %v2119 = vunpack.c.h.b16 %v237
    %v2120 = vunpack.c.l.b16 %v238
    %v2121 = vunpack.c.h.b16 %v238
    %v2122 = vunpack.c.l.b16 %v239
    %v2123 = vunpack.c.h.b16 %v239
    %v2124 = vunpack.c.l.b16 %v240
    %v2125 = vunpack.c.h.b16 %v240
    %v2126 = vunpack.c.l.b16 %v241
    %v2127 = vunpack.c.h.b16 %v241
    %v2128 = vunpack.c.l.b16 %v242
    %v2129 = vunpack.c.h.b16 %v242
    %v2130 = vunpack.c.l.b16 %v243
    %v2131 = vunpack.c.h.b16 %v243
    %v2132 = vunpack.c.l.b16 %v244
    %v2133 = vunpack.c.h.b16 %v244
    %v2134 = vunpack.c.l.b16 %v245
    %v2135 = vunpack.c.h.b16 %v245
    %v2136 = vunpack.c.l.b16 %v246
    %v2137 = vunpack.c.h.b16 %v246
    %v2138 = vunpack.c.l.b16 %v247
    %v2139 = vunpack.c.h.b16 %v247
    %v2140 = vunpack.c.l.b16 %v248
    %v2141 = vunpack.c.h.b16 %v248
    %v2142 = vunpack.c.l.b16 %v249
    %v2143 = vunpack.c.h.b16 %v249
    %v2144 = vunpack.c.l.b16 %v250
    %v2145 = vunpack.c.h.b16 %v250
    %v2146 = vunpack.c.l.b16 %v251
    %v2147 = vunpack.c.h.b16 %v251
    %v2148 = vunpack.c.l.b16 %v252
    %v2149 = vunpack.c.h.b16 %v252
    %v2150 = vunpack.c.l.b16 %v253
    %v2151 = vunpack.c.h.b16 %v253
    %v2152 = vunpack.c.l.b16 %v254
    %v2153 = vunpack.c.h.b16 %v254
    %v2154 = vunpack.c.l.b16 %v255
    %v2155 = vunpack.c.h.b16 %v255
    %v2156 = vunpack.c.l.b16 %v256
    %v2157 = vunpack.c.h.b16 %v256
    %v2158 = vunpack.c.l.b16 %v257
    %v2159 = vunpack.c.h.b16 %v257
    %v2160 = vunpack.c.l.b16 %v258
    %v2161 = vunpack.c.h.b16 %v258
    %v2162 = vunpack.c.l.b16 %v259
    %v2163 = vunpack.c.h.b16 %v259
    %v2164 = vunpack.c.l.b16 %v260
    %v2165 = vunpack.c.h.b16 %v260
    %v2166 = vunpack.c.l.b16 %v261
    %v2167 = vunpack.c.h.b16 %v261
    %v2168 = vunpack.c.l.b16 %v262
    %v2169 = vunpack.c.h.b16 %v262
    %v2170 = vunpack.c.l.b16 %v263
    %v2171 = vunpack.c.h.b16 %v263
    %v2172 = vunpack.c.l.b16 %v264
    %v2173 = vunpack.c.h.b16 %v264
    %v2174 = vunpack.c.l.b16 %v265
    %v2175 = vunpack.c.h.b16 %v265
    %v2176 = vunpack.c.l.b16 %v266
    %v2177 = vunpack.c.h.b16 %v266
    %v2178 = vunpack.c.l.b16 %v267
    %v2179 = vunpack.c.h.b16 %v267
    %v2180 = vunpack.c.l.b16 %v268
    %v2181 = vunpack.c.h.b16 %v268
    %v2182 = vunpack.c.l.b16 %v269
    %v2183 = vunpack.c.h.b16 %v269
    %v2184 = vunpack.c.l.b16 %v270
    %v2185 = vunpack.c.h.b16 %v270
    %v2186 = vunpack.c.l.b16 %v271
    %v2187 = vunpack.c.h.b16 %v271
    %v2188 = vunpack.c.l.b16 %v272
    %v2189 = vunpack.c.h.b16 %v272
    %v2190 = vunpack.c.l.b16 %v273
    %v2191 = vunpack.c.h.b16 %v273
    %v2192 = vunpack.c.l.b16 %v274
    %v2193 = vunpack.c.h.b16 %v274
    %v2194 = vunpack.c.l.b16 %v275
    %v2195 = vunpack.c.h.b16 %v275
    %v2196 = vunpack.c.l.b16 %v276
    %v2197 = vunpack.c.h.b16 %v276
    %v2198 = vunpack.c.l.b16 %v277
    %v2199 = vunpack.c.h.b16 %v277
    %v2200 = vunpack.c.l.b16 %v278
    %v2201 = vunpack.c.h.b16 %v278
    %v2202 = vunpack.c.l.b16 %v279
    %v2203 = vunpack.c.h.b16 %v279
    %v2204 = vunpack.c.l.b16 %v280
    %v2205 = vunpack.c.h.b16 %v280
    %v2206 = vunpack.c.l.b16 %v281
    %v2207 = vunpack.c.h.b16 %v281
    %v2208 = vunpack.c.l.b16 %v282
    %v2209 = vunpack.c.h.b16 %v282
    %v2210 = vunpack.c.l.b16 %v283
    %v2211 = vunpack.c.h.b16 %v283
    %v2212 = vunpack.c.l.b16 %v284
    %v2213 = vunpack.c.h.b16 %v284
    %v2214 = vunpack.c.l.b16 %v285
    %v2215 = vunpack.c.h.b16 %v285
    %v2216 = vunpack.c.l.b16 %v286
    %v2217 = vunpack.c.h.b16 %v286
    %v2218 = vunpack.c.l.b16 %v287
    %v2219 = vunpack.c.h.b16 %v287
    %v2220 = vunpack.c.l.b16 %v288
    %v2221 = vunpack.c.h.b16 %v288
    %v2222 = vunpack.c.l.b16 %v289
    %v2223 = vunpack.c.h.b16 %v289
    %v2224 = vunpack.c.l.b16 %v290
    %v2225 = vunpack.c.h.b16 %v290
    %v2226 = vunpack.c.l.b16 %v291
    %v2227 = vunpack.c.h.b16 %v291
    %v2228 = vunpack.c.l.b16 %v292
    %v2229 = vunpack.c.h.b16 %v292
    %v2230 = vunpack.c.l.b16 %v293
    %v2231 = vunpack.c.h.b16 %v293
    %v2232 = vunpack.c.l.b16 %v294
    %v2233 = vunpack.c.h.b16 %v294
    %v2234 = vunpack.c.l.b16 %v295
    %v2235 = vunpack.c.h.b16 %v295
    %v2236 = vunpack.c.l.b16 %v296
    %v2237 = vunpack.c.h.b16 %v296
    %v2238 = vunpack.c.l.b16 %v297
    %v2239 = vunpack.c.h.b16 %v297
    %v2240 = vunpack.c.l.b16 %v298
    %v2241 = vunpack.c.h.b16 %v298
    %v2242 = vunpack.c.l.b16 %v299
    %v2243 = vunpack.c.h.b16 %v299
    %v2244 = vunpack.c.l.b16 %v300
    %v2245 = vunpack.c.h.b16 %v300
    %v2246 = vunpack.c.l.b16 %v301
    %v2247 = vunpack.c.h.b16 %v301
    %v2248 = vunpack.c.l.b16 %v302
    %v2249 = vunpack.c.h.b16 %v302
    %v2250 = vunpack.c.l.b16 %v303
    %v2251 = vunpack.c.h.b16 %v303
    %v2252 = vunpack.c.l.b16 %v304
    %v2253 = vunpack.c.h.b16 %v304
    %v2254 = vunpack.c.l.b16 %v305
    %v2255 = vunpack.c.h.b16 %v305
    %v2256 = vunpack.c.l.b16 %v306
    %v2257 = vunpack.c.h.b16 %v306
    %v2258 = vunpack.c.l.b16 %v307
    %v2259 = vunpack.c.h.b16 %v307
    %v2260 = vunpack.c.l.b16 %v308
    %v2261 = vunpack.c.h.b16 %v308
    %v2262 = vunpack.c.l.b16 %v309
    %v2263 = vunpack.c.h.b16 %v309
    %v2264 = vunpack.c.l.b16 %v310
    %v2265 = vunpack.c.h.b16 %v310
    %v2266 = vunpack.c.l.b16 %v311
    %v2267 = vunpack.c.h.b16 %v311
    %v2268 = vunpack.c.l.b16 %v312
    %v2269 = vunpack.c.h.b16 %v312
    %v2270 = vunpack.c.l.b16 %v313
    %v2271 = vunpack.c.h.b16 %v313
    %v2272 = vunpack.c.l.b16 %v314
    %v2273 = vunpack.c.h.b16 %v314
    %v2274 = vunpack.c.l.b16 %v315
    %v2275 = vunpack.c.h.b16 %v315
    %v2276 = vunpack.c.l.b16 %v316
    %v2277 = vunpack.c.h.b16 %v316
    %v2278 = vunpack.c.l.b16 %v317
    %v2279 = vunpack.c.h.b16 %v317
    %v2280 = vunpack.c.l.b16 %v318
    %v2281 = vunpack.c.h.b16 %v318
    %v2282 = vunpack.c.l.b16 %v319
    %v2283 = vunpack.c.h.b16 %v319
    %v2284 = vunpack.c.l.b16 %v320
    %v2285 = vunpack.c.h.b16 %v320
    %v2286 = vunpack.c.l.b16 %v321
    %v2287 = vunpack.c.h.b16 %v321
    %v2288 = vunpack.c.l.b16 %v322
    %v2289 = vunpack.c.h.b16 %v322
    %v2290 = vunpack.c.l.b16 %v323
    %v2291 = vunpack.c.h.b16 %v323
    %v2292 = vunpack.c.l.b16 %v324
    %v2293 = vunpack.c.h.b16 %v324
    %v2294 = vunpack.c.l.b16 %v325
    %v2295 = vunpack.c.h.b16 %v325
    %v2296 = vunpack.c.l.b16 %v326
    %v2297 = vunpack.c.h.b16 %v326
    %v2298 = vunpack.c.l.b16 %v327
    %v2299 = vunpack.c.h.b16 %v327
    %v2300 = vunpack.c.l.b16 %v328
    %v2301 = vunpack.c.h.b16 %v328
    %v2302 = vunpack.c.l.b16 %v329
    %v2303 = vunpack.c.h.b16 %v329
    %v2304 = vunpack.c.l.b16 %v330
    %v2305 = vunpack.c.h.b16 %v330
    %v2306 = vunpack.c.l.b16 %v331
    %v2307 = vunpack.c.h.b16 %v331
    %v2308 = vunpack.c.l.b16 %v332
    %v2309 = vunpack.c.h.b16 %v332
    %v2310 = vunpack.c.l.b16 %v333
    %v2311 = vunpack.c.h.b16 %v333
    %v2312 = vunpack.c.l.b16 %v334
    %v2313 = vunpack.c.h.b16 %v334
    %v2314 = vunpack.c.l.b16 %v335
    %v2315 = vunpack.c.h.b16 %v335
    %v2316 = vunpack.c.l.b16 %v336
    %v2317 = vunpack.c.h.b16 %v336
    %v2318 = vunpack.c.l.b16 %v337
    %v2319 = vunpack.c.h.b16 %v337
    %v2320 = vunpack.c.l.b16 %v338
    %v2321 = vunpack.c.h.b16 %v338
    %v2322 = vunpack.c.l.b16 %v339
    %v2323 = vunpack.c.h.b16 %v339
    %v2324 = vunpack.c.l.b16 %v340
    %v2325 = vunpack.c.h.b16 %v340
    %v2326 = vunpack.c.l.b16 %v341
    %v2327 = vunpack.c.h.b16 %v341
    %v2328 = vunpack.c.l.b16 %v342
    %v2329 = vunpack.c.h.b16 %v342
    %v2330 = vunpack.c.l.b16 %v343
    %v2331 = vunpack.c.h.b16 %v343
    %v2332 = vunpack.c.l.b16 %v344
    %v2333 = vunpack.c.h.b16 %v344
    %v2334 = vunpack.c.l.b16 %v345
    %v2335 = vunpack.c.h.b16 %v345
    %v2336 = vunpack.c.l.b16 %v346
    %v2337 = vunpack.c.h.b16 %v346
    %v2338 = vunpack.c.l.b16 %v347
    %v2339 = vunpack.c.h.b16 %v347
    %v2340 = vunpack.c.l.b16 %v348
    %v2341 = vunpack.c.h.b16 %v348
    %v2342 = vunpack.c.l.b16 %v349
    %v2343 = vunpack.c.h.b16 %v349
    %v2344 = vunpack.c.l.b16 %v350
    %v2345 = vunpack.c.h.b16 %v350
    %v2346 = vunpack.c.l.b16 %v351
    %v2347 = vunpack.c.h.b16 %v351
    %v2348 = vunpack.c.l.b16 %v352
    %v2349 = vunpack.c.h.b16 %v352
    %v2350 = vunpack.c.l.b16 %v353
    %v2351 = vunpack.c.h.b16 %v353
    %v2352 = vunpack.c.l.b16 %v354
    %v2353 = vunpack.c.h.b16 %v354
    %v2354 = vunpack.c.l.b16 %v355
    %v2355 = vunpack.c.h.b16 %v355
    %v2356 = vunpack.c.l.b16 %v356
    %v2357 = vunpack.c.h.b16 %v356
    %v2358 = vunpack.c.l.b16 %v357
    %v2359 = vunpack.c.h.b16 %v357
    %v2360 = vunpack.c.l.b16 %v358
    %v2361 = vunpack.c.h.b16 %v358
    %v2362 = vunpack.c.l.b16 %v359
    %v2363 = vunpack.c.h.b16 %v359
    %v2364 = vunpack.c.l.b16 %v360
    %v2365 = vunpack.c.h.b16 %v360
    %v2366 = vunpack.c.l.b16 %v361
    %v2367 = vunpack.c.h.b16 %v361
    %v2368 = vunpack.c.l.b16 %v362
    %v2369 = vunpack.c.h.b16 %v362
    %v2370 = vunpack.c.l.b16 %v363
    %v2371 = vunpack.c.h.b16 %v363
    %v2372 = vunpack.c.l.b16 %v364
    %v2373 = vunpack.c.h.b16 %v364
    %v2374 = vunpack.c.l.b16 %v365
    %v2375 = vunpack.c.h.b16 %v365
    %v2376 = vunpack.c.l.b16 %v366
    %v2377 = vunpack.c.h.b16 %v366
    %v2378 = vunpack.c.l.b16 %v367
    %v2379 = vunpack.c.h.b16 %v367
    %v2380 = vunpack.c.l.b16 %v368
    %v2381 = vunpack.c.h.b16 %v368
    %v2382 = vunpack.c.l.b16 %v369
    %v2383 = vunpack.c.h.b16 %v369
    %v2384 = vunpack.c.l.b16 %v370
    %v2385 = vunpack.c.h.b16 %v370
    %v2386 = vunpack.c.l.b16 %v371
    %v2387 = vunpack.c.h.b16 %v371
    %v2388 = vunpack.c.l.b16 %v372
    %v2389 = vunpack.c.h.b16 %v372
    %v2390 = vunpack.c.l.b16 %v373
    %v2391 = vunpack.c.h.b16 %v373
    %v2392 = vunpack.c.l.b16 %v374
    %v2393 = vunpack.c.h.b16 %v374
    %v2394 = vunpack.c.l.b16 %v375
    %v2395 = vunpack.c.h.b16 %v375
    %v2396 = vunpack.c.l.b16 %v376
    %v2397 = vunpack.c.h.b16 %v376
    %v2398 = vunpack.c.l.b16 %v377
    %v2399 = vunpack.c.h.b16 %v377
    %v2400 = vunpack.c.l.b16 %v378
    %v2401 = vunpack.c.h.b16 %v378
    %v2402 = vunpack.c.l.b16 %v379
    %v2403 = vunpack.c.h.b16 %v379
    %v2404 = vunpack.c.l.b16 %v380
    %v2405 = vunpack.c.h.b16 %v380
    %v2406 = vunpack.c.l.b16 %v381
    %v2407 = vunpack.c.h.b16 %v381
    %v2408 = vunpack.c.l.b16 %v382
    %v2409 = vunpack.c.h.b16 %v382
    %v2410 = vunpack.c.l.b16 %v383
    %v2411 = vunpack.c.h.b16 %v383
    %v2412 = vunpack.c.l.b16 %v384
    %v2413 = vunpack.c.h.b16 %v384
    %v2414 = vunpack.c.l.b16 %v385
    %v2415 = vunpack.c.h.b16 %v385
    %v2416 = vunpack.c.l.b16 %v386
    %v2417 = vunpack.c.h.b16 %v386
    %v2418 = vunpack.c.l.b16 %v387
    %v2419 = vunpack.c.h.b16 %v387
    %v2420 = vunpack.c.l.b16 %v388
    %v2421 = vunpack.c.h.b16 %v388
    %v2422 = vunpack.c.l.b16 %v389
    %v2423 = vunpack.c.h.b16 %v389
    %v2424 = vunpack.c.l.b16 %v390
    %v2425 = vunpack.c.h.b16 %v390
    %v2426 = vunpack.c.l.b16 %v391
    %v2427 = vunpack.c.h.b16 %v391
    %v2428 = vunpack.c.l.b16 %v392
    %v2429 = vunpack.c.h.b16 %v392
    %v2430 = vunpack.c.l.b16 %v393
    %v2431 = vunpack.c.h.b16 %v393
    %v2432 = vunpack.c.l.b16 %v394
    %v2433 = vunpack.c.h.b16 %v394
    %v2434 = vunpack.c.l.b16 %v395
    %v2435 = vunpack.c.h.b16 %v395
    %v2436 = vunpack.c.l.b16 %v396
    %v2437 = vunpack.c.h.b16 %v396
    %v2438 = vunpack.c.l.b16 %v397
    %v2439 = vunpack.c.h.b16 %v397
    %v2440 = vunpack.c.l.b16 %v398
    %v2441 = vunpack.c.h.b16 %v398
    %v2442 = vunpack.c.l.b16 %v399
    %v2443 = vunpack.c.h.b16 %v399
    %v2444 = vunpack.c.l.b16 %v400
    %v2445 = vunpack.c.h.b16 %v400
    %v2446 = vunpack.c.l.b16 %v401
    %v2447 = vunpack.c.h.b16 %v401
    %v2448 = vunpack.c.l.b16 %v402
    %v2449 = vunpack.c.h.b16 %v402
    %v2450 = vunpack.c.l.b16 %v403
    %v2451 = vunpack.c.h.b16 %v403
    %v2452 = vunpack.c.l.b16 %v404
    %v2453 = vunpack.c.h.b16 %v404
    %v2454 = vunpack.c.l.b16 %v405
    %v2455 = vunpack.c.h.b16 %v405
    %v2456 = vunpack.c.l.b16 %v406
    %v2457 = vunpack.c.h.b16 %v406
    %v2458 = vunpack.c.l.b16 %v407
    %v2459 = vunpack.c.h.b16 %v407
    %v2460 = vunpack.c.l.b16 %v408
    %v2461 = vunpack.c.h.b16 %v408
    %v2462 = vunpack.c.l.b16 %v409
    %v2463 = vunpack.c.h.b16 %v409
    %v2464 = vunpack.c.l.b16 %v410
    %v2465 = vunpack.c.h.b16 %v410
    %v2466 = vunpack.c.l.b16 %v411
    %v2467 = vunpack.c.h.b16 %v411
    %v2468 = vunpack.c.l.b16 %v412
    %v2469 = vunpack.c.h.b16 %v412
    %v2470 = vunpack.c.l.b16 %v413
    %v2471 = vunpack.c.h.b16 %v413
    %v2472 = vunpack.c.l.b16 %v414
    %v2473 = vunpack.c.h.b16 %v414
    %v2474 = vunpack.c.l.b16 %v415
    %v2475 = vunpack.c.h.b16 %v415
    %v2476 = vunpack.c.l.b16 %v416
    %v2477 = vunpack.c.h.b16 %v416
    %v2478 = vunpack.c.l.b16 %v417
    %v2479 = vunpack.c.h.b16 %v417
    %v2480 = vunpack.c.l.b16 %v418
    %v2481 = vunpack.c.h.b16 %v418
    %v2482 = vunpack.c.l.b16 %v419
    %v2483 = vunpack.c.h.b16 %v419
    %v2484 = vunpack.c.l.b16 %v420
    %v2485 = vunpack.c.h.b16 %v420
    %v2486 = vunpack.c.l.b16 %v421
    %v2487 = vunpack.c.h.b16 %v421
    %v2488 = vunpack.c.l.b16 %v422
    %v2489 = vunpack.c.h.b16 %v422
    %v2490 = vunpack.c.l.b16 %v423
    %v2491 = vunpack.c.h.b16 %v423
    %v2492 = vunpack.c.l.b16 %v424
    %v2493 = vunpack.c.h.b16 %v424
    %v2494 = vunpack.c.l.b16 %v425
    %v2495 = vunpack.c.h.b16 %v425
    %v2496 = vunpack.c.l.b16 %v426
    %v2497 = vunpack.c.h.b16 %v426
    %v2498 = vunpack.c.l.b16 %v427
    %v2499 = vunpack.c.h.b16 %v427
    %v2500 = vunpack.c.l.b16 %v428
    %v2501 = vunpack.c.h.b16 %v428
    %v2502 = vunpack.c.l.b16 %v429
    %v2503 = vunpack.c.h.b16 %v429
    %v2504 = vunpack.c.l.b16 %v430
    %v2505 = vunpack.c.h.b16 %v430
    %v2506 = vunpack.c.l.b16 %v431
    %v2507 = vunpack.c.h.b16 %v431
    %v2508 = vunpack.c.l.b16 %v432
    %v2509 = vunpack.c.h.b16 %v432
    %v2510 = vunpack.c.l.b16 %v433
    %v2511 = vunpack.c.h.b16 %v433
    %v2512 = vunpack.c.l.b16 %v434
    %v2513 = vunpack.c.h.b16 %v434
    %v2514 = vunpack.c.l.b16 %v435
    %v2515 = vunpack.c.h.b16 %v435
    %v2516 = vunpack.c.l.b16 %v436
    %v2517 = vunpack.c.h.b16 %v436
    %v2518 = vunpack.c.l.b16 %v437
    %v2519 = vunpack.c.h.b16 %v437
    %v2520 = vunpack.c.l.b16 %v438
    %v2521 = vunpack.c.h.b16 %v438
    %v2522 = vunpack.c.l.b16 %v439
    %v2523 = vunpack.c.h.b16 %v439
    %v2524 = vunpack.c.l.b16 %v440
    %v2525 = vunpack.c.h.b16 %v440
    %v2526 = vunpack.c.l.b16 %v441
    %v2527 = vunpack.c.h.b16 %v441
    %v2528 = vunpack.c.l.b16 %v442
    %v2529 = vunpack.c.h.b16 %v442
    %v2530 = vunpack.c.l.b16 %v443
    %v2531 = vunpack.c.h.b16 %v443
    %v2532 = vunpack.c.l.b16 %v444
    %v2533 = vunpack.c.h.b16 %v444
    %v2534 = vunpack.c.l.b16 %v445
    %v2535 = vunpack.c.h.b16 %v445
    %v2536 = vunpack.c.l.b16 %v446
    %v2537 = vunpack.c.h.b16 %v446
    %v2538 = vunpack.c.l.b16 %v447
    %v2539 = vunpack.c.h.b16 %v447
    %v2540 = vunpack.c.l.b16 %v448
    %v2541 = vunpack.c.h.b16 %v448
    %v2542 = vunpack.c.l.b16 %v449
    %v2543 = vunpack.c.h.b16 %v449
    %v2544 = vunpack.c.l.b16 %v450
    %v2545 = vunpack.c.h.b16 %v450
    %v2546 = vunpack.c.l.b16 %v451
    %v2547 = vunpack.c.h.b16 %v451
    %v2548 = vunpack.c.l.b16 %v452
    %v2549 = vunpack.c.h.b16 %v452
    %v2550 = vunpack.c.l.b16 %v453
    %v2551 = vunpack.c.h.b16 %v453
    %v2552 = vunpack.c.l.b16 %v454
    %v2553 = vunpack.c.h.b16 %v454
    %v2554 = vunpack.c.l.b16 %v455
    %v2555 = vunpack.c.h.b16 %v455
    %v2556 = vunpack.c.l.b16 %v456
    %v2557 = vunpack.c.h.b16 %v456
    %v2558 = vunpack.c.l.b16 %v457
    %v2559 = vunpack.c.h.b16 %v457
    %v2560 = vunpack.c.l.b16 %v458
    %v2561 = vunpack.c.h.b16 %v458
    %v2562 = vunpack.c.l.b16 %v459
    %v2563 = vunpack.c.h.b16 %v459
    %v2564 = vunpack.c.l.b16 %v460
    %v2565 = vunpack.c.h.b16 %v460
    %v2566 = vunpack.c.l.b16 %v461
    %v2567 = vunpack.c.h.b16 %v461
    %v2568 = vunpack.c.l.b16 %v462
    %v2569 = vunpack.c.h.b16 %v462
    %v2570 = vunpack.c.l.b16 %v463
    %v2571 = vunpack.c.h.b16 %v463
    %v2572 = vunpack.c.l.b16 %v464
    %v2573 = vunpack.c.h.b16 %v464
    %v2574 = vunpack.c.l.b16 %v465
    %v2575 = vunpack.c.h.b16 %v465
    %v2576 = vunpack.c.l.b16 %v466
    %v2577 = vunpack.c.h.b16 %v466
    %v2578 = vunpack.c.l.b16 %v467
    %v2579 = vunpack.c.h.b16 %v467
    %v2580 = vunpack.c.l.b16 %v468
    %v2581 = vunpack.c.h.b16 %v468
    %v2582 = vunpack.c.l.b16 %v469
    %v2583 = vunpack.c.h.b16 %v469
    %v2584 = vunpack.c.l.b16 %v470
    %v2585 = vunpack.c.h.b16 %v470
    %v2586 = vunpack.c.l.b16 %v471
    %v2587 = vunpack.c.h.b16 %v471
    %v2588 = vunpack.c.l.b16 %v472
    %v2589 = vunpack.c.h.b16 %v472
    %v2590 = vunpack.c.l.b16 %v473
    %v2591 = vunpack.c.h.b16 %v473
    %v2592 = vunpack.c.l.b16 %v474
    %v2593 = vunpack.c.h.b16 %v474
    %v2594 = vunpack.c.l.b16 %v475
    %v2595 = vunpack.c.h.b16 %v475
    %v2596 = vunpack.c.l.b16 %v476
    %v2597 = vunpack.c.h.b16 %v476
    %v2598 = vunpack.c.l.b16 %v477
    %v2599 = vunpack.c.h.b16 %v477
    %v2600 = vunpack.c.l.b16 %v478
    %v2601 = vunpack.c.h.b16 %v478
    %v2602 = vunpack.c.l.b16 %v479
    %v2603 = vunpack.c.h.b16 %v479
    %v2604 = vunpack.c.l.b16 %v480
    %v2605 = vunpack.c.h.b16 %v480
    %v2606 = vunpack.c.l.b16 %v481
    %v2607 = vunpack.c.h.b16 %v481
    %v2608 = vunpack.c.l.b16 %v482
    %v2609 = vunpack.c.h.b16 %v482
    %v2610 = vunpack.c.l.b16 %v483
    %v2611 = vunpack.c.h.b16 %v483
    %v2612 = vunpack.c.l.b16 %v484
    %v2613 = vunpack.c.h.b16 %v484
    %v2614 = vunpack.c.l.b16 %v485
    %v2615 = vunpack.c.h.b16 %v485
    %v2616 = vunpack.c.l.b16 %v486
    %v2617 = vunpack.c.h.b16 %v486
    %v2618 = vunpack.c.l.b16 %v487
    %v2619 = vunpack.c.h.b16 %v487
    %v2620 = vunpack.c.l.b16 %v488
    %v2621 = vunpack.c.h.b16 %v488
    %v2622 = vunpack.c.l.b16 %v489
    %v2623 = vunpack.c.h.b16 %v489
    %v2624 = vunpack.c.l.b16 %v490
    %v2625 = vunpack.c.h.b16 %v490
    %v2626 = vunpack.c.l.b16 %v491
    %v2627 = vunpack.c.h.b16 %v491
    %v2628 = vunpack.c.l.b16 %v492
    %v2629 = vunpack.c.h.b16 %v492
    %v2630 = vunpack.c.l.b16 %v493
    %v2631 = vunpack.c.h.b16 %v493
    %v2632 = vunpack.c.l.b16 %v494
    %v2633 = vunpack.c.h.b16 %v494
    %v2634 = vunpack.c.l.b16 %v495
    %v2635 = vunpack.c.h.b16 %v495
    %v2636 = vunpack.c.l.b16 %v496
    %v2637 = vunpack.c.h.b16 %v496
    %v2638 = vunpack.c.l.b16 %v497
    %v2639 = vunpack.c.h.b16 %v497
    %v2640 = vunpack.c.l.b16 %v498
    %v2641 = vunpack.c.h.b16 %v498
    %v2642 = vunpack.c.l.b16 %v499
    %v2643 = vunpack.c.h.b16 %v499
    %v2644 = vunpack.c.l.b16 %v500
    %v2645 = vunpack.c.h.b16 %v500
    %v2646 = vunpack.c.l.b16 %v501
    %v2647 = vunpack.c.h.b16 %v501
    %v2648 = vunpack.c.l.b16 %v502
    %v2649 = vunpack.c.h.b16 %v502
    %v2650 = vunpack.c.l.b16 %v503
    %v2651 = vunpack.c.h.b16 %v503
    %v2652 = vunpack.c.l.b16 %v504
    %v2653 = vunpack.c.h.b16 %v504
    %v2654 = vunpack.c.l.b16 %v505
    %v2655 = vunpack.c.h.b16 %v505
    %v2656 = vunpack.c.l.b16 %v506
    %v2657 = vunpack.c.h.b16 %v506
    %v2658 = vunpack.c.l.b16 %v507
    %v2659 = vunpack.c.h.b16 %v507
    %v2660 = vunpack.c.l.b16 %v508
    %v2661 = vunpack.c.h.b16 %v508
    %v2662 = vunpack.c.l.b16 %v509
    %v2663 = vunpack.c.h.b16 %v509
    %v2664 = vunpack.c.l.b16 %v510
    %v2665 = vunpack.c.h.b16 %v510
    %v2666 = vunpack.c.l.b16 %v511
    %v2667 = vunpack.c.h.b16 %v511
    %v2668 = vunpack.c.l.b16 %v512
    %v2669 = vunpack.c.h.b16 %v512
    %v2670 = vunpack.c.l.b16 %v513
    %v2671 = vunpack.c.h.b16 %v513
    %v2672 = vunpack.c.l.b16 %v514
    %v2673 = vunpack.c.h.b16 %v514
    %v2674 = vunpack.c.l.b16 %v515
    %v2675 = vunpack.c.h.b16 %v515
    %v2676 = vunpack.c.l.b16 %v516
    %v2677 = vunpack.c.h.b16 %v516
    %v2678 = vunpack.c.l.b16 %v517
    %v2679 = vunpack.c.h.b16 %v517
    %v2680 = vunpack.c.l.b16 %v518
    %v2681 = vunpack.c.h.b16 %v518
    %v2682 = vunpack.c.l.b16 %v519
    %v2683 = vunpack.c.h.b16 %v519
    %v2684 = vunpack.c.l.b16 %v520
    %v2685 = vunpack.c.h.b16 %v520
    %v2686 = vunpack.c.l.b16 %v521
    %v2687 = vunpack.c.h.b16 %v521
    %v2688 = vunpack.c.l.b16 %v522
    %v2689 = vunpack.c.h.b16 %v522
    %v2690 = vunpack.c.l.b16 %v523
    %v2691 = vunpack.c.h.b16 %v523
    %v2692 = vunpack.c.l.b16 %v524
    %v2693 = vunpack.c.h.b16 %v524
    %v2694 = vunpack.c.l.b16 %v525
    %v2695 = vunpack.c.h.b16 %v525
    %v2696 = vunpack.c.l.b16 %v526
    %v2697 = vunpack.c.h.b16 %v526
    %v2698 = vunpack.c.l.b16 %v527
    %v2699 = vunpack.c.h.b16 %v527
    %v2700 = vunpack.c.l.b16 %v528
    %v2701 = vunpack.c.h.b16 %v528
    %v2702 = vunpack.c.l.b16 %v529
    %v2703 = vunpack.c.h.b16 %v529
    %v2704 = vunpack.c.l.b16 %v530
    %v2705 = vunpack.c.h.b16 %v530
    %v2706 = vunpack.c.l.b16 %v531
    %v2707 = vunpack.c.h.b16 %v531
    %v2708 = vunpack.c.l.b16 %v532
    %v2709 = vunpack.c.h.b16 %v532
    %v2710 = vunpack.c.l.b16 %v533
    %v2711 = vunpack.c.h.b16 %v533
    %v2712 = vunpack.c.l.b16 %v534
    %v2713 = vunpack.c.h.b16 %v534
    %v2714 = vunpack.c.l.b16 %v535
    %v2715 = vunpack.c.h.b16 %v535
    %v2716 = vunpack.c.l.b16 %v536
    %v2717 = vunpack.c.h.b16 %v536
    %v2718 = vunpack.c.l.b16 %v537
    %v2719 = vunpack.c.h.b16 %v537
    %v2720 = vunpack.c.l.b16 %v538
    %v2721 = vunpack.c.h.b16 %v538
    %v2722 = vunpack.c.l.b16 %v539
    %v2723 = vunpack.c.h.b16 %v539
    %v2724 = vunpack.c.l.b16 %v540
    %v2725 = vunpack.c.h.b16 %v540
    %v2726 = vunpack.c.l.b16 %v541
    %v2727 = vunpack.c.h.b16 %v541
    %v2728 = vunpack.c.l.b16 %v542
    %v2729 = vunpack.c.h.b16 %v542
    %v2730 = vunpack.c.l.b16 %v543
    %v2731 = vunpack.c.h.b16 %v543
    %v2732 = vunpack.c.l.b16 %v544
    %v2733 = vunpack.c.h.b16 %v544
    %v2734 = vunpack.c.l.b16 %v545
    %v2735 = vunpack.c.h.b16 %v545
    %v2736 = vunpack.c.l.b16 %v546
    %v2737 = vunpack.c.h.b16 %v546
    %v2738 = vunpack.c.l.b16 %v547
    %v2739 = vunpack.c.h.b16 %v547
    %v2740 = vunpack.c.l.b16 %v548
    %v2741 = vunpack.c.h.b16 %v548
    %v2742 = vunpack.c.l.b16 %v549
    %v2743 = vunpack.c.h.b16 %v549
    %v2744 = vunpack.c.l.b16 %v550
    %v2745 = vunpack.c.h.b16 %v550
    %v2746 = vunpack.c.l.b16 %v551
    %v2747 = vunpack.c.h.b16 %v551
    %v2748 = vunpack.c.l.b16 %v552
    %v2749 = vunpack.c.h.b16 %v552
    %v2750 = vunpack.c.l.b16 %v553
    %v2751 = vunpack.c.h.b16 %v553
    %v2752 = vunpack.c.l.b16 %v554
    %v2753 = vunpack.c.h.b16 %v554
    %v2754 = vunpack.c.l.b16 %v555
    %v2755 = vunpack.c.h.b16 %v555
    %v2756 = vunpack.c.l.b16 %v556
    %v2757 = vunpack.c.h.b16 %v556
    %v2758 = vunpack.c.l.b16 %v557
    %v2759 = vunpack.c.h.b16 %v557
    %v2760 = vunpack.c.l.b16 %v558
    %v2761 = vunpack.c.h.b16 %v558
    %v2762 = vunpack.c.l.b16 %v559
    %v2763 = vunpack.c.h.b16 %v559
    %v2764 = vunpack.c.l.b16 %v560
    %v2765 = vunpack.c.h.b16 %v560
    %v2766 = vunpack.c.l.b16 %v561
    %v2767 = vunpack.c.h.b16 %v561
    %v2768 = vunpack.c.l.b16 %v562
    %v2769 = vunpack.c.h.b16 %v562
    %v2770 = vunpack.c.l.b16 %v563
    %v2771 = vunpack.c.h.b16 %v563
    %v2772 = vunpack.c.l.b16 %v564
    %v2773 = vunpack.c.h.b16 %v564
    %v2774 = vunpack.c.l.b16 %v565
    %v2775 = vunpack.c.h.b16 %v565
    %v2776 = vunpack.c.l.b16 %v566
    %v2777 = vunpack.c.h.b16 %v566
    %v2778 = vunpack.c.l.b16 %v567
    %v2779 = vunpack.c.h.b16 %v567
    %v2780 = vunpack.c.l.b16 %v568
    %v2781 = vunpack.c.h.b16 %v568
    %v2782 = vunpack.c.l.b16 %v569
    %v2783 = vunpack.c.h.b16 %v569
    %v2784 = vunpack.c.l.b16 %v570
    %v2785 = vunpack.c.h.b16 %v570
    %v2786 = vunpack.c.l.b16 %v571
    %v2787 = vunpack.c.h.b16 %v571
    %v2788 = vunpack.c.l.b16 %v572
    %v2789 = vunpack.c.h.b16 %v572
    %v2790 = vunpack.c.l.b16 %v573
    %v2791 = vunpack.c.h.b16 %v573
    %v2792 = vunpack.c.l.b16 %v574
    %v2793 = vunpack.c.h.b16 %v574
    %v2794 = vunpack.c.l.b16 %v575
    %v2795 = vunpack.c.h.b16 %v575
    %v2796 = vunpack.c.l.b16 %v576
    %v2797 = vunpack.c.h.b16 %v576
    %v2798 = vunpack.c.l.b16 %v577
    %v2799 = vunpack.c.h.b16 %v577
    %v2800 = vunpack.c.l.b16 %v578
    %v2801 = vunpack.c.h.b16 %v578
    %v2802 = vunpack.c.l.b16 %v579
    %v2803 = vunpack.c.h.b16 %v579
    %v2804 = vunpack.c.l.b16 %v580
    %v2805 = vunpack.c.h.b16 %v580
    %v2806 = vunpack.c.l.b16 %v581
    %v2807 = vunpack.c.h.b16 %v581
    %v2808 = vunpack.c.l.b16 %v582
    %v2809 = vunpack.c.h.b16 %v582
    %v2810 = vunpack.c.l.b16 %v583
    %v2811 = vunpack.c.h.b16 %v583
    %v2812 = vunpack.c.l.b16 %v584
    %v2813 = vunpack.c.h.b16 %v584
    %v2814 = vunpack.c.l.b16 %v585
    %v2815 = vunpack.c.h.b16 %v585
    %v2816 = vunpack.c.l.b16 %v586
    %v2817 = vunpack.c.h.b16 %v586
    %v2818 = vunpack.c.l.b16 %v587
    %v2819 = vunpack.c.h.b16 %v587
    %v2820 = vunpack.c.l.b16 %v588
    %v2821 = vunpack.c.h.b16 %v588
    %v2822 = vunpack.c.l.b16 %v589
    %v2823 = vunpack.c.h.b16 %v589
    %v2824 = vunpack.c.l.b16 %v590
    %v2825 = vunpack.c.h.b16 %v590
    %v2826 = vunpack.c.l.b16 %v591
    %v2827 = vunpack.c.h.b16 %v591
    %v2828 = vunpack.c.l.b16 %v592
    %v2829 = vunpack.c.h.b16 %v592
    %v2830 = vunpack.c.l.b16 %v593
    %v2831 = vunpack.c.h.b16 %v593
    %v2832 = vunpack.c.l.b16 %v594
    %v2833 = vunpack.c.h.b16 %v594
    %v2834 = vunpack.c.l.b16 %v595
    %v2835 = vunpack.c.h.b16 %v595
    %v2836 = vunpack.c.l.b16 %v596
    %v2837 = vunpack.c.h.b16 %v596
    %v2838 = vunpack.c.l.b16 %v597
    %v2839 = vunpack.c.h.b16 %v597
    %v2840 = vunpack.c.l.b16 %v598
    %v2841 = vunpack.c.h.b16 %v598
    %v2842 = vunpack.c.l.b16 %v599
    %v2843 = vunpack.c.h.b16 %v599
    %v2844 = vunpack.c.l.b16 %v600
    %v2845 = vunpack.c.h.b16 %v600
    %v2846 = vunpack.c.l.b16 %v601
    %v2847 = vunpack.c.h.b16 %v601
    %v2848 = vunpack.c.l.b16 %v602
    %v2849 = vunpack.c.h.b16 %v602
    %v2850 = vunpack.c.l.b16 %v603
    %v2851 = vunpack.c.h.b16 %v603
    %v2852 = vunpack.c.l.b16 %v604
    %v2853 = vunpack.c.h.b16 %v604
    %v2854 = vunpack.c.l.b16 %v605
    %v2855 = vunpack.c.h.b16 %v605
    %v2856 = vunpack.c.l.b16 %v606
    %v2857 = vunpack.c.h.b16 %v606
    %v2858 = vunpack.c.l.b16 %v607
    %v2859 = vunpack.c.h.b16 %v607
    %v2860 = vunpack.c.l.b16 %v608
    %v2861 = vunpack.c.h.b16 %v608
    %v2862 = vunpack.c.l.b16 %v609
    %v2863 = vunpack.c.h.b16 %v609
    %v2864 = vunpack.c.l.b16 %v610
    %v2865 = vunpack.c.h.b16 %v610
    %v2866 = vunpack.c.l.b16 %v611
    %v2867 = vunpack.c.h.b16 %v611
    %v2868 = vunpack.c.l.b16 %v612
    %v2869 = vunpack.c.h.b16 %v612
    %v2870 = vunpack.c.l.b16 %v613
    %v2871 = vunpack.c.h.b16 %v613
    %v2872 = vunpack.c.l.b16 %v614
    %v2873 = vunpack.c.h.b16 %v614
    %v2874 = vunpack.c.l.b16 %v615
    %v2875 = vunpack.c.h.b16 %v615
    %v2876 = vunpack.c.l.b16 %v616
    %v2877 = vunpack.c.h.b16 %v616
    %v2878 = vunpack.c.l.b16 %v617
    %v2879 = vunpack.c.h.b16 %v617
    %v2880 = vunpack.c.l.b16 %v618
    %v2881 = vunpack.c.h.b16 %v618
    %v2882 = vunpack.c.l.b16 %v619
    %v2883 = vunpack.c.h.b16 %v619
    %v2884 = vunpack.c.l.b16 %v620
    %v2885 = vunpack.c.h.b16 %v620
    %v2886 = vunpack.c.l.b16 %v621
    %v2887 = vunpack.c.h.b16 %v621
    %v2888 = vunpack.c.l.b16 %v622
    %v2889 = vunpack.c.h.b16 %v622
    %v2890 = vunpack.c.l.b16 %v623
    %v2891 = vunpack.c.h.b16 %v623
    %v2892 = vunpack.c.l.b16 %v624
    %v2893 = vunpack.c.h.b16 %v624
    %v2894 = vunpack.c.l.b16 %v625
    %v2895 = vunpack.c.h.b16 %v625
    %v2896 = vunpack.c.l.b16 %v626
    %v2897 = vunpack.c.h.b16 %v626
    %v2898 = vunpack.c.l.b16 %v627
    %v2899 = vunpack.c.h.b16 %v627
    %v2900 = vunpack.c.l.b16 %v628
    %v2901 = vunpack.c.h.b16 %v628
    %v2902 = vunpack.c.l.b16 %v629
    %v2903 = vunpack.c.h.b16 %v629
    %v2904 = vunpack.c.l.b16 %v630
    %v2905 = vunpack.c.h.b16 %v630
    %v2906 = vunpack.c.l.b16 %v631
    %v2907 = vunpack.c.h.b16 %v631
    %v2908 = vunpack.c.l.b16 %v632
    %v2909 = vunpack.c.h.b16 %v632
    %v2910 = vunpack.c.l.b16 %v633
    %v2911 = vunpack.c.h.b16 %v633
    %v2912 = vunpack.c.l.b16 %v634
    %v2913 = vunpack.c.h.b16 %v634
    %v2914 = vunpack.c.l.b16 %v635
    %v2915 = vunpack.c.h.b16 %v635
    %v2916 = vunpack.c.l.b16 %v636
    %v2917 = vunpack.c.h.b16 %v636
    %v2918 = vunpack.c.l.b16 %v637
    %v2919 = vunpack.c.h.b16 %v637
    %v2920 = vunpack.c.l.b16 %v638
    %v2921 = vunpack.c.h.b16 %v638
    %v2922 = vunpack.c.l.b16 %v639
    %v2923 = vunpack.c.h.b16 %v639
    %v2924 = vunpack.c.l.b16 %v640
    %v2925 = vunpack.c.h.b16 %v640
    %v2926 = vunpack.c.l.b16 %v641
    %v2927 = vunpack.c.h.b16 %v641
    %v2928 = vunpack.c.l.b16 %v642
    %v2929 = vunpack.c.h.b16 %v642
    %v2930 = vunpack.c.l.b16 %v643
    %v2931 = vunpack.c.h.b16 %v643
    %v2932 = vunpack.c.l.b16 %v644
    %v2933 = vunpack.c.h.b16 %v644
    %v2934 = vunpack.c.l.b16 %v645
    %v2935 = vunpack.c.h.b16 %v645
    %v2936 = vunpack.c.l.b16 %v646
    %v2937 = vunpack.c.h.b16 %v646
    %v2938 = vunpack.c.l.b16 %v647
    %v2939 = vunpack.c.h.b16 %v647
    %v2940 = vunpack.c.l.b16 %v648
    %v2941 = vunpack.c.h.b16 %v648
    %v2942 = vunpack.c.l.b16 %v649
    %v2943 = vunpack.c.h.b16 %v649
    %v2944 = vunpack.c.l.b16 %v650
    %v2945 = vunpack.c.h.b16 %v650
    %v2946 = vunpack.c.l.b16 %v651
    %v2947 = vunpack.c.h.b16 %v651
    %v2948 = vunpack.c.l.b16 %v652
    %v2949 = vunpack.c.h.b16 %v652
    %v2950 = vunpack.c.l.b16 %v653
    %v2951 = vunpack.c.h.b16 %v653
    %v2952 = vunpack.c.l.b16 %v654
    %v2953 = vunpack.c.h.b16 %v654
    %v2954 = vunpack.c.l.b16 %v655
    %v2955 = vunpack.c.h.b16 %v655
    %v2956 = vunpack.c.l.b16 %v656
    %v2957 = vunpack.c.h.b16 %v656
    %v2958 = vunpack.c.l.b16 %v657
    %v2959 = vunpack.c.h.b16 %v657
    %v2960 = vunpack.c.l.b16 %v658
    %v2961 = vunpack.c.h.b16 %v658
    %v2962 = vunpack.c.l.b16 %v659
    %v2963 = vunpack.c.h.b16 %v659
    %v2964 = vunpack.c.l.b16 %v660
    %v2965 = vunpack.c.h.b16 %v660
    %v2966 = vunpack.c.l.b16 %v661
    %v2967 = vunpack.c.h.b16 %v661
    %v2968 = vunpack.c.l.b16 %v662
    %v2969 = vunpack.c.h.b16 %v662
    %v2970 = vunpack.c.l.b16 %v663
    %v2971 = vunpack.c.h.b16 %v663
    %v2972 = vunpack.c.l.b16 %v664
    %v2973 = vunpack.c.h.b16 %v664
    %v2974 = vunpack.c.l.b16 %v665
    %v2975 = vunpack.c.h.b16 %v665
    %v2976 = vunpack.c.l.b16 %v666
    %v2977 = vunpack.c.h.b16 %v666
    %v2978 = vunpack.c.l.b16 %v667
    %v2979 = vunpack.c.h.b16 %v667
    %v2980 = vunpack.c.l.b16 %v668
    %v2981 = vunpack.c.h.b16 %v668
    %v2982 = vunpack.c.l.b16 %v669
    %v2983 = vunpack.c.h.b16 %v669
    %v2984 = vunpack.c.l.b16 %v670
    %v2985 = vunpack.c.h.b16 %v670
    %v2986 = vunpack.c.l.b16 %v671
    %v2987 = vunpack.c.h.b16 %v671
    %v2988 = vunpack.c.l.b16 %v672
    %v2989 = vunpack.c.h.b16 %v672
    %v2990 = vunpack.c.l.b16 %v673
    %v2991 = vunpack.c.h.b16 %v673
    %v2992 = vunpack.c.l.b16 %v674
    %v2993 = vunpack.c.h.b16 %v674
    %v2994 = vunpack.c.l.b16 %v675
    %v2995 = vunpack.c.h.b16 %v675
    %v2996 = vunpack.c.l.b16 %v676
    %v2997 = vunpack.c.h.b16 %v676
    %v2998 = vunpack.c.l.b16 %v677
    %v2999 = vunpack.c.h.b16 %v677
    %v3000 = vunpack.c.l.b16 %v678
    %v3001 = vunpack.c.h.b16 %v678
    %v3002 = vunpack.c.l.b16 %v679
    %v3003 = vunpack.c.h.b16 %v679
    %v3004 = vunpack.c.l.b16 %v680
    %v3005 = vunpack.c.h.b16 %v680
    %v3006 = vunpack.c.l.b16 %v681
    %v3007 = vunpack.c.h.b16 %v681
    %v3008 = vunpack.c.l.b16 %v682
    %v3009 = vunpack.c.h.b16 %v682
    %v3010 = vunpack.c.l.b16 %v683
    %v3011 = vunpack.c.h.b16 %v683
    %v3012 = vunpack.c.l.b16 %v684
    %v3013 = vunpack.c.h.b16 %v684
    %v3014 = vunpack.c.l.b16 %v685
    %v3015 = vunpack.c.h.b16 %v685
    %v3016 = vunpack.c.l.b16 %v686
    %v3017 = vunpack.c.h.b16 %v686
    %v3018 = vunpack.c.l.b16 %v687
    %v3019 = vunpack.c.h.b16 %v687
    %v3020 = vunpack.c.l.b16 %v688
    %v3021 = vunpack.c.h.b16 %v688
    %v3022 = vunpack.c.l.b16 %v689
    %v3023 = vunpack.c.h.b16 %v689
    %v3024 = vunpack.c.l.b16 %v690
    %v3025 = vunpack.c.h.b16 %v690
    %v3026 = vunpack.c.l.b16 %v691
    %v3027 = vunpack.c.h.b16 %v691
    %v3028 = vunpack.c.l.b16 %v692
    %v3029 = vunpack.c.h.b16 %v692
    %v3030 = vunpack.c.l.b16 %v693
    %v3031 = vunpack.c.h.b16 %v693
    %v3032 = vunpack.c.l.b16 %v694
    %v3033 = vunpack.c.h.b16 %v694
    %v3034 = vunpack.c.l.b16 %v695
    %v3035 = vunpack.c.h.b16 %v695
    %v3036 = vunpack.c.l.b16 %v696
    %v3037 = vunpack.c.h.b16 %v696
    %v3038 = vunpack.c.l.b16 %v697
    %v3039 = vunpack.c.h.b16 %v697
    %v3040 = vunpack.c.l.b16 %v698
    %v3041 = vunpack.c.h.b16 %v698
    %v3042 = vunpack.c.l.b16 %v699
    %v3043 = vunpack.c.h.b16 %v699
    %v3044 = vunpack.c.l.b16 %v700
    %v3045 = vunpack.c.h.b16 %v700
    %v3046 = vunpack.c.l.b16 %v701
    %v3047 = vunpack.c.h.b16 %v701
    %v3048 = vunpack.c.l.b16 %v702
    %v3049 = vunpack.c.h.b16 %v702
    %v3050 = vunpack.c.l.b16 %v703
    %v3051 = vunpack.c.h.b16 %v703
    %v3052 = vunpack.c.l.b16 %v704
    %v3053 = vunpack.c.h.b16 %v704
    %v3054 = vunpack.c.l.b16 %v705
    %v3055 = vunpack.c.h.b16 %v705
    %v3056 = vunpack.c.l.b16 %v706
    %v3057 = vunpack.c.h.b16 %v706
    %v3058 = vunpack.c.l.b16 %v707
    %v3059 = vunpack.c.h.b16 %v707
    %v3060 = vunpack.c.l.b16 %v708
    %v3061 = vunpack.c.h.b16 %v708
    %v3062 = vunpack.c.l.b16 %v709
    %v3063 = vunpack.c.h.b16 %v709
    %v3064 = vunpack.c.l.b16 %v710
    %v3065 = vunpack.c.h.b16 %v710
    %v3066 = vunpack.c.l.b16 %v711
    %v3067 = vunpack.c.h.b16 %v711
    %v3068 = vunpack.c.l.b16 %v712
    %v3069 = vunpack.c.h.b16 %v712
    %v3070 = vunpack.c.l.b16 %v713
    %v3071 = vunpack.c.h.b16 %v713
    %v3072 = vunpack.c.l.b16 %v714
    %v3073 = vunpack.c.h.b16 %v714
    %v3074 = vunpack.c.l.b16 %v715
    %v3075 = vunpack.c.h.b16 %v715
    %v3076 = vunpack.c.l.b16 %v716
    %v3077 = vunpack.c.h.b16 %v716
    %v3078 = vunpack.c.l.b16 %v717
    %v3079 = vunpack.c.h.b16 %v717
    %v3080 = vunpack.c.l.b16 %v718
    %v3081 = vunpack.c.h.b16 %v718
    %v3082 = vunpack.c.l.b16 %v719
    %v3083 = vunpack.c.h.b16 %v719
    %v3084 = vunpack.c.l.b16 %v720
    %v3085 = vunpack.c.h.b16 %v720
    %v3086 = vunpack.c.l.b16 %v721
    %v3087 = vunpack.c.h.b16 %v721
    %v3088 = vunpack.c.l.b16 %v722
    %v3089 = vunpack.c.h.b16 %v722
    %v3090 = vunpack.c.l.b16 %v723
    %v3091 = vunpack.c.h.b16 %v723
    %v3092 = vunpack.c.l.b16 %v724
    %v3093 = vunpack.c.h.b16 %v724
    %v3094 = vunpack.c.l.b16 %v725
    %v3095 = vunpack.c.h.b16 %v725
    %v3096 = vunpack.c.l.b16 %v726
    %v3097 = vunpack.c.h.b16 %v726
    %v3098 = vunpack.c.l.b16 %v727
    %v3099 = vunpack.c.h.b16 %v727
    %v3100 = vunpack.c.l.b16 %v728
    %v3101 = vunpack.c.h.b16 %v728
    %v3102 = vunpack.c.l.b16 %v729
    %v3103 = vunpack.c.h.b16 %v729
    %v3104 = vunpack.c.l.b16 %v730
    %v3105 = vunpack.c.h.b16 %v730
    %v3106 = vunpack.c.l.b16 %v731
    %v3107 = vunpack.c.h.b16 %v731
    %v3108 = vunpack.c.l.b16 %v732
    %v3109 = vunpack.c.h.b16 %v732
    %v3110 = vunpack.c.l.b16 %v733
    %v3111 = vunpack.c.h.b16 %v733
    %v3112 = vunpack.c.l.b16 %v734
    %v3113 = vunpack.c.h.b16 %v734
    %v3114 = vunpack.c.l.b16 %v735
    %v3115 = vunpack.c.h.b16 %v735
    %v3116 = vunpack.c.l.b16 %v736
    %v3117 = vunpack.c.h.b16 %v736
    %v3118 = vunpack.c.l.b16 %v737
    %v3119 = vunpack.c.h.b16 %v737
    %v3120 = vunpack.c.l.b16 %v738
    %v3121 = vunpack.c.h.b16 %v738
    %v3122 = vunpack.c.l.b16 %v739
    %v3123 = vunpack.c.h.b16 %v739
    %v3124 = vunpack.c.l.b16 %v740
    %v3125 = vunpack.c.h.b16 %v740
    %v3126 = vunpack.c.l.b16 %v741
    %v3127 = vunpack.c.h.b16 %v741
    %v3128 = vunpack.c.l.b16 %v742
    %v3129 = vunpack.c.h.b16 %v742
    %v3130 = vunpack.c.l.b16 %v743
    %v3131 = vunpack.c.h.b16 %v743
    %v3132 = vunpack.c.l.b16 %v744
    %v3133 = vunpack.c.h.b16 %v744
    %v3134 = vunpack.c.l.b16 %v745
    %v3135 = vunpack.c.h.b16 %v745
    %v3136 = vunpack.c.l.b16 %v746
    %v3137 = vunpack.c.h.b16 %v746
    %v3138 = vunpack.c.l.b16 %v747
    %v3139 = vunpack.c.h.b16 %v747
    %v3140 = vunpack.c.l.b16 %v748
    %v3141 = vunpack.c.h.b16 %v748
    %v3142 = vunpack.c.l.b16 %v749
    %v3143 = vunpack.c.h.b16 %v749
    %v3144 = vunpack.c.l.b16 %v750
    %v3145 = vunpack.c.h.b16 %v750
    %v3146 = vunpack.c.l.b16 %v751
    %v3147 = vunpack.c.h.b16 %v751
    %v3148 = vunpack.c.l.b16 %v752
    %v3149 = vunpack.c.h.b16 %v752
    %v3150 = vunpack.c.l.b16 %v753
    %v3151 = vunpack.c.h.b16 %v753
    %v3152 = vunpack.c.l.b16 %v754
    %v3153 = vunpack.c.h.b16 %v754
    %v3154 = vunpack.c.l.b16 %v755
    %v3155 = vunpack.c.h.b16 %v755
    %v3156 = vunpack.c.l.b16 %v756
    %v3157 = vunpack.c.h.b16 %v756
    %v3158 = vunpack.c.l.b16 %v757
    %v3159 = vunpack.c.h.b16 %v757
    %v3160 = vunpack.c.l.b16 %v758
    %v3161 = vunpack.c.h.b16 %v758
    %v3162 = vunpack.c.l.b16 %v759
    %v3163 = vunpack.c.h.b16 %v759
    %v3164 = vunpack.c.l.b16 %v760
    %v3165 = vunpack.c.h.b16 %v760
    %v3166 = vunpack.c.l.b16 %v761
    %v3167 = vunpack.c.h.b16 %v761
    %v3168 = vunpack.c.l.b16 %v762
    %v3169 = vunpack.c.h.b16 %v762
    %v3170 = vunpack.c.l.b16 %v763
    %v3171 = vunpack.c.h.b16 %v763
    %v3172 = vunpack.c.l.b16 %v764
    %v3173 = vunpack.c.h.b16 %v764
    %v3174 = vunpack.c.l.b16 %v765
    %v3175 = vunpack.c.h.b16 %v765
    %v3176 = vunpack.c.l.b16 %v766
    %v3177 = vunpack.c.h.b16 %v766
    %v3178 = vunpack.c.l.b16 %v767
    %v3179 = vunpack.c.h.b16 %v767
    %v3180 = vunpack.c.l.b16 %v768
    %v3181 = vunpack.c.h.b16 %v768
    %v3182 = vunpack.c.l.b16 %v769
    %v3183 = vunpack.c.h.b16 %v769
    %v3184 = vunpack.c.l.b16 %v770
    %v3185 = vunpack.c.h.b16 %v770
    %v3186 = vunpack.c.l.b16 %v771
    %v3187 = vunpack.c.h.b16 %v771
    %v3188 = vunpack.c.l.b16 %v772
    %v3189 = vunpack.c.h.b16 %v772
    %v3190 = vunpack.c.l.b16 %v773
    %v3191 = vunpack.c.h.b16 %v773
    %v3192 = vunpack.c.l.b16 %v774
    %v3193 = vunpack.c.h.b16 %v774
    %v3194 = vunpack.c.l.b16 %v775
    %v3195 = vunpack.c.h.b16 %v775
    %v3196 = vunpack.c.l.b16 %v776
    %v3197 = vunpack.c.h.b16 %v776
    %v3198 = vunpack.c.l.b16 %v777
    %v3199 = vunpack.c.h.b16 %v777
    %v3200 = vunpack.c.l.b16 %v778
    %v3201 = vunpack.c.h.b16 %v778
    %v3202 = vunpack.c.l.b16 %v779
    %v3203 = vunpack.c.h.b16 %v779
    %v3204 = vunpack.c.l.b16 %v780
    %v3205 = vunpack.c.h.b16 %v780
    %v3206 = vunpack.c.l.b16 %v781
    %v3207 = vunpack.c.h.b16 %v781
    %v3208 = vunpack.c.l.b16 %v782
    %v3209 = vunpack.c.h.b16 %v782
    %v3210 = vunpack.c.l.b16 %v783
    %v3211 = vunpack.c.h.b16 %v783
    %v3212 = vunpack.c.l.b16 %v784
    %v3213 = vunpack.c.h.b16 %v784
    %v3214 = vunpack.c.l.b16 %v785
    %v3215 = vunpack.c.h.b16 %v785
    %v3216 = vunpack.c.l.b16 %v786
    %v3217 = vunpack.c.h.b16 %v786
    %v3218 = vunpack.c.l.b16 %v787
    %v3219 = vunpack.c.h.b16 %v787
    %v3220 = vunpack.c.l.b16 %v788
    %v3221 = vunpack.c.h.b16 %v788
    %v3222 = vunpack.c.l.b16 %v789
    %v3223 = vunpack.c.h.b16 %v789
    %v3224 = vunpack.c.l.b16 %v790
    %v3225 = vunpack.c.h.b16 %v790
    %v3226 = vunpack.c.l.b16 %v791
    %v3227 = vunpack.c.h.b16 %v791
    %v3228 = vunpack.c.l.b16 %v792
    %v3229 = vunpack.c.h.b16 %v792
    %v3230 = vunpack.c.l.b16 %v793
    %v3231 = vunpack.c.h.b16 %v793
    %v3232 = vunpack.c.l.b16 %v794
    %v3233 = vunpack.c.h.b16 %v794
    %v3234 = vunpack.c.l.b16 %v795
    %v3235 = vunpack.c.h.b16 %v795
    %v3236 = vunpack.c.l.b16 %v796
    %v3237 = vunpack.c.h.b16 %v796
    %v3238 = vunpack.c.l.b16 %v797
    %v3239 = vunpack.c.h.b16 %v797
    %v3240 = vunpack.c.l.b16 %v798
    %v3241 = vunpack.c.h.b16 %v798
    %v3242 = vunpack.c.l.b16 %v799
    %v3243 = vunpack.c.h.b16 %v799
    %v3244 = vunpack.c.l.b16 %v800
    %v3245 = vunpack.c.h.b16 %v800
    %v3246 = vunpack.c.l.b16 %v801
    %v3247 = vunpack.c.h.b16 %v801
    %v3248 = vunpack.c.l.b16 %v802
    %v3249 = vunpack.c.h.b16 %v802
    %v3250 = vunpack.c.l.b16 %v803
    %v3251 = vunpack.c.h.b16 %v803
    %v3252 = vunpack.c.l.b16 %v804
    %v3253 = vunpack.c.h.b16 %v804
    %v3254 = vunpack.c.l.b16 %v805
    %v3255 = vunpack.c.h.b16 %v805
    %v3256 = vunpack.c.l.b16 %v806
    %v3257 = vunpack.c.h.b16 %v806
    %v3258 = vunpack.c.l.b16 %v807
    %v3259 = vunpack.c.h.b16 %v807
    %v3260 = vunpack.c.l.b16 %v808
    %v3261 = vunpack.c.h.b16 %v808
    %v3262 = vunpack.c.l.b16 %v809
    %v3263 = vunpack.c.h.b16 %v809
    %v3264 = vunpack.c.l.b16 %v810
    %v3265 = vunpack.c.h.b16 %v810
    %v3266 = vunpack.c.l.b16 %v811
    %v3267 = vunpack.c.h.b16 %v811
    %v3268 = vunpack.c.l.b16 %v812
    %v3269 = vunpack.c.h.b16 %v812
    %v3270 = vunpack.c.l.b16 %v813
    %v3271 = vunpack.c.h.b16 %v813
    %v3272 = vunpack.c.l.b16 %v814
    %v3273 = vunpack.c.h.b16 %v814
    %v3274 = vunpack.c.l.b16 %v815
    %v3275 = vunpack.c.h.b16 %v815
    %v3276 = vunpack.c.l.b16 %v816
    %v3277 = vunpack.c.h.b16 %v816
    %v3278 = vunpack.c.l.b16 %v817
    %v3279 = vunpack.c.h.b16 %v817
    %v3280 = vunpack.c.l.b16 %v818
    %v3281 = vunpack.c.h.b16 %v818
    %v3282 = vunpack.c.l.b16 %v819
    %v3283 = vunpack.c.h.b16 %v819
    %v3284 = vunpack.c.l.b16 %v820
    %v3285 = vunpack.c.h.b16 %v820
    %v3286 = vunpack.c.l.b16 %v821
    %v3287 = vunpack.c.h.b16 %v821
    %v3288 = vunpack.c.l.b16 %v822
    %v3289 = vunpack.c.h.b16 %v822
    %v3290 = vunpack.c.l.b16 %v823
    %v3291 = vunpack.c.h.b16 %v823
    %v3292 = vunpack.c.l.b16 %v824
    %v3293 = vunpack.c.h.b16 %v824
    %v3294 = vunpack.c.l.b16 %v825
    %v3295 = vunpack.c.h.b16 %v825
    %v3296 = vunpack.c.l.b16 %v826
    %v3297 = vunpack.c.h.b16 %v826
    %v3298 = vunpack.c.l.b16 %v827
    %v3299 = vunpack.c.h.b16 %v827
    %v3300 = vunpack.c.l.b16 %v828
    %v3301 = vunpack.c.h.b16 %v828
    %v3302 = vunpack.c.l.b16 %v829
    %v3303 = vunpack.c.h.b16 %v829
    %v3304 = vunpack.c.l.b16 %v830
    %v3305 = vunpack.c.h.b16 %v830
    %v3306 = vunpack.c.l.b16 %v831
    %v3307 = vunpack.c.h.b16 %v831
    %v3308 = vunpack.c.l.b16 %v832
    %v3309 = vunpack.c.h.b16 %v832
    %v3310 = vunpack.c.l.b16 %v833
    %v3311 = vunpack.c.h.b16 %v833
    %v3312 = vunpack.c.l.b16 %v834
    %v3313 = vunpack.c.h.b16 %v834
    %v3314 = vunpack.c.l.b16 %v835
    %v3315 = vunpack.c.h.b16 %v835
    %v3316 = vunpack.c.l.b16 %v836
    %v3317 = vunpack.c.h.b16 %v836
    %v3318 = vunpack.c.l.b16 %v837
    %v3319 = vunpack.c.h.b16 %v837
    %v3320 = vpack.c.b16 %v1756, %v1752
    %v3321 = vpack.c.b16 %v1757, %v1753
    %v3322 = vpack.c.b16 %v1758, %v1754
    %v3323 = vpack.c.b16 %v1759, %v1755
    %v3324 = vpack.c.b16 %v1764, %v1760
    %v3325 = vpack.c.b16 %v1765, %v1761
    %v3326 = vpack.c.b16 %v1766, %v1762
    %v3327 = vpack.c.b16 %v1767, %v1763
    %v3328 = vpack.c.b16 %v1772, %v1768
    %v3329 = vpack.c.b16 %v1773, %v1769
    %v3330 = vpack.c.b16 %v1774, %v1770
    %v3331 = vpack.c.b16 %v1775, %v1771
    %v3332 = vpack.c.b16 %v1780, %v1776
    %v3333 = vpack.c.b16 %v1781, %v1777
    %v3334 = vpack.c.b16 %v1782, %v1778
    %v3335 = vpack.c.b16 %v1783, %v1779
    %v3336 = vpack.c.b16 %v1788, %v1784
    %v3337 = vpack.c.b16 %v1789, %v1785
    %v3338 = vpack.c.b16 %v1790, %v1786
    %v3339 = vpack.c.b16 %v1791, %v1787
    %v3340 = vpack.c.b16 %v1796, %v1792
    %v3341 = vpack.c.b16 %v1797, %v1793
    %v3342 = vpack.c.b16 %v1798, %v1794
    %v3343 = vpack.c.b16 %v1799, %v1795
    %v3344 = vpack.c.b16 %v1804, %v1800
    %v3345 = vpack.c.b16 %v1805, %v1801
    %v3346 = vpack.c.b16 %v1806, %v1802
    %v3347 = vpack.c.b16 %v1807, %v1803
    %v3348 = vpack.c.b16 %v1812, %v1808
    %v3349 = vpack.c.b16 %v1813, %v1809
    %v3350 = vpack.c.b16 %v1814, %v1810
    %v3351 = vpack.c.b16 %v1815, %v1811
    %v3352 = vpack.c.b16 %v1820, %v1816
    %v3353 = vpack.c.b16 %v1821, %v1817
    %v3354 = vpack.c.b16 %v1822, %v1818
    %v3355 = vpack.c.b16 %v1823, %v1819
    %v3356 = vpack.c.b16 %v1828, %v1824
    %v3357 = vpack.c.b16 %v1829, %v1825
    %v3358 = vpack.c.b16 %v1830, %v1826
    %v3359 = vpack.c.b16 %v1831, %v1827
    %v3360 = vpack.c.b16 %v1836, %v1832
    %v3361 = vpack.c.b16 %v1837, %v1833
    %v3362 = vpack.c.b16 %v1838, %v1834
    %v3363 = vpack.c.b16 %v1839, %v1835
    %v3364 = vpack.c.b16 %v1844, %v1840
    %v3365 = vpack.c.b16 %v1845, %v1841
    %v3366 = vpack.c.b16 %v1846, %v1842
    %v3367 = vpack.c.b16 %v1847, %v1843
    %v3368 = vpack.c.b16 %v1852, %v1848
    %v3369 = vpack.c.b16 %v1853, %v1849
    %v3370 = vpack.c.b16 %v1854, %v1850
    %v3371 = vpack.c.b16 %v1855, %v1851
    %v3372 = vpack.c.b16 %v1860, %v1856
    %v3373 = vpack.c.b16 %v1861, %v1857
    %v3374 = vpack.c.b16 %v1862, %v1858
    %v3375 = vpack.c.b16 %v1863, %v1859
    %v3376 = vpack.c.b16 %v1868, %v1864
    %v3377 = vpack.c.b16 %v1869, %v1865
    %v3378 = vpack.c.b16 %v1870, %v1866
    %v3379 = vpack.c.b16 %v1871, %v1867
    %v3380 = vpack.c.b16 %v1876, %v1872
    %v3381 = vpack.c.b16 %v1877, %v1873
    %v3382 = vpack.c.b16 %v1878, %v1874
    %v3383 = vpack.c.b16 %v1879, %v1875
    %v3384 = vpack.c.b16 %v1884, %v1880
    %v3385 = vpack.c.b16 %v1885, %v1881
    %v3386 = vpack.c.b16 %v1886, %v1882
    %v3387 = vpack.c.b16 %v1887, %v1883
    %v3388 = vpack.c.b16 %v1892, %v1888
    %v3389 = vpack.c.b16 %v1893, %v1889
    %v3390 = vpack.c.b16 %v1894, %v1890
    %v3391 = vpack.c.b16 %v1895, %v1891
    %v3392 = vpack.c.b16 %v1900, %v1896
    %v3393 = vpack.c.b16 %v1901, %v1897
    %v3394 = vpack.c.b16 %v1902, %v1898
    %v3395 = vpack.c.b16 %v1903, %v1899
    %v3396 = vpack.c.b16 %v1908, %v1904
    %v3397 = vpack.c.b16 %v1909, %v1905
    %v3398 = vpack.c.b16 %v1910, %v1906
    %v3399 = vpack.c.b16 %v1911, %v1907
    %v3400 = vpack.c.b16 %v1916, %v1912
    %v3401 = vpack.c.b16 %v1917, %v1913
    %v3402 = vpack.c.b16 %v1918, %v1914
    %v3403 = vpack.c.b16 %v1919, %v1915
    %v3404 = vpack.c.b16 %v1924, %v1920
    %v3405 = vpack.c.b16 %v1925, %v1921
    %v3406 = vpack.c.b16 %v1926, %v1922
    %v3407 = vpack.c.b16 %v1927, %v1923
    %v3408 = vpack.c.b16 %v1932, %v1928
    %v3409 = vpack.c.b16 %v1933, %v1929
    %v3410 = vpack.c.b16 %v1934, %v1930
    %v3411 = vpack.c.b16 %v1935, %v1931
    %v3412 = vpack.c.b16 %v1940, %v1936
    %v3413 = vpack.c.b16 %v1941, %v1937
    %v3414 = vpack.c.b16 %v1942, %v1938
    %v3415 = vpack.c.b16 %v1943, %v1939
    %v3416 = vpack.c.b16 %v1948, %v1944
    %v3417 = vpack.c.b16 %v1949, %v1945
    %v3418 = vpack.c.b16 %v1950, %v1946
    %v3419 = vpack.c.b16 %v1951, %v1947
    %v3420 = vpack.c.b16 %v1956, %v1952
    %v3421 = vpack.c.b16 %v1957, %v1953
    %v3422 = vpack.c.b16 %v1958, %v1954
    %v3423 = vpack.c.b16 %v1959, %v1955
    %v3424 = vpack.c.b16 %v1964, %v1960
    %v3425 = vpack.c.b16 %v1965, %v1961
    %v3426 = vpack.c.b16 %v1966, %v1962
    %v3427 = vpack.c.b16 %v1967, %v1963
    %v3428 = vpack.c.b16 %v1972, %v1968
    %v3429 = vpack.c.b16 %v1973, %v1969
    %v3430 = vpack.c.b16 %v1974, %v1970
    %v3431 = vpack.c.b16 %v1975, %v1971
    %v3432 = vpack.c.b16 %v1980, %v1976
    %v3433 = vpack.c.b16 %v1981, %v1977
    %v3434 = vpack.c.b16 %v1982, %v1978
    %v3435 = vpack.c.b16 %v1983, %v1979
    %v3436 = vpack.c.b16 %v1988, %v1984
    %v3437 = vpack.c.b16 %v1989, %v1985
    %v3438 = vpack.c.b16 %v1990, %v1986
    %v3439 = vpack.c.b16 %v1991, %v1987
    %v3440 = vpack.c.b16 %v1996, %v1992
    %v3441 = vpack.c.b16 %v1997, %v1993
    %v3442 = vpack.c.b16 %v1998, %v1994
    %v3443 = vpack.c.b16 %v1999, %v1995
    %v3444 = vpack.c.b16 %v2004, %v2000
    %v3445 = vpack.c.b16 %v2005, %v2001
    %v3446 = vpack.c.b16 %v2006, %v2002
    %v3447 = vpack.c.b16 %v2007, %v2003
    %v3448 = vpack.c.b16 %v2012, %v2008
    %v3449 = vpack.c.b16 %v2013, %v2009
    %v3450 = vpack.c.b16 %v2014, %v2010
    %v3451 = vpack.c.b16 %v2015, %v2011
    %v3452 = vpack.c.b16 %v2020, %v2016
    %v3453 = vpack.c.b16 %v2021, %v2017
    %v3454 = vpack.c.b16 %v2022, %v2018
    %v3455 = vpack.c.b16 %v2023, %v2019
    %v3456 = vpack.c.b16 %v2028, %v2024
    %v3457 = vpack.c.b16 %v2029, %v2025
    %v3458 = vpack.c.b16 %v2030, %v2026
    %v3459 = vpack.c.b16 %v2031, %v2027
    %v3460 = vpack.c.b16 %v2036, %v2032
    %v3461 = vpack.c.b16 %v2037, %v2033
    %v3462 = vpack.c.b16 %v2038, %v2034
    %v3463 = vpack.c.b16 %v2039, %v2035
    %v3464 = vpack.c.b16 %v2044, %v2040
    %v3465 = vpack.c.b16 %v2045, %v2041
    %v3466 = vpack.c.b16 %v2046, %v2042
    %v3467 = vpack.c.b16 %v2047, %v2043
    %v3468 = vpack.c.b16 %v2052, %v2048
    %v3469 = vpack.c.b16 %v2053, %v2049
    %v3470 = vpack.c.b16 %v2054, %v2050
    %v3471 = vpack.c.b16 %v2055, %v2051
    %v3472 = vpack.c.b16 %v2060, %v2056
    %v3473 = vpack.c.b16 %v2061, %v2057
    %v3474 = vpack.c.b16 %v2062, %v2058
    %v3475 = vpack.c.b16 %v2063, %v2059
    %v3476 = vpack.c.b16 %v2068, %v2064
    %v3477 = vpack.c.b16 %v2069, %v2065
    %v3478 = vpack.c.b16 %v2070, %v2066
    %v3479 = vpack.c.b16 %v2071, %v2067
    %v3480 = vpack.c.b16 %v2076, %v2072
    %v3481 = vpack.c.b16 %v2077, %v2073
    %v3482 = vpack.c.b16 %v2078, %v2074
    %v3483 = vpack.c.b16 %v2079, %v2075
    %v3484 = vpack.c.b16 %v2084, %v2080
    %v3485 = vpack.c.b16 %v2085, %v2081
    %v3486 = vpack.c.b16 %v2086, %v2082
    %v3487 = vpack.c.b16 %v2087, %v2083
    %v3488 = vpack.c.b16 %v2092, %v2088
    %v3489 = vpack.c.b16 %v2093, %v2089
    %v3490 = vpack.c.b16 %v2094, %v2090
    %v3491 = vpack.c.b16 %v2095, %v2091
    %v3492 = vpack.c.b16 %v2100, %v2096
    %v3493 = vpack.c.b16 %v2101, %v2097
    %v3494 = vpack.c.b16 %v2102, %v2098
    %v3495 = vpack.c.b16 %v2103, %v2099
    %v3496 = vpack.c.b16 %v2108, %v2104
    %v3497 = vpack.c.b16 %v2109, %v2105
    %v3498 = vpack.c.b16 %v2110, %v2106
    %v3499 = vpack.c.b16 %v2111, %v2107
    %v3500 = vpack.c.b16 %v2116, %v2112
    %v3501 = vpack.c.b16 %v2117, %v2113
    %v3502 = vpack.c.b16 %v2118, %v2114
    %v3503 = vpack.c.b16 %v2119, %v2115
    %v3504 = vpack.c.b16 %v2124, %v2120
    %v3505 = vpack.c.b16 %v2125, %v2121
    %v3506 = vpack.c.b16 %v2126, %v2122
    %v3507 = vpack.c.b16 %v2127, %v2123
    %v3508 = vpack.c.b16 %v2132, %v2128
    %v3509 = vpack.c.b16 %v2133, %v2129
    %v3510 = vpack.c.b16 %v2134, %v2130
    %v3511 = vpack.c.b16 %v2135, %v2131
    %v3512 = vpack.c.b16 %v2140, %v2136
    %v3513 = vpack.c.b16 %v2141, %v2137
    %v3514 = vpack.c.b16 %v2142, %v2138
    %v3515 = vpack.c.b16 %v2143, %v2139
    %v3516 = vpack.c.b16 %v2148, %v2144
    %v3517 = vpack.c.b16 %v2149, %v2145
    %v3518 = vpack.c.b16 %v2150, %v2146
    %v3519 = vpack.c.b16 %v2151, %v2147
    %v3520 = vpack.c.b16 %v2156, %v2152
    %v3521 = vpack.c.b16 %v2157, %v2153
    %v3522 = vpack.c.b16 %v2158, %v2154
    %v3523 = vpack.c.b16 %v2159, %v2155
    %v3524 = vpack.c.b16 %v2164, %v2160
    %v3525 = vpack.c.b16 %v2165, %v2161
    %v3526 = vpack.c.b16 %v2166, %v2162
    %v3527 = vpack.c.b16 %v2167, %v2163
    %v3528 = vpack.c.b16 %v2172, %v2168
    %v3529 = vpack.c.b16 %v2173, %v2169
    %v3530 = vpack.c.b16 %v2174, %v2170
    %v3531 = vpack.c.b16 %v2175, %v2171
    %v3532 = vpack.c.b16 %v2180, %v2176
    %v3533 = vpack.c.b16 %v2181, %v2177
    %v3534 = vpack.c.b16 %v2182, %v2178
    %v3535 = vpack.c.b16 %v2183, %v2179
    %v3536 = vpack.c.b16 %v2188, %v2184
    %v3537 = vpack.c.b16 %v2189, %v2185
    %v3538 = vpack.c.b16 %v2190, %v2186
    %v3539 = vpack.c.b16 %v2191, %v2187
    %v3540 = vpack.c.b16 %v2196, %v2192
    %v3541 = vpack.c.b16 %v2197, %v2193
    %v3542 = vpack.c.b16 %v2198, %v2194
    %v3543 = vpack.c.b16 %v2199, %v2195
    %v3544 = vpack.c.b16 %v2204, %v2200
    %v3545 = vpack.c.b16 %v2205, %v2201
    %v3546 = vpack.c.b16 %v2206, %v2202
    %v3547 = vpack.c.b16 %v2207, %v2203
    %v3548 = vpack.c.b16 %v2212, %v2208
    %v3549 = vpack.c.b16 %v2213, %v2209
    %v3550 = vpack.c.b16 %v2214, %v2210
    %v3551 = vpack.c.b16 %v2215, %v2211
    %v3552 = vpack.c.b16 %v2220, %v2216
    %v3553 = vpack.c.b16 %v2221, %v2217
    %v3554 = vpack.c.b16 %v2222, %v2218
    %v3555 = vpack.c.b16 %v2223, %v2219
    %v3556 = vpack.c.b16 %v2228, %v2224
    %v3557 = vpack.c.b16 %v2229, %v2225
    %v3558 = vpack.c.b16 %v2230, %v2226
    %v3559 = vpack.c.b16 %v2231, %v2227
    %v3560 = vpack.c.b16 %v2236, %v2232
    %v3561 = vpack.c.b16 %v2237, %v2233
    %v3562 = vpack.c.b16 %v2238, %v2234
    %v3563 = vpack.c.b16 %v2239, %v2235
    %v3564 = vpack.c.b16 %v2244, %v2240
    %v3565 = vpack.c.b16 %v2245, %v2241
    %v3566 = vpack.c.b16 %v2246, %v2242
    %v3567 = vpack.c.b16 %v2247, %v2243
    %v3568 = vpack.c.b16 %v2252, %v2248
    %v3569 = vpack.c.b16 %v2253, %v2249
    %v3570 = vpack.c.b16 %v2254, %v2250
    %v3571 = vpack.c.b16 %v2255, %v2251
    %v3572 = vpack.c.b16 %v2260, %v2256
    %v3573 = vpack.c.b16 %v2261, %v2257
    %v3574 = vpack.c.b16 %v2262, %v2258
    %v3575 = vpack.c.b16 %v2263, %v2259
    %v3576 = vpack.c.b16 %v2268, %v2264
    %v3577 = vpack.c.b16 %v2269, %v2265
    %v3578 = vpack.c.b16 %v2270, %v2266
    %v3579 = vpack.c.b16 %v2271, %v2267
    %v3580 = vpack.c.b16 %v2276, %v2272
    %v3581 = vpack.c.b16 %v2277, %v2273
    %v3582 = vpack.c.b16 %v2278, %v2274
    %v3583 = vpack.c.b16 %v2279, %v2275
    %v3584 = vpack.c.b16 %v2284, %v2280
    %v3585 = vpack.c.b16 %v2285, %v2281
    %v3586 = vpack.c.b16 %v2286, %v2282
    %v3587 = vpack.c.b16 %v2287, %v2283
    %v3588 = vpack.c.b16 %v2292, %v2288
    %v3589 = vpack.c.b16 %v2293, %v2289
    %v3590 = vpack.c.b16 %v2294, %v2290
    %v3591 = vpack.c.b16 %v2295, %v2291
    %v3592 = vpack.c.b16 %v2300, %v2296
    %v3593 = vpack.c.b16 %v2301, %v2297
    %v3594 = vpack.c.b16 %v2302, %v2298
    %v3595 = vpack.c.b16 %v2303, %v2299
    %v3596 = vpack.c.b16 %v2308, %v2304
    %v3597 = vpack.c.b16 %v2309, %v2305
    %v3598 = vpack.c.b16 %v2310, %v2306
    %v3599 = vpack.c.b16 %v2311, %v2307
    %v3600 = vpack.c.b16 %v2316, %v2312
    %v3601 = vpack.c.b16 %v2317, %v2313
    %v3602 = vpack.c.b16 %v2318, %v2314
    %v3603 = vpack.c.b16 %v2319, %v2315
    %v3604 = vpack.c.b16 %v2324, %v2320
    %v3605 = vpack.c.b16 %v2325, %v2321
    %v3606 = vpack.c.b16 %v2326, %v2322
    %v3607 = vpack.c.b16 %v2327, %v2323
    %v3608 = vpack.c.b16 %v2332, %v2328
    %v3609 = vpack.c.b16 %v2333, %v2329
    %v3610 = vpack.c.b16 %v2334, %v2330
    %v3611 = vpack.c.b16 %v2335, %v2331
    %v3612 = vpack.c.b16 %v2340, %v2336
    %v3613 = vpack.c.b16 %v2341, %v2337
    %v3614 = vpack.c.b16 %v2342, %v2338
    %v3615 = vpack.c.b16 %v2343, %v2339
    %v3616 = vpack.c.b16 %v2348, %v2344
    %v3617 = vpack.c.b16 %v2349, %v2345
    %v3618 = vpack.c.b16 %v2350, %v2346
    %v3619 = vpack.c.b16 %v2351, %v2347
    %v3620 = vpack.c.b16 %v2356, %v2352
    %v3621 = vpack.c.b16 %v2357, %v2353
    %v3622 = vpack.c.b16 %v2358, %v2354
    %v3623 = vpack.c.b16 %v2359, %v2355
    %v3624 = vpack.c.b16 %v2364, %v2360
    %v3625 = vpack.c.b16 %v2365, %v2361
    %v3626 = vpack.c.b16 %v2366, %v2362
    %v3627 = vpack.c.b16 %v2367, %v2363
    %v3628 = vpack.c.b16 %v2372, %v2368
    %v3629 = vpack.c.b16 %v2373, %v2369
    %v3630 = vpack.c.b16 %v2374, %v2370
    %v3631 = vpack.c.b16 %v2375, %v2371
    %v3632 = vpack.c.b16 %v2380, %v2376
    %v3633 = vpack.c.b16 %v2381, %v2377
    %v3634 = vpack.c.b16 %v2382, %v2378
    %v3635 = vpack.c.b16 %v2383, %v2379
    %v3636 = vpack.c.b16 %v2388, %v2384
    %v3637 = vpack.c.b16 %v2389, %v2385
    %v3638 = vpack.c.b16 %v2390, %v2386
    %v3639 = vpack.c.b16 %v2391, %v2387
    %v3640 = vpack.c.b16 %v2396, %v2392
    %v3641 = vpack.c.b16 %v2397, %v2393
    %v3642 = vpack.c.b16 %v2398, %v2394
    %v3643 = vpack.c.b16 %v2399, %v2395
    %v3644 = vpack.c.b16 %v2404, %v2400
    %v3645 = vpack.c.b16 %v2405, %v2401
    %v3646 = vpack.c.b16 %v2406, %v2402
    %v3647 = vpack.c.b16 %v2407, %v2403
    %v3648 = vpack.c.b16 %v2412, %v2408
    %v3649 = vpack.c.b16 %v2413, %v2409
    %v3650 = vpack.c.b16 %v2414, %v2410
    %v3651 = vpack.c.b16 %v2415, %v2411
    %v3652 = vpack.c.b16 %v2420, %v2416
    %v3653 = vpack.c.b16 %v2421, %v2417
    %v3654 = vpack.c.b16 %v2422, %v2418
    %v3655 = vpack.c.b16 %v2423, %v2419
    %v3656 = vpack.c.b16 %v2428, %v2424
    %v3657 = vpack.c.b16 %v2429, %v2425
    %v3658 = vpack.c.b16 %v2430, %v2426
    %v3659 = vpack.c.b16 %v2431, %v2427
    %v3660 = vpack.c.b16 %v2436, %v2432
    %v3661 = vpack.c.b16 %v2437, %v2433
    %v3662 = vpack.c.b16 %v2438, %v2434
    %v3663 = vpack.c.b16 %v2439, %v2435
    %v3664 = vpack.c.b16 %v2444, %v2440
    %v3665 = vpack.c.b16 %v2445, %v2441
    %v3666 = vpack.c.b16 %v2446, %v2442
    %v3667 = vpack.c.b16 %v2447, %v2443
    %v3668 = vpack.c.b16 %v2452, %v2448
    %v3669 = vpack.c.b16 %v2453, %v2449
    %v3670 = vpack.c.b16 %v2454, %v2450
    %v3671 = vpack.c.b16 %v2455, %v2451
    %v3672 = vpack.c.b16 %v2460, %v2456
    %v3673 = vpack.c.b16 %v2461, %v2457
    %v3674 = vpack.c.b16 %v2462, %v2458
    %v3675 = vpack.c.b16 %v2463, %v2459
    %v3676 = vpack.c.b16 %v2468, %v2464
    %v3677 = vpack.c.b16 %v2469, %v2465
    %v3678 = vpack.c.b16 %v2470, %v2466
    %v3679 = vpack.c.b16 %v2471, %v2467
    %v3680 = vpack.c.b16 %v2476, %v2472
    %v3681 = vpack.c.b16 %v2477, %v2473
    %v3682 = vpack.c.b16 %v2478, %v2474
    %v3683 = vpack.c.b16 %v2479, %v2475
    %v3684 = vpack.c.b16 %v2484, %v2480
    %v3685 = vpack.c.b16 %v2485, %v2481
    %v3686 = vpack.c.b16 %v2486, %v2482
    %v3687 = vpack.c.b16 %v2487, %v2483
    %v3688 = vpack.c.b16 %v2492, %v2488
    %v3689 = vpack.c.b16 %v2493, %v2489
    %v3690 = vpack.c.b16 %v2494, %v2490
    %v3691 = vpack.c.b16 %v2495, %v2491
    %v3692 = vpack.c.b16 %v2500, %v2496
    %v3693 = vpack.c.b16 %v2501, %v2497
    %v3694 = vpack.c.b16 %v2502, %v2498
    %v3695 = vpack.c.b16 %v2503, %v2499
    %v3696 = vpack.c.b16 %v2508, %v2504
    %v3697 = vpack.c.b16 %v2509, %v2505
    %v3698 = vpack.c.b16 %v2510, %v2506
    %v3699 = vpack.c.b16 %v2511, %v2507
    %v3700 = vpack.c.b16 %v2516, %v2512
    %v3701 = vpack.c.b16 %v2517, %v2513
    %v3702 = vpack.c.b16 %v2518, %v2514
    %v3703 = vpack.c.b16 %v2519, %v2515
    %v3704 = vpack.c.b16 %v2524, %v2520
    %v3705 = vpack.c.b16 %v2525, %v2521
    %v3706 = vpack.c.b16 %v2526, %v2522
    %v3707 = vpack.c.b16 %v2527, %v2523
    %v3708 = vpack.c.b16 %v2532, %v2528
    %v3709 = vpack.c.b16 %v2533, %v2529
    %v3710 = vpack.c.b16 %v2534, %v2530
    %v3711 = vpack.c.b16 %v2535, %v2531
    %v3712 = vpack.c.b16 %v2540, %v2536
    %v3713 = vpack.c.b16 %v2541, %v2537
    %v3714 = vpack.c.b16 %v2542, %v2538
    %v3715 = vpack.c.b16 %v2543, %v2539
    %v3716 = vpack.c.b16 %v2548, %v2544
    %v3717 = vpack.c.b16 %v2549, %v2545
    %v3718 = vpack.c.b16 %v2550, %v2546
    %v3719 = vpack.c.b16 %v2551, %v2547
    %v3720 = vpack.c.b16 %v2556, %v2552
    %v3721 = vpack.c.b16 %v2557, %v2553
    %v3722 = vpack.c.b16 %v2558, %v2554
    %v3723 = vpack.c.b16 %v2559, %v2555
    %v3724 = vpack.c.b16 %v2564, %v2560
    %v3725 = vpack.c.b16 %v2565, %v2561
    %v3726 = vpack.c.b16 %v2566, %v2562
    %v3727 = vpack.c.b16 %v2567, %v2563
    %v3728 = vpack.c.b16 %v2572, %v2568
    %v3729 = vpack.c.b16 %v2573, %v2569
    %v3730 = vpack.c.b16 %v2574, %v2570
    %v3731 = vpack.c.b16 %v2575, %v2571
    %v3732 = vpack.c.b16 %v2580, %v2576
    %v3733 = vpack.c.b16 %v2581, %v2577
    %v3734 = vpack.c.b16 %v2582, %v2578
    %v3735 = vpack.c.b16 %v2583, %v2579
    %v3736 = vpack.c.b16 %v2588, %v2584
    %v3737 = vpack.c.b16 %v2589, %v2585
    %v3738 = vpack.c.b16 %v2590, %v2586
    %v3739 = vpack.c.b16 %v2591, %v2587
    %v3740 = vpack.c.b16 %v2596, %v2592
    %v3741 = vpack.c.b16 %v2597, %v2593
    %v3742 = vpack.c.b16 %v2598, %v2594
    %v3743 = vpack.c.b16 %v2599, %v2595
    %v3744 = vpack.c.b16 %v2604, %v2600
    %v3745 = vpack.c.b16 %v2605, %v2601
    %v3746 = vpack.c.b16 %v2606, %v2602
    %v3747 = vpack.c.b16 %v2607, %v2603
    %v3748 = vpack.c.b16 %v2612, %v2608
    %v3749 = vpack.c.b16 %v2613, %v2609
    %v3750 = vpack.c.b16 %v2614, %v2610
    %v3751 = vpack.c.b16 %v2615, %v2611
    %v3752 = vpack.c.b16 %v2620, %v2616
    %v3753 = vpack.c.b16 %v2621, %v2617
    %v3754 = vpack.c.b16 %v2622, %v2618
    %v3755 = vpack.c.b16 %v2623, %v2619
    %v3756 = vpack.c.b16 %v2628, %v2624
    %v3757 = vpack.c.b16 %v2629, %v2625
    %v3758 = vpack.c.b16 %v2630, %v2626
    %v3759 = vpack.c.b16 %v2631, %v2627
    %v3760 = vpack.c.b16 %v2636, %v2632
    %v3761 = vpack.c.b16 %v2637, %v2633
    %v3762 = vpack.c.b16 %v2638, %v2634
    %v3763 = vpack.c.b16 %v2639, %v2635
    %v3764 = vpack.c.b16 %v2644, %v2640
    %v3765 = vpack.c.b16 %v2645, %v2641
    %v3766 = vpack.c.b16 %v2646, %v2642
    %v3767 = vpack.c.b16 %v2647, %v2643
    %v3768 = vpack.c.b16 %v2652, %v2648
    %v3769 = vpack.c.b16 %v2653, %v2649
    %v3770 = vpack.c.b16 %v2654, %v2650
    %v3771 = vpack.c.b16 %v2655, %v2651
    %v3772 = vpack.c.b16 %v2660, %v2656
    %v3773 = vpack.c.b16 %v2661, %v2657
    %v3774 = vpack.c.b16 %v2662, %v2658
    %v3775 = vpack.c.b16 %v2663, %v2659
    %v3776 = vpack.c.b16 %v2668, %v2664
    %v3777 = vpack.c.b16 %v2669, %v2665
    %v3778 = vpack.c.b16 %v2670, %v2666
    %v3779 = vpack.c.b16 %v2671, %v2667
    %v3780 = vpack.c.b16 %v2676, %v2672
    %v3781 = vpack.c.b16 %v2677, %v2673
    %v3782 = vpack.c.b16 %v2678, %v2674
    %v3783 = vpack.c.b16 %v2679, %v2675
    %v3784 = vpack.c.b16 %v2684, %v2680
    %v3785 = vpack.c.b16 %v2685, %v2681
    %v3786 = vpack.c.b16 %v2686, %v2682
    %v3787 = vpack.c.b16 %v2687, %v2683
    %v3788 = vpack.c.b16 %v2692, %v2688
    %v3789 = vpack.c.b16 %v2693, %v2689
    %v3790 = vpack.c.b16 %v2694, %v2690
    %v3791 = vpack.c.b16 %v2695, %v2691
    %v3792 = vpack.c.b16 %v2700, %v2696
    %v3793 = vpack.c.b16 %v2701, %v2697
    %v3794 = vpack.c.b16 %v2702, %v2698
    %v3795 = vpack.c.b16 %v2703, %v2699
    %v3796 = vpack.c.b16 %v2708, %v2704
    %v3797 = vpack.c.b16 %v2709, %v2705
    %v3798 = vpack.c.b16 %v2710, %v2706
    %v3799 = vpack.c.b16 %v2711, %v2707
    %v3800 = vpack.c.b16 %v2716, %v2712
    %v3801 = vpack.c.b16 %v2717, %v2713
    %v3802 = vpack.c.b16 %v2718, %v2714
    %v3803 = vpack.c.b16 %v2719, %v2715
    %v3804 = vpack.c.b16 %v2724, %v2720
    %v3805 = vpack.c.b16 %v2725, %v2721
    %v3806 = vpack.c.b16 %v2726, %v2722
    %v3807 = vpack.c.b16 %v2727, %v2723
    %v3808 = vpack.c.b16 %v2732, %v2728
    %v3809 = vpack.c.b16 %v2733, %v2729
    %v3810 = vpack.c.b16 %v2734, %v2730
    %v3811 = vpack.c.b16 %v2735, %v2731
    %v3812 = vpack.c.b16 %v2740, %v2736
    %v3813 = vpack.c.b16 %v2741, %v2737
    %v3814 = vpack.c.b16 %v2742, %v2738
    %v3815 = vpack.c.b16 %v2743, %v2739
    %v3816 = vpack.c.b16 %v2748, %v2744
    %v3817 = vpack.c.b16 %v2749, %v2745
    %v3818 = vpack.c.b16 %v2750, %v2746
    %v3819 = vpack.c.b16 %v2751, %v2747
    %v3820 = vpack.c.b16 %v2756, %v2752
    %v3821 = vpack.c.b16 %v2757, %v2753
    %v3822 = vpack.c.b16 %v2758, %v2754
    %v3823 = vpack.c.b16 %v2759, %v2755
    %v3824 = vpack.c.b16 %v2764, %v2760
    %v3825 = vpack.c.b16 %v2765, %v2761
    %v3826 = vpack.c.b16 %v2766, %v2762
    %v3827 = vpack.c.b16 %v2767, %v2763
    %v3828 = vpack.c.b16 %v2772, %v2768
    %v3829 = vpack.c.b16 %v2773, %v2769
    %v3830 = vpack.c.b16 %v2774, %v2770
    %v3831 = vpack.c.b16 %v2775, %v2771
    %v3832 = vpack.c.b16 %v2780, %v2776
    %v3833 = vpack.c.b16 %v2781, %v2777
    %v3834 = vpack.c.b16 %v2782, %v2778
    %v3835 = vpack.c.b16 %v2783, %v2779
    %v3836 = vpack.c.b16 %v2788, %v2784
    %v3837 = vpack.c.b16 %v2789, %v2785
    %v3838 = vpack.c.b16 %v2790, %v2786
    %v3839 = vpack.c.b16 %v2791, %v2787
    %v3840 = vpack.c.b16 %v2796, %v2792
    %v3841 = vpack.c.b16 %v2797, %v2793
    %v3842 = vpack.c.b16 %v2798, %v2794
    %v3843 = vpack.c.b16 %v2799, %v2795
    %v3844 = vpack.c.b16 %v2804, %v2800
    %v3845 = vpack.c.b16 %v2805, %v2801
    %v3846 = vpack.c.b16 %v2806, %v2802
    %v3847 = vpack.c.b16 %v2807, %v2803
    %v3848 = vpack.c.b16 %v2812, %v2808
    %v3849 = vpack.c.b16 %v2813, %v2809
    %v3850 = vpack.c.b16 %v2814, %v2810
    %v3851 = vpack.c.b16 %v2815, %v2811
    %v3852 = vpack.c.b16 %v2820, %v2816
    %v3853 = vpack.c.b16 %v2821, %v2817
    %v3854 = vpack.c.b16 %v2822, %v2818
    %v3855 = vpack.c.b16 %v2823, %v2819
    %v3856 = vpack.c.b16 %v2828, %v2824
    %v3857 = vpack.c.b16 %v2829, %v2825
    %v3858 = vpack.c.b16 %v2830, %v2826
    %v3859 = vpack.c.b16 %v2831, %v2827
    %v3860 = vpack.c.b16 %v2836, %v2832
    %v3861 = vpack.c.b16 %v2837, %v2833
    %v3862 = vpack.c.b16 %v2838, %v2834
    %v3863 = vpack.c.b16 %v2839, %v2835
    %v3864 = vpack.c.b16 %v2844, %v2840
    %v3865 = vpack.c.b16 %v2845, %v2841
    %v3866 = vpack.c.b16 %v2846, %v2842
    %v3867 = vpack.c.b16 %v2847, %v2843
    %v3868 = vpack.c.b16 %v2852, %v2848
    %v3869 = vpack.c.b16 %v2853, %v2849
    %v3870 = vpack.c.b16 %v2854, %v2850
    %v3871 = vpack.c.b16 %v2855, %v2851
    %v3872 = vpack.c.b16 %v2860, %v2856
    %v3873 = vpack.c.b16 %v2861, %v2857
    %v3874 = vpack.c.b16 %v2862, %v2858
    %v3875 = vpack.c.b16 %v2863, %v2859
    %v3876 = vpack.c.b16 %v2868, %v2864
    %v3877 = vpack.c.b16 %v2869, %v2865
    %v3878 = vpack.c.b16 %v2870, %v2866
    %v3879 = vpack.c.b16 %v2871, %v2867
    %v3880 = vpack.c.b16 %v2876, %v2872
    %v3881 = vpack.c.b16 %v2877, %v2873
    %v3882 = vpack.c.b16 %v2878, %v2874
    %v3883 = vpack.c.b16 %v2879, %v2875
    %v3884 = vpack.c.b16 %v2884, %v2880
    %v3885 = vpack.c.b16 %v2885, %v2881
    %v3886 = vpack.c.b16 %v2886, %v2882
    %v3887 = vpack.c.b16 %v2887, %v2883
    %v3888 = vpack.c.b16 %v2892, %v2888
    %v3889 = vpack.c.b16 %v2893, %v2889
    %v3890 = vpack.c.b16 %v2894, %v2890
    %v3891 = vpack.c.b16 %v2895, %v2891
    %v3892 = vpack.c.b16 %v2900, %v2896
    %v3893 = vpack.c.b16 %v2901, %v2897
    %v3894 = vpack.c.b16 %v2902, %v2898
    %v3895 = vpack.c.b16 %v2903, %v2899
    %v3896 = vpack.c.b16 %v2908, %v2904
    %v3897 = vpack.c.b16 %v2909, %v2905
    %v3898 = vpack.c.b16 %v2910, %v2906
    %v3899 = vpack.c.b16 %v2911, %v2907
    %v3900 = vpack.c.b16 %v2916, %v2912
    %v3901 = vpack.c.b16 %v2917, %v2913
    %v3902 = vpack.c.b16 %v2918, %v2914
    %v3903 = vpack.c.b16 %v2919, %v2915
    %v3904 = vpack.c.b16 %v2924, %v2920
    %v3905 = vpack.c.b16 %v2925, %v2921
    %v3906 = vpack.c.b16 %v2926, %v2922
    %v3907 = vpack.c.b16 %v2927, %v2923
    %v3908 = vpack.c.b16 %v2932, %v2928
    %v3909 = vpack.c.b16 %v2933, %v2929
    %v3910 = vpack.c.b16 %v2934, %v2930
    %v3911 = vpack.c.b16 %v2935, %v2931
    %v3912 = vpack.c.b16 %v2940, %v2936
    %v3913 = vpack.c.b16 %v2941, %v2937
    %v3914 = vpack.c.b16 %v2942, %v2938
    %v3915 = vpack.c.b16 %v2943, %v2939
    %v3916 = vpack.c.b16 %v2948, %v2944
    %v3917 = vpack.c.b16 %v2949, %v2945
    %v3918 = vpack.c.b16 %v2950, %v2946
    %v3919 = vpack.c.b16 %v2951, %v2947
    %v3920 = vpack.c.b16 %v2956, %v2952
    %v3921 = vpack.c.b16 %v2957, %v2953
    %v3922 = vpack.c.b16 %v2958, %v2954
    %v3923 = vpack.c.b16 %v2959, %v2955
    %v3924 = vpack.c.b16 %v2964, %v2960
    %v3925 = vpack.c.b16 %v2965, %v2961
    %v3926 = vpack.c.b16 %v2966, %v2962
    %v3927 = vpack.c.b16 %v2967, %v2963
    %v3928 = vpack.c.b16 %v2972, %v2968
    %v3929 = vpack.c.b16 %v2973, %v2969
    %v3930 = vpack.c.b16 %v2974, %v2970
    %v3931 = vpack.c.b16 %v2975, %v2971
    %v3932 = vpack.c.b16 %v2980, %v2976
    %v3933 = vpack.c.b16 %v2981, %v2977
    %v3934 = vpack.c.b16 %v2982, %v2978
    %v3935 = vpack.c.b16 %v2983, %v2979
    %v3936 = vpack.c.b16 %v2988, %v2984
    %v3937 = vpack.c.b16 %v2989, %v2985
    %v3938 = vpack.c.b16 %v2990, %v2986
    %v3939 = vpack.c.b16 %v2991, %v2987
    %v3940 = vpack.c.b16 %v2996, %v2992
    %v3941 = vpack.c.b16 %v2997, %v2993
    %v3942 = vpack.c.b16 %v2998, %v2994
    %v3943 = vpack.c.b16 %v2999, %v2995
    %v3944 = vpack.c.b16 %v3004, %v3000
    %v3945 = vpack.c.b16 %v3005, %v3001
    %v3946 = vpack.c.b16 %v3006, %v3002
    %v3947 = vpack.c.b16 %v3007, %v3003
    %v3948 = vpack.c.b16 %v3012, %v3008
    %v3949 = vpack.c.b16 %v3013, %v3009
    %v3950 = vpack.c.b16 %v3014, %v3010
    %v3951 = vpack.c.b16 %v3015, %v3011
    %v3952 = vpack.c.b16 %v3020, %v3016
    %v3953 = vpack.c.b16 %v3021, %v3017
    %v3954 = vpack.c.b16 %v3022, %v3018
    %v3955 = vpack.c.b16 %v3023, %v3019
    %v3956 = vpack.c.b16 %v3028, %v3024
    %v3957 = vpack.c.b16 %v3029, %v3025
    %v3958 = vpack.c.b16 %v3030, %v3026
    %v3959 = vpack.c.b16 %v3031, %v3027
    %v3960 = vpack.c.b16 %v3036, %v3032
    %v3961 = vpack.c.b16 %v3037, %v3033
    %v3962 = vpack.c.b16 %v3038, %v3034
    %v3963 = vpack.c.b16 %v3039, %v3035
    %v3964 = vpack.c.b16 %v3044, %v3040
    %v3965 = vpack.c.b16 %v3045, %v3041
    %v3966 = vpack.c.b16 %v3046, %v3042
    %v3967 = vpack.c.b16 %v3047, %v3043
    %v3968 = vpack.c.b16 %v3052, %v3048
    %v3969 = vpack.c.b16 %v3053, %v3049
    %v3970 = vpack.c.b16 %v3054, %v3050
    %v3971 = vpack.c.b16 %v3055, %v3051
    %v3972 = vpack.c.b16 %v3060, %v3056
    %v3973 = vpack.c.b16 %v3061, %v3057
    %v3974 = vpack.c.b16 %v3062, %v3058
    %v3975 = vpack.c.b16 %v3063, %v3059
    %v3976 = vpack.c.b16 %v3068, %v3064
    %v3977 = vpack.c.b16 %v3069, %v3065
    %v3978 = vpack.c.b16 %v3070, %v3066
    %v3979 = vpack.c.b16 %v3071, %v3067
    %v3980 = vpack.c.b16 %v3076, %v3072
    %v3981 = vpack.c.b16 %v3077, %v3073
    %v3982 = vpack.c.b16 %v3078, %v3074
    %v3983 = vpack.c.b16 %v3079, %v3075
    %v3984 = vpack.c.b16 %v3084, %v3080
    %v3985 = vpack.c.b16 %v3085, %v3081
    %v3986 = vpack.c.b16 %v3086, %v3082
    %v3987 = vpack.c.b16 %v3087, %v3083
    %v3988 = vpack.c.b16 %v3092, %v3088
    %v3989 = vpack.c.b16 %v3093, %v3089
    %v3990 = vpack.c.b16 %v3094, %v3090
    %v3991 = vpack.c.b16 %v3095, %v3091
    %v3992 = vpack.c.b16 %v3100, %v3096
    %v3993 = vpack.c.b16 %v3101, %v3097
    %v3994 = vpack.c.b16 %v3102, %v3098
    %v3995 = vpack.c.b16 %v3103, %v3099
    %v3996 = vpack.c.b16 %v3108, %v3104
    %v3997 = vpack.c.b16 %v3109, %v3105
    %v3998 = vpack.c.b16 %v3110, %v3106
    %v3999 = vpack.c.b16 %v3111, %v3107
    %v4000 = vpack.c.b16 %v3116, %v3112
    %v4001 = vpack.c.b16 %v3117, %v3113
    %v4002 = vpack.c.b16 %v3118, %v3114
    %v4003 = vpack.c.b16 %v3119, %v3115
    %v4004 = vpack.c.b16 %v3124, %v3120
    %v4005 = vpack.c.b16 %v3125, %v3121
    %v4006 = vpack.c.b16 %v3126, %v3122
    %v4007 = vpack.c.b16 %v3127, %v3123
    %v4008 = vpack.c.b16 %v3132, %v3128
    %v4009 = vpack.c.b16 %v3133, %v3129
    %v4010 = vpack.c.b16 %v3134, %v3130
    %v4011 = vpack.c.b16 %v3135, %v3131
    %v4012 = vpack.c.b16 %v3140, %v3136
    %v4013 = vpack.c.b16 %v3141, %v3137
    %v4014 = vpack.c.b16 %v3142, %v3138
    %v4015 = vpack.c.b16 %v3143, %v3139
    %v4016 = vpack.c.b16 %v3148, %v3144
    %v4017 = vpack.c.b16 %v3149, %v3145
    %v4018 = vpack.c.b16 %v3150, %v3146
    %v4019 = vpack.c.b16 %v3151, %v3147
    %v4020 = vpack.c.b16 %v3156, %v3152
    %v4021 = vpack.c.b16 %v3157, %v3153
    %v4022 = vpack.c.b16 %v3158, %v3154
    %v4023 = vpack.c.b16 %v3159, %v3155
    %v4024 = vpack.c.b16 %v3164, %v3160
    %v4025 = vpack.c.b16 %v3165, %v3161
    %v4026 = vpack.c.b16 %v3166, %v3162
    %v4027 = vpack.c.b16 %v3167, %v3163
    %v4028 = vpack.c.b16 %v3172, %v3168
    %v4029 = vpack.c.b16 %v3173, %v3169
    %v4030 = vpack.c.b16 %v3174, %v3170
    %v4031 = vpack.c.b16 %v3175, %v3171
    %v4032 = vpack.c.b16 %v3180, %v3176
    %v4033 = vpack.c.b16 %v3181, %v3177
    %v4034 = vpack.c.b16 %v3182, %v3178
    %v4035 = vpack.c.b16 %v3183, %v3179
    %v4036 = vpack.c.b16 %v3188, %v3184
    %v4037 = vpack.c.b16 %v3189, %v3185
    %v4038 = vpack.c.b16 %v3190, %v3186
    %v4039 = vpack.c.b16 %v3191, %v3187
    %v4040 = vpack.c.b16 %v3196, %v3192
    %v4041 = vpack.c.b16 %v3197, %v3193
    %v4042 = vpack.c.b16 %v3198, %v3194
    %v4043 = vpack.c.b16 %v3199, %v3195
    %v4044 = vpack.c.b16 %v3204, %v3200
    %v4045 = vpack.c.b16 %v3205, %v3201
    %v4046 = vpack.c.b16 %v3206, %v3202
    %v4047 = vpack.c.b16 %v3207, %v3203
    %v4048 = vpack.c.b16 %v3212, %v3208
    %v4049 = vpack.c.b16 %v3213, %v3209
    %v4050 = vpack.c.b16 %v3214, %v3210
    %v4051 = vpack.c.b16 %v3215, %v3211
    %v4052 = vpack.c.b16 %v3220, %v3216
    %v4053 = vpack.c.b16 %v3221, %v3217
    %v4054 = vpack.c.b16 %v3222, %v3218
    %v4055 = vpack.c.b16 %v3223, %v3219
    %v4056 = vpack.c.b16 %v3228, %v3224
    %v4057 = vpack.c.b16 %v3229, %v3225
    %v4058 = vpack.c.b16 %v3230, %v3226
    %v4059 = vpack.c.b16 %v3231, %v3227
    %v4060 = vpack.c.b16 %v3236, %v3232
    %v4061 = vpack.c.b16 %v3237, %v3233
    %v4062 = vpack.c.b16 %v3238, %v3234
    %v4063 = vpack.c.b16 %v3239, %v3235
    %v4064 = vpack.c.b16 %v3244, %v3240
    %v4065 = vpack.c.b16 %v3245, %v3241
    %v4066 = vpack.c.b16 %v3246, %v3242
    %v4067 = vpack.c.b16 %v3247, %v3243
    %v4068 = vpack.c.b16 %v3252, %v3248
    %v4069 = vpack.c.b16 %v3253, %v3249
    %v4070 = vpack.c.b16 %v3254, %v3250
    %v4071 = vpack.c.b16 %v3255, %v3251
    %v4072 = vpack.c.b16 %v3260, %v3256
    %v4073 = vpack.c.b16 %v3261, %v3257
    %v4074 = vpack.c.b16 %v3262, %v3258
    %v4075 = vpack.c.b16 %v3263, %v3259
    %v4076 = vpack.c.b16 %v3268, %v3264
    %v4077 = vpack.c.b16 %v3269, %v3265
    %v4078 = vpack.c.b16 %v3270, %v3266
    %v4079 = vpack.c.b16 %v3271, %v3267
    %v4080 = vpack.c.b16 %v3276, %v3272
    %v4081 = vpack.c.b16 %v3277, %v3273
    %v4082 = vpack.c.b16 %v3278, %v3274
    %v4083 = vpack.c.b16 %v3279, %v3275
    %v4084 = vpack.c.b16 %v3284, %v3280
    %v4085 = vpack.c.b16 %v3285, %v3281
    %v4086 = vpack.c.b16 %v3286, %v3282
    %v4087 = vpack.c.b16 %v3287, %v3283
    %v4088 = vpack.c.b16 %v3292, %v3288
    %v4089 = vpack.c.b16 %v3293, %v3289
    %v4090 = vpack.c.b16 %v3294, %v3290
    %v4091 = vpack.c.b16 %v3295, %v3291
    %v4092 = vpack.c.b16 %v3300, %v3296
    %v4093 = vpack.c.b16 %v3301, %v3297
    %v4094 = vpack.c.b16 %v3302, %v3298
    %v4095 = vpack.c.b16 %v3303, %v3299
    %v4096 = vpack.c.b16 %v3308, %v3304
    %v4097 = vpack.c.b16 %v3309, %v3305
    %v4098 = vpack.c.b16 %v3310, %v3306
    %v4099 = vpack.c.b16 %v3311, %v3307
    %v4100 = vpack.c.b16 %v3316, %v3312
    %v4101 = vpack.c.b16 %v3317, %v3313
    %v4102 = vpack.c.b16 %v3318, %v3314
    %v4103 = vpack.c.b16 %v3319, %v3315
    %vm4888 = vcmask 523264
    %v4889 = vsel %vm4888, %v943, 0
    %4891 = vmatpush.bf16.msra.mxu0 %v3348
    %4892 = vmatpush.bf16.msra.mxu0 %v3344
    %4893 = vmatpush.bf16.msra.mxu0 %v3340
    %4894 = vmatpush.bf16.msra.mxu0 %v3336
    %4895 = vmatpush.bf16.msra.mxu0 %v3332
    %4896 = vmatpush.bf16.msra.mxu0 %v3328
    %4897 = vmatpush.bf16.msra.mxu0 %v3324
    %4898 = vmatpush.bf16.msra.mxu0 %v3320
    %4899 = vmatmul.bf16.gmra.mxu0 %v871
    %v4900 = vpop.f32.mrf.mxu0
    %v4901 = vadd.f32 %v840, %v4900
    %v4902 = vpop.f32.mrf.mxu0
    %v4903 = vadd.f32 %v840, %v4902
    %4904 = vdwg.mxu0
    %4905 = vmatpush.bf16.msra.mxu0 %v3380
    %4906 = vmatpush.bf16.msra.mxu0 %v3376
    %4907 = vmatpush.bf16.msra.mxu0 %v3372
    %4908 = vmatpush.bf16.msra.mxu0 %v3368
    %4909 = vmatpush.bf16.msra.mxu0 %v3364
    %4910 = vmatpush.bf16.msra.mxu0 %v3360
    %4911 = vmatpush.bf16.msra.mxu0 %v3356
    %4912 = vmatpush.bf16.msra.mxu0 %v3352
    %4913 = vmatmul.bf16.gmra.mxu0 %v872
    %v4914 = vpop.f32.mrf.mxu0
    %v4915 = vadd.f32 %v4901, %v4914
    %v4916 = vpop.f32.mrf.mxu0
    %v4917 = vadd.f32 %v4903, %v4916
    %4918 = vdwg.mxu0
    %4919 = vmatpush.bf16.msra.mxu0 %v3412
    %4920 = vmatpush.bf16.msra.mxu0 %v3408
    %4921 = vmatpush.bf16.msra.mxu0 %v3404
    %4922 = vmatpush.bf16.msra.mxu0 %v3400
    %4923 = vmatpush.bf16.msra.mxu0 %v3396
    %4924 = vmatpush.bf16.msra.mxu0 %v3392
    %4925 = vmatpush.bf16.msra.mxu0 %v3388
    %4926 = vmatpush.bf16.msra.mxu0 %v3384
    %4927 = vmatmul.bf16.gmra.mxu0 %v873
    %v4928 = vpop.f32.mrf.mxu0
    %v4929 = vadd.f32 %v4915, %v4928
    %v4930 = vpop.f32.mrf.mxu0
    %v4931 = vadd.f32 %v4917, %v4930
    %4932 = vdwg.mxu0
    %4933 = vmatpush.bf16.msra.mxu0 %v3444
    %4934 = vmatpush.bf16.msra.mxu0 %v3440
    %4935 = vmatpush.bf16.msra.mxu0 %v3436
    %4936 = vmatpush.bf16.msra.mxu0 %v3432
    %4937 = vmatpush.bf16.msra.mxu0 %v3428
    %4938 = vmatpush.bf16.msra.mxu0 %v3424
    %4939 = vmatpush.bf16.msra.mxu0 %v3420
    %4940 = vmatpush.bf16.msra.mxu0 %v3416
    %4941 = vmatmul.bf16.gmra.mxu0 %v874
    %v4942 = vpop.f32.mrf.mxu0
    %v4943 = vadd.f32 %v4929, %v4942
    %v4944 = vpop.f32.mrf.mxu0
    %v4945 = vadd.f32 %v4931, %v4944
    %4946 = vdwg.mxu0
    %4947 = vmatpush.bf16.msra.mxu0 %v3476
    %4948 = vmatpush.bf16.msra.mxu0 %v3472
    %4949 = vmatpush.bf16.msra.mxu0 %v3468
    %4950 = vmatpush.bf16.msra.mxu0 %v3464
    %4951 = vmatpush.bf16.msra.mxu0 %v3460
    %4952 = vmatpush.bf16.msra.mxu0 %v3456
    %4953 = vmatpush.bf16.msra.mxu0 %v3452
    %4954 = vmatpush.bf16.msra.mxu0 %v3448
    %4955 = vmatmul.bf16.gmra.mxu0 %v875
    %v4956 = vpop.f32.mrf.mxu0
    %v4957 = vadd.f32 %v4943, %v4956
    %v4958 = vpop.f32.mrf.mxu0
    %v4959 = vadd.f32 %v4945, %v4958
    %4960 = vdwg.mxu0
    %4961 = vmatpush.bf16.msra.mxu0 %v3508
    %4962 = vmatpush.bf16.msra.mxu0 %v3504
    %4963 = vmatpush.bf16.msra.mxu0 %v3500
    %4964 = vmatpush.bf16.msra.mxu0 %v3496
    %4965 = vmatpush.bf16.msra.mxu0 %v3492
    %4966 = vmatpush.bf16.msra.mxu0 %v3488
    %4967 = vmatpush.bf16.msra.mxu0 %v3484
    %4968 = vmatpush.bf16.msra.mxu0 %v3480
    %4969 = vmatmul.bf16.gmra.mxu0 %v876
    %v4970 = vpop.f32.mrf.mxu0
    %v4971 = vadd.f32 %v4957, %v4970
    %v4972 = vpop.f32.mrf.mxu0
    %v4973 = vadd.f32 %v4959, %v4972
    %4974 = vdwg.mxu0
    %4975 = vmatpush.bf16.msra.mxu0 %v3540
    %4976 = vmatpush.bf16.msra.mxu0 %v3536
    %4977 = vmatpush.bf16.msra.mxu0 %v3532
    %4978 = vmatpush.bf16.msra.mxu0 %v3528
    %4979 = vmatpush.bf16.msra.mxu0 %v3524
    %4980 = vmatpush.bf16.msra.mxu0 %v3520
    %4981 = vmatpush.bf16.msra.mxu0 %v3516
    %4982 = vmatpush.bf16.msra.mxu0 %v3512
    %4983 = vmatmul.bf16.gmra.mxu0 %v877
    %v4984 = vpop.f32.mrf.mxu0
    %v4985 = vadd.f32 %v4971, %v4984
    %v4986 = vpop.f32.mrf.mxu0
    %v4987 = vadd.f32 %v4973, %v4986
    %4988 = vdwg.mxu0
    %4989 = vmatpush.bf16.msra.mxu0 %v3572
    %4990 = vmatpush.bf16.msra.mxu0 %v3568
    %4991 = vmatpush.bf16.msra.mxu0 %v3564
    %4992 = vmatpush.bf16.msra.mxu0 %v3560
    %4993 = vmatpush.bf16.msra.mxu0 %v3556
    %4994 = vmatpush.bf16.msra.mxu0 %v3552
    %4995 = vmatpush.bf16.msra.mxu0 %v3548
    %4996 = vmatpush.bf16.msra.mxu0 %v3544
    %4997 = vmatmul.bf16.gmra.mxu0 %v878
    %v4998 = vpop.f32.mrf.mxu0
    %v4999 = vadd.f32 %v4985, %v4998
    %v5000 = vpop.f32.mrf.mxu0
    %v5001 = vadd.f32 %v4987, %v5000
    %5002 = vdwg.mxu0
    %5003 = vmatpush.bf16.msra.mxu0 %v3604
    %5004 = vmatpush.bf16.msra.mxu0 %v3600
    %5005 = vmatpush.bf16.msra.mxu0 %v3596
    %5006 = vmatpush.bf16.msra.mxu0 %v3592
    %5007 = vmatpush.bf16.msra.mxu0 %v3588
    %5008 = vmatpush.bf16.msra.mxu0 %v3584
    %5009 = vmatpush.bf16.msra.mxu0 %v3580
    %5010 = vmatpush.bf16.msra.mxu0 %v3576
    %5011 = vmatmul.bf16.gmra.mxu0 %v895
    %v5012 = vpop.f32.mrf.mxu0
    %v5013 = vadd.f32 %v4999, %v5012
    %v5014 = vpop.f32.mrf.mxu0
    %v5015 = vadd.f32 %v5001, %v5014
    %5016 = vdwg.mxu0
    %5017 = vmatpush.bf16.msra.mxu0 %v3636
    %5018 = vmatpush.bf16.msra.mxu0 %v3632
    %5019 = vmatpush.bf16.msra.mxu0 %v3628
    %5020 = vmatpush.bf16.msra.mxu0 %v3624
    %5021 = vmatpush.bf16.msra.mxu0 %v3620
    %5022 = vmatpush.bf16.msra.mxu0 %v3616
    %5023 = vmatpush.bf16.msra.mxu0 %v3612
    %5024 = vmatpush.bf16.msra.mxu0 %v3608
    %5025 = vmatmul.bf16.gmra.mxu0 %v896
    %v5026 = vpop.f32.mrf.mxu0
    %v5027 = vadd.f32 %v5013, %v5026
    %v5028 = vpop.f32.mrf.mxu0
    %v5029 = vadd.f32 %v5015, %v5028
    %5030 = vdwg.mxu0
    %5031 = vmatpush.bf16.msra.mxu0 %v3668
    %5032 = vmatpush.bf16.msra.mxu0 %v3664
    %5033 = vmatpush.bf16.msra.mxu0 %v3660
    %5034 = vmatpush.bf16.msra.mxu0 %v3656
    %5035 = vmatpush.bf16.msra.mxu0 %v3652
    %5036 = vmatpush.bf16.msra.mxu0 %v3648
    %5037 = vmatpush.bf16.msra.mxu0 %v3644
    %5038 = vmatpush.bf16.msra.mxu0 %v3640
    %5039 = vmatmul.bf16.gmra.mxu0 %v897
    %v5040 = vpop.f32.mrf.mxu0
    %v5041 = vadd.f32 %v5027, %v5040
    %v5042 = vpop.f32.mrf.mxu0
    %v5043 = vadd.f32 %v5029, %v5042
    %5044 = vdwg.mxu0
    %5045 = vmatpush.bf16.msra.mxu0 %v3700
    %5046 = vmatpush.bf16.msra.mxu0 %v3696
    %5047 = vmatpush.bf16.msra.mxu0 %v3692
    %5048 = vmatpush.bf16.msra.mxu0 %v3688
    %5049 = vmatpush.bf16.msra.mxu0 %v3684
    %5050 = vmatpush.bf16.msra.mxu0 %v3680
    %5051 = vmatpush.bf16.msra.mxu0 %v3676
    %5052 = vmatpush.bf16.msra.mxu0 %v3672
    %5053 = vmatmul.bf16.gmra.mxu0 %v898
    %v5054 = vpop.f32.mrf.mxu0
    %v5055 = vadd.f32 %v5041, %v5054
    %v5056 = vpop.f32.mrf.mxu0
    %v5057 = vadd.f32 %v5043, %v5056
    %5058 = vdwg.mxu0
    %5059 = vmatpush.bf16.msra.mxu0 %v3732
    %5060 = vmatpush.bf16.msra.mxu0 %v3728
    %5061 = vmatpush.bf16.msra.mxu0 %v3724
    %5062 = vmatpush.bf16.msra.mxu0 %v3720
    %5063 = vmatpush.bf16.msra.mxu0 %v3716
    %5064 = vmatpush.bf16.msra.mxu0 %v3712
    %5065 = vmatpush.bf16.msra.mxu0 %v3708
    %5066 = vmatpush.bf16.msra.mxu0 %v3704
    %5067 = vmatmul.bf16.gmra.mxu0 %v899
    %v5068 = vpop.f32.mrf.mxu0
    %v5069 = vadd.f32 %v5055, %v5068
    %v5070 = vpop.f32.mrf.mxu0
    %v5071 = vadd.f32 %v5057, %v5070
    %5072 = vdwg.mxu0
    %5073 = vmatpush.bf16.msra.mxu0 %v3764
    %5074 = vmatpush.bf16.msra.mxu0 %v3760
    %5075 = vmatpush.bf16.msra.mxu0 %v3756
    %5076 = vmatpush.bf16.msra.mxu0 %v3752
    %5077 = vmatpush.bf16.msra.mxu0 %v3748
    %5078 = vmatpush.bf16.msra.mxu0 %v3744
    %5079 = vmatpush.bf16.msra.mxu0 %v3740
    %5080 = vmatpush.bf16.msra.mxu0 %v3736
    %5081 = vmatmul.bf16.gmra.mxu0 %v900
    %v5082 = vpop.f32.mrf.mxu0
    %v5083 = vadd.f32 %v5069, %v5082
    %v5084 = vpop.f32.mrf.mxu0
    %v5085 = vadd.f32 %v5071, %v5084
    %5086 = vdwg.mxu0
    %5087 = vmatpush.bf16.msra.mxu0 %v3796
    %5088 = vmatpush.bf16.msra.mxu0 %v3792
    %5089 = vmatpush.bf16.msra.mxu0 %v3788
    %5090 = vmatpush.bf16.msra.mxu0 %v3784
    %5091 = vmatpush.bf16.msra.mxu0 %v3780
    %5092 = vmatpush.bf16.msra.mxu0 %v3776
    %5093 = vmatpush.bf16.msra.mxu0 %v3772
    %5094 = vmatpush.bf16.msra.mxu0 %v3768
    %5095 = vmatmul.bf16.gmra.mxu0 %v901
    %v5096 = vpop.f32.mrf.mxu0
    %v5097 = vadd.f32 %v5083, %v5096
    %v5098 = vpop.f32.mrf.mxu0
    %v5099 = vadd.f32 %v5085, %v5098
    %5100 = vdwg.mxu0
    %5101 = vmatpush.bf16.msra.mxu0 %v3828
    %5102 = vmatpush.bf16.msra.mxu0 %v3824
    %5103 = vmatpush.bf16.msra.mxu0 %v3820
    %5104 = vmatpush.bf16.msra.mxu0 %v3816
    %5105 = vmatpush.bf16.msra.mxu0 %v3812
    %5106 = vmatpush.bf16.msra.mxu0 %v3808
    %5107 = vmatpush.bf16.msra.mxu0 %v3804
    %5108 = vmatpush.bf16.msra.mxu0 %v3800
    %5109 = vmatmul.bf16.gmra.mxu0 %v902
    %v5110 = vpop.f32.mrf.mxu0
    %v5111 = vadd.f32 %v5097, %v5110
    %v5112 = vpop.f32.mrf.mxu0
    %v5113 = vadd.f32 %v5099, %v5112
    %5114 = vdwg.mxu0
    %5115 = vmatpush.bf16.msra.mxu0 %v3860
    %5116 = vmatpush.bf16.msra.mxu0 %v3856
    %5117 = vmatpush.bf16.msra.mxu0 %v3852
    %5118 = vmatpush.bf16.msra.mxu0 %v3848
    %5119 = vmatpush.bf16.msra.mxu0 %v3844
    %5120 = vmatpush.bf16.msra.mxu0 %v3840
    %5121 = vmatpush.bf16.msra.mxu0 %v3836
    %5122 = vmatpush.bf16.msra.mxu0 %v3832
    %5123 = vmatmul.bf16.gmra.mxu0 %v919
    %v5124 = vpop.f32.mrf.mxu0
    %v5125 = vadd.f32 %v5111, %v5124
    %v5126 = vpop.f32.mrf.mxu0
    %v5127 = vadd.f32 %v5113, %v5126
    %5128 = vdwg.mxu0
    %5129 = vmatpush.bf16.msra.mxu0 %v3892
    %5130 = vmatpush.bf16.msra.mxu0 %v3888
    %5131 = vmatpush.bf16.msra.mxu0 %v3884
    %5132 = vmatpush.bf16.msra.mxu0 %v3880
    %5133 = vmatpush.bf16.msra.mxu0 %v3876
    %5134 = vmatpush.bf16.msra.mxu0 %v3872
    %5135 = vmatpush.bf16.msra.mxu0 %v3868
    %5136 = vmatpush.bf16.msra.mxu0 %v3864
    %5137 = vmatmul.bf16.gmra.mxu0 %v920
    %v5138 = vpop.f32.mrf.mxu0
    %v5139 = vadd.f32 %v5125, %v5138
    %v5140 = vpop.f32.mrf.mxu0
    %v5141 = vadd.f32 %v5127, %v5140
    %5142 = vdwg.mxu0
    %5143 = vmatpush.bf16.msra.mxu0 %v3924
    %5144 = vmatpush.bf16.msra.mxu0 %v3920
    %5145 = vmatpush.bf16.msra.mxu0 %v3916
    %5146 = vmatpush.bf16.msra.mxu0 %v3912
    %5147 = vmatpush.bf16.msra.mxu0 %v3908
    %5148 = vmatpush.bf16.msra.mxu0 %v3904
    %5149 = vmatpush.bf16.msra.mxu0 %v3900
    %5150 = vmatpush.bf16.msra.mxu0 %v3896
    %5151 = vmatmul.bf16.gmra.mxu0 %v921
    %v5152 = vpop.f32.mrf.mxu0
    %v5153 = vadd.f32 %v5139, %v5152
    %v5154 = vpop.f32.mrf.mxu0
    %v5155 = vadd.f32 %v5141, %v5154
    %5156 = vdwg.mxu0
    %5157 = vmatpush.bf16.msra.mxu0 %v3956
    %5158 = vmatpush.bf16.msra.mxu0 %v3952
    %5159 = vmatpush.bf16.msra.mxu0 %v3948
    %5160 = vmatpush.bf16.msra.mxu0 %v3944
    %5161 = vmatpush.bf16.msra.mxu0 %v3940
    %5162 = vmatpush.bf16.msra.mxu0 %v3936
    %5163 = vmatpush.bf16.msra.mxu0 %v3932
    %5164 = vmatpush.bf16.msra.mxu0 %v3928
    %5165 = vmatmul.bf16.gmra.mxu0 %v922
    %v5166 = vpop.f32.mrf.mxu0
    %v5167 = vadd.f32 %v5153, %v5166
    %v5168 = vpop.f32.mrf.mxu0
    %v5169 = vadd.f32 %v5155, %v5168
    %5170 = vdwg.mxu0
    %5171 = vmatpush.bf16.msra.mxu0 %v3988
    %5172 = vmatpush.bf16.msra.mxu0 %v3984
    %5173 = vmatpush.bf16.msra.mxu0 %v3980
    %5174 = vmatpush.bf16.msra.mxu0 %v3976
    %5175 = vmatpush.bf16.msra.mxu0 %v3972
    %5176 = vmatpush.bf16.msra.mxu0 %v3968
    %5177 = vmatpush.bf16.msra.mxu0 %v3964
    %5178 = vmatpush.bf16.msra.mxu0 %v3960
    %5179 = vmatmul.bf16.gmra.mxu0 %v923
    %v5180 = vpop.f32.mrf.mxu0
    %v5181 = vadd.f32 %v5167, %v5180
    %v5182 = vpop.f32.mrf.mxu0
    %v5183 = vadd.f32 %v5169, %v5182
    %5184 = vdwg.mxu0
    %5185 = vmatpush.bf16.msra.mxu0 %v4020
    %5186 = vmatpush.bf16.msra.mxu0 %v4016
    %5187 = vmatpush.bf16.msra.mxu0 %v4012
    %5188 = vmatpush.bf16.msra.mxu0 %v4008
    %5189 = vmatpush.bf16.msra.mxu0 %v4004
    %5190 = vmatpush.bf16.msra.mxu0 %v4000
    %5191 = vmatpush.bf16.msra.mxu0 %v3996
    %5192 = vmatpush.bf16.msra.mxu0 %v3992
    %5193 = vmatmul.bf16.gmra.mxu0 %v924
    %v5194 = vpop.f32.mrf.mxu0
    %v5195 = vadd.f32 %v5181, %v5194
    %v5196 = vpop.f32.mrf.mxu0
    %v5197 = vadd.f32 %v5183, %v5196
    %5198 = vdwg.mxu0
    %5199 = vmatpush.bf16.msra.mxu0 %v4052
    %5200 = vmatpush.bf16.msra.mxu0 %v4048
    %5201 = vmatpush.bf16.msra.mxu0 %v4044
    %5202 = vmatpush.bf16.msra.mxu0 %v4040
    %5203 = vmatpush.bf16.msra.mxu0 %v4036
    %5204 = vmatpush.bf16.msra.mxu0 %v4032
    %5205 = vmatpush.bf16.msra.mxu0 %v4028
    %5206 = vmatpush.bf16.msra.mxu0 %v4024
    %5207 = vmatmul.bf16.gmra.mxu0 %v925
    %v5208 = vpop.f32.mrf.mxu0
    %v5209 = vadd.f32 %v5195, %v5208
    %v5210 = vpop.f32.mrf.mxu0
    %v5211 = vadd.f32 %v5197, %v5210
    %5212 = vdwg.mxu0
    %5213 = vmatpush.bf16.msra.mxu0 %v4084
    %5214 = vmatpush.bf16.msra.mxu0 %v4080
    %5215 = vmatpush.bf16.msra.mxu0 %v4076
    %5216 = vmatpush.bf16.msra.mxu0 %v4072
    %5217 = vmatpush.bf16.msra.mxu0 %v4068
    %5218 = vmatpush.bf16.msra.mxu0 %v4064
    %5219 = vmatpush.bf16.msra.mxu0 %v4060
    %5220 = vmatpush.bf16.msra.mxu0 %v4056
    %5221 = vmatmul.bf16.gmra.mxu0 %v926
    %v5222 = vpop.f32.mrf.mxu0
    %v5223 = vadd.f32 %v5209, %v5222
    %v5224 = vpop.f32.mrf.mxu0
    %v5225 = vadd.f32 %v5211, %v5224
    %5226 = vdwg.mxu0
    %5227 = vmatpush.bf16.msra.mxu0 0
    %5228 = vmatpush.bf16.msra.mxu0 0
    %5229 = vmatpush.bf16.msra.mxu0 0
    %5230 = vmatpush.bf16.msra.mxu0 0
    %5231 = vmatpush.bf16.msra.mxu0 %v4100
    %5232 = vmatpush.bf16.msra.mxu0 %v4096
    %5233 = vmatpush.bf16.msra.mxu0 %v4092
    %5234 = vmatpush.bf16.msra.mxu0 %v4088
    %5235 = vmatmul.bf16.gmra.mxu0 %v4889
    %v5236 = vpop.f32.mrf.mxu0
    %v5237 = vadd.f32 %v5223, %v5236
    %v5238 = vpop.f32.mrf.mxu0
    %v5239 = vadd.f32 %v5225, %v5238
    %5240 = vdwg.mxu0
    %5241 = vmatpush.bf16.msra.mxu0 %v3349
    %5242 = vmatpush.bf16.msra.mxu0 %v3345
    %5243 = vmatpush.bf16.msra.mxu0 %v3341
    %5244 = vmatpush.bf16.msra.mxu0 %v3337
    %5245 = vmatpush.bf16.msra.mxu0 %v3333
    %5246 = vmatpush.bf16.msra.mxu0 %v3329
    %5247 = vmatpush.bf16.msra.mxu0 %v3325
    %5248 = vmatpush.bf16.msra.mxu0 %v3321
    %5249 = vmatmul.bf16.gmra.mxu0 %v871
    %v5250 = vpop.f32.mrf.mxu0
    %v5251 = vadd.f32 %v841, %v5250
    %v5252 = vpop.f32.mrf.mxu0
    %v5253 = vadd.f32 %v841, %v5252
    %5254 = vdwg.mxu0
    %5255 = vmatpush.bf16.msra.mxu0 %v3381
    %5256 = vmatpush.bf16.msra.mxu0 %v3377
    %5257 = vmatpush.bf16.msra.mxu0 %v3373
    %5258 = vmatpush.bf16.msra.mxu0 %v3369
    %5259 = vmatpush.bf16.msra.mxu0 %v3365
    %5260 = vmatpush.bf16.msra.mxu0 %v3361
    %5261 = vmatpush.bf16.msra.mxu0 %v3357
    %5262 = vmatpush.bf16.msra.mxu0 %v3353
    %5263 = vmatmul.bf16.gmra.mxu0 %v872
    %v5264 = vpop.f32.mrf.mxu0
    %v5265 = vadd.f32 %v5251, %v5264
    %v5266 = vpop.f32.mrf.mxu0
    %v5267 = vadd.f32 %v5253, %v5266
    %5268 = vdwg.mxu0
    %5269 = vmatpush.bf16.msra.mxu0 %v3413
    %5270 = vmatpush.bf16.msra.mxu0 %v3409
    %5271 = vmatpush.bf16.msra.mxu0 %v3405
    %5272 = vmatpush.bf16.msra.mxu0 %v3401
    %5273 = vmatpush.bf16.msra.mxu0 %v3397
    %5274 = vmatpush.bf16.msra.mxu0 %v3393
    %5275 = vmatpush.bf16.msra.mxu0 %v3389
    %5276 = vmatpush.bf16.msra.mxu0 %v3385
    %5277 = vmatmul.bf16.gmra.mxu0 %v873
    %v5278 = vpop.f32.mrf.mxu0
    %v5279 = vadd.f32 %v5265, %v5278
    %v5280 = vpop.f32.mrf.mxu0
    %v5281 = vadd.f32 %v5267, %v5280
    %5282 = vdwg.mxu0
    %5283 = vmatpush.bf16.msra.mxu0 %v3445
    %5284 = vmatpush.bf16.msra.mxu0 %v3441
    %5285 = vmatpush.bf16.msra.mxu0 %v3437
    %5286 = vmatpush.bf16.msra.mxu0 %v3433
    %5287 = vmatpush.bf16.msra.mxu0 %v3429
    %5288 = vmatpush.bf16.msra.mxu0 %v3425
    %5289 = vmatpush.bf16.msra.mxu0 %v3421
    %5290 = vmatpush.bf16.msra.mxu0 %v3417
    %5291 = vmatmul.bf16.gmra.mxu0 %v874
    %v5292 = vpop.f32.mrf.mxu0
    %v5293 = vadd.f32 %v5279, %v5292
    %v5294 = vpop.f32.mrf.mxu0
    %v5295 = vadd.f32 %v5281, %v5294
    %5296 = vdwg.mxu0
    %5297 = vmatpush.bf16.msra.mxu0 %v3477
    %5298 = vmatpush.bf16.msra.mxu0 %v3473
    %5299 = vmatpush.bf16.msra.mxu0 %v3469
    %5300 = vmatpush.bf16.msra.mxu0 %v3465
    %5301 = vmatpush.bf16.msra.mxu0 %v3461
    %5302 = vmatpush.bf16.msra.mxu0 %v3457
    %5303 = vmatpush.bf16.msra.mxu0 %v3453
    %5304 = vmatpush.bf16.msra.mxu0 %v3449
    %5305 = vmatmul.bf16.gmra.mxu0 %v875
    %v5306 = vpop.f32.mrf.mxu0
    %v5307 = vadd.f32 %v5293, %v5306
    %v5308 = vpop.f32.mrf.mxu0
    %v5309 = vadd.f32 %v5295, %v5308
    %5310 = vdwg.mxu0
    %5311 = vmatpush.bf16.msra.mxu0 %v3509
    %5312 = vmatpush.bf16.msra.mxu0 %v3505
    %5313 = vmatpush.bf16.msra.mxu0 %v3501
    %5314 = vmatpush.bf16.msra.mxu0 %v3497
    %5315 = vmatpush.bf16.msra.mxu0 %v3493
    %5316 = vmatpush.bf16.msra.mxu0 %v3489
    %5317 = vmatpush.bf16.msra.mxu0 %v3485
    %5318 = vmatpush.bf16.msra.mxu0 %v3481
    %5319 = vmatmul.bf16.gmra.mxu0 %v876
    %v5320 = vpop.f32.mrf.mxu0
    %v5321 = vadd.f32 %v5307, %v5320
    %v5322 = vpop.f32.mrf.mxu0
    %v5323 = vadd.f32 %v5309, %v5322
    %5324 = vdwg.mxu0
    %5325 = vmatpush.bf16.msra.mxu0 %v3541
    %5326 = vmatpush.bf16.msra.mxu0 %v3537
    %5327 = vmatpush.bf16.msra.mxu0 %v3533
    %5328 = vmatpush.bf16.msra.mxu0 %v3529
    %5329 = vmatpush.bf16.msra.mxu0 %v3525
    %5330 = vmatpush.bf16.msra.mxu0 %v3521
    %5331 = vmatpush.bf16.msra.mxu0 %v3517
    %5332 = vmatpush.bf16.msra.mxu0 %v3513
    %5333 = vmatmul.bf16.gmra.mxu0 %v877
    %v5334 = vpop.f32.mrf.mxu0
    %v5335 = vadd.f32 %v5321, %v5334
    %v5336 = vpop.f32.mrf.mxu0
    %v5337 = vadd.f32 %v5323, %v5336
    %5338 = vdwg.mxu0
    %5339 = vmatpush.bf16.msra.mxu0 %v3573
    %5340 = vmatpush.bf16.msra.mxu0 %v3569
    %5341 = vmatpush.bf16.msra.mxu0 %v3565
    %5342 = vmatpush.bf16.msra.mxu0 %v3561
    %5343 = vmatpush.bf16.msra.mxu0 %v3557
    %5344 = vmatpush.bf16.msra.mxu0 %v3553
    %5345 = vmatpush.bf16.msra.mxu0 %v3549
    %5346 = vmatpush.bf16.msra.mxu0 %v3545
    %5347 = vmatmul.bf16.gmra.mxu0 %v878
    %v5348 = vpop.f32.mrf.mxu0
    %v5349 = vadd.f32 %v5335, %v5348
    %v5350 = vpop.f32.mrf.mxu0
    %v5351 = vadd.f32 %v5337, %v5350
    %5352 = vdwg.mxu0
    %5353 = vmatpush.bf16.msra.mxu0 %v3605
    %5354 = vmatpush.bf16.msra.mxu0 %v3601
    %5355 = vmatpush.bf16.msra.mxu0 %v3597
    %5356 = vmatpush.bf16.msra.mxu0 %v3593
    %5357 = vmatpush.bf16.msra.mxu0 %v3589
    %5358 = vmatpush.bf16.msra.mxu0 %v3585
    %5359 = vmatpush.bf16.msra.mxu0 %v3581
    %5360 = vmatpush.bf16.msra.mxu0 %v3577
    %5361 = vmatmul.bf16.gmra.mxu0 %v895
    %v5362 = vpop.f32.mrf.mxu0
    %v5363 = vadd.f32 %v5349, %v5362
    %v5364 = vpop.f32.mrf.mxu0
    %v5365 = vadd.f32 %v5351, %v5364
    %5366 = vdwg.mxu0
    %5367 = vmatpush.bf16.msra.mxu0 %v3637
    %5368 = vmatpush.bf16.msra.mxu0 %v3633
    %5369 = vmatpush.bf16.msra.mxu0 %v3629
    %5370 = vmatpush.bf16.msra.mxu0 %v3625
    %5371 = vmatpush.bf16.msra.mxu0 %v3621
    %5372 = vmatpush.bf16.msra.mxu0 %v3617
    %5373 = vmatpush.bf16.msra.mxu0 %v3613
    %5374 = vmatpush.bf16.msra.mxu0 %v3609
    %5375 = vmatmul.bf16.gmra.mxu0 %v896
    %v5376 = vpop.f32.mrf.mxu0
    %v5377 = vadd.f32 %v5363, %v5376
    %v5378 = vpop.f32.mrf.mxu0
    %v5379 = vadd.f32 %v5365, %v5378
    %5380 = vdwg.mxu0
    %5381 = vmatpush.bf16.msra.mxu0 %v3669
    %5382 = vmatpush.bf16.msra.mxu0 %v3665
    %5383 = vmatpush.bf16.msra.mxu0 %v3661
    %5384 = vmatpush.bf16.msra.mxu0 %v3657
    %5385 = vmatpush.bf16.msra.mxu0 %v3653
    %5386 = vmatpush.bf16.msra.mxu0 %v3649
    %5387 = vmatpush.bf16.msra.mxu0 %v3645
    %5388 = vmatpush.bf16.msra.mxu0 %v3641
    %5389 = vmatmul.bf16.gmra.mxu0 %v897
    %v5390 = vpop.f32.mrf.mxu0
    %v5391 = vadd.f32 %v5377, %v5390
    %v5392 = vpop.f32.mrf.mxu0
    %v5393 = vadd.f32 %v5379, %v5392
    %5394 = vdwg.mxu0
    %5395 = vmatpush.bf16.msra.mxu0 %v3701
    %5396 = vmatpush.bf16.msra.mxu0 %v3697
    %5397 = vmatpush.bf16.msra.mxu0 %v3693
    %5398 = vmatpush.bf16.msra.mxu0 %v3689
    %5399 = vmatpush.bf16.msra.mxu0 %v3685
    %5400 = vmatpush.bf16.msra.mxu0 %v3681
    %5401 = vmatpush.bf16.msra.mxu0 %v3677
    %5402 = vmatpush.bf16.msra.mxu0 %v3673
    %5403 = vmatmul.bf16.gmra.mxu0 %v898
    %v5404 = vpop.f32.mrf.mxu0
    %v5405 = vadd.f32 %v5391, %v5404
    %v5406 = vpop.f32.mrf.mxu0
    %v5407 = vadd.f32 %v5393, %v5406
    %5408 = vdwg.mxu0
    %5409 = vmatpush.bf16.msra.mxu0 %v3733
    %5410 = vmatpush.bf16.msra.mxu0 %v3729
    %5411 = vmatpush.bf16.msra.mxu0 %v3725
    %5412 = vmatpush.bf16.msra.mxu0 %v3721
    %5413 = vmatpush.bf16.msra.mxu0 %v3717
    %5414 = vmatpush.bf16.msra.mxu0 %v3713
    %5415 = vmatpush.bf16.msra.mxu0 %v3709
    %5416 = vmatpush.bf16.msra.mxu0 %v3705
    %5417 = vmatmul.bf16.gmra.mxu0 %v899
    %v5418 = vpop.f32.mrf.mxu0
    %v5419 = vadd.f32 %v5405, %v5418
    %v5420 = vpop.f32.mrf.mxu0
    %v5421 = vadd.f32 %v5407, %v5420
    %5422 = vdwg.mxu0
    %5423 = vmatpush.bf16.msra.mxu0 %v3765
    %5424 = vmatpush.bf16.msra.mxu0 %v3761
    %5425 = vmatpush.bf16.msra.mxu0 %v3757
    %5426 = vmatpush.bf16.msra.mxu0 %v3753
    %5427 = vmatpush.bf16.msra.mxu0 %v3749
    %5428 = vmatpush.bf16.msra.mxu0 %v3745
    %5429 = vmatpush.bf16.msra.mxu0 %v3741
    %5430 = vmatpush.bf16.msra.mxu0 %v3737
    %5431 = vmatmul.bf16.gmra.mxu0 %v900
    %v5432 = vpop.f32.mrf.mxu0
    %v5433 = vadd.f32 %v5419, %v5432
    %v5434 = vpop.f32.mrf.mxu0
    %v5435 = vadd.f32 %v5421, %v5434
    %5436 = vdwg.mxu0
    %5437 = vmatpush.bf16.msra.mxu0 %v3797
    %5438 = vmatpush.bf16.msra.mxu0 %v3793
    %5439 = vmatpush.bf16.msra.mxu0 %v3789
    %5440 = vmatpush.bf16.msra.mxu0 %v3785
    %5441 = vmatpush.bf16.msra.mxu0 %v3781
    %5442 = vmatpush.bf16.msra.mxu0 %v3777
    %5443 = vmatpush.bf16.msra.mxu0 %v3773
    %5444 = vmatpush.bf16.msra.mxu0 %v3769
    %5445 = vmatmul.bf16.gmra.mxu0 %v901
    %v5446 = vpop.f32.mrf.mxu0
    %v5447 = vadd.f32 %v5433, %v5446
    %v5448 = vpop.f32.mrf.mxu0
    %v5449 = vadd.f32 %v5435, %v5448
    %5450 = vdwg.mxu0
    %5451 = vmatpush.bf16.msra.mxu0 %v3829
    %5452 = vmatpush.bf16.msra.mxu0 %v3825
    %5453 = vmatpush.bf16.msra.mxu0 %v3821
    %5454 = vmatpush.bf16.msra.mxu0 %v3817
    %5455 = vmatpush.bf16.msra.mxu0 %v3813
    %5456 = vmatpush.bf16.msra.mxu0 %v3809
    %5457 = vmatpush.bf16.msra.mxu0 %v3805
    %5458 = vmatpush.bf16.msra.mxu0 %v3801
    %5459 = vmatmul.bf16.gmra.mxu0 %v902
    %v5460 = vpop.f32.mrf.mxu0
    %v5461 = vadd.f32 %v5447, %v5460
    %v5462 = vpop.f32.mrf.mxu0
    %v5463 = vadd.f32 %v5449, %v5462
    %5464 = vdwg.mxu0
    %5465 = vmatpush.bf16.msra.mxu0 %v3861
    %5466 = vmatpush.bf16.msra.mxu0 %v3857
    %5467 = vmatpush.bf16.msra.mxu0 %v3853
    %5468 = vmatpush.bf16.msra.mxu0 %v3849
    %5469 = vmatpush.bf16.msra.mxu0 %v3845
    %5470 = vmatpush.bf16.msra.mxu0 %v3841
    %5471 = vmatpush.bf16.msra.mxu0 %v3837
    %5472 = vmatpush.bf16.msra.mxu0 %v3833
    %5473 = vmatmul.bf16.gmra.mxu0 %v919
    %v5474 = vpop.f32.mrf.mxu0
    %v5475 = vadd.f32 %v5461, %v5474
    %v5476 = vpop.f32.mrf.mxu0
    %v5477 = vadd.f32 %v5463, %v5476
    %5478 = vdwg.mxu0
    %5479 = vmatpush.bf16.msra.mxu0 %v3893
    %5480 = vmatpush.bf16.msra.mxu0 %v3889
    %5481 = vmatpush.bf16.msra.mxu0 %v3885
    %5482 = vmatpush.bf16.msra.mxu0 %v3881
    %5483 = vmatpush.bf16.msra.mxu0 %v3877
    %5484 = vmatpush.bf16.msra.mxu0 %v3873
    %5485 = vmatpush.bf16.msra.mxu0 %v3869
    %5486 = vmatpush.bf16.msra.mxu0 %v3865
    %5487 = vmatmul.bf16.gmra.mxu0 %v920
    %v5488 = vpop.f32.mrf.mxu0
    %v5489 = vadd.f32 %v5475, %v5488
    %v5490 = vpop.f32.mrf.mxu0
    %v5491 = vadd.f32 %v5477, %v5490
    %5492 = vdwg.mxu0
    %5493 = vmatpush.bf16.msra.mxu0 %v3925
    %5494 = vmatpush.bf16.msra.mxu0 %v3921
    %5495 = vmatpush.bf16.msra.mxu0 %v3917
    %5496 = vmatpush.bf16.msra.mxu0 %v3913
    %5497 = vmatpush.bf16.msra.mxu0 %v3909
    %5498 = vmatpush.bf16.msra.mxu0 %v3905
    %5499 = vmatpush.bf16.msra.mxu0 %v3901
    %5500 = vmatpush.bf16.msra.mxu0 %v3897
    %5501 = vmatmul.bf16.gmra.mxu0 %v921
    %v5502 = vpop.f32.mrf.mxu0
    %v5503 = vadd.f32 %v5489, %v5502
    %v5504 = vpop.f32.mrf.mxu0
    %v5505 = vadd.f32 %v5491, %v5504
    %5506 = vdwg.mxu0
    %5507 = vmatpush.bf16.msra.mxu0 %v3957
    %5508 = vmatpush.bf16.msra.mxu0 %v3953
    %5509 = vmatpush.bf16.msra.mxu0 %v3949
    %5510 = vmatpush.bf16.msra.mxu0 %v3945
    %5511 = vmatpush.bf16.msra.mxu0 %v3941
    %5512 = vmatpush.bf16.msra.mxu0 %v3937
    %5513 = vmatpush.bf16.msra.mxu0 %v3933
    %5514 = vmatpush.bf16.msra.mxu0 %v3929
    %5515 = vmatmul.bf16.gmra.mxu0 %v922
    %v5516 = vpop.f32.mrf.mxu0
    %v5517 = vadd.f32 %v5503, %v5516
    %v5518 = vpop.f32.mrf.mxu0
    %v5519 = vadd.f32 %v5505, %v5518
    %5520 = vdwg.mxu0
    %5521 = vmatpush.bf16.msra.mxu0 %v3989
    %5522 = vmatpush.bf16.msra.mxu0 %v3985
    %5523 = vmatpush.bf16.msra.mxu0 %v3981
    %5524 = vmatpush.bf16.msra.mxu0 %v3977
    %5525 = vmatpush.bf16.msra.mxu0 %v3973
    %5526 = vmatpush.bf16.msra.mxu0 %v3969
    %5527 = vmatpush.bf16.msra.mxu0 %v3965
    %5528 = vmatpush.bf16.msra.mxu0 %v3961
    %5529 = vmatmul.bf16.gmra.mxu0 %v923
    %v5530 = vpop.f32.mrf.mxu0
    %v5531 = vadd.f32 %v5517, %v5530
    %v5532 = vpop.f32.mrf.mxu0
    %v5533 = vadd.f32 %v5519, %v5532
    %5534 = vdwg.mxu0
    %5535 = vmatpush.bf16.msra.mxu0 %v4021
    %5536 = vmatpush.bf16.msra.mxu0 %v4017
    %5537 = vmatpush.bf16.msra.mxu0 %v4013
    %5538 = vmatpush.bf16.msra.mxu0 %v4009
    %5539 = vmatpush.bf16.msra.mxu0 %v4005
    %5540 = vmatpush.bf16.msra.mxu0 %v4001
    %5541 = vmatpush.bf16.msra.mxu0 %v3997
    %5542 = vmatpush.bf16.msra.mxu0 %v3993
    %5543 = vmatmul.bf16.gmra.mxu0 %v924
    %v5544 = vpop.f32.mrf.mxu0
    %v5545 = vadd.f32 %v5531, %v5544
    %v5546 = vpop.f32.mrf.mxu0
    %v5547 = vadd.f32 %v5533, %v5546
    %5548 = vdwg.mxu0
    %5549 = vmatpush.bf16.msra.mxu0 %v4053
    %5550 = vmatpush.bf16.msra.mxu0 %v4049
    %5551 = vmatpush.bf16.msra.mxu0 %v4045
    %5552 = vmatpush.bf16.msra.mxu0 %v4041
    %5553 = vmatpush.bf16.msra.mxu0 %v4037
    %5554 = vmatpush.bf16.msra.mxu0 %v4033
    %5555 = vmatpush.bf16.msra.mxu0 %v4029
    %5556 = vmatpush.bf16.msra.mxu0 %v4025
    %5557 = vmatmul.bf16.gmra.mxu0 %v925
    %v5558 = vpop.f32.mrf.mxu0
    %v5559 = vadd.f32 %v5545, %v5558
    %v5560 = vpop.f32.mrf.mxu0
    %v5561 = vadd.f32 %v5547, %v5560
    %5562 = vdwg.mxu0
    %5563 = vmatpush.bf16.msra.mxu0 %v4085
    %5564 = vmatpush.bf16.msra.mxu0 %v4081
    %5565 = vmatpush.bf16.msra.mxu0 %v4077
    %5566 = vmatpush.bf16.msra.mxu0 %v4073
    %5567 = vmatpush.bf16.msra.mxu0 %v4069
    %5568 = vmatpush.bf16.msra.mxu0 %v4065
    %5569 = vmatpush.bf16.msra.mxu0 %v4061
    %5570 = vmatpush.bf16.msra.mxu0 %v4057
    %5571 = vmatmul.bf16.gmra.mxu0 %v926
    %v5572 = vpop.f32.mrf.mxu0
    %v5573 = vadd.f32 %v5559, %v5572
    %v5574 = vpop.f32.mrf.mxu0
    %v5575 = vadd.f32 %v5561, %v5574
    %5576 = vdwg.mxu0
    %5577 = vmatpush.bf16.msra.mxu0 0
    %5578 = vmatpush.bf16.msra.mxu0 0
    %5579 = vmatpush.bf16.msra.mxu0 0
    %5580 = vmatpush.bf16.msra.mxu0 0
    %5581 = vmatpush.bf16.msra.mxu0 %v4101
    %5582 = vmatpush.bf16.msra.mxu0 %v4097
    %5583 = vmatpush.bf16.msra.mxu0 %v4093
    %5584 = vmatpush.bf16.msra.mxu0 %v4089
    %5585 = vmatmul.bf16.gmra.mxu0 %v4889
    %v5586 = vpop.f32.mrf.mxu0
    %v5587 = vadd.f32 %v5573, %v5586
    %v5588 = vpop.f32.mrf.mxu0
    %v5589 = vadd.f32 %v5575, %v5588
    %5590 = vdwg.mxu0
    %5591 = vmatpush.bf16.msra.mxu0 %v3350
    %5592 = vmatpush.bf16.msra.mxu0 %v3346
    %5593 = vmatpush.bf16.msra.mxu0 %v3342
    %5594 = vmatpush.bf16.msra.mxu0 %v3338
    %5595 = vmatpush.bf16.msra.mxu0 %v3334
    %5596 = vmatpush.bf16.msra.mxu0 %v3330
    %5597 = vmatpush.bf16.msra.mxu0 %v3326
    %5598 = vmatpush.bf16.msra.mxu0 %v3322
    %5599 = vmatmul.bf16.gmra.mxu0 %v871
    %v5600 = vpop.f32.mrf.mxu0
    %v5601 = vadd.f32 %v842, %v5600
    %v5602 = vpop.f32.mrf.mxu0
    %v5603 = vadd.f32 %v842, %v5602
    %5604 = vdwg.mxu0
    %5605 = vmatpush.bf16.msra.mxu0 %v3382
    %5606 = vmatpush.bf16.msra.mxu0 %v3378
    %5607 = vmatpush.bf16.msra.mxu0 %v3374
    %5608 = vmatpush.bf16.msra.mxu0 %v3370
    %5609 = vmatpush.bf16.msra.mxu0 %v3366
    %5610 = vmatpush.bf16.msra.mxu0 %v3362
    %5611 = vmatpush.bf16.msra.mxu0 %v3358
    %5612 = vmatpush.bf16.msra.mxu0 %v3354
    %5613 = vmatmul.bf16.gmra.mxu0 %v872
    %v5614 = vpop.f32.mrf.mxu0
    %v5615 = vadd.f32 %v5601, %v5614
    %v5616 = vpop.f32.mrf.mxu0
    %v5617 = vadd.f32 %v5603, %v5616
    %5618 = vdwg.mxu0
    %5619 = vmatpush.bf16.msra.mxu0 %v3414
    %5620 = vmatpush.bf16.msra.mxu0 %v3410
    %5621 = vmatpush.bf16.msra.mxu0 %v3406
    %5622 = vmatpush.bf16.msra.mxu0 %v3402
    %5623 = vmatpush.bf16.msra.mxu0 %v3398
    %5624 = vmatpush.bf16.msra.mxu0 %v3394
    %5625 = vmatpush.bf16.msra.mxu0 %v3390
    %5626 = vmatpush.bf16.msra.mxu0 %v3386
    %5627 = vmatmul.bf16.gmra.mxu0 %v873
    %v5628 = vpop.f32.mrf.mxu0
    %v5629 = vadd.f32 %v5615, %v5628
    %v5630 = vpop.f32.mrf.mxu0
    %v5631 = vadd.f32 %v5617, %v5630
    %5632 = vdwg.mxu0
    %5633 = vmatpush.bf16.msra.mxu0 %v3446
    %5634 = vmatpush.bf16.msra.mxu0 %v3442
    %5635 = vmatpush.bf16.msra.mxu0 %v3438
    %5636 = vmatpush.bf16.msra.mxu0 %v3434
    %5637 = vmatpush.bf16.msra.mxu0 %v3430
    %5638 = vmatpush.bf16.msra.mxu0 %v3426
    %5639 = vmatpush.bf16.msra.mxu0 %v3422
    %5640 = vmatpush.bf16.msra.mxu0 %v3418
    %5641 = vmatmul.bf16.gmra.mxu0 %v874
    %v5642 = vpop.f32.mrf.mxu0
    %v5643 = vadd.f32 %v5629, %v5642
    %v5644 = vpop.f32.mrf.mxu0
    %v5645 = vadd.f32 %v5631, %v5644
    %5646 = vdwg.mxu0
    %5647 = vmatpush.bf16.msra.mxu0 %v3478
    %5648 = vmatpush.bf16.msra.mxu0 %v3474
    %5649 = vmatpush.bf16.msra.mxu0 %v3470
    %5650 = vmatpush.bf16.msra.mxu0 %v3466
    %5651 = vmatpush.bf16.msra.mxu0 %v3462
    %5652 = vmatpush.bf16.msra.mxu0 %v3458
    %5653 = vmatpush.bf16.msra.mxu0 %v3454
    %5654 = vmatpush.bf16.msra.mxu0 %v3450
    %5655 = vmatmul.bf16.gmra.mxu0 %v875
    %v5656 = vpop.f32.mrf.mxu0
    %v5657 = vadd.f32 %v5643, %v5656
    %v5658 = vpop.f32.mrf.mxu0
    %v5659 = vadd.f32 %v5645, %v5658
    %5660 = vdwg.mxu0
    %5661 = vmatpush.bf16.msra.mxu0 %v3510
    %5662 = vmatpush.bf16.msra.mxu0 %v3506
    %5663 = vmatpush.bf16.msra.mxu0 %v3502
    %5664 = vmatpush.bf16.msra.mxu0 %v3498
    %5665 = vmatpush.bf16.msra.mxu0 %v3494
    %5666 = vmatpush.bf16.msra.mxu0 %v3490
    %5667 = vmatpush.bf16.msra.mxu0 %v3486
    %5668 = vmatpush.bf16.msra.mxu0 %v3482
    %5669 = vmatmul.bf16.gmra.mxu0 %v876
    %v5670 = vpop.f32.mrf.mxu0
    %v5671 = vadd.f32 %v5657, %v5670
    %v5672 = vpop.f32.mrf.mxu0
    %v5673 = vadd.f32 %v5659, %v5672
    %5674 = vdwg.mxu0
    %5675 = vmatpush.bf16.msra.mxu0 %v3542
    %5676 = vmatpush.bf16.msra.mxu0 %v3538
    %5677 = vmatpush.bf16.msra.mxu0 %v3534
    %5678 = vmatpush.bf16.msra.mxu0 %v3530
    %5679 = vmatpush.bf16.msra.mxu0 %v3526
    %5680 = vmatpush.bf16.msra.mxu0 %v3522
    %5681 = vmatpush.bf16.msra.mxu0 %v3518
    %5682 = vmatpush.bf16.msra.mxu0 %v3514
    %5683 = vmatmul.bf16.gmra.mxu0 %v877
    %v5684 = vpop.f32.mrf.mxu0
    %v5685 = vadd.f32 %v5671, %v5684
    %v5686 = vpop.f32.mrf.mxu0
    %v5687 = vadd.f32 %v5673, %v5686
    %5688 = vdwg.mxu0
    %5689 = vmatpush.bf16.msra.mxu0 %v3574
    %5690 = vmatpush.bf16.msra.mxu0 %v3570
    %5691 = vmatpush.bf16.msra.mxu0 %v3566
    %5692 = vmatpush.bf16.msra.mxu0 %v3562
    %5693 = vmatpush.bf16.msra.mxu0 %v3558
    %5694 = vmatpush.bf16.msra.mxu0 %v3554
    %5695 = vmatpush.bf16.msra.mxu0 %v3550
    %5696 = vmatpush.bf16.msra.mxu0 %v3546
    %5697 = vmatmul.bf16.gmra.mxu0 %v878
    %v5698 = vpop.f32.mrf.mxu0
    %v5699 = vadd.f32 %v5685, %v5698
    %v5700 = vpop.f32.mrf.mxu0
    %v5701 = vadd.f32 %v5687, %v5700
    %5702 = vdwg.mxu0
    %5703 = vmatpush.bf16.msra.mxu0 %v3606
    %5704 = vmatpush.bf16.msra.mxu0 %v3602
    %5705 = vmatpush.bf16.msra.mxu0 %v3598
    %5706 = vmatpush.bf16.msra.mxu0 %v3594
    %5707 = vmatpush.bf16.msra.mxu0 %v3590
    %5708 = vmatpush.bf16.msra.mxu0 %v3586
    %5709 = vmatpush.bf16.msra.mxu0 %v3582
    %5710 = vmatpush.bf16.msra.mxu0 %v3578
    %5711 = vmatmul.bf16.gmra.mxu0 %v895
    %v5712 = vpop.f32.mrf.mxu0
    %v5713 = vadd.f32 %v5699, %v5712
    %v5714 = vpop.f32.mrf.mxu0
    %v5715 = vadd.f32 %v5701, %v5714
    %5716 = vdwg.mxu0
    %5717 = vmatpush.bf16.msra.mxu0 %v3638
    %5718 = vmatpush.bf16.msra.mxu0 %v3634
    %5719 = vmatpush.bf16.msra.mxu0 %v3630
    %5720 = vmatpush.bf16.msra.mxu0 %v3626
    %5721 = vmatpush.bf16.msra.mxu0 %v3622
    %5722 = vmatpush.bf16.msra.mxu0 %v3618
    %5723 = vmatpush.bf16.msra.mxu0 %v3614
    %5724 = vmatpush.bf16.msra.mxu0 %v3610
    %5725 = vmatmul.bf16.gmra.mxu0 %v896
    %v5726 = vpop.f32.mrf.mxu0
    %v5727 = vadd.f32 %v5713, %v5726
    %v5728 = vpop.f32.mrf.mxu0
    %v5729 = vadd.f32 %v5715, %v5728
    %5730 = vdwg.mxu0
    %5731 = vmatpush.bf16.msra.mxu0 %v3670
    %5732 = vmatpush.bf16.msra.mxu0 %v3666
    %5733 = vmatpush.bf16.msra.mxu0 %v3662
    %5734 = vmatpush.bf16.msra.mxu0 %v3658
    %5735 = vmatpush.bf16.msra.mxu0 %v3654
    %5736 = vmatpush.bf16.msra.mxu0 %v3650
    %5737 = vmatpush.bf16.msra.mxu0 %v3646
    %5738 = vmatpush.bf16.msra.mxu0 %v3642
    %5739 = vmatmul.bf16.gmra.mxu0 %v897
    %v5740 = vpop.f32.mrf.mxu0
    %v5741 = vadd.f32 %v5727, %v5740
    %v5742 = vpop.f32.mrf.mxu0
    %v5743 = vadd.f32 %v5729, %v5742
    %5744 = vdwg.mxu0
    %5745 = vmatpush.bf16.msra.mxu0 %v3702
    %5746 = vmatpush.bf16.msra.mxu0 %v3698
    %5747 = vmatpush.bf16.msra.mxu0 %v3694
    %5748 = vmatpush.bf16.msra.mxu0 %v3690
    %5749 = vmatpush.bf16.msra.mxu0 %v3686
    %5750 = vmatpush.bf16.msra.mxu0 %v3682
    %5751 = vmatpush.bf16.msra.mxu0 %v3678
    %5752 = vmatpush.bf16.msra.mxu0 %v3674
    %5753 = vmatmul.bf16.gmra.mxu0 %v898
    %v5754 = vpop.f32.mrf.mxu0
    %v5755 = vadd.f32 %v5741, %v5754
    %v5756 = vpop.f32.mrf.mxu0
    %v5757 = vadd.f32 %v5743, %v5756
    %5758 = vdwg.mxu0
    %5759 = vmatpush.bf16.msra.mxu0 %v3734
    %5760 = vmatpush.bf16.msra.mxu0 %v3730
    %5761 = vmatpush.bf16.msra.mxu0 %v3726
    %5762 = vmatpush.bf16.msra.mxu0 %v3722
    %5763 = vmatpush.bf16.msra.mxu0 %v3718
    %5764 = vmatpush.bf16.msra.mxu0 %v3714
    %5765 = vmatpush.bf16.msra.mxu0 %v3710
    %5766 = vmatpush.bf16.msra.mxu0 %v3706
    %5767 = vmatmul.bf16.gmra.mxu0 %v899
    %v5768 = vpop.f32.mrf.mxu0
    %v5769 = vadd.f32 %v5755, %v5768
    %v5770 = vpop.f32.mrf.mxu0
    %v5771 = vadd.f32 %v5757, %v5770
    %5772 = vdwg.mxu0
    %5773 = vmatpush.bf16.msra.mxu0 %v3766
    %5774 = vmatpush.bf16.msra.mxu0 %v3762
    %5775 = vmatpush.bf16.msra.mxu0 %v3758
    %5776 = vmatpush.bf16.msra.mxu0 %v3754
    %5777 = vmatpush.bf16.msra.mxu0 %v3750
    %5778 = vmatpush.bf16.msra.mxu0 %v3746
    %5779 = vmatpush.bf16.msra.mxu0 %v3742
    %5780 = vmatpush.bf16.msra.mxu0 %v3738
    %5781 = vmatmul.bf16.gmra.mxu0 %v900
    %v5782 = vpop.f32.mrf.mxu0
    %v5783 = vadd.f32 %v5769, %v5782
    %v5784 = vpop.f32.mrf.mxu0
    %v5785 = vadd.f32 %v5771, %v5784
    %5786 = vdwg.mxu0
    %5787 = vmatpush.bf16.msra.mxu0 %v3798
    %5788 = vmatpush.bf16.msra.mxu0 %v3794
    %5789 = vmatpush.bf16.msra.mxu0 %v3790
    %5790 = vmatpush.bf16.msra.mxu0 %v3786
    %5791 = vmatpush.bf16.msra.mxu0 %v3782
    %5792 = vmatpush.bf16.msra.mxu0 %v3778
    %5793 = vmatpush.bf16.msra.mxu0 %v3774
    %5794 = vmatpush.bf16.msra.mxu0 %v3770
    %5795 = vmatmul.bf16.gmra.mxu0 %v901
    %v5796 = vpop.f32.mrf.mxu0
    %v5797 = vadd.f32 %v5783, %v5796
    %v5798 = vpop.f32.mrf.mxu0
    %v5799 = vadd.f32 %v5785, %v5798
    %5800 = vdwg.mxu0
    %5801 = vmatpush.bf16.msra.mxu0 %v3830
    %5802 = vmatpush.bf16.msra.mxu0 %v3826
    %5803 = vmatpush.bf16.msra.mxu0 %v3822
    %5804 = vmatpush.bf16.msra.mxu0 %v3818
    %5805 = vmatpush.bf16.msra.mxu0 %v3814
    %5806 = vmatpush.bf16.msra.mxu0 %v3810
    %5807 = vmatpush.bf16.msra.mxu0 %v3806
    %5808 = vmatpush.bf16.msra.mxu0 %v3802
    %5809 = vmatmul.bf16.gmra.mxu0 %v902
    %v5810 = vpop.f32.mrf.mxu0
    %v5811 = vadd.f32 %v5797, %v5810
    %v5812 = vpop.f32.mrf.mxu0
    %v5813 = vadd.f32 %v5799, %v5812
    %5814 = vdwg.mxu0
    %5815 = vmatpush.bf16.msra.mxu0 %v3862
    %5816 = vmatpush.bf16.msra.mxu0 %v3858
    %5817 = vmatpush.bf16.msra.mxu0 %v3854
    %5818 = vmatpush.bf16.msra.mxu0 %v3850
    %5819 = vmatpush.bf16.msra.mxu0 %v3846
    %5820 = vmatpush.bf16.msra.mxu0 %v3842
    %5821 = vmatpush.bf16.msra.mxu0 %v3838
    %5822 = vmatpush.bf16.msra.mxu0 %v3834
    %5823 = vmatmul.bf16.gmra.mxu0 %v919
    %v5824 = vpop.f32.mrf.mxu0
    %v5825 = vadd.f32 %v5811, %v5824
    %v5826 = vpop.f32.mrf.mxu0
    %v5827 = vadd.f32 %v5813, %v5826
    %5828 = vdwg.mxu0
    %5829 = vmatpush.bf16.msra.mxu0 %v3894
    %5830 = vmatpush.bf16.msra.mxu0 %v3890
    %5831 = vmatpush.bf16.msra.mxu0 %v3886
    %5832 = vmatpush.bf16.msra.mxu0 %v3882
    %5833 = vmatpush.bf16.msra.mxu0 %v3878
    %5834 = vmatpush.bf16.msra.mxu0 %v3874
    %5835 = vmatpush.bf16.msra.mxu0 %v3870
    %5836 = vmatpush.bf16.msra.mxu0 %v3866
    %5837 = vmatmul.bf16.gmra.mxu0 %v920
    %v5838 = vpop.f32.mrf.mxu0
    %v5839 = vadd.f32 %v5825, %v5838
    %v5840 = vpop.f32.mrf.mxu0
    %v5841 = vadd.f32 %v5827, %v5840
    %5842 = vdwg.mxu0
    %5843 = vmatpush.bf16.msra.mxu0 %v3926
    %5844 = vmatpush.bf16.msra.mxu0 %v3922
    %5845 = vmatpush.bf16.msra.mxu0 %v3918
    %5846 = vmatpush.bf16.msra.mxu0 %v3914
    %5847 = vmatpush.bf16.msra.mxu0 %v3910
    %5848 = vmatpush.bf16.msra.mxu0 %v3906
    %5849 = vmatpush.bf16.msra.mxu0 %v3902
    %5850 = vmatpush.bf16.msra.mxu0 %v3898
    %5851 = vmatmul.bf16.gmra.mxu0 %v921
    %v5852 = vpop.f32.mrf.mxu0
    %v5853 = vadd.f32 %v5839, %v5852
    %v5854 = vpop.f32.mrf.mxu0
    %v5855 = vadd.f32 %v5841, %v5854
    %5856 = vdwg.mxu0
    %5857 = vmatpush.bf16.msra.mxu0 %v3958
    %5858 = vmatpush.bf16.msra.mxu0 %v3954
    %5859 = vmatpush.bf16.msra.mxu0 %v3950
    %5860 = vmatpush.bf16.msra.mxu0 %v3946
    %5861 = vmatpush.bf16.msra.mxu0 %v3942
    %5862 = vmatpush.bf16.msra.mxu0 %v3938
    %5863 = vmatpush.bf16.msra.mxu0 %v3934
    %5864 = vmatpush.bf16.msra.mxu0 %v3930
    %5865 = vmatmul.bf16.gmra.mxu0 %v922
    %v5866 = vpop.f32.mrf.mxu0
    %v5867 = vadd.f32 %v5853, %v5866
    %v5868 = vpop.f32.mrf.mxu0
    %v5869 = vadd.f32 %v5855, %v5868
    %5870 = vdwg.mxu0
    %5871 = vmatpush.bf16.msra.mxu0 %v3990
    %5872 = vmatpush.bf16.msra.mxu0 %v3986
    %5873 = vmatpush.bf16.msra.mxu0 %v3982
    %5874 = vmatpush.bf16.msra.mxu0 %v3978
    %5875 = vmatpush.bf16.msra.mxu0 %v3974
    %5876 = vmatpush.bf16.msra.mxu0 %v3970
    %5877 = vmatpush.bf16.msra.mxu0 %v3966
    %5878 = vmatpush.bf16.msra.mxu0 %v3962
    %5879 = vmatmul.bf16.gmra.mxu0 %v923
    %v5880 = vpop.f32.mrf.mxu0
    %v5881 = vadd.f32 %v5867, %v5880
    %v5882 = vpop.f32.mrf.mxu0
    %v5883 = vadd.f32 %v5869, %v5882
    %5884 = vdwg.mxu0
    %5885 = vmatpush.bf16.msra.mxu0 %v4022
    %5886 = vmatpush.bf16.msra.mxu0 %v4018
    %5887 = vmatpush.bf16.msra.mxu0 %v4014
    %5888 = vmatpush.bf16.msra.mxu0 %v4010
    %5889 = vmatpush.bf16.msra.mxu0 %v4006
    %5890 = vmatpush.bf16.msra.mxu0 %v4002
    %5891 = vmatpush.bf16.msra.mxu0 %v3998
    %5892 = vmatpush.bf16.msra.mxu0 %v3994
    %5893 = vmatmul.bf16.gmra.mxu0 %v924
    %v5894 = vpop.f32.mrf.mxu0
    %v5895 = vadd.f32 %v5881, %v5894
    %v5896 = vpop.f32.mrf.mxu0
    %v5897 = vadd.f32 %v5883, %v5896
    %5898 = vdwg.mxu0
    %5899 = vmatpush.bf16.msra.mxu0 %v4054
    %5900 = vmatpush.bf16.msra.mxu0 %v4050
    %5901 = vmatpush.bf16.msra.mxu0 %v4046
    %5902 = vmatpush.bf16.msra.mxu0 %v4042
    %5903 = vmatpush.bf16.msra.mxu0 %v4038
    %5904 = vmatpush.bf16.msra.mxu0 %v4034
    %5905 = vmatpush.bf16.msra.mxu0 %v4030
    %5906 = vmatpush.bf16.msra.mxu0 %v4026
    %5907 = vmatmul.bf16.gmra.mxu0 %v925
    %v5908 = vpop.f32.mrf.mxu0
    %v5909 = vadd.f32 %v5895, %v5908
    %v5910 = vpop.f32.mrf.mxu0
    %v5911 = vadd.f32 %v5897, %v5910
    %5912 = vdwg.mxu0
    %5913 = vmatpush.bf16.msra.mxu0 %v4086
    %5914 = vmatpush.bf16.msra.mxu0 %v4082
    %5915 = vmatpush.bf16.msra.mxu0 %v4078
    %5916 = vmatpush.bf16.msra.mxu0 %v4074
    %5917 = vmatpush.bf16.msra.mxu0 %v4070
    %5918 = vmatpush.bf16.msra.mxu0 %v4066
    %5919 = vmatpush.bf16.msra.mxu0 %v4062
    %5920 = vmatpush.bf16.msra.mxu0 %v4058
    %5921 = vmatmul.bf16.gmra.mxu0 %v926
    %v5922 = vpop.f32.mrf.mxu0
    %v5923 = vadd.f32 %v5909, %v5922
    %v5924 = vpop.f32.mrf.mxu0
    %v5925 = vadd.f32 %v5911, %v5924
    %5926 = vdwg.mxu0
    %5927 = vmatpush.bf16.msra.mxu0 0
    %5928 = vmatpush.bf16.msra.mxu0 0
    %5929 = vmatpush.bf16.msra.mxu0 0
    %5930 = vmatpush.bf16.msra.mxu0 0
    %5931 = vmatpush.bf16.msra.mxu0 %v4102
    %5932 = vmatpush.bf16.msra.mxu0 %v4098
    %5933 = vmatpush.bf16.msra.mxu0 %v4094
    %5934 = vmatpush.bf16.msra.mxu0 %v4090
    %5935 = vmatmul.bf16.gmra.mxu0 %v4889
    %v5936 = vpop.f32.mrf.mxu0
    %v5937 = vadd.f32 %v5923, %v5936
    %v5938 = vpop.f32.mrf.mxu0
    %v5939 = vadd.f32 %v5925, %v5938
    %5940 = vdwg.mxu0
    %5941 = vmatpush.bf16.msra.mxu0 %v3351
    %5942 = vmatpush.bf16.msra.mxu0 %v3347
    %5943 = vmatpush.bf16.msra.mxu0 %v3343
    %5944 = vmatpush.bf16.msra.mxu0 %v3339
    %5945 = vmatpush.bf16.msra.mxu0 %v3335
    %5946 = vmatpush.bf16.msra.mxu0 %v3331
    %5947 = vmatpush.bf16.msra.mxu0 %v3327
    %5948 = vmatpush.bf16.msra.mxu0 %v3323
    %5949 = vmatmul.bf16.gmra.mxu0 %v871
    %v5950 = vpop.f32.mrf.mxu0
    %v5951 = vadd.f32 %v843, %v5950
    %v5952 = vpop.f32.mrf.mxu0
    %v5953 = vadd.f32 %v843, %v5952
    %5954 = vdwg.mxu0
    %5955 = vmatpush.bf16.msra.mxu0 %v3383
    %5956 = vmatpush.bf16.msra.mxu0 %v3379
    %5957 = vmatpush.bf16.msra.mxu0 %v3375
    %5958 = vmatpush.bf16.msra.mxu0 %v3371
    %5959 = vmatpush.bf16.msra.mxu0 %v3367
    %5960 = vmatpush.bf16.msra.mxu0 %v3363
    %5961 = vmatpush.bf16.msra.mxu0 %v3359
    %5962 = vmatpush.bf16.msra.mxu0 %v3355
    %5963 = vmatmul.bf16.gmra.mxu0 %v872
    %v5964 = vpop.f32.mrf.mxu0
    %v5965 = vadd.f32 %v5951, %v5964
    %v5966 = vpop.f32.mrf.mxu0
    %v5967 = vadd.f32 %v5953, %v5966
    %5968 = vdwg.mxu0
    %5969 = vmatpush.bf16.msra.mxu0 %v3415
    %5970 = vmatpush.bf16.msra.mxu0 %v3411
    %5971 = vmatpush.bf16.msra.mxu0 %v3407
    %5972 = vmatpush.bf16.msra.mxu0 %v3403
    %5973 = vmatpush.bf16.msra.mxu0 %v3399
    %5974 = vmatpush.bf16.msra.mxu0 %v3395
    %5975 = vmatpush.bf16.msra.mxu0 %v3391
    %5976 = vmatpush.bf16.msra.mxu0 %v3387
    %5977 = vmatmul.bf16.gmra.mxu0 %v873
    %v5978 = vpop.f32.mrf.mxu0
    %v5979 = vadd.f32 %v5965, %v5978
    %v5980 = vpop.f32.mrf.mxu0
    %v5981 = vadd.f32 %v5967, %v5980
    %5982 = vdwg.mxu0
    %5983 = vmatpush.bf16.msra.mxu0 %v3447
    %5984 = vmatpush.bf16.msra.mxu0 %v3443
    %5985 = vmatpush.bf16.msra.mxu0 %v3439
    %5986 = vmatpush.bf16.msra.mxu0 %v3435
    %5987 = vmatpush.bf16.msra.mxu0 %v3431
    %5988 = vmatpush.bf16.msra.mxu0 %v3427
    %5989 = vmatpush.bf16.msra.mxu0 %v3423
    %5990 = vmatpush.bf16.msra.mxu0 %v3419
    %5991 = vmatmul.bf16.gmra.mxu0 %v874
    %v5992 = vpop.f32.mrf.mxu0
    %v5993 = vadd.f32 %v5979, %v5992
    %v5994 = vpop.f32.mrf.mxu0
    %v5995 = vadd.f32 %v5981, %v5994
    %5996 = vdwg.mxu0
    %5997 = vmatpush.bf16.msra.mxu0 %v3479
    %5998 = vmatpush.bf16.msra.mxu0 %v3475
    %5999 = vmatpush.bf16.msra.mxu0 %v3471
    %6000 = vmatpush.bf16.msra.mxu0 %v3467
    %6001 = vmatpush.bf16.msra.mxu0 %v3463
    %6002 = vmatpush.bf16.msra.mxu0 %v3459
    %6003 = vmatpush.bf16.msra.mxu0 %v3455
    %6004 = vmatpush.bf16.msra.mxu0 %v3451
    %6005 = vmatmul.bf16.gmra.mxu0 %v875
    %v6006 = vpop.f32.mrf.mxu0
    %v6007 = vadd.f32 %v5993, %v6006
    %v6008 = vpop.f32.mrf.mxu0
    %v6009 = vadd.f32 %v5995, %v6008
    %6010 = vdwg.mxu0
    %6011 = vmatpush.bf16.msra.mxu0 %v3511
    %6012 = vmatpush.bf16.msra.mxu0 %v3507
    %6013 = vmatpush.bf16.msra.mxu0 %v3503
    %6014 = vmatpush.bf16.msra.mxu0 %v3499
    %6015 = vmatpush.bf16.msra.mxu0 %v3495
    %6016 = vmatpush.bf16.msra.mxu0 %v3491
    %6017 = vmatpush.bf16.msra.mxu0 %v3487
    %6018 = vmatpush.bf16.msra.mxu0 %v3483
    %6019 = vmatmul.bf16.gmra.mxu0 %v876
    %v6020 = vpop.f32.mrf.mxu0
    %v6021 = vadd.f32 %v6007, %v6020
    %v6022 = vpop.f32.mrf.mxu0
    %v6023 = vadd.f32 %v6009, %v6022
    %6024 = vdwg.mxu0
    %6025 = vmatpush.bf16.msra.mxu0 %v3543
    %6026 = vmatpush.bf16.msra.mxu0 %v3539
    %6027 = vmatpush.bf16.msra.mxu0 %v3535
    %6028 = vmatpush.bf16.msra.mxu0 %v3531
    %6029 = vmatpush.bf16.msra.mxu0 %v3527
    %6030 = vmatpush.bf16.msra.mxu0 %v3523
    %6031 = vmatpush.bf16.msra.mxu0 %v3519
    %6032 = vmatpush.bf16.msra.mxu0 %v3515
    %6033 = vmatmul.bf16.gmra.mxu0 %v877
    %v6034 = vpop.f32.mrf.mxu0
    %v6035 = vadd.f32 %v6021, %v6034
    %v6036 = vpop.f32.mrf.mxu0
    %v6037 = vadd.f32 %v6023, %v6036
    %6038 = vdwg.mxu0
    %6039 = vmatpush.bf16.msra.mxu0 %v3575
    %6040 = vmatpush.bf16.msra.mxu0 %v3571
    %6041 = vmatpush.bf16.msra.mxu0 %v3567
    %6042 = vmatpush.bf16.msra.mxu0 %v3563
    %6043 = vmatpush.bf16.msra.mxu0 %v3559
    %6044 = vmatpush.bf16.msra.mxu0 %v3555
    %6045 = vmatpush.bf16.msra.mxu0 %v3551
    %6046 = vmatpush.bf16.msra.mxu0 %v3547
    %6047 = vmatmul.bf16.gmra.mxu0 %v878
    %v6048 = vpop.f32.mrf.mxu0
    %v6049 = vadd.f32 %v6035, %v6048
    %v6050 = vpop.f32.mrf.mxu0
    %v6051 = vadd.f32 %v6037, %v6050
    %6052 = vdwg.mxu0
    %6053 = vmatpush.bf16.msra.mxu0 %v3607
    %6054 = vmatpush.bf16.msra.mxu0 %v3603
    %6055 = vmatpush.bf16.msra.mxu0 %v3599
    %6056 = vmatpush.bf16.msra.mxu0 %v3595
    %6057 = vmatpush.bf16.msra.mxu0 %v3591
    %6058 = vmatpush.bf16.msra.mxu0 %v3587
    %6059 = vmatpush.bf16.msra.mxu0 %v3583
    %6060 = vmatpush.bf16.msra.mxu0 %v3579
    %6061 = vmatmul.bf16.gmra.mxu0 %v895
    %v6062 = vpop.f32.mrf.mxu0
    %v6063 = vadd.f32 %v6049, %v6062
    %v6064 = vpop.f32.mrf.mxu0
    %v6065 = vadd.f32 %v6051, %v6064
    %6066 = vdwg.mxu0
    %6067 = vmatpush.bf16.msra.mxu0 %v3639
    %6068 = vmatpush.bf16.msra.mxu0 %v3635
    %6069 = vmatpush.bf16.msra.mxu0 %v3631
    %6070 = vmatpush.bf16.msra.mxu0 %v3627
    %6071 = vmatpush.bf16.msra.mxu0 %v3623
    %6072 = vmatpush.bf16.msra.mxu0 %v3619
    %6073 = vmatpush.bf16.msra.mxu0 %v3615
    %6074 = vmatpush.bf16.msra.mxu0 %v3611
    %6075 = vmatmul.bf16.gmra.mxu0 %v896
    %v6076 = vpop.f32.mrf.mxu0
    %v6077 = vadd.f32 %v6063, %v6076
    %v6078 = vpop.f32.mrf.mxu0
    %v6079 = vadd.f32 %v6065, %v6078
    %6080 = vdwg.mxu0
    %6081 = vmatpush.bf16.msra.mxu0 %v3671
    %6082 = vmatpush.bf16.msra.mxu0 %v3667
    %6083 = vmatpush.bf16.msra.mxu0 %v3663
    %6084 = vmatpush.bf16.msra.mxu0 %v3659
    %6085 = vmatpush.bf16.msra.mxu0 %v3655
    %6086 = vmatpush.bf16.msra.mxu0 %v3651
    %6087 = vmatpush.bf16.msra.mxu0 %v3647
    %6088 = vmatpush.bf16.msra.mxu0 %v3643
    %6089 = vmatmul.bf16.gmra.mxu0 %v897
    %v6090 = vpop.f32.mrf.mxu0
    %v6091 = vadd.f32 %v6077, %v6090
    %v6092 = vpop.f32.mrf.mxu0
    %v6093 = vadd.f32 %v6079, %v6092
    %6094 = vdwg.mxu0
    %6095 = vmatpush.bf16.msra.mxu0 %v3703
    %6096 = vmatpush.bf16.msra.mxu0 %v3699
    %6097 = vmatpush.bf16.msra.mxu0 %v3695
    %6098 = vmatpush.bf16.msra.mxu0 %v3691
    %6099 = vmatpush.bf16.msra.mxu0 %v3687
    %6100 = vmatpush.bf16.msra.mxu0 %v3683
    %6101 = vmatpush.bf16.msra.mxu0 %v3679
    %6102 = vmatpush.bf16.msra.mxu0 %v3675
    %6103 = vmatmul.bf16.gmra.mxu0 %v898
    %v6104 = vpop.f32.mrf.mxu0
    %v6105 = vadd.f32 %v6091, %v6104
    %v6106 = vpop.f32.mrf.mxu0
    %v6107 = vadd.f32 %v6093, %v6106
    %6108 = vdwg.mxu0
    %6109 = vmatpush.bf16.msra.mxu0 %v3735
    %6110 = vmatpush.bf16.msra.mxu0 %v3731
    %6111 = vmatpush.bf16.msra.mxu0 %v3727
    %6112 = vmatpush.bf16.msra.mxu0 %v3723
    %6113 = vmatpush.bf16.msra.mxu0 %v3719
    %6114 = vmatpush.bf16.msra.mxu0 %v3715
    %6115 = vmatpush.bf16.msra.mxu0 %v3711
    %6116 = vmatpush.bf16.msra.mxu0 %v3707
    %6117 = vmatmul.bf16.gmra.mxu0 %v899
    %v6118 = vpop.f32.mrf.mxu0
    %v6119 = vadd.f32 %v6105, %v6118
    %v6120 = vpop.f32.mrf.mxu0
    %v6121 = vadd.f32 %v6107, %v6120
    %6122 = vdwg.mxu0
    %6123 = vmatpush.bf16.msra.mxu0 %v3767
    %6124 = vmatpush.bf16.msra.mxu0 %v3763
    %6125 = vmatpush.bf16.msra.mxu0 %v3759
    %6126 = vmatpush.bf16.msra.mxu0 %v3755
    %6127 = vmatpush.bf16.msra.mxu0 %v3751
    %6128 = vmatpush.bf16.msra.mxu0 %v3747
    %6129 = vmatpush.bf16.msra.mxu0 %v3743
    %6130 = vmatpush.bf16.msra.mxu0 %v3739
    %6131 = vmatmul.bf16.gmra.mxu0 %v900
    %v6132 = vpop.f32.mrf.mxu0
    %v6133 = vadd.f32 %v6119, %v6132
    %v6134 = vpop.f32.mrf.mxu0
    %v6135 = vadd.f32 %v6121, %v6134
    %6136 = vdwg.mxu0
    %6137 = vmatpush.bf16.msra.mxu0 %v3799
    %6138 = vmatpush.bf16.msra.mxu0 %v3795
    %6139 = vmatpush.bf16.msra.mxu0 %v3791
    %6140 = vmatpush.bf16.msra.mxu0 %v3787
    %6141 = vmatpush.bf16.msra.mxu0 %v3783
    %6142 = vmatpush.bf16.msra.mxu0 %v3779
    %6143 = vmatpush.bf16.msra.mxu0 %v3775
    %6144 = vmatpush.bf16.msra.mxu0 %v3771
    %6145 = vmatmul.bf16.gmra.mxu0 %v901
    %v6146 = vpop.f32.mrf.mxu0
    %v6147 = vadd.f32 %v6133, %v6146
    %v6148 = vpop.f32.mrf.mxu0
    %v6149 = vadd.f32 %v6135, %v6148
    %6150 = vdwg.mxu0
    %6151 = vmatpush.bf16.msra.mxu0 %v3831
    %6152 = vmatpush.bf16.msra.mxu0 %v3827
    %6153 = vmatpush.bf16.msra.mxu0 %v3823
    %6154 = vmatpush.bf16.msra.mxu0 %v3819
    %6155 = vmatpush.bf16.msra.mxu0 %v3815
    %6156 = vmatpush.bf16.msra.mxu0 %v3811
    %6157 = vmatpush.bf16.msra.mxu0 %v3807
    %6158 = vmatpush.bf16.msra.mxu0 %v3803
    %6159 = vmatmul.bf16.gmra.mxu0 %v902
    %v6160 = vpop.f32.mrf.mxu0
    %v6161 = vadd.f32 %v6147, %v6160
    %v6162 = vpop.f32.mrf.mxu0
    %v6163 = vadd.f32 %v6149, %v6162
    %6164 = vdwg.mxu0
    %6165 = vmatpush.bf16.msra.mxu0 %v3863
    %6166 = vmatpush.bf16.msra.mxu0 %v3859
    %6167 = vmatpush.bf16.msra.mxu0 %v3855
    %6168 = vmatpush.bf16.msra.mxu0 %v3851
    %6169 = vmatpush.bf16.msra.mxu0 %v3847
    %6170 = vmatpush.bf16.msra.mxu0 %v3843
    %6171 = vmatpush.bf16.msra.mxu0 %v3839
    %6172 = vmatpush.bf16.msra.mxu0 %v3835
    %6173 = vmatmul.bf16.gmra.mxu0 %v919
    %v6174 = vpop.f32.mrf.mxu0
    %v6175 = vadd.f32 %v6161, %v6174
    %v6176 = vpop.f32.mrf.mxu0
    %v6177 = vadd.f32 %v6163, %v6176
    %6178 = vdwg.mxu0
    %6179 = vmatpush.bf16.msra.mxu0 %v3895
    %6180 = vmatpush.bf16.msra.mxu0 %v3891
    %6181 = vmatpush.bf16.msra.mxu0 %v3887
    %6182 = vmatpush.bf16.msra.mxu0 %v3883
    %6183 = vmatpush.bf16.msra.mxu0 %v3879
    %6184 = vmatpush.bf16.msra.mxu0 %v3875
    %6185 = vmatpush.bf16.msra.mxu0 %v3871
    %6186 = vmatpush.bf16.msra.mxu0 %v3867
    %6187 = vmatmul.bf16.gmra.mxu0 %v920
    %v6188 = vpop.f32.mrf.mxu0
    %v6189 = vadd.f32 %v6175, %v6188
    %v6190 = vpop.f32.mrf.mxu0
    %v6191 = vadd.f32 %v6177, %v6190
    %6192 = vdwg.mxu0
    %6193 = vmatpush.bf16.msra.mxu0 %v3927
    %6194 = vmatpush.bf16.msra.mxu0 %v3923
    %6195 = vmatpush.bf16.msra.mxu0 %v3919
    %6196 = vmatpush.bf16.msra.mxu0 %v3915
    %6197 = vmatpush.bf16.msra.mxu0 %v3911
    %6198 = vmatpush.bf16.msra.mxu0 %v3907
    %6199 = vmatpush.bf16.msra.mxu0 %v3903
    %6200 = vmatpush.bf16.msra.mxu0 %v3899
    %6201 = vmatmul.bf16.gmra.mxu0 %v921
    %v6202 = vpop.f32.mrf.mxu0
    %v6203 = vadd.f32 %v6189, %v6202
    %v6204 = vpop.f32.mrf.mxu0
    %v6205 = vadd.f32 %v6191, %v6204
    %6206 = vdwg.mxu0
    %6207 = vmatpush.bf16.msra.mxu0 %v3959
    %6208 = vmatpush.bf16.msra.mxu0 %v3955
    %6209 = vmatpush.bf16.msra.mxu0 %v3951
    %6210 = vmatpush.bf16.msra.mxu0 %v3947
    %6211 = vmatpush.bf16.msra.mxu0 %v3943
    %6212 = vmatpush.bf16.msra.mxu0 %v3939
    %6213 = vmatpush.bf16.msra.mxu0 %v3935
    %6214 = vmatpush.bf16.msra.mxu0 %v3931
    %6215 = vmatmul.bf16.gmra.mxu0 %v922
    %v6216 = vpop.f32.mrf.mxu0
    %v6217 = vadd.f32 %v6203, %v6216
    %v6218 = vpop.f32.mrf.mxu0
    %v6219 = vadd.f32 %v6205, %v6218
    %6220 = vdwg.mxu0
    %6221 = vmatpush.bf16.msra.mxu0 %v3991
    %6222 = vmatpush.bf16.msra.mxu0 %v3987
    %6223 = vmatpush.bf16.msra.mxu0 %v3983
    %6224 = vmatpush.bf16.msra.mxu0 %v3979
    %6225 = vmatpush.bf16.msra.mxu0 %v3975
    %6226 = vmatpush.bf16.msra.mxu0 %v3971
    %6227 = vmatpush.bf16.msra.mxu0 %v3967
    %6228 = vmatpush.bf16.msra.mxu0 %v3963
    %6229 = vmatmul.bf16.gmra.mxu0 %v923
    %v6230 = vpop.f32.mrf.mxu0
    %v6231 = vadd.f32 %v6217, %v6230
    %v6232 = vpop.f32.mrf.mxu0
    %v6233 = vadd.f32 %v6219, %v6232
    %6234 = vdwg.mxu0
    %6235 = vmatpush.bf16.msra.mxu0 %v4023
    %6236 = vmatpush.bf16.msra.mxu0 %v4019
    %6237 = vmatpush.bf16.msra.mxu0 %v4015
    %6238 = vmatpush.bf16.msra.mxu0 %v4011
    %6239 = vmatpush.bf16.msra.mxu0 %v4007
    %6240 = vmatpush.bf16.msra.mxu0 %v4003
    %6241 = vmatpush.bf16.msra.mxu0 %v3999
    %6242 = vmatpush.bf16.msra.mxu0 %v3995
    %6243 = vmatmul.bf16.gmra.mxu0 %v924
    %v6244 = vpop.f32.mrf.mxu0
    %v6245 = vadd.f32 %v6231, %v6244
    %v6246 = vpop.f32.mrf.mxu0
    %v6247 = vadd.f32 %v6233, %v6246
    %6248 = vdwg.mxu0
    %6249 = vmatpush.bf16.msra.mxu0 %v4055
    %6250 = vmatpush.bf16.msra.mxu0 %v4051
    %6251 = vmatpush.bf16.msra.mxu0 %v4047
    %6252 = vmatpush.bf16.msra.mxu0 %v4043
    %6253 = vmatpush.bf16.msra.mxu0 %v4039
    %6254 = vmatpush.bf16.msra.mxu0 %v4035
    %6255 = vmatpush.bf16.msra.mxu0 %v4031
    %6256 = vmatpush.bf16.msra.mxu0 %v4027
    %6257 = vmatmul.bf16.gmra.mxu0 %v925
    %v6258 = vpop.f32.mrf.mxu0
    %v6259 = vadd.f32 %v6245, %v6258
    %v6260 = vpop.f32.mrf.mxu0
    %v6261 = vadd.f32 %v6247, %v6260
    %6262 = vdwg.mxu0
    %6263 = vmatpush.bf16.msra.mxu0 %v4087
    %6264 = vmatpush.bf16.msra.mxu0 %v4083
    %6265 = vmatpush.bf16.msra.mxu0 %v4079
    %6266 = vmatpush.bf16.msra.mxu0 %v4075
    %6267 = vmatpush.bf16.msra.mxu0 %v4071
    %6268 = vmatpush.bf16.msra.mxu0 %v4067
    %6269 = vmatpush.bf16.msra.mxu0 %v4063
    %6270 = vmatpush.bf16.msra.mxu0 %v4059
    %6271 = vmatmul.bf16.gmra.mxu0 %v926
    %v6272 = vpop.f32.mrf.mxu0
    %v6273 = vadd.f32 %v6259, %v6272
    %v6274 = vpop.f32.mrf.mxu0
    %v6275 = vadd.f32 %v6261, %v6274
    %6276 = vdwg.mxu0
    %6277 = vmatpush.bf16.msra.mxu0 0
    %6278 = vmatpush.bf16.msra.mxu0 0
    %6279 = vmatpush.bf16.msra.mxu0 0
    %6280 = vmatpush.bf16.msra.mxu0 0
    %6281 = vmatpush.bf16.msra.mxu0 %v4103
    %6282 = vmatpush.bf16.msra.mxu0 %v4099
    %6283 = vmatpush.bf16.msra.mxu0 %v4095
    %6284 = vmatpush.bf16.msra.mxu0 %v4091
    %6285 = vmatmul.bf16.gmra.mxu0 %v4889
    %v6286 = vpop.f32.mrf.mxu0
    %v6287 = vadd.f32 %v6273, %v6286
    %v6288 = vpop.f32.mrf.mxu0
    %v6289 = vadd.f32 %v6275, %v6288
    %6290 = vdwg.mxu0
    %v6291 = vmax.f32 %v5237, 0.0
    %v6292 = vmax.f32 %v5587, 0.0
    %v6293 = vmax.f32 %v5937, 0.0
    %v6294 = vmax.f32 %v6287, 0.0
    %v6295 = vmax.f32 %v5239, 0.0
    %v6296 = vmax.f32 %v5589, 0.0
    %v6297 = vmax.f32 %v5939, 0.0
    %v6298 = vmax.f32 %v6289, 0.0
    %v6299 = vpack.c.bf16 %v6295, %v6291
    %v6300 = vpack.c.bf16 %v6296, %v6292
    %v6301 = vpack.c.bf16 %v6297, %v6293
    %v6302 = vpack.c.bf16 %v6298, %v6294
    %v6303 = vld [vmem:[%s3] sm:$0xf]
    %v6304 = vld [vmem:[%s3 + $0x4] sm:$0xf]
    %v6305 = vld [vmem:[%s3 + $0x8] sm:$0xf]
    %v6306 = vld [vmem:[%s3 + $0xc] sm:$0xf]
    %v6307 = vld [vmem:[%s3 + $0x10] sm:$0xf]
    %v6308 = vld [vmem:[%s3 + $0x14] sm:$0xf]
    %v6309 = vld [vmem:[%s3 + $0x18] sm:$0xf]
    %v6310 = vld [vmem:[%s3 + $0x1c] sm:$0xf]
    %v6311 = vld [vmem:[%s3 + $0x20] sm:$0xf]
    %v6312 = vld [vmem:[%s3 + $0x24] sm:$0xf]
    %v6313 = vld [vmem:[%s3 + $0x28] sm:$0xf]
    %v6314 = vld [vmem:[%s3 + $0x2c] sm:$0xf]
    %v6315 = vld [vmem:[%s3 + $0x30] sm:$0xf]
    %v6316 = vld [vmem:[%s3 + $0x34] sm:$0xf]
    %v6317 = vld [vmem:[%s3 + $0x38] sm:$0xf]
    %v6318 = vld [vmem:[%s3 + $0x3c] sm:$0xf]
    %v6319 = vld [vmem:[%s3 + $0x40] sm:$0xf]
    %v6320 = vld [vmem:[%s3 + $0x44] sm:$0xf]
    %v6321 = vld [vmem:[%s3 + $0x48] sm:$0xf]
    %v6322 = vld [vmem:[%s3 + $0x4c] sm:$0xf]
    %v6323 = vld [vmem:[%s3 + $0x50] sm:$0xf]
    %v6324 = vld [vmem:[%s3 + $0x54] sm:$0xf]
    %v6325 = vld [vmem:[%s3 + $0x58] sm:$0xf]
    %v6326 = vld [vmem:[%s3 + $0x5c] sm:$0xf]
    %v6327 = vld [vmem:[%s3 + $0x60] sm:$0xf]
    %v6328 = vld [vmem:[%s3 + $0x64] sm:$0xf]
    %v6329 = vld [vmem:[%s3 + $0x68] sm:$0xf]
    %v6330 = vld [vmem:[%s3 + $0x6c] sm:$0xf]
    %v6331 = vld [vmem:[%s3 + $0x70] sm:$0xf]
    %v6332 = vld [vmem:[%s3 + $0x74] sm:$0xf]
    %v6333 = vld [vmem:[%s3 + $0x78] sm:$0xf]
    %v6334 = vld [vmem:[%s3 + $0x7c] sm:$0xf]
    %v6335 = vld [vmem:[%s3 + $0x80] sm:$0xf]
    %v6336 = vld [vmem:[%s3 + $0x84] sm:$0xf]
    %v6337 = vld [vmem:[%s3 + $0x88] sm:$0xf]
    %v6338 = vld [vmem:[%s3 + $0x8c] sm:$0xf]
    %v6339 = vld [vmem:[%s3 + $0x90] sm:$0xf]
    %v6340 = vld [vmem:[%s3 + $0x94] sm:$0xf]
    %v6341 = vld [vmem:[%s3 + $0x98] sm:$0xf]
    %v6342 = vld [vmem:[%s3 + $0x9c] sm:$0xf]
    %v6343 = vld [vmem:[%s3 + $0xa0] sm:$0xf]
    %v6344 = vld [vmem:[%s3 + $0xa4] sm:$0xf]
    %v6345 = vld [vmem:[%s3 + $0xa8] sm:$0xf]
    %v6346 = vld [vmem:[%s3 + $0xac] sm:$0xf]
    %v6347 = vld [vmem:[%s3 + $0xb0] sm:$0xf]
    %v6348 = vld [vmem:[%s3 + $0xb4] sm:$0xf]
    %v6349 = vld [vmem:[%s3 + $0xb8] sm:$0xf]
    %v6350 = vld [vmem:[%s3 + $0xbc] sm:$0xf]
    %v6351 = vld [vmem:[%s3 + $0xc0] sm:$0xf]
    %v6352 = vld [vmem:[%s3 + $0xc4] sm:$0xf]
    %v6353 = vld [vmem:[%s3 + $0xc8] sm:$0xf]
    %v6354 = vld [vmem:[%s3 + $0xcc] sm:$0xf]
    %v6355 = vld [vmem:[%s3 + $0xd0] sm:$0xf]
    %v6356 = vld [vmem:[%s3 + $0xd4] sm:$0xf]
    %v6357 = vld [vmem:[%s3 + $0xd8] sm:$0xf]
    %v6358 = vld [vmem:[%s3 + $0xdc] sm:$0xf]
    %v6359 = vld [vmem:[%s3 + $0xe0] sm:$0xf]
    %v6360 = vld [vmem:[%s3 + $0xe4] sm:$0xf]
    %v6361 = vld [vmem:[%s3 + $0xe8] sm:$0xf]
    %v6362 = vld [vmem:[%s3 + $0xec] sm:$0xf]
    %v6363 = vld [vmem:[%s3 + $0xf0] sm:$0xf]
    %v6364 = vld [vmem:[%s3 + $0xf4] sm:$0xf]
    %v6365 = vld [vmem:[%s3 + $0xf8] sm:$0xf]
    %v6366 = vld [vmem:[%s3 + $0xfc] sm:$0xf]
    %v6367 = vld [vmem:[%s4] sm:$0x1]
    %v6369 = vperm.slane %v6367, 0
    %v6435 = vunpack.c.l.b16 %v6303
    %v6436 = vunpack.c.l.b16 %v6304
    %v6437 = vunpack.c.l.b16 %v6305
    %v6438 = vunpack.c.l.b16 %v6306
    %v6439 = vunpack.c.l.b16 %v6307
    %v6440 = vunpack.c.l.b16 %v6308
    %v6441 = vunpack.c.l.b16 %v6309
    %v6442 = vunpack.c.l.b16 %v6310
    %v6443 = vunpack.c.l.b16 %v6311
    %v6444 = vunpack.c.l.b16 %v6312
    %v6445 = vunpack.c.l.b16 %v6313
    %v6446 = vunpack.c.l.b16 %v6314
    %v6447 = vunpack.c.l.b16 %v6315
    %v6448 = vunpack.c.l.b16 %v6316
    %v6449 = vunpack.c.l.b16 %v6317
    %v6450 = vunpack.c.l.b16 %v6318
    %v6451 = vunpack.c.l.b16 %v6319
    %v6452 = vunpack.c.l.b16 %v6320
    %v6453 = vunpack.c.l.b16 %v6321
    %v6454 = vunpack.c.l.b16 %v6322
    %v6455 = vunpack.c.l.b16 %v6323
    %v6456 = vunpack.c.l.b16 %v6324
    %v6457 = vunpack.c.l.b16 %v6325
    %v6458 = vunpack.c.l.b16 %v6326
    %v6459 = vunpack.c.l.b16 %v6327
    %v6460 = vunpack.c.l.b16 %v6328
    %v6461 = vunpack.c.l.b16 %v6329
    %v6462 = vunpack.c.l.b16 %v6330
    %v6463 = vunpack.c.l.b16 %v6331
    %v6464 = vunpack.c.l.b16 %v6332
    %v6465 = vunpack.c.l.b16 %v6333
    %v6466 = vunpack.c.l.b16 %v6334
    %v6467 = vunpack.c.l.b16 %v6335
    %v6468 = vunpack.c.l.b16 %v6336
    %v6469 = vunpack.c.l.b16 %v6337
    %v6470 = vunpack.c.l.b16 %v6338
    %v6471 = vunpack.c.l.b16 %v6339
    %v6472 = vunpack.c.l.b16 %v6340
    %v6473 = vunpack.c.l.b16 %v6341
    %v6474 = vunpack.c.l.b16 %v6342
    %v6475 = vunpack.c.l.b16 %v6343
    %v6476 = vunpack.c.l.b16 %v6344
    %v6477 = vunpack.c.l.b16 %v6345
    %v6478 = vunpack.c.l.b16 %v6346
    %v6479 = vunpack.c.l.b16 %v6347
    %v6480 = vunpack.c.l.b16 %v6348
    %v6481 = vunpack.c.l.b16 %v6349
    %v6482 = vunpack.c.l.b16 %v6350
    %v6483 = vunpack.c.l.b16 %v6351
    %v6484 = vunpack.c.l.b16 %v6352
    %v6485 = vunpack.c.l.b16 %v6353
    %v6486 = vunpack.c.l.b16 %v6354
    %v6487 = vunpack.c.l.b16 %v6355
    %v6488 = vunpack.c.l.b16 %v6356
    %v6489 = vunpack.c.l.b16 %v6357
    %v6490 = vunpack.c.l.b16 %v6358
    %v6491 = vunpack.c.l.b16 %v6359
    %v6492 = vunpack.c.l.b16 %v6360
    %v6493 = vunpack.c.l.b16 %v6361
    %v6494 = vunpack.c.l.b16 %v6362
    %v6495 = vunpack.c.l.b16 %v6363
    %v6496 = vunpack.c.l.b16 %v6364
    %v6497 = vunpack.c.l.b16 %v6365
    %v6498 = vunpack.c.l.b16 %v6366
    %v6499 = vpack.c.b16 %v6436, %v6435
    %v6500 = vpack.c.b16 %v6438, %v6437
    %v6501 = vpack.c.b16 %v6440, %v6439
    %v6502 = vpack.c.b16 %v6442, %v6441
    %v6503 = vpack.c.b16 %v6444, %v6443
    %v6504 = vpack.c.b16 %v6446, %v6445
    %v6505 = vpack.c.b16 %v6448, %v6447
    %v6506 = vpack.c.b16 %v6450, %v6449
    %v6507 = vpack.c.b16 %v6452, %v6451
    %v6508 = vpack.c.b16 %v6454, %v6453
    %v6509 = vpack.c.b16 %v6456, %v6455
    %v6510 = vpack.c.b16 %v6458, %v6457
    %v6511 = vpack.c.b16 %v6460, %v6459
    %v6512 = vpack.c.b16 %v6462, %v6461
    %v6513 = vpack.c.b16 %v6464, %v6463
    %v6514 = vpack.c.b16 %v6466, %v6465
    %v6515 = vpack.c.b16 %v6468, %v6467
    %v6516 = vpack.c.b16 %v6470, %v6469
    %v6517 = vpack.c.b16 %v6472, %v6471
    %v6518 = vpack.c.b16 %v6474, %v6473
    %v6519 = vpack.c.b16 %v6476, %v6475
    %v6520 = vpack.c.b16 %v6478, %v6477
    %v6521 = vpack.c.b16 %v6480, %v6479
    %v6522 = vpack.c.b16 %v6482, %v6481
    %v6523 = vpack.c.b16 %v6484, %v6483
    %v6524 = vpack.c.b16 %v6486, %v6485
    %v6525 = vpack.c.b16 %v6488, %v6487
    %v6526 = vpack.c.b16 %v6490, %v6489
    %v6527 = vpack.c.b16 %v6492, %v6491
    %v6528 = vpack.c.b16 %v6494, %v6493
    %v6529 = vpack.c.b16 %v6496, %v6495
    %v6530 = vpack.c.b16 %v6498, %v6497
    %6563 = vmatpush.bf16.msra.mxu0 %v6506
    %6564 = vmatpush.bf16.msra.mxu0 %v6505
    %6565 = vmatpush.bf16.msra.mxu0 %v6504
    %6566 = vmatpush.bf16.msra.mxu0 %v6503
    %6567 = vmatpush.bf16.msra.mxu0 %v6502
    %6568 = vmatpush.bf16.msra.mxu0 %v6501
    %6569 = vmatpush.bf16.msra.mxu0 %v6500
    %6570 = vmatpush.bf16.msra.mxu0 %v6499
    %6571 = vmatmul.bf16.gmra.mxu0 %v6299
    %v6572 = vpop.f32.mrf.mxu0
    %v6573 = vadd.f32 %v6369, %v6572
    %v6574 = vpop.f32.mrf.mxu0
    %v6575 = vadd.f32 %v6369, %v6574
    %6576 = vdwg.mxu0
    %6577 = vmatpush.bf16.msra.mxu0 %v6514
    %6578 = vmatpush.bf16.msra.mxu0 %v6513
    %6579 = vmatpush.bf16.msra.mxu0 %v6512
    %6580 = vmatpush.bf16.msra.mxu0 %v6511
    %6581 = vmatpush.bf16.msra.mxu0 %v6510
    %6582 = vmatpush.bf16.msra.mxu0 %v6509
    %6583 = vmatpush.bf16.msra.mxu0 %v6508
    %6584 = vmatpush.bf16.msra.mxu0 %v6507
    %6585 = vmatmul.bf16.gmra.mxu0 %v6300
    %v6586 = vpop.f32.mrf.mxu0
    %v6587 = vadd.f32 %v6573, %v6586
    %v6588 = vpop.f32.mrf.mxu0
    %v6589 = vadd.f32 %v6575, %v6588
    %6590 = vdwg.mxu0
    %6591 = vmatpush.bf16.msra.mxu0 %v6522
    %6592 = vmatpush.bf16.msra.mxu0 %v6521
    %6593 = vmatpush.bf16.msra.mxu0 %v6520
    %6594 = vmatpush.bf16.msra.mxu0 %v6519
    %6595 = vmatpush.bf16.msra.mxu0 %v6518
    %6596 = vmatpush.bf16.msra.mxu0 %v6517
    %6597 = vmatpush.bf16.msra.mxu0 %v6516
    %6598 = vmatpush.bf16.msra.mxu0 %v6515
    %6599 = vmatmul.bf16.gmra.mxu0 %v6301
    %v6600 = vpop.f32.mrf.mxu0
    %v6601 = vadd.f32 %v6587, %v6600
    %v6602 = vpop.f32.mrf.mxu0
    %v6603 = vadd.f32 %v6589, %v6602
    %6604 = vdwg.mxu0
    %6605 = vmatpush.bf16.msra.mxu0 %v6530
    %6606 = vmatpush.bf16.msra.mxu0 %v6529
    %6607 = vmatpush.bf16.msra.mxu0 %v6528
    %6608 = vmatpush.bf16.msra.mxu0 %v6527
    %6609 = vmatpush.bf16.msra.mxu0 %v6526
    %6610 = vmatpush.bf16.msra.mxu0 %v6525
    %6611 = vmatpush.bf16.msra.mxu0 %v6524
    %6612 = vmatpush.bf16.msra.mxu0 %v6523
    %6613 = vmatmul.bf16.gmra.mxu0 %v6302
    %v6614 = vpop.f32.mrf.mxu0
    %v6615 = vadd.f32 %v6601, %v6614
    %v6616 = vpop.f32.mrf.mxu0
    %v6617 = vadd.f32 %v6603, %v6616
    %6618 = vdwg.mxu0
    %vm6619 = vcmask 48128
    %6620 = vst.msk [vmem:[#allocation2] sm:$0xff] %vm6619, %v6615
    %6621 = vst.msk [vmem:[#allocation2 + $0x8] sm:$0xff] %vm6619, %v6617
    // Predicated region
    $region22: #{dqn_forward.7} parent=1 // pred_check
      _
    $region23: #{dqn_forward.7} parent=1 // pred_check_branch
      %6623 = sbr.rel (0) target = $region25
    $region24: #{dqn_forward.7} parent=1 // pred_region
      %6625 = vsyncadd [#allocation3], 224
      %s6626 = sshll.u32 [#allocation2], 4
      %s6627 = int_to_ptr.vmem [resolvable:$true] %s6626
      %s6628 = sshll.u32 %s5, 4
      %s6629 = int_to_ptr.hbm [resolvable:$true] %s6628
      %6634 = dma.vmem_to_hbm [thread:$0]  %s6627, 32, %s6629, [#allocation3], 32, 32, 2
    $region25: #{dqn_forward.7} parent=1 // pred_fallthru
      _
    // Predicated region
    $region26: #{dqn_forward.7} parent=1 // pred_check
      _
    $region27: #{dqn_forward.7} parent=1 // pred_check_branch
      %6636 = sbr.rel (0) target = $region29
    $region28: #{dqn_forward.7} parent=1 // pred_region
      %6638 = dma.done [#allocation3], 256
    $region29: #{dqn_forward.7} parent=1 // pred_fallthru
      _
    %6639 = vsyncpa [#allocation3], 1

</llo_original>
